<compile_context>
chip_gen: v7x
topology: tpu7x:2x2x1
jax: 0.10.0
libtpu: 0.0.40
codegen_flags: <defaults>
</compile_context>

<pallas_src>
import functools
import math

import jax
import jax.numpy as jnp
import numpy as np
from jax.experimental import pallas as pl
from jax.experimental.pallas import tpu as pltpu


# -----------------------------------------------------------------------------
# Configuration — matches IndirctIllumNetwork defaults:
#   multires=0  -> no positional embedding, input_dim = 3
#   no_hdr=False -> use_hdr, input_dim = 3 + 1 = 4
#   dims=[128,128,128,128], num_lgt_sgs=24 -> lobe MLP 4->128->128->128->128->144
# -----------------------------------------------------------------------------
LOBE_DIMS = [128, 128, 128, 128]
NUM_LGT_SGS = 24
INPUT_DIM = 4
AE_HIDDEN = 128
AE_LATENT = 32
OUT_WIDTH = 256          # lane-dense combined output: 7*S (=168) sgs + 3 env + pad
# TODO(synk): the exact SparseAE architecture (model/sg_envmap_material.py) is not
# available here; it is approximated as a 2-layer encoder / 2-layer decoder MLP
# whose latent is activated by lc_act = softplus and whose output has no activation
# (out_act=None).  forward() returns (latent, output); the module uses [1].


def _sigmoid(x):
    # exact sigmoid, routed through tanh (EUP slot) instead of a VALU divide
    return 0.5 * (jnp.tanh(0.5 * x) + 1.0)


def _softplus(x):
    # matches torch.nn.functional.softplus(beta=1, threshold=20)
    return jnp.where(x > 20.0, x, jnp.log1p(jnp.exp(jnp.minimum(x, 20.0))))


# -----------------------------------------------------------------------------
# Pallas kernel: whole forward hot path (all matmuls + elementwise post-proc).
# Final lobe-layer weight columns are pre-permuted (pack_params) to a
# channel-major layout so each raw SG channel occupies a contiguous lane slice.
# First lobe layer and first AE-encoder layer are fused into one (4, 256) matmul.
# -----------------------------------------------------------------------------
def _indirect_illum_kernel(x_ref,
                           wf, bf, w1, b1, w2, b2, w3, b3, w4, b4,
                           ew1, eb1, dw0, db0, dw1, db1,
                           out_ref):
    S = NUM_LGT_SGS
    x32 = x_ref[...]                                   # (TN, 4) f32
    x = x32.astype(jnp.bfloat16)

    # ---- fused first layer: lobe[0] (128) || encoder[0] (128) ----
    h0 = jnp.maximum(
        jnp.dot(x, wf[...], preferred_element_type=jnp.float32) + bf[...], 0.0)
    h = h0[:, :128].astype(jnp.bfloat16)               # lobe branch
    he = h0[:, 128:].astype(jnp.bfloat16)              # AE encoder branch

    # ---- remaining lobe MLP (MXU, bf16 in / f32 acc) ----
    for w, b in ((w1, b1), (w2, b2), (w3, b3)):
        h = jnp.maximum(
            jnp.dot(h, w[...], preferred_element_type=jnp.float32) + b[...], 0.0
        ).astype(jnp.bfloat16)
    out = jnp.dot(h, w4[...], preferred_element_type=jnp.float32) + b4[...]  # (TN, 6*S) f32

    # ---- spherical-gaussian post-processing (VPU/EUP, f32) ----
    theta = _sigmoid(out[:, 0 * S:1 * S]) * (2.0 * math.pi)
    phi = _sigmoid(out[:, 1 * S:2 * S]) * math.pi
    sin_phi = jnp.sin(phi)
    lam = _sigmoid(out[:, 2 * S:3 * S]) * 30.0 + 0.1
    mu = jnp.maximum(out[:, 3 * S:6 * S], 0.0)

    # ---- SparseAE integral layer (env_int = |decoder(softplus(encoder(x)))|) ----
    lc = _softplus(
        jnp.dot(he, ew1[...], preferred_element_type=jnp.float32) + eb1[...]
    ).astype(jnp.bfloat16)
    hd = jnp.maximum(
        jnp.dot(lc, dw0[...], preferred_element_type=jnp.float32) + db0[...], 0.0
    ).astype(jnp.bfloat16)
    env = jnp.abs(jnp.dot(hd, dw1[...], preferred_element_type=jnp.float32) + db1[...])

    # ---- single lane-dense full-width store ----
    tn = out.shape[0]
    pad = jnp.zeros((tn, OUT_WIDTH - 7 * S - 3), jnp.float32)
    out_ref[...] = jnp.concatenate(
        [jnp.cos(theta) * sin_phi,      # lobe x
         jnp.sin(theta) * sin_phi,      # lobe y
         jnp.cos(phi),                  # lobe z
         lam,                           # lambda
         mu,                            # mu (rgb, channel-major)
         env,                           # env_int (3)
         pad], axis=-1)


# -----------------------------------------------------------------------------
# Parameter init (deterministic, nn.Linear-style uniform(-1/sqrt(fan_in), ...))
# -----------------------------------------------------------------------------
def init_params(key):
    def linear(k, fan_in, fan_out):
        k1, k2 = jax.random.split(k)
        bound = 1.0 / math.sqrt(fan_in)
        w = jax.random.uniform(k1, (fan_in, fan_out), jnp.float32, -bound, bound)
        b = jax.random.uniform(k2, (fan_out,), jnp.float32, -bound, bound)
        return w, b

    keys = jax.random.split(key, 16)
    params = {}
    lobe, dim, ki = [], INPUT_DIM, 0
    for d in LOBE_DIMS:
        lobe.append(linear(keys[ki], dim, d)); dim = d; ki += 1
    lobe.append(linear(keys[ki], dim, NUM_LGT_SGS * 6)); ki += 1
    params["lobe"] = lobe
    params["enc"] = [linear(keys[ki], INPUT_DIM, AE_HIDDEN),
                     linear(keys[ki + 1], AE_HIDDEN, AE_LATENT)]
    params["dec"] = [linear(keys[ki + 2], AE_LATENT, AE_HIDDEN),
                     linear(keys[ki + 3], AE_HIDDEN, 3)]
    return params


# -----------------------------------------------------------------------------
# One-time parameter packing: bf16 weights, f32 (1, C) biases, fused first
# layer, channel-major permutation of the final lobe layer.
# -----------------------------------------------------------------------------
def pack_params(params):
    S = NUM_LGT_SGS
    as2d = lambda b: b.reshape(1, -1).astype(jnp.float32)

    (w0, b0) = params["lobe"][0]
    (ew0, eb0) = params["enc"][0]
    wf = jnp.concatenate([w0, ew0], axis=1).astype(jnp.bfloat16)      # (4, 256)
    bff = as2d(jnp.concatenate([b0, eb0]))                            # (1, 256)

    flat = [wf, bff]
    for (w, b) in params["lobe"][1:-1]:
        flat += [w.astype(jnp.bfloat16), as2d(b)]

    w4, b4 = params["lobe"][-1]
    # new column c*S + j  <->  PyTorch flat column j*6 + c
    w4p = w4.reshape(w4.shape[0], S, 6).transpose(0, 2, 1).reshape(w4.shape[0], 6 * S)
    b4p = b4.reshape(S, 6).transpose(1, 0).reshape(6 * S)
    flat += [w4p.astype(jnp.bfloat16), as2d(b4p)]

    for (w, b) in [params["enc"][1]] + params["dec"]:
        flat += [w.astype(jnp.bfloat16), as2d(b)]
    return flat


# -----------------------------------------------------------------------------
# Wrapper: glue (concat, padding, tiling, output slicing / reshape)
# -----------------------------------------------------------------------------
def _round_up(x, m):
    return ((x + m - 1) // m) * m


@functools.partial(jax.jit, static_argnames=("tile_n",))
def indirect_illum_forward(points, hdr_shift, packed_params, tile_n=1024):
    S = NUM_LGT_SGS
    N = points.shape[0]
    # keep at least 2 grid steps (megacore / v7x) when N allows; never below 128
    tile_n = max(128, min(tile_n, _round_up(pl.cdiv(N, 2), 128)))

    x = jnp.concatenate([points, hdr_shift], axis=-1).astype(jnp.float32)  # (N, 4)
    n_blocks = pl.cdiv(N, tile_n)
    n_pad = n_blocks * tile_n
    if n_pad != N:
        x = jnp.pad(x, ((0, n_pad - N), (0, 0)))

    in_specs = [pl.BlockSpec((tile_n, INPUT_DIM), lambda i: (i, 0))]
    in_specs += [pl.BlockSpec(a.shape, lambda i: (0, 0))       # weights resident in VMEM
                 for a in packed_params]

    combined = pl.pallas_call(
        _indirect_illum_kernel,
        grid=(n_blocks,),
        in_specs=in_specs,
        out_specs=pl.BlockSpec((tile_n, OUT_WIDTH), lambda i: (i, 0)),
        out_shape=jax.ShapeDtypeStruct((n_pad, OUT_WIDTH), jnp.float32),
        compiler_params=pltpu.CompilerParams(
            dimension_semantics=("parallel",),
            vmem_limit_bytes=64 << 20),
    )(x, *packed_params)

    # channel-major (N, 7*S) -> (N, S, 7) to match PyTorch output layout
    lgt_sgs = combined[:N, :7 * S].reshape(N, 7, S).transpose(0, 2, 1)
    env_int = combined[:N, 7 * S:7 * S + 3]
    return lgt_sgs, env_int


# -----------------------------------------------------------------------------
# Pure-JAX reference (mirrors the PyTorch forward exactly, f32)
# -----------------------------------------------------------------------------
def reference_forward(points, hdr_shift, params):
    S = NUM_LGT_SGS
    x = jnp.concatenate([points, hdr_shift], axis=-1).astype(jnp.float32)
    h = x
    for w, b in params["lobe"][:-1]:
        h = jnp.maximum(h @ w + b, 0.0)
    w4, b4 = params["lobe"][-1]
    out = (h @ w4 + b4).reshape(x.shape[0], S, 6)
    lobes = 1.0 / (1.0 + jnp.exp(-out[..., :2]))
    theta = lobes[..., :1] * 2.0 * math.pi
    phi = lobes[..., 1:2] * math.pi
    lobes = jnp.concatenate(
        [jnp.cos(theta) * jnp.sin(phi), jnp.sin(theta) * jnp.sin(phi), jnp.cos(phi)],
        axis=-1)
    lam = 1.0 / (1.0 + jnp.exp(-out[..., 2:3])) * 30.0 + 0.1
    mu = jnp.maximum(out[..., 3:], 0.0)
    lgt_sgs = jnp.concatenate([lobes, lam, mu], axis=-1)

    (ew0, eb0), (ew1, eb1) = params["enc"]
    (dw0, db0), (dw1, db1) = params["dec"]
    he = jnp.maximum(x @ ew0 + eb0, 0.0)
    lc = _softplus(he @ ew1 + eb1)
    hd = jnp.maximum(lc @ dw0 + db0, 0.0)
    env_int = jnp.abs(hd @ dw1 + db1)
    return lgt_sgs, env_int


if __name__ == "__main__":
    key = jax.random.PRNGKey(0)
    kp, kx, kh = jax.random.split(key, 3)
    params = init_params(kp)
    packed = pack_params(params)

    N = 200
    points = jax.random.normal(kx, (N, 3), jnp.float32)
    hdr_shift = jax.random.normal(kh, (N, 1), jnp.float32)

    lgt_sgs, env_int = indirect_illum_forward(points, hdr_shift, packed)
    jax.block_until_ready((lgt_sgs, env_int))

    sgs_ref, env_ref = reference_forward(points, hdr_shift, params)
    assert lgt_sgs.shape == (N, NUM_LGT_SGS, 7)
    assert env_int.shape == (N, 3)
    # bf16 matmuls (f32 accumulation) -> loosen tolerance vs. f32 reference
    np.testing.assert_allclose(np.asarray(lgt_sgs), np.asarray(sgs_ref),
                               rtol=5e-2, atol=5e-2)
    np.testing.assert_allclose(np.asarray(env_int), np.asarray(env_ref),
                               rtol=5e-2, atol=5e-2)
    print("KERNEL_OK")
</pallas_src>

<mosaic_0001>
module attributes {stable_mosaic.version = 11 : i64} {
  func.func @_indirect_illum_kernel(%arg0: i32, %arg1: memref<128x4xf32, #tpu.memory_space<vmem>>, %arg2: memref<4x256xbf16, #tpu.memory_space<vmem>>, %arg3: memref<1x256xf32, #tpu.memory_space<vmem>>, %arg4: memref<128x128xbf16, #tpu.memory_space<vmem>>, %arg5: memref<1x128xf32, #tpu.memory_space<vmem>>, %arg6: memref<128x128xbf16, #tpu.memory_space<vmem>>, %arg7: memref<1x128xf32, #tpu.memory_space<vmem>>, %arg8: memref<128x128xbf16, #tpu.memory_space<vmem>>, %arg9: memref<1x128xf32, #tpu.memory_space<vmem>>, %arg10: memref<128x144xbf16, #tpu.memory_space<vmem>>, %arg11: memref<1x144xf32, #tpu.memory_space<vmem>>, %arg12: memref<128x32xbf16, #tpu.memory_space<vmem>>, %arg13: memref<1x32xf32, #tpu.memory_space<vmem>>, %arg14: memref<32x128xbf16, #tpu.memory_space<vmem>>, %arg15: memref<1x128xf32, #tpu.memory_space<vmem>>, %arg16: memref<128x3xbf16, #tpu.memory_space<vmem>>, %arg17: memref<1x3xf32, #tpu.memory_space<vmem>>, %arg18: memref<128x256xf32, #tpu.memory_space<vmem>>) attributes {dimension_semantics = [#tpu.dimension_semantics<parallel>], iteration_bounds = array<i64: 2>, scalar_prefetch = 0 : i64, scratch_operands = 0 : i64, tpu.core_type = #tpu.core_type<tc>, window_params = [{transform_indices = @transform_0, window_bounds = array<i64: 128, 4>}, {pipeline_mode = #tpu.pipeline_mode<synchronous>, transform_indices = @transform_1, window_bounds = array<i64: 4, 256>}, {pipeline_mode = #tpu.pipeline_mode<synchronous>, transform_indices = @transform_2, window_bounds = array<i64: 1, 256>}, {pipeline_mode = #tpu.pipeline_mode<synchronous>, transform_indices = @transform_3, window_bounds = array<i64: 128, 128>}, {pipeline_mode = #tpu.pipeline_mode<synchronous>, transform_indices = @transform_4, window_bounds = array<i64: 1, 128>}, {pipeline_mode = #tpu.pipeline_mode<synchronous>, transform_indices = @transform_5, window_bounds = array<i64: 128, 128>}, {pipeline_mode = #tpu.pipeline_mode<synchronous>, transform_indices = @transform_6, window_bounds = array<i64: 1, 128>}, {pipeline_mode = #tpu.pipeline_mode<synchronous>, transform_indices = @transform_7, window_bounds = array<i64: 128, 128>}, {pipeline_mode = #tpu.pipeline_mode<synchronous>, transform_indices = @transform_8, window_bounds = array<i64: 1, 128>}, {pipeline_mode = #tpu.pipeline_mode<synchronous>, transform_indices = @transform_9, window_bounds = array<i64: 128, 144>}, {pipeline_mode = #tpu.pipeline_mode<synchronous>, transform_indices = @transform_10, window_bounds = array<i64: 1, 144>}, {pipeline_mode = #tpu.pipeline_mode<synchronous>, transform_indices = @transform_11, window_bounds = array<i64: 128, 32>}, {pipeline_mode = #tpu.pipeline_mode<synchronous>, transform_indices = @transform_12, window_bounds = array<i64: 1, 32>}, {pipeline_mode = #tpu.pipeline_mode<synchronous>, transform_indices = @transform_13, window_bounds = array<i64: 32, 128>}, {pipeline_mode = #tpu.pipeline_mode<synchronous>, transform_indices = @transform_14, window_bounds = array<i64: 1, 128>}, {pipeline_mode = #tpu.pipeline_mode<synchronous>, transform_indices = @transform_15, window_bounds = array<i64: 128, 3>}, {pipeline_mode = #tpu.pipeline_mode<synchronous>, transform_indices = @transform_16, window_bounds = array<i64: 1, 3>}, {transform_indices = @transform_17, window_bounds = array<i64: 128, 256>}]} {
    %c0 = arith.constant 0 : index
    %c0_0 = arith.constant 0 : index
    %0 = vector.load %arg1[%c0, %c0_0] : memref<128x4xf32, #tpu.memory_space<vmem>>, vector<128x4xf32>
    %1 = arith.truncf %0 : vector<128x4xf32> to vector<128x4xbf16>
    %c0_1 = arith.constant 0 : index
    %c0_2 = arith.constant 0 : index
    %2 = vector.load %arg2[%c0_1, %c0_2] : memref<4x256xbf16, #tpu.memory_space<vmem>>, vector<4x256xbf16>
    %cst = arith.constant dense<0.000000e+00> : vector<128x256xf32>
    %3 = tpu.matmul %1, %2, %cst {dimension_numbers = #tpu.dot_dimension_numbers<[1], [0], [0], [1], [0, 0, 1, 1], [], []>} : vector<128x4xbf16>, vector<4x256xbf16>, vector<128x256xf32> -> vector<128x256xf32>
    %c0_3 = arith.constant 0 : index
    %c0_4 = arith.constant 0 : index
    %4 = vector.load %arg3[%c0_3, %c0_4] : memref<1x256xf32, #tpu.memory_space<vmem>>, vector<1x256xf32>
    %5 = vector.broadcast %4 : vector<1x256xf32> to vector<128x256xf32>
    %6 = arith.addf %3, %5 : vector<128x256xf32>
    %cst_5 = arith.constant 0.000000e+00 : f32
    %7 = vector.broadcast %cst_5 : f32 to vector<128x256xf32>
    %8 = arith.maximumf %6, %7 : vector<128x256xf32>
    %9 = vector.extract_strided_slice %8 {offsets = [0, 0], sizes = [128, 128], strides = [1, 1]} : vector<128x256xf32> to vector<128x128xf32>
    %10 = arith.truncf %9 : vector<128x128xf32> to vector<128x128xbf16>
    %11 = vector.extract_strided_slice %8 {offsets = [0, 128], sizes = [128, 128], strides = [1, 1]} : vector<128x256xf32> to vector<128x128xf32>
    %12 = arith.truncf %11 : vector<128x128xf32> to vector<128x128xbf16>
    %c0_6 = arith.constant 0 : index
    %c0_7 = arith.constant 0 : index
    %13 = vector.load %arg4[%c0_6, %c0_7] : memref<128x128xbf16, #tpu.memory_space<vmem>>, vector<128x128xbf16>
    %cst_8 = arith.constant dense<0.000000e+00> : vector<128x128xf32>
    %14 = tpu.matmul %10, %13, %cst_8 {dimension_numbers = #tpu.dot_dimension_numbers<[1], [0], [0], [1], [0, 0, 1, 1], [], []>} : vector<128x128xbf16>, vector<128x128xbf16>, vector<128x128xf32> -> vector<128x128xf32>
    %c0_9 = arith.constant 0 : index
    %c0_10 = arith.constant 0 : index
    %15 = vector.load %arg5[%c0_9, %c0_10] : memref<1x128xf32, #tpu.memory_space<vmem>>, vector<1x128xf32>
    %16 = vector.broadcast %15 : vector<1x128xf32> to vector<128x128xf32>
    %17 = arith.addf %14, %16 : vector<128x128xf32>
    %cst_11 = arith.constant 0.000000e+00 : f32
    %18 = vector.broadcast %cst_11 : f32 to vector<128x128xf32>
    %19 = arith.maximumf %17, %18 : vector<128x128xf32>
    %20 = arith.truncf %19 : vector<128x128xf32> to vector<128x128xbf16>
    %c0_12 = arith.constant 0 : index
    %c0_13 = arith.constant 0 : index
    %21 = vector.load %arg6[%c0_12, %c0_13] : memref<128x128xbf16, #tpu.memory_space<vmem>>, vector<128x128xbf16>
    %cst_14 = arith.constant dense<0.000000e+00> : vector<128x128xf32>
    %22 = tpu.matmul %20, %21, %cst_14 {dimension_numbers = #tpu.dot_dimension_numbers<[1], [0], [0], [1], [0, 0, 1, 1], [], []>} : vector<128x128xbf16>, vector<128x128xbf16>, vector<128x128xf32> -> vector<128x128xf32>
    %c0_15 = arith.constant 0 : index
    %c0_16 = arith.constant 0 : index
    %23 = vector.load %arg7[%c0_15, %c0_16] : memref<1x128xf32, #tpu.memory_space<vmem>>, vector<1x128xf32>
    %24 = vector.broadcast %23 : vector<1x128xf32> to vector<128x128xf32>
    %25 = arith.addf %22, %24 : vector<128x128xf32>
    %cst_17 = arith.constant 0.000000e+00 : f32
    %26 = vector.broadcast %cst_17 : f32 to vector<128x128xf32>
    %27 = arith.maximumf %25, %26 : vector<128x128xf32>
    %28 = arith.truncf %27 : vector<128x128xf32> to vector<128x128xbf16>
    %c0_18 = arith.constant 0 : index
    %c0_19 = arith.constant 0 : index
    %29 = vector.load %arg8[%c0_18, %c0_19] : memref<128x128xbf16, #tpu.memory_space<vmem>>, vector<128x128xbf16>
    %cst_20 = arith.constant dense<0.000000e+00> : vector<128x128xf32>
    %30 = tpu.matmul %28, %29, %cst_20 {dimension_numbers = #tpu.dot_dimension_numbers<[1], [0], [0], [1], [0, 0, 1, 1], [], []>} : vector<128x128xbf16>, vector<128x128xbf16>, vector<128x128xf32> -> vector<128x128xf32>
    %c0_21 = arith.constant 0 : index
    %c0_22 = arith.constant 0 : index
    %31 = vector.load %arg9[%c0_21, %c0_22] : memref<1x128xf32, #tpu.memory_space<vmem>>, vector<1x128xf32>
    %32 = vector.broadcast %31 : vector<1x128xf32> to vector<128x128xf32>
    %33 = arith.addf %30, %32 : vector<128x128xf32>
    %cst_23 = arith.constant 0.000000e+00 : f32
    %34 = vector.broadcast %cst_23 : f32 to vector<128x128xf32>
    %35 = arith.maximumf %33, %34 : vector<128x128xf32>
    %36 = arith.truncf %35 : vector<128x128xf32> to vector<128x128xbf16>
    %c0_24 = arith.constant 0 : index
    %c0_25 = arith.constant 0 : index
    %37 = vector.load %arg10[%c0_24, %c0_25] : memref<128x144xbf16, #tpu.memory_space<vmem>>, vector<128x144xbf16>
    %cst_26 = arith.constant dense<0.000000e+00> : vector<128x144xf32>
    %38 = tpu.matmul %36, %37, %cst_26 {dimension_numbers = #tpu.dot_dimension_numbers<[1], [0], [0], [1], [0, 0, 1, 1], [], []>} : vector<128x128xbf16>, vector<128x144xbf16>, vector<128x144xf32> -> vector<128x144xf32>
    %c0_27 = arith.constant 0 : index
    %c0_28 = arith.constant 0 : index
    %39 = vector.load %arg11[%c0_27, %c0_28] : memref<1x144xf32, #tpu.memory_space<vmem>>, vector<1x144xf32>
    %40 = vector.broadcast %39 : vector<1x144xf32> to vector<128x144xf32>
    %41 = arith.addf %38, %40 : vector<128x144xf32>
    %42 = vector.extract_strided_slice %41 {offsets = [0, 0], sizes = [128, 24], strides = [1, 1]} : vector<128x144xf32> to vector<128x24xf32>
    %cst_29 = arith.constant 5.000000e-01 : f32
    %43 = vector.broadcast %cst_29 : f32 to vector<128x24xf32>
    %44 = arith.mulf %43, %42 : vector<128x24xf32>
    %45 = math.tanh %44 : vector<128x24xf32>
    %cst_30 = arith.constant 1.000000e+00 : f32
    %46 = vector.broadcast %cst_30 : f32 to vector<128x24xf32>
    %47 = arith.addf %45, %46 : vector<128x24xf32>
    %cst_31 = arith.constant 5.000000e-01 : f32
    %48 = vector.broadcast %cst_31 : f32 to vector<128x24xf32>
    %49 = arith.mulf %48, %47 : vector<128x24xf32>
    %cst_32 = arith.constant 6.28318548 : f32
    %50 = vector.broadcast %cst_32 : f32 to vector<128x24xf32>
    %51 = arith.mulf %49, %50 : vector<128x24xf32>
    %52 = vector.extract_strided_slice %41 {offsets = [0, 24], sizes = [128, 24], strides = [1, 1]} : vector<128x144xf32> to vector<128x24xf32>
    %cst_33 = arith.constant 5.000000e-01 : f32
    %53 = vector.broadcast %cst_33 : f32 to vector<128x24xf32>
    %54 = arith.mulf %53, %52 : vector<128x24xf32>
    %55 = math.tanh %54 : vector<128x24xf32>
    %cst_34 = arith.constant 1.000000e+00 : f32
    %56 = vector.broadcast %cst_34 : f32 to vector<128x24xf32>
    %57 = arith.addf %55, %56 : vector<128x24xf32>
    %cst_35 = arith.constant 5.000000e-01 : f32
    %58 = vector.broadcast %cst_35 : f32 to vector<128x24xf32>
    %59 = arith.mulf %58, %57 : vector<128x24xf32>
    %cst_36 = arith.constant 3.14159274 : f32
    %60 = vector.broadcast %cst_36 : f32 to vector<128x24xf32>
    %61 = arith.mulf %59, %60 : vector<128x24xf32>
    %62 = math.sin %61 : vector<128x24xf32>
    %63 = vector.extract_strided_slice %41 {offsets = [0, 48], sizes = [128, 24], strides = [1, 1]} : vector<128x144xf32> to vector<128x24xf32>
    %cst_37 = arith.constant 5.000000e-01 : f32
    %64 = vector.broadcast %cst_37 : f32 to vector<128x24xf32>
    %65 = arith.mulf %64, %63 : vector<128x24xf32>
    %66 = math.tanh %65 : vector<128x24xf32>
    %cst_38 = arith.constant 1.000000e+00 : f32
    %67 = vector.broadcast %cst_38 : f32 to vector<128x24xf32>
    %68 = arith.addf %66, %67 : vector<128x24xf32>
    %cst_39 = arith.constant 5.000000e-01 : f32
    %69 = vector.broadcast %cst_39 : f32 to vector<128x24xf32>
    %70 = arith.mulf %69, %68 : vector<128x24xf32>
    %cst_40 = arith.constant 3.000000e+01 : f32
    %71 = vector.broadcast %cst_40 : f32 to vector<128x24xf32>
    %72 = arith.mulf %70, %71 : vector<128x24xf32>
    %cst_41 = arith.constant 1.000000e-01 : f32
    %73 = vector.broadcast %cst_41 : f32 to vector<128x24xf32>
    %74 = arith.addf %72, %73 : vector<128x24xf32>
    %75 = vector.extract_strided_slice %41 {offsets = [0, 72], sizes = [128, 72], strides = [1, 1]} : vector<128x144xf32> to vector<128x72xf32>
    %cst_42 = arith.constant 0.000000e+00 : f32
    %76 = vector.broadcast %cst_42 : f32 to vector<128x72xf32>
    %77 = arith.maximumf %75, %76 : vector<128x72xf32>
    %c0_43 = arith.constant 0 : index
    %c0_44 = arith.constant 0 : index
    %78 = vector.load %arg12[%c0_43, %c0_44] : memref<128x32xbf16, #tpu.memory_space<vmem>>, vector<128x32xbf16>
    %cst_45 = arith.constant dense<0.000000e+00> : vector<128x32xf32>
    %79 = tpu.matmul %12, %78, %cst_45 {dimension_numbers = #tpu.dot_dimension_numbers<[1], [0], [0], [1], [0, 0, 1, 1], [], []>} : vector<128x128xbf16>, vector<128x32xbf16>, vector<128x32xf32> -> vector<128x32xf32>
    %c0_46 = arith.constant 0 : index
    %c0_47 = arith.constant 0 : index
    %80 = vector.load %arg13[%c0_46, %c0_47] : memref<1x32xf32, #tpu.memory_space<vmem>>, vector<1x32xf32>
    %81 = vector.broadcast %80 : vector<1x32xf32> to vector<128x32xf32>
    %82 = arith.addf %79, %81 : vector<128x32xf32>
    %cst_48 = arith.constant 2.000000e+01 : f32
    %83 = vector.broadcast %cst_48 : f32 to vector<128x32xf32>
    %84 = arith.cmpf ogt, %82, %83 : vector<128x32xf32>
    %cst_49 = arith.constant 2.000000e+01 : f32
    %85 = vector.broadcast %cst_49 : f32 to vector<128x32xf32>
    %86 = arith.minimumf %82, %85 : vector<128x32xf32>
    %87 = math.exp %86 : vector<128x32xf32>
    %88 = math.log1p %87 : vector<128x32xf32>
    %89 = arith.select %84, %82, %88 : vector<128x32xi1>, vector<128x32xf32>
    %90 = arith.truncf %89 : vector<128x32xf32> to vector<128x32xbf16>
    %c0_50 = arith.constant 0 : index
    %c0_51 = arith.constant 0 : index
    %91 = vector.load %arg14[%c0_50, %c0_51] : memref<32x128xbf16, #tpu.memory_space<vmem>>, vector<32x128xbf16>
    %cst_52 = arith.constant dense<0.000000e+00> : vector<128x128xf32>
    %92 = tpu.matmul %90, %91, %cst_52 {dimension_numbers = #tpu.dot_dimension_numbers<[1], [0], [0], [1], [0, 0, 1, 1], [], []>} : vector<128x32xbf16>, vector<32x128xbf16>, vector<128x128xf32> -> vector<128x128xf32>
    %c0_53 = arith.constant 0 : index
    %c0_54 = arith.constant 0 : index
    %93 = vector.load %arg15[%c0_53, %c0_54] : memref<1x128xf32, #tpu.memory_space<vmem>>, vector<1x128xf32>
    %94 = vector.broadcast %93 : vector<1x128xf32> to vector<128x128xf32>
    %95 = arith.addf %92, %94 : vector<128x128xf32>
    %cst_55 = arith.constant 0.000000e+00 : f32
    %96 = vector.broadcast %cst_55 : f32 to vector<128x128xf32>
    %97 = arith.maximumf %95, %96 : vector<128x128xf32>
    %98 = arith.truncf %97 : vector<128x128xf32> to vector<128x128xbf16>
    %c0_56 = arith.constant 0 : index
    %c0_57 = arith.constant 0 : index
    %99 = vector.load %arg16[%c0_56, %c0_57] : memref<128x3xbf16, #tpu.memory_space<vmem>>, vector<128x3xbf16>
    %cst_58 = arith.constant dense<0.000000e+00> : vector<128x3xf32>
    %100 = tpu.matmul %98, %99, %cst_58 {dimension_numbers = #tpu.dot_dimension_numbers<[1], [0], [0], [1], [0, 0, 1, 1], [], []>} : vector<128x128xbf16>, vector<128x3xbf16>, vector<128x3xf32> -> vector<128x3xf32>
    %c0_59 = arith.constant 0 : index
    %c0_60 = arith.constant 0 : index
    %101 = vector.load %arg17[%c0_59, %c0_60] : memref<1x3xf32, #tpu.memory_space<vmem>>, vector<1x3xf32>
    %102 = vector.broadcast %101 : vector<1x3xf32> to vector<128x3xf32>
    %103 = arith.addf %100, %102 : vector<128x3xf32>
    %104 = math.absf %103 : vector<128x3xf32>
    %cst_61 = arith.constant 0.000000e+00 : f32
    %105 = vector.broadcast %cst_61 : f32 to vector<128x85xf32>
    %106 = math.cos %51 : vector<128x24xf32>
    %107 = arith.mulf %106, %62 : vector<128x24xf32>
    %108 = math.sin %51 : vector<128x24xf32>
    %109 = arith.mulf %108, %62 : vector<128x24xf32>
    %110 = math.cos %61 : vector<128x24xf32>
    %111 = tpu.concatenate %107, %109, %110, %74, %77, %104, %105 in 1 : vector<128x24xf32>, vector<128x24xf32>, vector<128x24xf32>, vector<128x24xf32>, vector<128x72xf32>, vector<128x3xf32>, vector<128x85xf32> -> vector<128x256xf32>
    %c0_62 = arith.constant 0 : index
    %c0_63 = arith.constant 0 : index
    %112 = vector.load %arg18[%c0_62, %c0_63] : memref<128x256xf32, #tpu.memory_space<vmem>>, vector<128x256xf32>
    tpu.vector_store %arg18[%c0_62, %c0_63], %111 {strides = array<i32>} : memref<128x256xf32, #tpu.memory_space<vmem>>, vector<128x256xf32>,
    return
  }
  func.func @transform_0(%arg0: i32) -> (i32, i32) {
    %c0_i32 = arith.constant 0 : i32
    %c0_i32_0 = arith.constant 0 : i32
    return %arg0, %c0_i32 : i32, i32
  }
  func.func @transform_1(%arg0: i32) -> (i32, i32) {
    %c0_i32 = arith.constant 0 : i32
    %c0_i32_0 = arith.constant 0 : i32
    %c0_i32_1 = arith.constant 0 : i32
    return %c0_i32, %c0_i32_0 : i32, i32
  }
  func.func @transform_2(%arg0: i32) -> (i32, i32) {
    %c0_i32 = arith.constant 0 : i32
    %c0_i32_0 = arith.constant 0 : i32
    %c0_i32_1 = arith.constant 0 : i32
    return %c0_i32, %c0_i32_0 : i32, i32
  }
  func.func @transform_3(%arg0: i32) -> (i32, i32) {
    %c0_i32 = arith.constant 0 : i32
    %c0_i32_0 = arith.constant 0 : i32
    %c0_i32_1 = arith.constant 0 : i32
    return %c0_i32, %c0_i32_0 : i32, i32
  }
  func.func @transform_4(%arg0: i32) -> (i32, i32) {
    %c0_i32 = arith.constant 0 : i32
    %c0_i32_0 = arith.constant 0 : i32
    %c0_i32_1 = arith.constant 0 : i32
    return %c0_i32, %c0_i32_0 : i32, i32
  }
  func.func @transform_5(%arg0: i32) -> (i32, i32) {
    %c0_i32 = arith.constant 0 : i32
    %c0_i32_0 = arith.constant 0 : i32
    %c0_i32_1 = arith.constant 0 : i32
    return %c0_i32, %c0_i32_0 : i32, i32
  }
  func.func @transform_6(%arg0: i32) -> (i32, i32) {
    %c0_i32 = arith.constant 0 : i32
    %c0_i32_0 = arith.constant 0 : i32
    %c0_i32_1 = arith.constant 0 : i32
    return %c0_i32, %c0_i32_0 : i32, i32
  }
  func.func @transform_7(%arg0: i32) -> (i32, i32) {
    %c0_i32 = arith.constant 0 : i32
    %c0_i32_0 = arith.constant 0 : i32
    %c0_i32_1 = arith.constant 0 : i32
    return %c0_i32, %c0_i32_0 : i32, i32
  }
  func.func @transform_8(%arg0: i32) -> (i32, i32) {
    %c0_i32 = arith.constant 0 : i32
    %c0_i32_0 = arith.constant 0 : i32
    %c0_i32_1 = arith.constant 0 : i32
    return %c0_i32, %c0_i32_0 : i32, i32
  }
  func.func @transform_9(%arg0: i32) -> (i32, i32) {
    %c0_i32 = arith.constant 0 : i32
    %c0_i32_0 = arith.constant 0 : i32
    %c0_i32_1 = arith.constant 0 : i32
    return %c0_i32, %c0_i32_0 : i32, i32
  }
  func.func @transform_10(%arg0: i32) -> (i32, i32) {
    %c0_i32 = arith.constant 0 : i32
    %c0_i32_0 = arith.constant 0 : i32
    %c0_i32_1 = arith.constant 0 : i32
    return %c0_i32, %c0_i32_0 : i32, i32
  }
  func.func @transform_11(%arg0: i32) -> (i32, i32) {
    %c0_i32 = arith.constant 0 : i32
    %c0_i32_0 = arith.constant 0 : i32
    %c0_i32_1 = arith.constant 0 : i32
    return %c0_i32, %c0_i32_0 : i32, i32
  }
  func.func @transform_12(%arg0: i32) -> (i32, i32) {
    %c0_i32 = arith.constant 0 : i32
    %c0_i32_0 = arith.constant 0 : i32
    %c0_i32_1 = arith.constant 0 : i32
    return %c0_i32, %c0_i32_0 : i32, i32
  }
  func.func @transform_13(%arg0: i32) -> (i32, i32) {
    %c0_i32 = arith.constant 0 : i32
    %c0_i32_0 = arith.constant 0 : i32
    %c0_i32_1 = arith.constant 0 : i32
    return %c0_i32, %c0_i32_0 : i32, i32
  }
  func.func @transform_14(%arg0: i32) -> (i32, i32) {
    %c0_i32 = arith.constant 0 : i32
    %c0_i32_0 = arith.constant 0 : i32
    %c0_i32_1 = arith.constant 0 : i32
    return %c0_i32, %c0_i32_0 : i32, i32
  }
  func.func @transform_15(%arg0: i32) -> (i32, i32) {
    %c0_i32 = arith.constant 0 : i32
    %c0_i32_0 = arith.constant 0 : i32
    %c0_i32_1 = arith.constant 0 : i32
    return %c0_i32, %c0_i32_0 : i32, i32
  }
  func.func @transform_16(%arg0: i32) -> (i32, i32) {
    %c0_i32 = arith.constant 0 : i32
    %c0_i32_0 = arith.constant 0 : i32
    %c0_i32_1 = arith.constant 0 : i32
    return %c0_i32, %c0_i32_0 : i32, i32
  }
  func.func @transform_17(%arg0: i32) -> (i32, i32) {
    %c0_i32 = arith.constant 0 : i32
    %c0_i32_0 = arith.constant 0 : i32
    return %arg0, %c0_i32 : i32, i32
  }
}

</mosaic_0001>

<llo_original>
// kernel: indirect_illum_forward.1
$region0: #{indirect_illum_forward.1}
  #allocation0 [shape = 'u32[]', space=smem, size = 0x4, offset = 0x4, fixed_abs, tag = 'smem constant byte address 0x4 - core index']
  #allocation1 [shape = 'u32[144,128]{1,0:T(1,128)}', space=vmem, size = 0x12000, scoped, tag = 'internal scratch']
  %s0 = inlined_call_operand.hbm [shape: f32[256,4], index: 0, kind: input, shape index: {}]
  %s1 = inlined_call_operand.hbm [shape: bf16[4,256], index: 1, kind: input, shape index: {}]
  %s2 = inlined_call_operand.hbm [shape: f32[1,256], index: 2, kind: input, shape index: {}]
  %s3 = inlined_call_operand.hbm [shape: bf16[128,128], index: 3, kind: input, shape index: {}]
  %s4 = inlined_call_operand.hbm [shape: f32[1,128], index: 4, kind: input, shape index: {}]
  %s5 = inlined_call_operand.hbm [shape: bf16[128,128], index: 5, kind: input, shape index: {}]
  %s6 = inlined_call_operand.hbm [shape: f32[1,128], index: 6, kind: input, shape index: {}]
  %s7 = inlined_call_operand.hbm [shape: bf16[128,128], index: 7, kind: input, shape index: {}]
  %s8 = inlined_call_operand.hbm [shape: f32[1,128], index: 8, kind: input, shape index: {}]
  %s9 = inlined_call_operand.hbm [shape: bf16[128,144], index: 9, kind: input, shape index: {}]
  %s10 = inlined_call_operand.hbm [shape: f32[1,144], index: 10, kind: input, shape index: {}]
  %s11 = inlined_call_operand.hbm [shape: bf16[128,32], index: 11, kind: input, shape index: {}]
  %s12 = inlined_call_operand.hbm [shape: f32[1,32], index: 12, kind: input, shape index: {}]
  %s13 = inlined_call_operand.hbm [shape: bf16[32,128], index: 13, kind: input, shape index: {}]
  %s14 = inlined_call_operand.hbm [shape: f32[1,128], index: 14, kind: input, shape index: {}]
  %s15 = inlined_call_operand.hbm [shape: bf16[128,3], index: 15, kind: input, shape index: {}]
  %s16 = inlined_call_operand.hbm [shape: f32[1,3], index: 16, kind: input, shape index: {}]
  %s17 = inlined_call_operand.hbm [shape: f32[256,256], index: 17, kind: output, shape index: {}]
  %s18 = sld [smem:[#allocation0]]
  $region169: #{indirect_illum_forward.1} parent=0
    _
  %s20 = ssub.s32 1, %s18
  %s21 = scalar_select 0, %s20, %s18
  $region1: #{indirect_illum_forward.1} parent=0
    #allocation2 [shape = 'u8[131072]{0}', space=vmem, size = 0x20000, scoped, tag = 'input window, operand 0']
    #allocation3 [shape = 's32[2]{0}', space=sflag, size = 0x8, scoped, tag = 'scoped memory for indirect_illum_forward.1']
    #allocation4 [shape = 's32[2]{0}', space=sflag, size = 0x8, scoped, tag = 'scoped memory for indirect_illum_forward.1']
    #allocation5 [shape = 'u8[2048]{0}', space=vmem, size = 0x800, scoped, tag = 'input window, operand 1, single buffered']
    #allocation6 [shape = 's32[1]{0}', space=sflag, size = 0x4, scoped, tag = 'scoped memory for indirect_illum_forward.1']
    #allocation7 [shape = 'u8[1024]{0}', space=vmem, size = 0x400, scoped, tag = 'input window, operand 2, single buffered']
    #allocation8 [shape = 'u8[32768]{0}', space=vmem, size = 0x8000, scoped, tag = 'input window, operand 3, single buffered']
    #allocation9 [shape = 's32[1]{0}', space=sflag, size = 0x4, scoped, tag = 'scoped memory for indirect_illum_forward.1']
    #allocation10 [shape = 'u8[512]{0}', space=vmem, size = 0x400, scoped, tag = 'input window, operand 4, single buffered']
    #allocation11 [shape = 'u8[32768]{0}', space=vmem, size = 0x8000, scoped, tag = 'input window, operand 5, single buffered']
    #allocation12 [shape = 's32[1]{0}', space=sflag, size = 0x4, scoped, tag = 'scoped memory for indirect_illum_forward.1']
    #allocation13 [shape = 'u8[512]{0}', space=vmem, size = 0x400, scoped, tag = 'input window, operand 6, single buffered']
    #allocation14 [shape = 'u8[32768]{0}', space=vmem, size = 0x8000, scoped, tag = 'input window, operand 7, single buffered']
    #allocation15 [shape = 's32[1]{0}', space=sflag, size = 0x4, scoped, tag = 'scoped memory for indirect_illum_forward.1']
    #allocation16 [shape = 'u8[512]{0}', space=vmem, size = 0x400, scoped, tag = 'input window, operand 8, single buffered']
    #allocation17 [shape = 'u8[65536]{0}', space=vmem, size = 0x10000, scoped, tag = 'input window, operand 9, single buffered']
    #allocation18 [shape = 's32[1]{0}', space=sflag, size = 0x4, scoped, tag = 'scoped memory for indirect_illum_forward.1']
    #allocation19 [shape = 'u8[1024]{0}', space=vmem, size = 0x400, scoped, tag = 'input window, operand 10, single buffered']
    #allocation20 [shape = 'u8[32768]{0}', space=vmem, size = 0x8000, scoped, tag = 'input window, operand 11, single buffered']
    #allocation21 [shape = 's32[1]{0}', space=sflag, size = 0x4, scoped, tag = 'scoped memory for indirect_illum_forward.1']
    #allocation22 [shape = 'u8[512]{0}', space=vmem, size = 0x400, scoped, tag = 'input window, operand 12, single buffered']
    #allocation23 [shape = 'u8[8192]{0}', space=vmem, size = 0x2000, scoped, tag = 'input window, operand 13, single buffered']
    #allocation24 [shape = 's32[1]{0}', space=sflag, size = 0x4, scoped, tag = 'scoped memory for indirect_illum_forward.1']
    #allocation25 [shape = 'u8[512]{0}', space=vmem, size = 0x400, scoped, tag = 'input window, operand 14, single buffered']
    #allocation26 [shape = 'u8[32768]{0}', space=vmem, size = 0x8000, scoped, tag = 'input window, operand 15, single buffered']
    #allocation27 [shape = 's32[1]{0}', space=sflag, size = 0x4, scoped, tag = 'scoped memory for indirect_illum_forward.1']
    #allocation28 [shape = 'u8[512]{0}', space=vmem, size = 0x400, scoped, tag = 'input window, operand 16, single buffered']
    #allocation29 [shape = 'u8[262144]{0}', space=vmem, size = 0x40000, scoped, tag = 'output window, operand 0']
    %22 = vsyncpa [#allocation3], 0
    %s23 = scalar_lea.sflag [#allocation3], 1
    %24 = vsyncpa %s23, 0
    %25 = vsyncpa [#allocation6], 0
    %26 = vsyncpa [#allocation9], 0
    %27 = vsyncpa [#allocation12], 0
    %28 = vsyncpa [#allocation15], 0
    %29 = vsyncpa [#allocation18], 0
    %30 = vsyncpa [#allocation21], 0
    %31 = vsyncpa [#allocation24], 0
    %32 = vsyncpa [#allocation27], 0
    %33 = vsyncpa [#allocation4], 0
    %s34 = scalar_lea.sflag [#allocation4], 1
    %35 = vsyncpa %s34, 0
    loop: start=0, step=1, limit=4
    $region2: #{indirect_illum_forward.1} parent=1 // loop_pre_header
      _
    $region3: #{indirect_illum_forward.1} parent=1 // loop_header
      %s37 = sphi 0, %s41
      %p38 = scmp.ge.s32.totalorder %s37, 4
      %s47 = sphi 0, %s49
      %s50 = sphi 0, %s47
      %s51 = sphi 0, %s50
      %s67 = sphi 0, %s51
      %s71 = sphi 0, %s71
      %s73 = sphi 0, %s71
      %s74 = sphi 0, %s73
      %s88 = sphi 0, %s74
      %s92 = sphi 0, %s92
      %s94 = sphi 0, %s92
      %s95 = sphi 0, %s94
      %s109 = sphi 0, %s95
      %s113 = sphi 0, %s113
      %s115 = sphi 0, %s113
      %s116 = sphi 0, %s115
      %s130 = sphi 0, %s116
      %s134 = sphi 0, %s134
      %s136 = sphi 0, %s134
      %s137 = sphi 0, %s136
      %s151 = sphi 0, %s137
      %s155 = sphi 0, %s155
      %s157 = sphi 0, %s155
      %s158 = sphi 0, %s157
      %s172 = sphi 0, %s158
      %s176 = sphi 0, %s176
      %s178 = sphi 0, %s176
      %s179 = sphi 0, %s178
      %s193 = sphi 0, %s179
      %s197 = sphi 0, %s197
      %s199 = sphi 0, %s197
      %s200 = sphi 0, %s199
      %s214 = sphi 0, %s200
      %s218 = sphi 0, %s218
      %s220 = sphi 0, %s218
      %s221 = sphi 0, %s220
      %s235 = sphi 0, %s221
      %s239 = sphi 0, %s239
      %s241 = sphi 0, %s239
      %s242 = sphi 0, %s241
      %s256 = sphi 0, %s242
      %s260 = sphi 0, %s260
      %s262 = sphi 0, %s260
      %s263 = sphi 0, %s262
      %s277 = sphi 0, %s263
      %s281 = sphi 0, %s281
      %s283 = sphi 0, %s281
      %s284 = sphi 0, %s283
      %s298 = sphi 0, %s284
      %s302 = sphi 0, %s302
      %s304 = sphi 0, %s302
      %s305 = sphi 0, %s304
      %s319 = sphi 0, %s305
      %s323 = sphi 0, %s323
      %s325 = sphi 0, %s323
      %s326 = sphi 0, %s325
      %s340 = sphi 0, %s326
      %s344 = sphi 0, %s344
      %s346 = sphi 0, %s344
      %s347 = sphi 0, %s346
      %s361 = sphi 0, %s347
      %s365 = sphi 0, %s365
      %s367 = sphi 0, %s365
      %s368 = sphi 0, %s367
      %s382 = sphi 0, %s368
      %s386 = sphi 0, %s386
      %s388 = sphi 0, %s386
      %s389 = sphi 0, %s388
      %s403 = sphi 0, %s389
      %s409 = sphi 0, %s411
      %s412 = sphi 0, %s409
      %s413 = sphi 0, %s412
      %s429 = sphi 0, %s413
    $region4: #{indirect_illum_forward.1} parent=1 // loop_header_branch
      %40 = sbr.rel (%p38) target = $region8
    $region5: #{indirect_illum_forward.1} parent=1 // loop_body
      %s42 = ssub.s32 %s37, 1
      %s43 = ssub.s32 %s37, 2
      %s44 = sadd.s32 %s37, 1
      %s45 = ssub.s32 %s37, %s44
      %p46 = scmp.eq.s32.totalorder %s45, 0
      %s48 = sadd.s32 %s47, 1
      %s49 = scalar_select %p46, %s47, %s48
      %p52 = pneg %p46
      %p53 = scmp.eq.s32.totalorder %s37, 1
      %p54 = por %p52, %p53
      %p55 = scmp.ne.s32.totalorder %s47, %s50
      %p56 = scmp.eq.s32.totalorder %s37, 0
      %p57 = por %p55, %p56
      %p58 = scmp.ne.s32.totalorder %s47, %s50
      %p59 = scmp.eq.s32.totalorder %s42, 1
      %p60 = por %p58, %p59
      %p61 = scmp.ne.s32.totalorder %s50, %s51
      %p62 = scmp.eq.s32.totalorder %s42, 0
      %p63 = por %p61, %p62
      %p64 = scmp.ne.s32.totalorder %s50, %s51
      %p65 = scmp.eq.s32.totalorder %s43, 1
      %p66 = por %p64, %p65
      %p68 = scmp.ne.s32.totalorder %s51, %s67
      %p69 = scmp.eq.s32.totalorder %s43, 0
      %p70 = por %p68, %p69
      %s72 = sadd.s32 %s71, 1
      %p75 = scmp.eq.s32.totalorder %s37, 1
      %p76 = scmp.ne.s32.totalorder %s71, %s73
      %p77 = scmp.eq.s32.totalorder %s37, 0
      %p78 = por %p76, %p77
      %p79 = scmp.ne.s32.totalorder %s71, %s73
      %p80 = scmp.eq.s32.totalorder %s42, 1
      %p81 = por %p79, %p80
      %p82 = scmp.ne.s32.totalorder %s73, %s74
      %p83 = scmp.eq.s32.totalorder %s42, 0
      %p84 = por %p82, %p83
      %p85 = scmp.ne.s32.totalorder %s73, %s74
      %p86 = scmp.eq.s32.totalorder %s43, 1
      %p87 = por %p85, %p86
      %p89 = scmp.ne.s32.totalorder %s74, %s88
      %p90 = scmp.eq.s32.totalorder %s43, 0
      %p91 = por %p89, %p90
      %s93 = sadd.s32 %s92, 1
      %p96 = scmp.eq.s32.totalorder %s37, 1
      %p97 = scmp.ne.s32.totalorder %s92, %s94
      %p98 = scmp.eq.s32.totalorder %s37, 0
      %p99 = por %p97, %p98
      %p100 = scmp.ne.s32.totalorder %s92, %s94
      %p101 = scmp.eq.s32.totalorder %s42, 1
      %p102 = por %p100, %p101
      %p103 = scmp.ne.s32.totalorder %s94, %s95
      %p104 = scmp.eq.s32.totalorder %s42, 0
      %p105 = por %p103, %p104
      %p106 = scmp.ne.s32.totalorder %s94, %s95
      %p107 = scmp.eq.s32.totalorder %s43, 1
      %p108 = por %p106, %p107
      %p110 = scmp.ne.s32.totalorder %s95, %s109
      %p111 = scmp.eq.s32.totalorder %s43, 0
      %p112 = por %p110, %p111
      %s114 = sadd.s32 %s113, 1
      %p117 = scmp.eq.s32.totalorder %s37, 1
      %p118 = scmp.ne.s32.totalorder %s113, %s115
      %p119 = scmp.eq.s32.totalorder %s37, 0
      %p120 = por %p118, %p119
      %p121 = scmp.ne.s32.totalorder %s113, %s115
      %p122 = scmp.eq.s32.totalorder %s42, 1
      %p123 = por %p121, %p122
      %p124 = scmp.ne.s32.totalorder %s115, %s116
      %p125 = scmp.eq.s32.totalorder %s42, 0
      %p126 = por %p124, %p125
      %p127 = scmp.ne.s32.totalorder %s115, %s116
      %p128 = scmp.eq.s32.totalorder %s43, 1
      %p129 = por %p127, %p128
      %p131 = scmp.ne.s32.totalorder %s116, %s130
      %p132 = scmp.eq.s32.totalorder %s43, 0
      %p133 = por %p131, %p132
      %s135 = sadd.s32 %s134, 1
      %p138 = scmp.eq.s32.totalorder %s37, 1
      %p139 = scmp.ne.s32.totalorder %s134, %s136
      %p140 = scmp.eq.s32.totalorder %s37, 0
      %p141 = por %p139, %p140
      %p142 = scmp.ne.s32.totalorder %s134, %s136
      %p143 = scmp.eq.s32.totalorder %s42, 1
      %p144 = por %p142, %p143
      %p145 = scmp.ne.s32.totalorder %s136, %s137
      %p146 = scmp.eq.s32.totalorder %s42, 0
      %p147 = por %p145, %p146
      %p148 = scmp.ne.s32.totalorder %s136, %s137
      %p149 = scmp.eq.s32.totalorder %s43, 1
      %p150 = por %p148, %p149
      %p152 = scmp.ne.s32.totalorder %s137, %s151
      %p153 = scmp.eq.s32.totalorder %s43, 0
      %p154 = por %p152, %p153
      %s156 = sadd.s32 %s155, 1
      %p159 = scmp.eq.s32.totalorder %s37, 1
      %p160 = scmp.ne.s32.totalorder %s155, %s157
      %p161 = scmp.eq.s32.totalorder %s37, 0
      %p162 = por %p160, %p161
      %p163 = scmp.ne.s32.totalorder %s155, %s157
      %p164 = scmp.eq.s32.totalorder %s42, 1
      %p165 = por %p163, %p164
      %p166 = scmp.ne.s32.totalorder %s157, %s158
      %p167 = scmp.eq.s32.totalorder %s42, 0
      %p168 = por %p166, %p167
      %p169 = scmp.ne.s32.totalorder %s157, %s158
      %p170 = scmp.eq.s32.totalorder %s43, 1
      %p171 = por %p169, %p170
      %p173 = scmp.ne.s32.totalorder %s158, %s172
      %p174 = scmp.eq.s32.totalorder %s43, 0
      %p175 = por %p173, %p174
      %s177 = sadd.s32 %s176, 1
      %p180 = scmp.eq.s32.totalorder %s37, 1
      %p181 = scmp.ne.s32.totalorder %s176, %s178
      %p182 = scmp.eq.s32.totalorder %s37, 0
      %p183 = por %p181, %p182
      %p184 = scmp.ne.s32.totalorder %s176, %s178
      %p185 = scmp.eq.s32.totalorder %s42, 1
      %p186 = por %p184, %p185
      %p187 = scmp.ne.s32.totalorder %s178, %s179
      %p188 = scmp.eq.s32.totalorder %s42, 0
      %p189 = por %p187, %p188
      %p190 = scmp.ne.s32.totalorder %s178, %s179
      %p191 = scmp.eq.s32.totalorder %s43, 1
      %p192 = por %p190, %p191
      %p194 = scmp.ne.s32.totalorder %s179, %s193
      %p195 = scmp.eq.s32.totalorder %s43, 0
      %p196 = por %p194, %p195
      %s198 = sadd.s32 %s197, 1
      %p201 = scmp.eq.s32.totalorder %s37, 1
      %p202 = scmp.ne.s32.totalorder %s197, %s199
      %p203 = scmp.eq.s32.totalorder %s37, 0
      %p204 = por %p202, %p203
      %p205 = scmp.ne.s32.totalorder %s197, %s199
      %p206 = scmp.eq.s32.totalorder %s42, 1
      %p207 = por %p205, %p206
      %p208 = scmp.ne.s32.totalorder %s199, %s200
      %p209 = scmp.eq.s32.totalorder %s42, 0
      %p210 = por %p208, %p209
      %p211 = scmp.ne.s32.totalorder %s199, %s200
      %p212 = scmp.eq.s32.totalorder %s43, 1
      %p213 = por %p211, %p212
      %p215 = scmp.ne.s32.totalorder %s200, %s214
      %p216 = scmp.eq.s32.totalorder %s43, 0
      %p217 = por %p215, %p216
      %s219 = sadd.s32 %s218, 1
      %p222 = scmp.eq.s32.totalorder %s37, 1
      %p223 = scmp.ne.s32.totalorder %s218, %s220
      %p224 = scmp.eq.s32.totalorder %s37, 0
      %p225 = por %p223, %p224
      %p226 = scmp.ne.s32.totalorder %s218, %s220
      %p227 = scmp.eq.s32.totalorder %s42, 1
      %p228 = por %p226, %p227
      %p229 = scmp.ne.s32.totalorder %s220, %s221
      %p230 = scmp.eq.s32.totalorder %s42, 0
      %p231 = por %p229, %p230
      %p232 = scmp.ne.s32.totalorder %s220, %s221
      %p233 = scmp.eq.s32.totalorder %s43, 1
      %p234 = por %p232, %p233
      %p236 = scmp.ne.s32.totalorder %s221, %s235
      %p237 = scmp.eq.s32.totalorder %s43, 0
      %p238 = por %p236, %p237
      %s240 = sadd.s32 %s239, 1
      %p243 = scmp.eq.s32.totalorder %s37, 1
      %p244 = scmp.ne.s32.totalorder %s239, %s241
      %p245 = scmp.eq.s32.totalorder %s37, 0
      %p246 = por %p244, %p245
      %p247 = scmp.ne.s32.totalorder %s239, %s241
      %p248 = scmp.eq.s32.totalorder %s42, 1
      %p249 = por %p247, %p248
      %p250 = scmp.ne.s32.totalorder %s241, %s242
      %p251 = scmp.eq.s32.totalorder %s42, 0
      %p252 = por %p250, %p251
      %p253 = scmp.ne.s32.totalorder %s241, %s242
      %p254 = scmp.eq.s32.totalorder %s43, 1
      %p255 = por %p253, %p254
      %p257 = scmp.ne.s32.totalorder %s242, %s256
      %p258 = scmp.eq.s32.totalorder %s43, 0
      %p259 = por %p257, %p258
      %s261 = sadd.s32 %s260, 1
      %p264 = scmp.eq.s32.totalorder %s37, 1
      %p265 = scmp.ne.s32.totalorder %s260, %s262
      %p266 = scmp.eq.s32.totalorder %s37, 0
      %p267 = por %p265, %p266
      %p268 = scmp.ne.s32.totalorder %s260, %s262
      %p269 = scmp.eq.s32.totalorder %s42, 1
      %p270 = por %p268, %p269
      %p271 = scmp.ne.s32.totalorder %s262, %s263
      %p272 = scmp.eq.s32.totalorder %s42, 0
      %p273 = por %p271, %p272
      %p274 = scmp.ne.s32.totalorder %s262, %s263
      %p275 = scmp.eq.s32.totalorder %s43, 1
      %p276 = por %p274, %p275
      %p278 = scmp.ne.s32.totalorder %s263, %s277
      %p279 = scmp.eq.s32.totalorder %s43, 0
      %p280 = por %p278, %p279
      %s282 = sadd.s32 %s281, 1
      %p285 = scmp.eq.s32.totalorder %s37, 1
      %p286 = scmp.ne.s32.totalorder %s281, %s283
      %p287 = scmp.eq.s32.totalorder %s37, 0
      %p288 = por %p286, %p287
      %p289 = scmp.ne.s32.totalorder %s281, %s283
      %p290 = scmp.eq.s32.totalorder %s42, 1
      %p291 = por %p289, %p290
      %p292 = scmp.ne.s32.totalorder %s283, %s284
      %p293 = scmp.eq.s32.totalorder %s42, 0
      %p294 = por %p292, %p293
      %p295 = scmp.ne.s32.totalorder %s283, %s284
      %p296 = scmp.eq.s32.totalorder %s43, 1
      %p297 = por %p295, %p296
      %p299 = scmp.ne.s32.totalorder %s284, %s298
      %p300 = scmp.eq.s32.totalorder %s43, 0
      %p301 = por %p299, %p300
      %s303 = sadd.s32 %s302, 1
      %p306 = scmp.eq.s32.totalorder %s37, 1
      %p307 = scmp.ne.s32.totalorder %s302, %s304
      %p308 = scmp.eq.s32.totalorder %s37, 0
      %p309 = por %p307, %p308
      %p310 = scmp.ne.s32.totalorder %s302, %s304
      %p311 = scmp.eq.s32.totalorder %s42, 1
      %p312 = por %p310, %p311
      %p313 = scmp.ne.s32.totalorder %s304, %s305
      %p314 = scmp.eq.s32.totalorder %s42, 0
      %p315 = por %p313, %p314
      %p316 = scmp.ne.s32.totalorder %s304, %s305
      %p317 = scmp.eq.s32.totalorder %s43, 1
      %p318 = por %p316, %p317
      %p320 = scmp.ne.s32.totalorder %s305, %s319
      %p321 = scmp.eq.s32.totalorder %s43, 0
      %p322 = por %p320, %p321
      %s324 = sadd.s32 %s323, 1
      %p327 = scmp.eq.s32.totalorder %s37, 1
      %p328 = scmp.ne.s32.totalorder %s323, %s325
      %p329 = scmp.eq.s32.totalorder %s37, 0
      %p330 = por %p328, %p329
      %p331 = scmp.ne.s32.totalorder %s323, %s325
      %p332 = scmp.eq.s32.totalorder %s42, 1
      %p333 = por %p331, %p332
      %p334 = scmp.ne.s32.totalorder %s325, %s326
      %p335 = scmp.eq.s32.totalorder %s42, 0
      %p336 = por %p334, %p335
      %p337 = scmp.ne.s32.totalorder %s325, %s326
      %p338 = scmp.eq.s32.totalorder %s43, 1
      %p339 = por %p337, %p338
      %p341 = scmp.ne.s32.totalorder %s326, %s340
      %p342 = scmp.eq.s32.totalorder %s43, 0
      %p343 = por %p341, %p342
      %s345 = sadd.s32 %s344, 1
      %p348 = scmp.eq.s32.totalorder %s37, 1
      %p349 = scmp.ne.s32.totalorder %s344, %s346
      %p350 = scmp.eq.s32.totalorder %s37, 0
      %p351 = por %p349, %p350
      %p352 = scmp.ne.s32.totalorder %s344, %s346
      %p353 = scmp.eq.s32.totalorder %s42, 1
      %p354 = por %p352, %p353
      %p355 = scmp.ne.s32.totalorder %s346, %s347
      %p356 = scmp.eq.s32.totalorder %s42, 0
      %p357 = por %p355, %p356
      %p358 = scmp.ne.s32.totalorder %s346, %s347
      %p359 = scmp.eq.s32.totalorder %s43, 1
      %p360 = por %p358, %p359
      %p362 = scmp.ne.s32.totalorder %s347, %s361
      %p363 = scmp.eq.s32.totalorder %s43, 0
      %p364 = por %p362, %p363
      %s366 = sadd.s32 %s365, 1
      %p369 = scmp.eq.s32.totalorder %s37, 1
      %p370 = scmp.ne.s32.totalorder %s365, %s367
      %p371 = scmp.eq.s32.totalorder %s37, 0
      %p372 = por %p370, %p371
      %p373 = scmp.ne.s32.totalorder %s365, %s367
      %p374 = scmp.eq.s32.totalorder %s42, 1
      %p375 = por %p373, %p374
      %p376 = scmp.ne.s32.totalorder %s367, %s368
      %p377 = scmp.eq.s32.totalorder %s42, 0
      %p378 = por %p376, %p377
      %p379 = scmp.ne.s32.totalorder %s367, %s368
      %p380 = scmp.eq.s32.totalorder %s43, 1
      %p381 = por %p379, %p380
      %p383 = scmp.ne.s32.totalorder %s368, %s382
      %p384 = scmp.eq.s32.totalorder %s43, 0
      %p385 = por %p383, %p384
      %s387 = sadd.s32 %s386, 1
      %p390 = scmp.eq.s32.totalorder %s37, 1
      %p391 = scmp.ne.s32.totalorder %s386, %s388
      %p392 = scmp.eq.s32.totalorder %s37, 0
      %p393 = por %p391, %p392
      %p394 = scmp.ne.s32.totalorder %s386, %s388
      %p395 = scmp.eq.s32.totalorder %s42, 1
      %p396 = por %p394, %p395
      %p397 = scmp.ne.s32.totalorder %s388, %s389
      %p398 = scmp.eq.s32.totalorder %s42, 0
      %p399 = por %p397, %p398
      %p400 = scmp.ne.s32.totalorder %s388, %s389
      %p401 = scmp.eq.s32.totalorder %s43, 1
      %p402 = por %p400, %p401
      %p404 = scmp.ne.s32.totalorder %s389, %s403
      %p405 = scmp.eq.s32.totalorder %s43, 0
      %p406 = por %p404, %p405
      %s407 = ssub.s32 %s37, %s44
      %p408 = scmp.eq.s32.totalorder %s407, 0
      %s410 = sadd.s32 %s409, 1
      %s411 = scalar_select %p408, %s409, %s410
      %p414 = pneg %p408
      %p415 = scmp.eq.s32.totalorder %s37, 1
      %p416 = por %p414, %p415
      %p417 = scmp.ne.s32.totalorder %s409, %s412
      %p418 = scmp.eq.s32.totalorder %s37, 0
      %p419 = por %p417, %p418
      %p420 = scmp.ne.s32.totalorder %s409, %s412
      %p421 = scmp.eq.s32.totalorder %s42, 1
      %p422 = por %p420, %p421
      %p423 = scmp.ne.s32.totalorder %s412, %s413
      %p424 = scmp.eq.s32.totalorder %s42, 0
      %p425 = por %p423, %p424
      %p426 = scmp.ne.s32.totalorder %s412, %s413
      %p427 = scmp.eq.s32.totalorder %s43, 1
      %p428 = por %p426, %p427
      %p430 = scmp.ne.s32.totalorder %s413, %s429
      %p431 = scmp.eq.s32.totalorder %s43, 0
      %p432 = por %p430, %p431
      %p433 = scmp.le.s32.totalorder 1, %s37
      %p434 = scmp.lt.s32.totalorder %s37, 3
      %p435 = pnand %p433, %p434
      %p436 = pneg %p435
      // Predicated region
      $region9: #{indirect_illum_forward.1} parent=5 // pred_check
        _
      $region10: #{indirect_illum_forward.1} parent=5 // pred_check_branch
        %438 = sbr.rel (%p435) target = $region12
      $region11: #{indirect_illum_forward.1} parent=5 // pred_region
        %s439 = ssub.s32 %s37, 1
        // Predicated region
        $region13: #{indirect_illum_forward.1} parent=11 // pred_check
          %p440 = pneg %p84
        $region14: #{indirect_illum_forward.1} parent=11 // pred_check_branch
          %442 = sbr.rel (%p440) target = $region16
        $region15: #{indirect_illum_forward.1} parent=11 // pred_region
          %s444 = ssub.s32 64, 64
          %445 = vsyncadd [#allocation6], %s444
          %s447 = sshll.u32 [#allocation5], 4
          %s448 = int_to_ptr.vmem [resolvable:$true] %s447
          %450 = dma.hbm_to_vmem [thread:$0]  %s1, 64, %s448, [#allocation6]
        $region16: #{indirect_illum_forward.1} parent=11 // pred_fallthru
          _
        // Predicated region
        $region17: #{indirect_illum_forward.1} parent=11 // pred_check
          %p451 = pneg %p105
        $region18: #{indirect_illum_forward.1} parent=11 // pred_check_branch
          %453 = sbr.rel (%p451) target = $region20
        $region19: #{indirect_illum_forward.1} parent=11 // pred_region
          %s455 = ssub.s32 32, 32
          %456 = vsyncadd [#allocation6], %s455
          %s458 = sshll.u32 [#allocation7], 4
          %s459 = int_to_ptr.vmem [resolvable:$true] %s458
          %461 = dma.hbm_to_vmem [thread:$0]  %s2, 32, %s459, [#allocation6]
        $region20: #{indirect_illum_forward.1} parent=11 // pred_fallthru
          _
        // Predicated region
        $region21: #{indirect_illum_forward.1} parent=11 // pred_check
          %p462 = pneg %p126
        $region22: #{indirect_illum_forward.1} parent=11 // pred_check_branch
          %464 = sbr.rel (%p462) target = $region24
        $region23: #{indirect_illum_forward.1} parent=11 // pred_region
          %s466 = ssub.s32 1024, 1024
          %467 = vsyncadd [#allocation9], %s466
          %s468 = sshll.u32 [#allocation8], 4
          %s469 = int_to_ptr.vmem [resolvable:$true] %s468
          %474 = dma.hbm_to_vmem [thread:$0]  %s3, 1024, %s469, [#allocation9], 64, 64, 4
        $region24: #{indirect_illum_forward.1} parent=11 // pred_fallthru
          _
        // Predicated region
        $region25: #{indirect_illum_forward.1} parent=11 // pred_check
          %p475 = pneg %p147
        $region26: #{indirect_illum_forward.1} parent=11 // pred_check_branch
          %477 = sbr.rel (%p475) target = $region28
        $region27: #{indirect_illum_forward.1} parent=11 // pred_region
          %s479 = ssub.s32 16, 16
          %480 = vsyncadd [#allocation9], %s479
          %s482 = sshll.u32 [#allocation10], 4
          %s483 = int_to_ptr.vmem [resolvable:$true] %s482
          %485 = dma.hbm_to_vmem [thread:$0]  %s4, 16, %s483, [#allocation9]
        $region28: #{indirect_illum_forward.1} parent=11 // pred_fallthru
          _
        // Predicated region
        $region29: #{indirect_illum_forward.1} parent=11 // pred_check
          %p486 = pneg %p168
        $region30: #{indirect_illum_forward.1} parent=11 // pred_check_branch
          %488 = sbr.rel (%p486) target = $region32
        $region31: #{indirect_illum_forward.1} parent=11 // pred_region
          %s490 = ssub.s32 1024, 1024
          %491 = vsyncadd [#allocation12], %s490
          %s492 = sshll.u32 [#allocation11], 4
          %s493 = int_to_ptr.vmem [resolvable:$true] %s492
          %498 = dma.hbm_to_vmem [thread:$0]  %s5, 1024, %s493, [#allocation12], 64, 64, 4
        $region32: #{indirect_illum_forward.1} parent=11 // pred_fallthru
          _
        // Predicated region
        $region33: #{indirect_illum_forward.1} parent=11 // pred_check
          %p499 = pneg %p189
        $region34: #{indirect_illum_forward.1} parent=11 // pred_check_branch
          %501 = sbr.rel (%p499) target = $region36
        $region35: #{indirect_illum_forward.1} parent=11 // pred_region
          %s503 = ssub.s32 16, 16
          %504 = vsyncadd [#allocation12], %s503
          %s506 = sshll.u32 [#allocation13], 4
          %s507 = int_to_ptr.vmem [resolvable:$true] %s506
          %509 = dma.hbm_to_vmem [thread:$0]  %s6, 16, %s507, [#allocation12]
        $region36: #{indirect_illum_forward.1} parent=11 // pred_fallthru
          _
        // Predicated region
        $region37: #{indirect_illum_forward.1} parent=11 // pred_check
          %p510 = pneg %p210
        $region38: #{indirect_illum_forward.1} parent=11 // pred_check_branch
          %512 = sbr.rel (%p510) target = $region40
        $region39: #{indirect_illum_forward.1} parent=11 // pred_region
          %s514 = ssub.s32 1024, 1024
          %515 = vsyncadd [#allocation15], %s514
          %s516 = sshll.u32 [#allocation14], 4
          %s517 = int_to_ptr.vmem [resolvable:$true] %s516
          %522 = dma.hbm_to_vmem [thread:$0]  %s7, 1024, %s517, [#allocation15], 64, 64, 4
        $region40: #{indirect_illum_forward.1} parent=11 // pred_fallthru
          _
        // Predicated region
        $region41: #{indirect_illum_forward.1} parent=11 // pred_check
          %p523 = pneg %p231
        $region42: #{indirect_illum_forward.1} parent=11 // pred_check_branch
          %525 = sbr.rel (%p523) target = $region44
        $region43: #{indirect_illum_forward.1} parent=11 // pred_region
          %s527 = ssub.s32 16, 16
          %528 = vsyncadd [#allocation15], %s527
          %s530 = sshll.u32 [#allocation16], 4
          %s531 = int_to_ptr.vmem [resolvable:$true] %s530
          %533 = dma.hbm_to_vmem [thread:$0]  %s8, 16, %s531, [#allocation15]
        $region44: #{indirect_illum_forward.1} parent=11 // pred_fallthru
          _
        // Predicated region
        $region45: #{indirect_illum_forward.1} parent=11 // pred_check
          %p534 = pneg %p252
        $region46: #{indirect_illum_forward.1} parent=11 // pred_check_branch
          %536 = sbr.rel (%p534) target = $region48
        $region47: #{indirect_illum_forward.1} parent=11 // pred_region
          %s538 = ssub.s32 2048, 2048
          %539 = vsyncadd [#allocation18], %s538
          %s540 = sshll.u32 [#allocation17], 4
          %s541 = int_to_ptr.vmem [resolvable:$true] %s540
          %546 = dma.hbm_to_vmem [thread:$0]  %s9, 2048, %s541, [#allocation18], 128, 128, 8
        $region48: #{indirect_illum_forward.1} parent=11 // pred_fallthru
          _
        // Predicated region
        $region49: #{indirect_illum_forward.1} parent=11 // pred_check
          %p547 = pneg %p273
        $region50: #{indirect_illum_forward.1} parent=11 // pred_check_branch
          %549 = sbr.rel (%p547) target = $region52
        $region51: #{indirect_illum_forward.1} parent=11 // pred_region
          %s551 = ssub.s32 32, 32
          %552 = vsyncadd [#allocation18], %s551
          %s554 = sshll.u32 [#allocation19], 4
          %s555 = int_to_ptr.vmem [resolvable:$true] %s554
          %557 = dma.hbm_to_vmem [thread:$0]  %s10, 32, %s555, [#allocation18]
        $region52: #{indirect_illum_forward.1} parent=11 // pred_fallthru
          _
        // Predicated region
        $region53: #{indirect_illum_forward.1} parent=11 // pred_check
          %p558 = pneg %p294
        $region54: #{indirect_illum_forward.1} parent=11 // pred_check_branch
          %560 = sbr.rel (%p558) target = $region56
        $region55: #{indirect_illum_forward.1} parent=11 // pred_region
          %s562 = ssub.s32 1024, 1024
          %563 = vsyncadd [#allocation21], %s562
          %s564 = sshll.u32 [#allocation20], 4
          %s565 = int_to_ptr.vmem [resolvable:$true] %s564
          %570 = dma.hbm_to_vmem [thread:$0]  %s11, 1024, %s565, [#allocation21], 64, 64, 4
        $region56: #{indirect_illum_forward.1} parent=11 // pred_fallthru
          _
        // Predicated region
        $region57: #{indirect_illum_forward.1} parent=11 // pred_check
          %p571 = pneg %p315
        $region58: #{indirect_illum_forward.1} parent=11 // pred_check_branch
          %573 = sbr.rel (%p571) target = $region60
        $region59: #{indirect_illum_forward.1} parent=11 // pred_region
          %s575 = ssub.s32 16, 16
          %576 = vsyncadd [#allocation21], %s575
          %s578 = sshll.u32 [#allocation22], 4
          %s579 = int_to_ptr.vmem [resolvable:$true] %s578
          %581 = dma.hbm_to_vmem [thread:$0]  %s12, 16, %s579, [#allocation21]
        $region60: #{indirect_illum_forward.1} parent=11 // pred_fallthru
          _
        // Predicated region
        $region61: #{indirect_illum_forward.1} parent=11 // pred_check
          %p582 = pneg %p336
        $region62: #{indirect_illum_forward.1} parent=11 // pred_check_branch
          %584 = sbr.rel (%p582) target = $region64
        $region63: #{indirect_illum_forward.1} parent=11 // pred_region
          %s586 = ssub.s32 256, 256
          %587 = vsyncadd [#allocation24], %s586
          %s588 = sshll.u32 [#allocation23], 4
          %s589 = int_to_ptr.vmem [resolvable:$true] %s588
          %594 = dma.hbm_to_vmem [thread:$0]  %s13, 256, %s589, [#allocation24], 64, 64, 4
        $region64: #{indirect_illum_forward.1} parent=11 // pred_fallthru
          _
        // Predicated region
        $region65: #{indirect_illum_forward.1} parent=11 // pred_check
          %p595 = pneg %p357
        $region66: #{indirect_illum_forward.1} parent=11 // pred_check_branch
          %597 = sbr.rel (%p595) target = $region68
        $region67: #{indirect_illum_forward.1} parent=11 // pred_region
          %s599 = ssub.s32 16, 16
          %600 = vsyncadd [#allocation24], %s599
          %s602 = sshll.u32 [#allocation25], 4
          %s603 = int_to_ptr.vmem [resolvable:$true] %s602
          %605 = dma.hbm_to_vmem [thread:$0]  %s14, 16, %s603, [#allocation24]
        $region68: #{indirect_illum_forward.1} parent=11 // pred_fallthru
          _
        // Predicated region
        $region69: #{indirect_illum_forward.1} parent=11 // pred_check
          %p606 = pneg %p378
        $region70: #{indirect_illum_forward.1} parent=11 // pred_check_branch
          %608 = sbr.rel (%p606) target = $region72
        $region71: #{indirect_illum_forward.1} parent=11 // pred_region
          %s610 = ssub.s32 1024, 1024
          %611 = vsyncadd [#allocation27], %s610
          %s612 = sshll.u32 [#allocation26], 4
          %s613 = int_to_ptr.vmem [resolvable:$true] %s612
          %618 = dma.hbm_to_vmem [thread:$0]  %s15, 1024, %s613, [#allocation27], 64, 64, 4
        $region72: #{indirect_illum_forward.1} parent=11 // pred_fallthru
          _
        // Predicated region
        $region73: #{indirect_illum_forward.1} parent=11 // pred_check
          %p619 = pneg %p399
        $region74: #{indirect_illum_forward.1} parent=11 // pred_check_branch
          %621 = sbr.rel (%p619) target = $region76
        $region75: #{indirect_illum_forward.1} parent=11 // pred_region
          %s623 = ssub.s32 16, 16
          %624 = vsyncadd [#allocation27], %s623
          %s626 = sshll.u32 [#allocation28], 4
          %s627 = int_to_ptr.vmem [resolvable:$true] %s626
          %629 = dma.hbm_to_vmem [thread:$0]  %s16, 16, %s627, [#allocation27]
        $region76: #{indirect_illum_forward.1} parent=11 // pred_fallthru
          _
      $region12: #{indirect_illum_forward.1} parent=5 // pred_fallthru
        _
      %p630 = scmp.lt.s32.totalorder %s37, 2
      // Predicated region
      $region77: #{indirect_illum_forward.1} parent=5 // pred_check
        %p631 = pneg %p630
      $region78: #{indirect_illum_forward.1} parent=5 // pred_check_branch
        %633 = sbr.rel (%p631) target = $region80
      $region79: #{indirect_illum_forward.1} parent=5 // pred_region
        // Predicated region
        $region81: #{indirect_illum_forward.1} parent=79 // pred_check
          %p634 = pneg %p57
        $region82: #{indirect_illum_forward.1} parent=79 // pred_check_branch
          %636 = sbr.rel (%p634) target = $region84
        $region83: #{indirect_illum_forward.1} parent=79 // pred_region
          %s637 = sand.u32 %s47, 1
          %s638 = scalar_lea.sflag [#allocation3], %s637
          %s639 = sand.u32 %s47, 1
          %s640 = smul.addr %s639, 128
          %s641 = scalar_lea.vmem [#allocation2], %s640
          %s642 = smul.u32 16, %s37
          %s644 = ssub.s32 2048, 2048
          %645 = vsyncadd %s638, %s644
          %s646 = smul.addr %s642, 128
          %s647 = scalar_lea.hbm %s0, %s646
          %s648 = sshll.u32 %s641, 4
          %s649 = int_to_ptr.vmem [resolvable:$true] %s648
          %654 = dma.hbm_to_vmem [thread:$0]  %s647, 2048, %s649, %s638, 128, 128, 8
        $region84: #{indirect_illum_forward.1} parent=79 // pred_fallthru
          _
      $region80: #{indirect_illum_forward.1} parent=5 // pred_fallthru
        _
      %p655 = scmp.le.s32.totalorder 1, %s37
      %p656 = scmp.lt.s32.totalorder %s37, 3
      %p657 = pnand %p655, %p656
      %p658 = pneg %p657
      // Predicated region
      $region85: #{indirect_illum_forward.1} parent=5 // pred_check
        _
      $region86: #{indirect_illum_forward.1} parent=5 // pred_check_branch
        %660 = sbr.rel (%p657) target = $region88
      $region87: #{indirect_illum_forward.1} parent=5 // pred_region
        %s661 = ssub.s32 %s37, 1
        %s662 = sand.u32 %s50, 1
        %s663 = scalar_lea.sflag [#allocation3], %s662
        %s664 = sand.u32 %s50, 1
        %s665 = smul.addr %s664, 128
        %s666 = scalar_lea.vmem [#allocation2], %s665
        // Predicated region
        $region89: #{indirect_illum_forward.1} parent=87 // pred_check
          %p667 = pneg %p63
        $region90: #{indirect_illum_forward.1} parent=87 // pred_check_branch
          %669 = sbr.rel (%p667) target = $region92
        $region91: #{indirect_illum_forward.1} parent=87 // pred_region
          %670 = dma.done %s663, 2048
        $region92: #{indirect_illum_forward.1} parent=87 // pred_fallthru
          _
        // Predicated region
        $region93: #{indirect_illum_forward.1} parent=87 // pred_check
          %p671 = pneg %p84
        $region94: #{indirect_illum_forward.1} parent=87 // pred_check_branch
          %673 = sbr.rel (%p671) target = $region96
        $region95: #{indirect_illum_forward.1} parent=87 // pred_region
          %674 = dma.done [#allocation6], 64
        $region96: #{indirect_illum_forward.1} parent=87 // pred_fallthru
          _
        // Predicated region
        $region97: #{indirect_illum_forward.1} parent=87 // pred_check
          %p675 = pneg %p105
        $region98: #{indirect_illum_forward.1} parent=87 // pred_check_branch
          %677 = sbr.rel (%p675) target = $region100
        $region99: #{indirect_illum_forward.1} parent=87 // pred_region
          %678 = dma.done [#allocation6], 32
        $region100: #{indirect_illum_forward.1} parent=87 // pred_fallthru
          _
        // Predicated region
        $region101: #{indirect_illum_forward.1} parent=87 // pred_check
          %p679 = pneg %p126
        $region102: #{indirect_illum_forward.1} parent=87 // pred_check_branch
          %681 = sbr.rel (%p679) target = $region104
        $region103: #{indirect_illum_forward.1} parent=87 // pred_region
          %682 = dma.done [#allocation9], 1024
        $region104: #{indirect_illum_forward.1} parent=87 // pred_fallthru
          _
        // Predicated region
        $region105: #{indirect_illum_forward.1} parent=87 // pred_check
          %p683 = pneg %p147
        $region106: #{indirect_illum_forward.1} parent=87 // pred_check_branch
          %685 = sbr.rel (%p683) target = $region108
        $region107: #{indirect_illum_forward.1} parent=87 // pred_region
          %686 = dma.done [#allocation9], 16
        $region108: #{indirect_illum_forward.1} parent=87 // pred_fallthru
          _
        // Predicated region
        $region109: #{indirect_illum_forward.1} parent=87 // pred_check
          %p687 = pneg %p168
        $region110: #{indirect_illum_forward.1} parent=87 // pred_check_branch
          %689 = sbr.rel (%p687) target = $region112
        $region111: #{indirect_illum_forward.1} parent=87 // pred_region
          %690 = dma.done [#allocation12], 1024
        $region112: #{indirect_illum_forward.1} parent=87 // pred_fallthru
          _
        // Predicated region
        $region113: #{indirect_illum_forward.1} parent=87 // pred_check
          %p691 = pneg %p189
        $region114: #{indirect_illum_forward.1} parent=87 // pred_check_branch
          %693 = sbr.rel (%p691) target = $region116
        $region115: #{indirect_illum_forward.1} parent=87 // pred_region
          %694 = dma.done [#allocation12], 16
        $region116: #{indirect_illum_forward.1} parent=87 // pred_fallthru
          _
        // Predicated region
        $region117: #{indirect_illum_forward.1} parent=87 // pred_check
          %p695 = pneg %p210
        $region118: #{indirect_illum_forward.1} parent=87 // pred_check_branch
          %697 = sbr.rel (%p695) target = $region120
        $region119: #{indirect_illum_forward.1} parent=87 // pred_region
          %698 = dma.done [#allocation15], 1024
        $region120: #{indirect_illum_forward.1} parent=87 // pred_fallthru
          _
        // Predicated region
        $region121: #{indirect_illum_forward.1} parent=87 // pred_check
          %p699 = pneg %p231
        $region122: #{indirect_illum_forward.1} parent=87 // pred_check_branch
          %701 = sbr.rel (%p699) target = $region124
        $region123: #{indirect_illum_forward.1} parent=87 // pred_region
          %702 = dma.done [#allocation15], 16
        $region124: #{indirect_illum_forward.1} parent=87 // pred_fallthru
          _
        // Predicated region
        $region125: #{indirect_illum_forward.1} parent=87 // pred_check
          %p703 = pneg %p252
        $region126: #{indirect_illum_forward.1} parent=87 // pred_check_branch
          %705 = sbr.rel (%p703) target = $region128
        $region127: #{indirect_illum_forward.1} parent=87 // pred_region
          %706 = dma.done [#allocation18], 2048
        $region128: #{indirect_illum_forward.1} parent=87 // pred_fallthru
          _
        // Predicated region
        $region129: #{indirect_illum_forward.1} parent=87 // pred_check
          %p707 = pneg %p273
        $region130: #{indirect_illum_forward.1} parent=87 // pred_check_branch
          %709 = sbr.rel (%p707) target = $region132
        $region131: #{indirect_illum_forward.1} parent=87 // pred_region
          %710 = dma.done [#allocation18], 32
        $region132: #{indirect_illum_forward.1} parent=87 // pred_fallthru
          _
        // Predicated region
        $region133: #{indirect_illum_forward.1} parent=87 // pred_check
          %p711 = pneg %p294
        $region134: #{indirect_illum_forward.1} parent=87 // pred_check_branch
          %713 = sbr.rel (%p711) target = $region136
        $region135: #{indirect_illum_forward.1} parent=87 // pred_region
          %714 = dma.done [#allocation21], 1024
        $region136: #{indirect_illum_forward.1} parent=87 // pred_fallthru
          _
        // Predicated region
        $region137: #{indirect_illum_forward.1} parent=87 // pred_check
          %p715 = pneg %p315
        $region138: #{indirect_illum_forward.1} parent=87 // pred_check_branch
          %717 = sbr.rel (%p715) target = $region140
        $region139: #{indirect_illum_forward.1} parent=87 // pred_region
          %718 = dma.done [#allocation21], 16
        $region140: #{indirect_illum_forward.1} parent=87 // pred_fallthru
          _
        // Predicated region
        $region141: #{indirect_illum_forward.1} parent=87 // pred_check
          %p719 = pneg %p336
        $region142: #{indirect_illum_forward.1} parent=87 // pred_check_branch
          %721 = sbr.rel (%p719) target = $region144
        $region143: #{indirect_illum_forward.1} parent=87 // pred_region
          %722 = dma.done [#allocation24], 256
        $region144: #{indirect_illum_forward.1} parent=87 // pred_fallthru
          _
        // Predicated region
        $region145: #{indirect_illum_forward.1} parent=87 // pred_check
          %p723 = pneg %p357
        $region146: #{indirect_illum_forward.1} parent=87 // pred_check_branch
          %725 = sbr.rel (%p723) target = $region148
        $region147: #{indirect_illum_forward.1} parent=87 // pred_region
          %726 = dma.done [#allocation24], 16
        $region148: #{indirect_illum_forward.1} parent=87 // pred_fallthru
          _
        // Predicated region
        $region149: #{indirect_illum_forward.1} parent=87 // pred_check
          %p727 = pneg %p378
        $region150: #{indirect_illum_forward.1} parent=87 // pred_check_branch
          %729 = sbr.rel (%p727) target = $region152
        $region151: #{indirect_illum_forward.1} parent=87 // pred_region
          %730 = dma.done [#allocation27], 1024
        $region152: #{indirect_illum_forward.1} parent=87 // pred_fallthru
          _
        // Predicated region
        $region153: #{indirect_illum_forward.1} parent=87 // pred_check
          %p731 = pneg %p399
        $region154: #{indirect_illum_forward.1} parent=87 // pred_check_branch
          %733 = sbr.rel (%p731) target = $region156
        $region155: #{indirect_illum_forward.1} parent=87 // pred_region
          %734 = dma.done [#allocation27], 16
        $region156: #{indirect_illum_forward.1} parent=87 // pred_fallthru
          _
        %s735 = sand.u32 %s50, 1
        %s736 = scalar_lea.sflag [#allocation3], %s735
        %s737 = sand.u32 %s50, 1
        %s738 = smul.addr %s737, 128
        %s739 = scalar_lea.vmem [#allocation2], %s738
        %p740 = pneg %p63
        %p741 = pneg %p60
        %p742 = pneg %p84
        %p743 = pneg %p81
        %p744 = pneg %p105
        %p745 = pneg %p102
        %p746 = pneg %p126
        %p747 = pneg %p123
        %p748 = pneg %p147
        %p749 = pneg %p144
        %p750 = pneg %p168
        %p751 = pneg %p165
        %p752 = pneg %p189
        %p753 = pneg %p186
        %p754 = pneg %p210
        %p755 = pneg %p207
        %p756 = pneg %p231
        %p757 = pneg %p228
        %p758 = pneg %p252
        %p759 = pneg %p249
        %p760 = pneg %p273
        %p761 = pneg %p270
        %p762 = pneg %p294
        %p763 = pneg %p291
        %p764 = pneg %p315
        %p765 = pneg %p312
        %p766 = pneg %p336
        %p767 = pneg %p333
        %p768 = pneg %p357
        %p769 = pneg %p354
        %p770 = pneg %p378
        %p771 = pneg %p375
        %p772 = pneg %p399
        %p773 = pneg %p396
        %p774 = pneg %p425
        %p775 = pneg %p422
        %s776 = sand.u32 %s412, 1
        %s777 = scalar_lea.sflag [#allocation4], %s776
        %s778 = sand.u32 %s412, 1
        %s779 = smul.addr %s778, 256
        %s780 = scalar_lea.vmem [#allocation29], %s779
        %s781 = smul.u32 16, %s42
        %s782 = smul.u32 16, %s42
        %v784 = vld [vmem:[%s666] sm:$0xff]
        %v785 = vld [vmem:[%s666 + $0x8] sm:$0xff]
        %v786 = vld [vmem:[%s666 + $0x10] sm:$0xff]
        %v787 = vld [vmem:[%s666 + $0x18] sm:$0xff]
        %v788 = vld [vmem:[%s666 + $0x20] sm:$0xff]
        %v789 = vld [vmem:[%s666 + $0x28] sm:$0xff]
        %v790 = vld [vmem:[%s666 + $0x30] sm:$0xff]
        %v791 = vld [vmem:[%s666 + $0x38] sm:$0xff]
        %v792 = vld [vmem:[%s666 + $0x40] sm:$0xff]
        %v793 = vld [vmem:[%s666 + $0x48] sm:$0xff]
        %v794 = vld [vmem:[%s666 + $0x50] sm:$0xff]
        %v795 = vld [vmem:[%s666 + $0x58] sm:$0xff]
        %v796 = vld [vmem:[%s666 + $0x60] sm:$0xff]
        %v797 = vld [vmem:[%s666 + $0x68] sm:$0xff]
        %v798 = vld [vmem:[%s666 + $0x70] sm:$0xff]
        %v799 = vld [vmem:[%s666 + $0x78] sm:$0xff]
        %v800 = vpack.c.bf16 %v785, %v784
        %v801 = vpack.c.bf16 %v787, %v786
        %v802 = vpack.c.bf16 %v789, %v788
        %v803 = vpack.c.bf16 %v791, %v790
        %v804 = vpack.c.bf16 %v793, %v792
        %v805 = vpack.c.bf16 %v795, %v794
        %v806 = vpack.c.bf16 %v797, %v796
        %v807 = vpack.c.bf16 %v799, %v798
        %v808 = vld [vmem:[#allocation5] sm:$0xf]
        %v809 = vld [vmem:[#allocation7] sm:$0x3]
        %v811 = vlaneseq
        %v812 = vshrl.u32 %v811, 7
        %v813 = vsub.s32 0, %v812
        %v814 = vrot.slane %v809, %v813
        %v815 = vlaneseq
        %v816 = vshrl.u32 %v815, 7
        %v817 = vsub.s32 1, %v816
        %v818 = vrot.slane %v809, %v817
        %v823 = vunpack.c.l.s4 1983009808
        %v824 = vunpack.c.0.s8 %v823
        %v825 = vlaneseq
        %v826 = vshrl.u32 %v825, 7
        %v827 = vsub.s32 %v824, %v826
        %v828 = vrot.slane %v808, %v827
        %v829 = vcombine.high %v828, %v828
        %vm830 = vcmask 31744
        %v832 = vsel %vm830, %v800, 0
        %v835 = vsel %vm830, %v801, 0
        %v838 = vsel %vm830, %v802, 0
        %v841 = vsel %vm830, %v803, 0
        %v844 = vsel %vm830, %v804, 0
        %v847 = vsel %vm830, %v805, 0
        %v850 = vsel %vm830, %v806, 0
        %v853 = vsel %vm830, %v807, 0
        %vm855 = vcmask 1041408
        %v857 = vsel %vm855, %v828, 0
        %v860 = vsel %vm855, %v829, 0
        %862 = vmatprep.subr.bf16.mxu0 %v860
        %863 = vmatpush1.bf16.msra.mxu0 %v857
        %864 = vmatprep.subr.bf16.mxu0 0
        %865 = vmatpush1.bf16.msra.mxu0 0
        %866 = vmatprep.subr.bf16.mxu0 0
        %867 = vmatpush1.bf16.msra.mxu0 0
        %868 = vmatprep.subr.bf16.mxu0 0
        %869 = vmatpush1.bf16.msra.mxu0 0
        %870 = vmatprep.subr.bf16.mxu0 0
        %871 = vmatpush1.bf16.msra.mxu0 0
        %872 = vmatprep.subr.bf16.mxu0 0
        %873 = vmatpush1.bf16.msra.mxu0 0
        %874 = vmatprep.subr.bf16.mxu0 0
        %875 = vmatpush1.bf16.msra.mxu0 0
        %876 = vmatprep.subr.bf16.mxu0 0
        %877 = vmatpush1.bf16.msra.mxu0 0
        %878 = vmatprep.subr.bf16.mxu0 0
        %879 = vmatpush1.bf16.msra.mxu0 0
        %880 = vmatprep.subr.bf16.mxu0 0
        %881 = vmatpush1.bf16.msra.mxu0 0
        %882 = vmatprep.subr.bf16.mxu0 0
        %883 = vmatpush1.bf16.msra.mxu0 0
        %884 = vmatprep.subr.bf16.mxu0 0
        %885 = vmatpush1.bf16.msra.mxu0 0
        %886 = vmatprep.subr.bf16.mxu0 0
        %887 = vmatpush1.bf16.msra.mxu0 0
        %888 = vmatprep.subr.bf16.mxu0 0
        %889 = vmatpush1.bf16.msra.mxu0 0
        %890 = vmatprep.subr.bf16.mxu0 0
        %891 = vmatpush1.bf16.msra.mxu0 0
        %892 = vmatprep.subr.bf16.mxu0 0
        %893 = vmatpush1.bf16.msra.mxu0 0
        %894 = vmatprep.mubr.bf16.mxu0 0
        %895 = vmatmul.mubr.bf16.gmra.mrb[0].mxu0 %v832
        %v896 = vpop.f32.mrb[0].mxu0
        %v897 = vadd.f32 %v814, %v896
        %v898 = vpop.f32.mrb[0].mxu0
        %v899 = vadd.f32 %v818, %v898
        %v900 = vpop.f32.mrb[0].mxu0
        %v901 = vadd.f32 %v814, %v900
        %v902 = vpop.f32.mrb[0].mxu0
        %v903 = vadd.f32 %v818, %v902
        %904 = vmatprep.mubr.bf16.mxu0 0
        %905 = vmatmul.mubr.bf16.gmra.mrb[0].mxu0 %v835
        %v906 = vpop.f32.mrb[0].mxu0
        %v907 = vadd.f32 %v814, %v906
        %v908 = vpop.f32.mrb[0].mxu0
        %v909 = vadd.f32 %v818, %v908
        %v910 = vpop.f32.mrb[0].mxu0
        %v911 = vadd.f32 %v814, %v910
        %v912 = vpop.f32.mrb[0].mxu0
        %v913 = vadd.f32 %v818, %v912
        %914 = vmatprep.mubr.bf16.mxu0 0
        %915 = vmatmul.mubr.bf16.gmra.mrb[0].mxu0 %v838
        %v916 = vpop.f32.mrb[0].mxu0
        %v917 = vadd.f32 %v814, %v916
        %v918 = vpop.f32.mrb[0].mxu0
        %v919 = vadd.f32 %v818, %v918
        %v920 = vpop.f32.mrb[0].mxu0
        %v921 = vadd.f32 %v814, %v920
        %v922 = vpop.f32.mrb[0].mxu0
        %v923 = vadd.f32 %v818, %v922
        %924 = vmatprep.mubr.bf16.mxu0 0
        %925 = vmatmul.mubr.bf16.gmra.mrb[0].mxu0 %v841
        %v926 = vpop.f32.mrb[0].mxu0
        %v927 = vadd.f32 %v814, %v926
        %v928 = vpop.f32.mrb[0].mxu0
        %v929 = vadd.f32 %v818, %v928
        %v930 = vpop.f32.mrb[0].mxu0
        %v931 = vadd.f32 %v814, %v930
        %v932 = vpop.f32.mrb[0].mxu0
        %v933 = vadd.f32 %v818, %v932
        %934 = vmatprep.mubr.bf16.mxu0 0
        %935 = vmatmul.mubr.bf16.gmra.mrb[0].mxu0 %v844
        %v936 = vpop.f32.mrb[0].mxu0
        %v937 = vadd.f32 %v814, %v936
        %v938 = vpop.f32.mrb[0].mxu0
        %v939 = vadd.f32 %v818, %v938
        %v940 = vpop.f32.mrb[0].mxu0
        %v941 = vadd.f32 %v814, %v940
        %v942 = vpop.f32.mrb[0].mxu0
        %v943 = vadd.f32 %v818, %v942
        %944 = vmatprep.mubr.bf16.mxu0 0
        %945 = vmatmul.mubr.bf16.gmra.mrb[0].mxu0 %v847
        %v946 = vpop.f32.mrb[0].mxu0
        %v947 = vadd.f32 %v814, %v946
        %v948 = vpop.f32.mrb[0].mxu0
        %v949 = vadd.f32 %v818, %v948
        %v950 = vpop.f32.mrb[0].mxu0
        %v951 = vadd.f32 %v814, %v950
        %v952 = vpop.f32.mrb[0].mxu0
        %v953 = vadd.f32 %v818, %v952
        %954 = vmatprep.mubr.bf16.mxu0 0
        %955 = vmatmul.mubr.bf16.gmra.mrb[0].mxu0 %v850
        %v956 = vpop.f32.mrb[0].mxu0
        %v957 = vadd.f32 %v814, %v956
        %v958 = vpop.f32.mrb[0].mxu0
        %v959 = vadd.f32 %v818, %v958
        %v960 = vpop.f32.mrb[0].mxu0
        %v961 = vadd.f32 %v814, %v960
        %v962 = vpop.f32.mrb[0].mxu0
        %v963 = vadd.f32 %v818, %v962
        %964 = vmatprep.mubr.bf16.mxu0 0
        %965 = vmatmul.mubr.bf16.gmra.mrb[0].mxu0 %v853
        %v966 = vpop.f32.mrb[0].mxu0
        %v967 = vadd.f32 %v814, %v966
        %v968 = vpop.f32.mrb[0].mxu0
        %v969 = vadd.f32 %v818, %v968
        %v970 = vpop.f32.mrb[0].mxu0
        %v971 = vadd.f32 %v814, %v970
        %v972 = vpop.f32.mrb[0].mxu0
        %v973 = vadd.f32 %v818, %v972
        %974 = vdwg.mxu0
        %v975 = vmax.f32 %v897, 0.0
        %v976 = vmax.f32 %v899, 0.0
        %v977 = vmax.f32 %v901, 0.0
        %v978 = vmax.f32 %v903, 0.0
        %v979 = vmax.f32 %v907, 0.0
        %v980 = vmax.f32 %v909, 0.0
        %v981 = vmax.f32 %v911, 0.0
        %v982 = vmax.f32 %v913, 0.0
        %v983 = vmax.f32 %v917, 0.0
        %v984 = vmax.f32 %v919, 0.0
        %v985 = vmax.f32 %v921, 0.0
        %v986 = vmax.f32 %v923, 0.0
        %v987 = vmax.f32 %v927, 0.0
        %v988 = vmax.f32 %v929, 0.0
        %v989 = vmax.f32 %v931, 0.0
        %v990 = vmax.f32 %v933, 0.0
        %v991 = vmax.f32 %v937, 0.0
        %v992 = vmax.f32 %v939, 0.0
        %v993 = vmax.f32 %v941, 0.0
        %v994 = vmax.f32 %v943, 0.0
        %v995 = vmax.f32 %v947, 0.0
        %v996 = vmax.f32 %v949, 0.0
        %v997 = vmax.f32 %v951, 0.0
        %v998 = vmax.f32 %v953, 0.0
        %v999 = vmax.f32 %v957, 0.0
        %v1000 = vmax.f32 %v959, 0.0
        %v1001 = vmax.f32 %v961, 0.0
        %v1002 = vmax.f32 %v963, 0.0
        %v1003 = vmax.f32 %v967, 0.0
        %v1004 = vmax.f32 %v969, 0.0
        %v1005 = vmax.f32 %v971, 0.0
        %v1006 = vmax.f32 %v973, 0.0
        %v1007 = vpack.c.bf16 %v977, %v975
        %v1008 = vpack.c.bf16 %v981, %v979
        %v1009 = vpack.c.bf16 %v985, %v983
        %v1010 = vpack.c.bf16 %v989, %v987
        %v1011 = vpack.c.bf16 %v993, %v991
        %v1012 = vpack.c.bf16 %v997, %v995
        %v1013 = vpack.c.bf16 %v1001, %v999
        %v1014 = vpack.c.bf16 %v1005, %v1003
        %v1015 = vpack.c.bf16 %v978, %v976
        %v1016 = vpack.c.bf16 %v982, %v980
        %v1017 = vpack.c.bf16 %v986, %v984
        %v1018 = vpack.c.bf16 %v990, %v988
        %v1019 = vpack.c.bf16 %v994, %v992
        %v1020 = vpack.c.bf16 %v998, %v996
        %v1021 = vpack.c.bf16 %v1002, %v1000
        %v1022 = vpack.c.bf16 %v1006, %v1004
        %v1023 = vld [vmem:[#allocation8] sm:$0xf]
        %v1024 = vld [vmem:[#allocation8 + $0x4] sm:$0xf]
        %v1025 = vld [vmem:[#allocation8 + $0x8] sm:$0xf]
        %v1026 = vld [vmem:[#allocation8 + $0xc] sm:$0xf]
        %v1027 = vld [vmem:[#allocation8 + $0x10] sm:$0xf]
        %v1028 = vld [vmem:[#allocation8 + $0x14] sm:$0xf]
        %v1029 = vld [vmem:[#allocation8 + $0x18] sm:$0xf]
        %v1030 = vld [vmem:[#allocation8 + $0x1c] sm:$0xf]
        %v1031 = vld [vmem:[#allocation8 + $0x20] sm:$0xf]
        %v1032 = vld [vmem:[#allocation8 + $0x24] sm:$0xf]
        %v1033 = vld [vmem:[#allocation8 + $0x28] sm:$0xf]
        %v1034 = vld [vmem:[#allocation8 + $0x2c] sm:$0xf]
        %v1035 = vld [vmem:[#allocation8 + $0x30] sm:$0xf]
        %v1036 = vld [vmem:[#allocation8 + $0x34] sm:$0xf]
        %v1037 = vld [vmem:[#allocation8 + $0x38] sm:$0xf]
        %v1038 = vld [vmem:[#allocation8 + $0x3c] sm:$0xf]
        %v1039 = vld [vmem:[#allocation10] sm:$0x1]
        %v1041 = vlaneseq
        %v1042 = vshrl.u32 %v1041, 7
        %v1043 = vsub.s32 0, %v1042
        %v1044 = vrot.slane %v1039, %v1043
        %v1062 = vunpack.c.l.b16 %v1023
        %v1063 = vunpack.c.l.b16 %v1024
        %v1064 = vunpack.c.l.b16 %v1025
        %v1065 = vunpack.c.l.b16 %v1026
        %v1066 = vunpack.c.l.b16 %v1027
        %v1067 = vunpack.c.l.b16 %v1028
        %v1068 = vunpack.c.l.b16 %v1029
        %v1069 = vunpack.c.l.b16 %v1030
        %v1070 = vunpack.c.l.b16 %v1031
        %v1071 = vunpack.c.l.b16 %v1032
        %v1072 = vunpack.c.l.b16 %v1033
        %v1073 = vunpack.c.l.b16 %v1034
        %v1074 = vunpack.c.l.b16 %v1035
        %v1075 = vunpack.c.l.b16 %v1036
        %v1076 = vunpack.c.l.b16 %v1037
        %v1077 = vunpack.c.l.b16 %v1038
        %v1078 = vpack.c.b16 %v1063, %v1062
        %v1079 = vpack.c.b16 %v1065, %v1064
        %v1080 = vpack.c.b16 %v1067, %v1066
        %v1081 = vpack.c.b16 %v1069, %v1068
        %v1082 = vpack.c.b16 %v1071, %v1070
        %v1083 = vpack.c.b16 %v1073, %v1072
        %v1084 = vpack.c.b16 %v1075, %v1074
        %v1085 = vpack.c.b16 %v1077, %v1076
        %1094 = vmatprep.subr.bf16.mxu0 0
        %1095 = vmatpush1.bf16.msra.mxu0 %v1078
        %1096 = vmatprep.subr.bf16.mxu0 0
        %1097 = vmatpush1.bf16.msra.mxu0 %v1079
        %1098 = vmatprep.subr.bf16.mxu0 0
        %1099 = vmatpush1.bf16.msra.mxu0 %v1080
        %1100 = vmatprep.subr.bf16.mxu0 0
        %1101 = vmatpush1.bf16.msra.mxu0 %v1081
        %1102 = vmatprep.subr.bf16.mxu0 0
        %1103 = vmatpush1.bf16.msra.mxu0 %v1082
        %1104 = vmatprep.subr.bf16.mxu0 0
        %1105 = vmatpush1.bf16.msra.mxu0 %v1083
        %1106 = vmatprep.subr.bf16.mxu0 0
        %1107 = vmatpush1.bf16.msra.mxu0 %v1084
        %1108 = vmatprep.subr.bf16.mxu0 0
        %1109 = vmatpush1.bf16.msra.mxu0 %v1085
        %1110 = vmatprep.subr.bf16.mxu0 0
        %1111 = vmatpush1.bf16.msra.mxu0 0
        %1112 = vmatprep.subr.bf16.mxu0 0
        %1113 = vmatpush1.bf16.msra.mxu0 0
        %1114 = vmatprep.subr.bf16.mxu0 0
        %1115 = vmatpush1.bf16.msra.mxu0 0
        %1116 = vmatprep.subr.bf16.mxu0 0
        %1117 = vmatpush1.bf16.msra.mxu0 0
        %1118 = vmatprep.subr.bf16.mxu0 0
        %1119 = vmatpush1.bf16.msra.mxu0 0
        %1120 = vmatprep.subr.bf16.mxu0 0
        %1121 = vmatpush1.bf16.msra.mxu0 0
        %1122 = vmatprep.subr.bf16.mxu0 0
        %1123 = vmatpush1.bf16.msra.mxu0 0
        %1124 = vmatprep.subr.bf16.mxu0 0
        %1125 = vmatpush1.bf16.msra.mxu0 0
        %1126 = vmatprep.mubr.bf16.mxu0 0
        %1127 = vmatmul.mubr.bf16.gmra.mrb[0].mxu0 %v1007
        %v1128 = vpop.f32.mrb[0].mxu0
        %v1129 = vadd.f32 %v1044, %v1128
        %v1130 = vpop.f32.mrb[0].mxu0
        %v1131 = vpop.f32.mrb[0].mxu0
        %v1132 = vadd.f32 %v1044, %v1131
        %v1133 = vpop.f32.mrb[0].mxu0
        %1134 = vmatprep.mubr.bf16.mxu0 0
        %1135 = vmatmul.mubr.bf16.gmra.mrb[0].mxu0 %v1008
        %v1136 = vpop.f32.mrb[0].mxu0
        %v1137 = vadd.f32 %v1044, %v1136
        %v1138 = vpop.f32.mrb[0].mxu0
        %v1139 = vpop.f32.mrb[0].mxu0
        %v1140 = vadd.f32 %v1044, %v1139
        %v1141 = vpop.f32.mrb[0].mxu0
        %1142 = vmatprep.mubr.bf16.mxu0 0
        %1143 = vmatmul.mubr.bf16.gmra.mrb[0].mxu0 %v1009
        %v1144 = vpop.f32.mrb[0].mxu0
        %v1145 = vadd.f32 %v1044, %v1144
        %v1146 = vpop.f32.mrb[0].mxu0
        %v1147 = vpop.f32.mrb[0].mxu0
        %v1148 = vadd.f32 %v1044, %v1147
        %v1149 = vpop.f32.mrb[0].mxu0
        %1150 = vmatprep.mubr.bf16.mxu0 0
        %1151 = vmatmul.mubr.bf16.gmra.mrb[0].mxu0 %v1010
        %v1152 = vpop.f32.mrb[0].mxu0
        %v1153 = vadd.f32 %v1044, %v1152
        %v1154 = vpop.f32.mrb[0].mxu0
        %v1155 = vpop.f32.mrb[0].mxu0
        %v1156 = vadd.f32 %v1044, %v1155
        %v1157 = vpop.f32.mrb[0].mxu0
        %1158 = vmatprep.mubr.bf16.mxu0 0
        %1159 = vmatmul.mubr.bf16.gmra.mrb[0].mxu0 %v1011
        %v1160 = vpop.f32.mrb[0].mxu0
        %v1161 = vadd.f32 %v1044, %v1160
        %v1162 = vpop.f32.mrb[0].mxu0
        %v1163 = vpop.f32.mrb[0].mxu0
        %v1164 = vadd.f32 %v1044, %v1163
        %v1165 = vpop.f32.mrb[0].mxu0
        %1166 = vmatprep.mubr.bf16.mxu0 0
        %1167 = vmatmul.mubr.bf16.gmra.mrb[0].mxu0 %v1012
        %v1168 = vpop.f32.mrb[0].mxu0
        %v1169 = vadd.f32 %v1044, %v1168
        %v1170 = vpop.f32.mrb[0].mxu0
        %v1171 = vpop.f32.mrb[0].mxu0
        %v1172 = vadd.f32 %v1044, %v1171
        %v1173 = vpop.f32.mrb[0].mxu0
        %1174 = vmatprep.mubr.bf16.mxu0 0
        %1175 = vmatmul.mubr.bf16.gmra.mrb[0].mxu0 %v1013
        %v1176 = vpop.f32.mrb[0].mxu0
        %v1177 = vadd.f32 %v1044, %v1176
        %v1178 = vpop.f32.mrb[0].mxu0
        %v1179 = vpop.f32.mrb[0].mxu0
        %v1180 = vadd.f32 %v1044, %v1179
        %v1181 = vpop.f32.mrb[0].mxu0
        %1182 = vmatprep.mubr.bf16.mxu0 0
        %1183 = vmatmul.mubr.bf16.gmra.mrb[0].mxu0 %v1014
        %v1184 = vpop.f32.mrb[0].mxu0
        %v1185 = vadd.f32 %v1044, %v1184
        %v1186 = vpop.f32.mrb[0].mxu0
        %v1187 = vpop.f32.mrb[0].mxu0
        %v1188 = vadd.f32 %v1044, %v1187
        %v1189 = vpop.f32.mrb[0].mxu0
        %1190 = vdwg.mxu0
        %v1191 = vmax.f32 %v1129, 0.0
        %v1192 = vmax.f32 %v1132, 0.0
        %v1193 = vmax.f32 %v1137, 0.0
        %v1194 = vmax.f32 %v1140, 0.0
        %v1195 = vmax.f32 %v1145, 0.0
        %v1196 = vmax.f32 %v1148, 0.0
        %v1197 = vmax.f32 %v1153, 0.0
        %v1198 = vmax.f32 %v1156, 0.0
        %v1199 = vmax.f32 %v1161, 0.0
        %v1200 = vmax.f32 %v1164, 0.0
        %v1201 = vmax.f32 %v1169, 0.0
        %v1202 = vmax.f32 %v1172, 0.0
        %v1203 = vmax.f32 %v1177, 0.0
        %v1204 = vmax.f32 %v1180, 0.0
        %v1205 = vmax.f32 %v1185, 0.0
        %v1206 = vmax.f32 %v1188, 0.0
        %v1207 = vpack.c.bf16 %v1192, %v1191
        %v1208 = vpack.c.bf16 %v1194, %v1193
        %v1209 = vpack.c.bf16 %v1196, %v1195
        %v1210 = vpack.c.bf16 %v1198, %v1197
        %v1211 = vpack.c.bf16 %v1200, %v1199
        %v1212 = vpack.c.bf16 %v1202, %v1201
        %v1213 = vpack.c.bf16 %v1204, %v1203
        %v1214 = vpack.c.bf16 %v1206, %v1205
        %v1215 = vld [vmem:[#allocation11] sm:$0xf]
        %v1216 = vld [vmem:[#allocation11 + $0x4] sm:$0xf]
        %v1217 = vld [vmem:[#allocation11 + $0x8] sm:$0xf]
        %v1218 = vld [vmem:[#allocation11 + $0xc] sm:$0xf]
        %v1219 = vld [vmem:[#allocation11 + $0x10] sm:$0xf]
        %v1220 = vld [vmem:[#allocation11 + $0x14] sm:$0xf]
        %v1221 = vld [vmem:[#allocation11 + $0x18] sm:$0xf]
        %v1222 = vld [vmem:[#allocation11 + $0x1c] sm:$0xf]
        %v1223 = vld [vmem:[#allocation11 + $0x20] sm:$0xf]
        %v1224 = vld [vmem:[#allocation11 + $0x24] sm:$0xf]
        %v1225 = vld [vmem:[#allocation11 + $0x28] sm:$0xf]
        %v1226 = vld [vmem:[#allocation11 + $0x2c] sm:$0xf]
        %v1227 = vld [vmem:[#allocation11 + $0x30] sm:$0xf]
        %v1228 = vld [vmem:[#allocation11 + $0x34] sm:$0xf]
        %v1229 = vld [vmem:[#allocation11 + $0x38] sm:$0xf]
        %v1230 = vld [vmem:[#allocation11 + $0x3c] sm:$0xf]
        %v1231 = vld [vmem:[#allocation13] sm:$0x1]
        %v1233 = vlaneseq
        %v1234 = vshrl.u32 %v1233, 7
        %v1235 = vsub.s32 0, %v1234
        %v1236 = vrot.slane %v1231, %v1235
        %v1254 = vunpack.c.l.b16 %v1215
        %v1255 = vunpack.c.l.b16 %v1216
        %v1256 = vunpack.c.l.b16 %v1217
        %v1257 = vunpack.c.l.b16 %v1218
        %v1258 = vunpack.c.l.b16 %v1219
        %v1259 = vunpack.c.l.b16 %v1220
        %v1260 = vunpack.c.l.b16 %v1221
        %v1261 = vunpack.c.l.b16 %v1222
        %v1262 = vunpack.c.l.b16 %v1223
        %v1263 = vunpack.c.l.b16 %v1224
        %v1264 = vunpack.c.l.b16 %v1225
        %v1265 = vunpack.c.l.b16 %v1226
        %v1266 = vunpack.c.l.b16 %v1227
        %v1267 = vunpack.c.l.b16 %v1228
        %v1268 = vunpack.c.l.b16 %v1229
        %v1269 = vunpack.c.l.b16 %v1230
        %v1270 = vpack.c.b16 %v1255, %v1254
        %v1271 = vpack.c.b16 %v1257, %v1256
        %v1272 = vpack.c.b16 %v1259, %v1258
        %v1273 = vpack.c.b16 %v1261, %v1260
        %v1274 = vpack.c.b16 %v1263, %v1262
        %v1275 = vpack.c.b16 %v1265, %v1264
        %v1276 = vpack.c.b16 %v1267, %v1266
        %v1277 = vpack.c.b16 %v1269, %v1268
        %1286 = vmatprep.subr.bf16.mxu0 0
        %1287 = vmatpush1.bf16.msra.mxu0 %v1270
        %1288 = vmatprep.subr.bf16.mxu0 0
        %1289 = vmatpush1.bf16.msra.mxu0 %v1271
        %1290 = vmatprep.subr.bf16.mxu0 0
        %1291 = vmatpush1.bf16.msra.mxu0 %v1272
        %1292 = vmatprep.subr.bf16.mxu0 0
        %1293 = vmatpush1.bf16.msra.mxu0 %v1273
        %1294 = vmatprep.subr.bf16.mxu0 0
        %1295 = vmatpush1.bf16.msra.mxu0 %v1274
        %1296 = vmatprep.subr.bf16.mxu0 0
        %1297 = vmatpush1.bf16.msra.mxu0 %v1275
        %1298 = vmatprep.subr.bf16.mxu0 0
        %1299 = vmatpush1.bf16.msra.mxu0 %v1276
        %1300 = vmatprep.subr.bf16.mxu0 0
        %1301 = vmatpush1.bf16.msra.mxu0 %v1277
        %1302 = vmatprep.subr.bf16.mxu0 0
        %1303 = vmatpush1.bf16.msra.mxu0 0
        %1304 = vmatprep.subr.bf16.mxu0 0
        %1305 = vmatpush1.bf16.msra.mxu0 0
        %1306 = vmatprep.subr.bf16.mxu0 0
        %1307 = vmatpush1.bf16.msra.mxu0 0
        %1308 = vmatprep.subr.bf16.mxu0 0
        %1309 = vmatpush1.bf16.msra.mxu0 0
        %1310 = vmatprep.subr.bf16.mxu0 0
        %1311 = vmatpush1.bf16.msra.mxu0 0
        %1312 = vmatprep.subr.bf16.mxu0 0
        %1313 = vmatpush1.bf16.msra.mxu0 0
        %1314 = vmatprep.subr.bf16.mxu0 0
        %1315 = vmatpush1.bf16.msra.mxu0 0
        %1316 = vmatprep.subr.bf16.mxu0 0
        %1317 = vmatpush1.bf16.msra.mxu0 0
        %1318 = vmatprep.mubr.bf16.mxu0 0
        %1319 = vmatmul.mubr.bf16.gmra.mrb[0].mxu0 %v1207
        %v1320 = vpop.f32.mrb[0].mxu0
        %v1321 = vadd.f32 %v1236, %v1320
        %v1322 = vpop.f32.mrb[0].mxu0
        %v1323 = vpop.f32.mrb[0].mxu0
        %v1324 = vadd.f32 %v1236, %v1323
        %v1325 = vpop.f32.mrb[0].mxu0
        %1326 = vmatprep.mubr.bf16.mxu0 0
        %1327 = vmatmul.mubr.bf16.gmra.mrb[0].mxu0 %v1208
        %v1328 = vpop.f32.mrb[0].mxu0
        %v1329 = vadd.f32 %v1236, %v1328
        %v1330 = vpop.f32.mrb[0].mxu0
        %v1331 = vpop.f32.mrb[0].mxu0
        %v1332 = vadd.f32 %v1236, %v1331
        %v1333 = vpop.f32.mrb[0].mxu0
        %1334 = vmatprep.mubr.bf16.mxu0 0
        %1335 = vmatmul.mubr.bf16.gmra.mrb[0].mxu0 %v1209
        %v1336 = vpop.f32.mrb[0].mxu0
        %v1337 = vadd.f32 %v1236, %v1336
        %v1338 = vpop.f32.mrb[0].mxu0
        %v1339 = vpop.f32.mrb[0].mxu0
        %v1340 = vadd.f32 %v1236, %v1339
        %v1341 = vpop.f32.mrb[0].mxu0
        %1342 = vmatprep.mubr.bf16.mxu0 0
        %1343 = vmatmul.mubr.bf16.gmra.mrb[0].mxu0 %v1210
        %v1344 = vpop.f32.mrb[0].mxu0
        %v1345 = vadd.f32 %v1236, %v1344
        %v1346 = vpop.f32.mrb[0].mxu0
        %v1347 = vpop.f32.mrb[0].mxu0
        %v1348 = vadd.f32 %v1236, %v1347
        %v1349 = vpop.f32.mrb[0].mxu0
        %1350 = vmatprep.mubr.bf16.mxu0 0
        %1351 = vmatmul.mubr.bf16.gmra.mrb[0].mxu0 %v1211
        %v1352 = vpop.f32.mrb[0].mxu0
        %v1353 = vadd.f32 %v1236, %v1352
        %v1354 = vpop.f32.mrb[0].mxu0
        %v1355 = vpop.f32.mrb[0].mxu0
        %v1356 = vadd.f32 %v1236, %v1355
        %v1357 = vpop.f32.mrb[0].mxu0
        %1358 = vmatprep.mubr.bf16.mxu0 0
        %1359 = vmatmul.mubr.bf16.gmra.mrb[0].mxu0 %v1212
        %v1360 = vpop.f32.mrb[0].mxu0
        %v1361 = vadd.f32 %v1236, %v1360
        %v1362 = vpop.f32.mrb[0].mxu0
        %v1363 = vpop.f32.mrb[0].mxu0
        %v1364 = vadd.f32 %v1236, %v1363
        %v1365 = vpop.f32.mrb[0].mxu0
        %1366 = vmatprep.mubr.bf16.mxu0 0
        %1367 = vmatmul.mubr.bf16.gmra.mrb[0].mxu0 %v1213
        %v1368 = vpop.f32.mrb[0].mxu0
        %v1369 = vadd.f32 %v1236, %v1368
        %v1370 = vpop.f32.mrb[0].mxu0
        %v1371 = vpop.f32.mrb[0].mxu0
        %v1372 = vadd.f32 %v1236, %v1371
        %v1373 = vpop.f32.mrb[0].mxu0
        %1374 = vmatprep.mubr.bf16.mxu0 0
        %1375 = vmatmul.mubr.bf16.gmra.mrb[0].mxu0 %v1214
        %v1376 = vpop.f32.mrb[0].mxu0
        %v1377 = vadd.f32 %v1236, %v1376
        %v1378 = vpop.f32.mrb[0].mxu0
        %v1379 = vpop.f32.mrb[0].mxu0
        %v1380 = vadd.f32 %v1236, %v1379
        %v1381 = vpop.f32.mrb[0].mxu0
        %1382 = vdwg.mxu0
        %v1383 = vmax.f32 %v1321, 0.0
        %v1384 = vmax.f32 %v1324, 0.0
        %v1385 = vmax.f32 %v1329, 0.0
        %v1386 = vmax.f32 %v1332, 0.0
        %v1387 = vmax.f32 %v1337, 0.0
        %v1388 = vmax.f32 %v1340, 0.0
        %v1389 = vmax.f32 %v1345, 0.0
        %v1390 = vmax.f32 %v1348, 0.0
        %v1391 = vmax.f32 %v1353, 0.0
        %v1392 = vmax.f32 %v1356, 0.0
        %v1393 = vmax.f32 %v1361, 0.0
        %v1394 = vmax.f32 %v1364, 0.0
        %v1395 = vmax.f32 %v1369, 0.0
        %v1396 = vmax.f32 %v1372, 0.0
        %v1397 = vmax.f32 %v1377, 0.0
        %v1398 = vmax.f32 %v1380, 0.0
        %v1399 = vpack.c.bf16 %v1384, %v1383
        %v1400 = vpack.c.bf16 %v1386, %v1385
        %v1401 = vpack.c.bf16 %v1388, %v1387
        %v1402 = vpack.c.bf16 %v1390, %v1389
        %v1403 = vpack.c.bf16 %v1392, %v1391
        %v1404 = vpack.c.bf16 %v1394, %v1393
        %v1405 = vpack.c.bf16 %v1396, %v1395
        %v1406 = vpack.c.bf16 %v1398, %v1397
        %v1407 = vld [vmem:[#allocation14] sm:$0xf]
        %v1408 = vld [vmem:[#allocation14 + $0x4] sm:$0xf]
        %v1409 = vld [vmem:[#allocation14 + $0x8] sm:$0xf]
        %v1410 = vld [vmem:[#allocation14 + $0xc] sm:$0xf]
        %v1411 = vld [vmem:[#allocation14 + $0x10] sm:$0xf]
        %v1412 = vld [vmem:[#allocation14 + $0x14] sm:$0xf]
        %v1413 = vld [vmem:[#allocation14 + $0x18] sm:$0xf]
        %v1414 = vld [vmem:[#allocation14 + $0x1c] sm:$0xf]
        %v1415 = vld [vmem:[#allocation14 + $0x20] sm:$0xf]
        %v1416 = vld [vmem:[#allocation14 + $0x24] sm:$0xf]
        %v1417 = vld [vmem:[#allocation14 + $0x28] sm:$0xf]
        %v1418 = vld [vmem:[#allocation14 + $0x2c] sm:$0xf]
        %v1419 = vld [vmem:[#allocation14 + $0x30] sm:$0xf]
        %v1420 = vld [vmem:[#allocation14 + $0x34] sm:$0xf]
        %v1421 = vld [vmem:[#allocation14 + $0x38] sm:$0xf]
        %v1422 = vld [vmem:[#allocation14 + $0x3c] sm:$0xf]
        %v1423 = vld [vmem:[#allocation16] sm:$0x1]
        %v1425 = vlaneseq
        %v1426 = vshrl.u32 %v1425, 7
        %v1427 = vsub.s32 0, %v1426
        %v1428 = vrot.slane %v1423, %v1427
        %v1446 = vunpack.c.l.b16 %v1407
        %v1447 = vunpack.c.l.b16 %v1408
        %v1448 = vunpack.c.l.b16 %v1409
        %v1449 = vunpack.c.l.b16 %v1410
        %v1450 = vunpack.c.l.b16 %v1411
        %v1451 = vunpack.c.l.b16 %v1412
        %v1452 = vunpack.c.l.b16 %v1413
        %v1453 = vunpack.c.l.b16 %v1414
        %v1454 = vunpack.c.l.b16 %v1415
        %v1455 = vunpack.c.l.b16 %v1416
        %v1456 = vunpack.c.l.b16 %v1417
        %v1457 = vunpack.c.l.b16 %v1418
        %v1458 = vunpack.c.l.b16 %v1419
        %v1459 = vunpack.c.l.b16 %v1420
        %v1460 = vunpack.c.l.b16 %v1421
        %v1461 = vunpack.c.l.b16 %v1422
        %v1462 = vpack.c.b16 %v1447, %v1446
        %v1463 = vpack.c.b16 %v1449, %v1448
        %v1464 = vpack.c.b16 %v1451, %v1450
        %v1465 = vpack.c.b16 %v1453, %v1452
        %v1466 = vpack.c.b16 %v1455, %v1454
        %v1467 = vpack.c.b16 %v1457, %v1456
        %v1468 = vpack.c.b16 %v1459, %v1458
        %v1469 = vpack.c.b16 %v1461, %v1460
        %1478 = vmatprep.subr.bf16.mxu0 0
        %1479 = vmatpush1.bf16.msra.mxu0 %v1462
        %1480 = vmatprep.subr.bf16.mxu0 0
        %1481 = vmatpush1.bf16.msra.mxu0 %v1463
        %1482 = vmatprep.subr.bf16.mxu0 0
        %1483 = vmatpush1.bf16.msra.mxu0 %v1464
        %1484 = vmatprep.subr.bf16.mxu0 0
        %1485 = vmatpush1.bf16.msra.mxu0 %v1465
        %1486 = vmatprep.subr.bf16.mxu0 0
        %1487 = vmatpush1.bf16.msra.mxu0 %v1466
        %1488 = vmatprep.subr.bf16.mxu0 0
        %1489 = vmatpush1.bf16.msra.mxu0 %v1467
        %1490 = vmatprep.subr.bf16.mxu0 0
        %1491 = vmatpush1.bf16.msra.mxu0 %v1468
        %1492 = vmatprep.subr.bf16.mxu0 0
        %1493 = vmatpush1.bf16.msra.mxu0 %v1469
        %1494 = vmatprep.subr.bf16.mxu0 0
        %1495 = vmatpush1.bf16.msra.mxu0 0
        %1496 = vmatprep.subr.bf16.mxu0 0
        %1497 = vmatpush1.bf16.msra.mxu0 0
        %1498 = vmatprep.subr.bf16.mxu0 0
        %1499 = vmatpush1.bf16.msra.mxu0 0
        %1500 = vmatprep.subr.bf16.mxu0 0
        %1501 = vmatpush1.bf16.msra.mxu0 0
        %1502 = vmatprep.subr.bf16.mxu0 0
        %1503 = vmatpush1.bf16.msra.mxu0 0
        %1504 = vmatprep.subr.bf16.mxu0 0
        %1505 = vmatpush1.bf16.msra.mxu0 0
        %1506 = vmatprep.subr.bf16.mxu0 0
        %1507 = vmatpush1.bf16.msra.mxu0 0
        %1508 = vmatprep.subr.bf16.mxu0 0
        %1509 = vmatpush1.bf16.msra.mxu0 0
        %1510 = vmatprep.mubr.bf16.mxu0 0
        %1511 = vmatmul.mubr.bf16.gmra.mrb[0].mxu0 %v1399
        %v1512 = vpop.f32.mrb[0].mxu0
        %v1513 = vadd.f32 %v1428, %v1512
        %v1514 = vpop.f32.mrb[0].mxu0
        %v1515 = vpop.f32.mrb[0].mxu0
        %v1516 = vadd.f32 %v1428, %v1515
        %v1517 = vpop.f32.mrb[0].mxu0
        %1518 = vmatprep.mubr.bf16.mxu0 0
        %1519 = vmatmul.mubr.bf16.gmra.mrb[0].mxu0 %v1400
        %v1520 = vpop.f32.mrb[0].mxu0
        %v1521 = vadd.f32 %v1428, %v1520
        %v1522 = vpop.f32.mrb[0].mxu0
        %v1523 = vpop.f32.mrb[0].mxu0
        %v1524 = vadd.f32 %v1428, %v1523
        %v1525 = vpop.f32.mrb[0].mxu0
        %1526 = vmatprep.mubr.bf16.mxu0 0
        %1527 = vmatmul.mubr.bf16.gmra.mrb[0].mxu0 %v1401
        %v1528 = vpop.f32.mrb[0].mxu0
        %v1529 = vadd.f32 %v1428, %v1528
        %v1530 = vpop.f32.mrb[0].mxu0
        %v1531 = vpop.f32.mrb[0].mxu0
        %v1532 = vadd.f32 %v1428, %v1531
        %v1533 = vpop.f32.mrb[0].mxu0
        %1534 = vmatprep.mubr.bf16.mxu0 0
        %1535 = vmatmul.mubr.bf16.gmra.mrb[0].mxu0 %v1402
        %v1536 = vpop.f32.mrb[0].mxu0
        %v1537 = vadd.f32 %v1428, %v1536
        %v1538 = vpop.f32.mrb[0].mxu0
        %v1539 = vpop.f32.mrb[0].mxu0
        %v1540 = vadd.f32 %v1428, %v1539
        %v1541 = vpop.f32.mrb[0].mxu0
        %1542 = vmatprep.mubr.bf16.mxu0 0
        %1543 = vmatmul.mubr.bf16.gmra.mrb[0].mxu0 %v1403
        %v1544 = vpop.f32.mrb[0].mxu0
        %v1545 = vadd.f32 %v1428, %v1544
        %v1546 = vpop.f32.mrb[0].mxu0
        %v1547 = vpop.f32.mrb[0].mxu0
        %v1548 = vadd.f32 %v1428, %v1547
        %v1549 = vpop.f32.mrb[0].mxu0
        %1550 = vmatprep.mubr.bf16.mxu0 0
        %1551 = vmatmul.mubr.bf16.gmra.mrb[0].mxu0 %v1404
        %v1552 = vpop.f32.mrb[0].mxu0
        %v1553 = vadd.f32 %v1428, %v1552
        %v1554 = vpop.f32.mrb[0].mxu0
        %v1555 = vpop.f32.mrb[0].mxu0
        %v1556 = vadd.f32 %v1428, %v1555
        %v1557 = vpop.f32.mrb[0].mxu0
        %1558 = vmatprep.mubr.bf16.mxu0 0
        %1559 = vmatmul.mubr.bf16.gmra.mrb[0].mxu0 %v1405
        %v1560 = vpop.f32.mrb[0].mxu0
        %v1561 = vadd.f32 %v1428, %v1560
        %v1562 = vpop.f32.mrb[0].mxu0
        %v1563 = vpop.f32.mrb[0].mxu0
        %v1564 = vadd.f32 %v1428, %v1563
        %v1565 = vpop.f32.mrb[0].mxu0
        %1566 = vmatprep.mubr.bf16.mxu0 0
        %1567 = vmatmul.mubr.bf16.gmra.mrb[0].mxu0 %v1406
        %v1568 = vpop.f32.mrb[0].mxu0
        %v1569 = vadd.f32 %v1428, %v1568
        %v1570 = vpop.f32.mrb[0].mxu0
        %v1571 = vpop.f32.mrb[0].mxu0
        %v1572 = vadd.f32 %v1428, %v1571
        %v1573 = vpop.f32.mrb[0].mxu0
        %1574 = vdwg.mxu0
        %v1575 = vmax.f32 %v1513, 0.0
        %v1576 = vmax.f32 %v1516, 0.0
        %v1577 = vmax.f32 %v1521, 0.0
        %v1578 = vmax.f32 %v1524, 0.0
        %v1579 = vmax.f32 %v1529, 0.0
        %v1580 = vmax.f32 %v1532, 0.0
        %v1581 = vmax.f32 %v1537, 0.0
        %v1582 = vmax.f32 %v1540, 0.0
        %v1583 = vmax.f32 %v1545, 0.0
        %v1584 = vmax.f32 %v1548, 0.0
        %v1585 = vmax.f32 %v1553, 0.0
        %v1586 = vmax.f32 %v1556, 0.0
        %v1587 = vmax.f32 %v1561, 0.0
        %v1588 = vmax.f32 %v1564, 0.0
        %v1589 = vmax.f32 %v1569, 0.0
        %v1590 = vmax.f32 %v1572, 0.0
        %v1591 = vpack.c.bf16 %v1576, %v1575
        %v1592 = vpack.c.bf16 %v1578, %v1577
        %v1593 = vpack.c.bf16 %v1580, %v1579
        %v1594 = vpack.c.bf16 %v1582, %v1581
        %v1595 = vpack.c.bf16 %v1584, %v1583
        %v1596 = vpack.c.bf16 %v1586, %v1585
        %v1597 = vpack.c.bf16 %v1588, %v1587
        %v1598 = vpack.c.bf16 %v1590, %v1589
        %v1599 = vld [vmem:[#allocation17] sm:$0xff]
        %v1600 = vld [vmem:[#allocation17 + $0x8] sm:$0xff]
        %v1601 = vld [vmem:[#allocation17 + $0x10] sm:$0xff]
        %v1602 = vld [vmem:[#allocation17 + $0x18] sm:$0xff]
        %v1603 = vld [vmem:[#allocation17 + $0x20] sm:$0xff]
        %v1604 = vld [vmem:[#allocation17 + $0x28] sm:$0xff]
        %v1605 = vld [vmem:[#allocation17 + $0x30] sm:$0xff]
        %v1606 = vld [vmem:[#allocation17 + $0x38] sm:$0xff]
        %v1607 = vld [vmem:[#allocation17 + $0x40] sm:$0xff]
        %v1608 = vld [vmem:[#allocation17 + $0x48] sm:$0xff]
        %v1609 = vld [vmem:[#allocation17 + $0x50] sm:$0xff]
        %v1610 = vld [vmem:[#allocation17 + $0x58] sm:$0xff]
        %v1611 = vld [vmem:[#allocation17 + $0x60] sm:$0xff]
        %v1612 = vld [vmem:[#allocation17 + $0x68] sm:$0xff]
        %v1613 = vld [vmem:[#allocation17 + $0x70] sm:$0xff]
        %v1614 = vld [vmem:[#allocation17 + $0x78] sm:$0xff]
        %v1615 = vld [vmem:[#allocation19] sm:$0x3]
        %v1617 = vlaneseq
        %v1618 = vshrl.u32 %v1617, 7
        %v1619 = vsub.s32 0, %v1618
        %v1620 = vrot.slane %v1615, %v1619
        %v1621 = vlaneseq
        %v1622 = vshrl.u32 %v1621, 7
        %v1623 = vsub.s32 1, %v1622
        %v1624 = vrot.slane %v1615, %v1623
        %v1643 = vunpack.c.l.b16 %v1599
        %v1644 = vunpack.c.h.b16 %v1599
        %v1645 = vunpack.c.l.b16 %v1600
        %v1646 = vunpack.c.h.b16 %v1600
        %v1647 = vunpack.c.l.b16 %v1601
        %v1648 = vunpack.c.h.b16 %v1601
        %v1649 = vunpack.c.l.b16 %v1602
        %v1650 = vunpack.c.h.b16 %v1602
        %v1651 = vunpack.c.l.b16 %v1603
        %v1652 = vunpack.c.h.b16 %v1603
        %v1653 = vunpack.c.l.b16 %v1604
        %v1654 = vunpack.c.h.b16 %v1604
        %v1655 = vunpack.c.l.b16 %v1605
        %v1656 = vunpack.c.h.b16 %v1605
        %v1657 = vunpack.c.l.b16 %v1606
        %v1658 = vunpack.c.h.b16 %v1606
        %v1659 = vunpack.c.l.b16 %v1607
        %v1660 = vunpack.c.h.b16 %v1607
        %v1661 = vunpack.c.l.b16 %v1608
        %v1662 = vunpack.c.h.b16 %v1608
        %v1663 = vunpack.c.l.b16 %v1609
        %v1664 = vunpack.c.h.b16 %v1609
        %v1665 = vunpack.c.l.b16 %v1610
        %v1666 = vunpack.c.h.b16 %v1610
        %v1667 = vunpack.c.l.b16 %v1611
        %v1668 = vunpack.c.h.b16 %v1611
        %v1669 = vunpack.c.l.b16 %v1612
        %v1670 = vunpack.c.h.b16 %v1612
        %v1671 = vunpack.c.l.b16 %v1613
        %v1672 = vunpack.c.h.b16 %v1613
        %v1673 = vunpack.c.l.b16 %v1614
        %v1674 = vunpack.c.h.b16 %v1614
        %v1675 = vpack.c.b16 %v1645, %v1643
        %v1676 = vpack.c.b16 %v1646, %v1644
        %v1677 = vpack.c.b16 %v1649, %v1647
        %v1678 = vpack.c.b16 %v1650, %v1648
        %v1679 = vpack.c.b16 %v1653, %v1651
        %v1680 = vpack.c.b16 %v1654, %v1652
        %v1681 = vpack.c.b16 %v1657, %v1655
        %v1682 = vpack.c.b16 %v1658, %v1656
        %v1683 = vpack.c.b16 %v1661, %v1659
        %v1684 = vpack.c.b16 %v1662, %v1660
        %v1685 = vpack.c.b16 %v1665, %v1663
        %v1686 = vpack.c.b16 %v1666, %v1664
        %v1687 = vpack.c.b16 %v1669, %v1667
        %v1688 = vpack.c.b16 %v1670, %v1668
        %v1689 = vpack.c.b16 %v1673, %v1671
        %v1690 = vpack.c.b16 %v1674, %v1672
        %1707 = vmatprep.subr.bf16.mxu0 %v1676
        %1708 = vmatpush1.bf16.msra.mxu0 %v1675
        %1709 = vmatprep.subr.bf16.mxu0 %v1678
        %1710 = vmatpush1.bf16.msra.mxu0 %v1677
        %1711 = vmatprep.subr.bf16.mxu0 %v1680
        %1712 = vmatpush1.bf16.msra.mxu0 %v1679
        %1713 = vmatprep.subr.bf16.mxu0 %v1682
        %1714 = vmatpush1.bf16.msra.mxu0 %v1681
        %1715 = vmatprep.subr.bf16.mxu0 %v1684
        %1716 = vmatpush1.bf16.msra.mxu0 %v1683
        %1717 = vmatprep.subr.bf16.mxu0 %v1686
        %1718 = vmatpush1.bf16.msra.mxu0 %v1685
        %1719 = vmatprep.subr.bf16.mxu0 %v1688
        %1720 = vmatpush1.bf16.msra.mxu0 %v1687
        %1721 = vmatprep.subr.bf16.mxu0 %v1690
        %1722 = vmatpush1.bf16.msra.mxu0 %v1689
        %1723 = vmatprep.subr.bf16.mxu0 0
        %1724 = vmatpush1.bf16.msra.mxu0 0
        %1725 = vmatprep.subr.bf16.mxu0 0
        %1726 = vmatpush1.bf16.msra.mxu0 0
        %1727 = vmatprep.subr.bf16.mxu0 0
        %1728 = vmatpush1.bf16.msra.mxu0 0
        %1729 = vmatprep.subr.bf16.mxu0 0
        %1730 = vmatpush1.bf16.msra.mxu0 0
        %1731 = vmatprep.subr.bf16.mxu0 0
        %1732 = vmatpush1.bf16.msra.mxu0 0
        %1733 = vmatprep.subr.bf16.mxu0 0
        %1734 = vmatpush1.bf16.msra.mxu0 0
        %1735 = vmatprep.subr.bf16.mxu0 0
        %1736 = vmatpush1.bf16.msra.mxu0 0
        %1737 = vmatprep.subr.bf16.mxu0 0
        %1738 = vmatpush1.bf16.msra.mxu0 0
        %1739 = vmatprep.mubr.bf16.mxu0 0
        %1740 = vmatmul.mubr.bf16.gmra.mrb[0].mxu0 %v1591
        %v1741 = vpop.f32.mrb[0].mxu0
        %v1742 = vadd.f32 %v1620, %v1741
        %v1743 = vpop.f32.mrb[0].mxu0
        %v1744 = vadd.f32 %v1624, %v1743
        %v1745 = vpop.f32.mrb[0].mxu0
        %v1746 = vadd.f32 %v1620, %v1745
        %v1747 = vpop.f32.mrb[0].mxu0
        %v1748 = vadd.f32 %v1624, %v1747
        %1749 = vmatprep.mubr.bf16.mxu0 0
        %1750 = vmatmul.mubr.bf16.gmra.mrb[0].mxu0 %v1592
        %v1751 = vpop.f32.mrb[0].mxu0
        %v1752 = vadd.f32 %v1620, %v1751
        %v1753 = vpop.f32.mrb[0].mxu0
        %v1754 = vadd.f32 %v1624, %v1753
        %v1755 = vpop.f32.mrb[0].mxu0
        %v1756 = vadd.f32 %v1620, %v1755
        %v1757 = vpop.f32.mrb[0].mxu0
        %v1758 = vadd.f32 %v1624, %v1757
        %1759 = vmatprep.mubr.bf16.mxu0 0
        %1760 = vmatmul.mubr.bf16.gmra.mrb[0].mxu0 %v1593
        %v1761 = vpop.f32.mrb[0].mxu0
        %v1762 = vadd.f32 %v1620, %v1761
        %v1763 = vpop.f32.mrb[0].mxu0
        %v1764 = vadd.f32 %v1624, %v1763
        %v1765 = vpop.f32.mrb[0].mxu0
        %v1766 = vadd.f32 %v1620, %v1765
        %v1767 = vpop.f32.mrb[0].mxu0
        %v1768 = vadd.f32 %v1624, %v1767
        %1769 = vmatprep.mubr.bf16.mxu0 0
        %1770 = vmatmul.mubr.bf16.gmra.mrb[0].mxu0 %v1594
        %v1771 = vpop.f32.mrb[0].mxu0
        %v1772 = vadd.f32 %v1620, %v1771
        %v1773 = vpop.f32.mrb[0].mxu0
        %v1774 = vadd.f32 %v1624, %v1773
        %v1775 = vpop.f32.mrb[0].mxu0
        %v1776 = vadd.f32 %v1620, %v1775
        %v1777 = vpop.f32.mrb[0].mxu0
        %v1778 = vadd.f32 %v1624, %v1777
        %1779 = vmatprep.mubr.bf16.mxu0 0
        %1780 = vmatmul.mubr.bf16.gmra.mrb[0].mxu0 %v1595
        %v1781 = vpop.f32.mrb[0].mxu0
        %v1782 = vadd.f32 %v1620, %v1781
        %v1783 = vpop.f32.mrb[0].mxu0
        %v1784 = vadd.f32 %v1624, %v1783
        %v1785 = vpop.f32.mrb[0].mxu0
        %v1786 = vadd.f32 %v1620, %v1785
        %v1787 = vpop.f32.mrb[0].mxu0
        %v1788 = vadd.f32 %v1624, %v1787
        %1789 = vmatprep.mubr.bf16.mxu0 0
        %1790 = vmatmul.mubr.bf16.gmra.mrb[0].mxu0 %v1596
        %v1791 = vpop.f32.mrb[0].mxu0
        %v1792 = vadd.f32 %v1620, %v1791
        %v1793 = vpop.f32.mrb[0].mxu0
        %v1794 = vadd.f32 %v1624, %v1793
        %v1795 = vpop.f32.mrb[0].mxu0
        %v1796 = vadd.f32 %v1620, %v1795
        %v1797 = vpop.f32.mrb[0].mxu0
        %v1798 = vadd.f32 %v1624, %v1797
        %1799 = vmatprep.mubr.bf16.mxu0 0
        %1800 = vmatmul.mubr.bf16.gmra.mrb[0].mxu0 %v1597
        %v1801 = vpop.f32.mrb[0].mxu0
        %v1802 = vadd.f32 %v1620, %v1801
        %v1803 = vpop.f32.mrb[0].mxu0
        %v1804 = vadd.f32 %v1624, %v1803
        %v1805 = vpop.f32.mrb[0].mxu0
        %v1806 = vadd.f32 %v1620, %v1805
        %v1807 = vpop.f32.mrb[0].mxu0
        %v1808 = vadd.f32 %v1624, %v1807
        %1809 = vmatprep.mubr.bf16.mxu0 0
        %1810 = vmatmul.mubr.bf16.gmra.mrb[0].mxu0 %v1598
        %v1811 = vpop.f32.mrb[0].mxu0
        %v1812 = vadd.f32 %v1620, %v1811
        %v1813 = vpop.f32.mrb[0].mxu0
        %v1814 = vadd.f32 %v1624, %v1813
        %v1815 = vpop.f32.mrb[0].mxu0
        %v1816 = vadd.f32 %v1620, %v1815
        %v1817 = vpop.f32.mrb[0].mxu0
        %v1818 = vadd.f32 %v1624, %v1817
        %1819 = vdwg.mxu0
        %v1820 = vmul.f32 %v1742, 0.5
        %v1821 = vmul.f32 %v1746, 0.5
        %v1822 = vmul.f32 %v1752, 0.5
        %v1823 = vmul.f32 %v1756, 0.5
        %v1824 = vmul.f32 %v1762, 0.5
        %v1825 = vmul.f32 %v1766, 0.5
        %v1826 = vmul.f32 %v1772, 0.5
        %v1827 = vmul.f32 %v1776, 0.5
        %v1828 = vmul.f32 %v1782, 0.5
        %v1829 = vmul.f32 %v1786, 0.5
        %v1830 = vmul.f32 %v1792, 0.5
        %v1831 = vmul.f32 %v1796, 0.5
        %v1832 = vmul.f32 %v1802, 0.5
        %v1833 = vmul.f32 %v1806, 0.5
        %v1834 = vmul.f32 %v1812, 0.5
        %v1835 = vmul.f32 %v1816, 0.5
        %v1836 = vtanh.pop %v1820
        %v1837 = vtanh.pop %v1821
        %v1838 = vtanh.pop %v1822
        %v1839 = vtanh.pop %v1823
        %v1840 = vtanh.pop %v1824
        %v1841 = vtanh.pop %v1825
        %v1842 = vtanh.pop %v1826
        %v1843 = vtanh.pop %v1827
        %v1844 = vtanh.pop %v1828
        %v1845 = vtanh.pop %v1829
        %v1846 = vtanh.pop %v1830
        %v1847 = vtanh.pop %v1831
        %v1848 = vtanh.pop %v1832
        %v1849 = vtanh.pop %v1833
        %v1850 = vtanh.pop %v1834
        %v1851 = vtanh.pop %v1835
        %v1852 = vadd.f32 %v1836, 1.0
        %v1853 = vadd.f32 %v1837, 1.0
        %v1854 = vadd.f32 %v1838, 1.0
        %v1855 = vadd.f32 %v1839, 1.0
        %v1856 = vadd.f32 %v1840, 1.0
        %v1857 = vadd.f32 %v1841, 1.0
        %v1858 = vadd.f32 %v1842, 1.0
        %v1859 = vadd.f32 %v1843, 1.0
        %v1860 = vadd.f32 %v1844, 1.0
        %v1861 = vadd.f32 %v1845, 1.0
        %v1862 = vadd.f32 %v1846, 1.0
        %v1863 = vadd.f32 %v1847, 1.0
        %v1864 = vadd.f32 %v1848, 1.0
        %v1865 = vadd.f32 %v1849, 1.0
        %v1866 = vadd.f32 %v1850, 1.0
        %v1867 = vadd.f32 %v1851, 1.0
        %v1868 = vmul.f32 %v1852, 0.5
        %v1869 = vmul.f32 %v1853, 0.5
        %v1870 = vmul.f32 %v1854, 0.5
        %v1871 = vmul.f32 %v1855, 0.5
        %v1872 = vmul.f32 %v1856, 0.5
        %v1873 = vmul.f32 %v1857, 0.5
        %v1874 = vmul.f32 %v1858, 0.5
        %v1875 = vmul.f32 %v1859, 0.5
        %v1876 = vmul.f32 %v1860, 0.5
        %v1877 = vmul.f32 %v1861, 0.5
        %v1878 = vmul.f32 %v1862, 0.5
        %v1879 = vmul.f32 %v1863, 0.5
        %v1880 = vmul.f32 %v1864, 0.5
        %v1881 = vmul.f32 %v1865, 0.5
        %v1882 = vmul.f32 %v1866, 0.5
        %v1883 = vmul.f32 %v1867, 0.5
        %v1884 = vmul.f32 %v1868, 6.2831855
        %v1885 = vmul.f32 %v1869, 6.2831855
        %v1886 = vmul.f32 %v1870, 6.2831855
        %v1887 = vmul.f32 %v1871, 6.2831855
        %v1888 = vmul.f32 %v1872, 6.2831855
        %v1889 = vmul.f32 %v1873, 6.2831855
        %v1890 = vmul.f32 %v1874, 6.2831855
        %v1891 = vmul.f32 %v1875, 6.2831855
        %v1892 = vmul.f32 %v1876, 6.2831855
        %v1893 = vmul.f32 %v1877, 6.2831855
        %v1894 = vmul.f32 %v1878, 6.2831855
        %v1895 = vmul.f32 %v1879, 6.2831855
        %v1896 = vmul.f32 %v1880, 6.2831855
        %v1897 = vmul.f32 %v1881, 6.2831855
        %v1898 = vmul.f32 %v1882, 6.2831855
        %v1899 = vmul.f32 %v1883, 6.2831855
        %v1900 = vmul.f32 %v1868, 3.1415927
        %v1901 = vmul.f32 %v1869, 3.1415927
        %v1902 = vmul.f32 %v1870, 3.1415927
        %v1903 = vmul.f32 %v1871, 3.1415927
        %v1904 = vmul.f32 %v1872, 3.1415927
        %v1905 = vmul.f32 %v1873, 3.1415927
        %v1906 = vmul.f32 %v1874, 3.1415927
        %v1907 = vmul.f32 %v1875, 3.1415927
        %v1908 = vmul.f32 %v1876, 3.1415927
        %v1909 = vmul.f32 %v1877, 3.1415927
        %v1910 = vmul.f32 %v1878, 3.1415927
        %v1911 = vmul.f32 %v1879, 3.1415927
        %v1912 = vmul.f32 %v1880, 3.1415927
        %v1913 = vmul.f32 %v1881, 3.1415927
        %v1914 = vmul.f32 %v1882, 3.1415927
        %v1915 = vmul.f32 %v1883, 3.1415927
        %v1916 = vand.u32 2147483647, %v1900
        %vm1917 = vcmp.le.f32.partialorder %v1916, 0.7853982
        %vm1918 = vcmp.lt.s32.totalorder %v1900, 0
        %v1919 = vand.u32 %v1900, 2139095040
        %v1920 = vshrl.u32 %v1919, 23
        %v1921 = vsub.s32 %v1920, 127
        %v1922 = vand.u32 2147483647, %v1900
        %v1923 = vand.u32 %v1922, 8388607
        %v1924 = vor.u32 %v1923, 8388608
        %v1925 = vsub.s32 0, %v1924
        %v1926 = vadd.s32 %v1921, 1
        %vm1927 = vcmp.gt.s32.totalorder %v1926, 0
        %v1928 = vsel %vm1927, %v1926, 0
        %v1929 = vshrl.u32 %v1928, 5
        %v1930 = vand.u32 %v1928, 31
        %v1931 = vsub.s32 32, %v1930
        %v1932 = vshrl.u32 683565275, %v1931
        %v1933 = vshll.u32 683565275, %v1930
        %v1934 = vshrl.u32 2475754826, %v1931
        %v1935 = vor.u32 %v1933, %v1934
        %v1936 = vshll.u32 2475754826, %v1930
        %v1937 = vshrl.u32 2131351028, %v1931
        %v1938 = vor.u32 %v1936, %v1937
        %v1939 = vshll.u32 2131351028, %v1930
        %v1940 = vshrl.u32 2102212464, %v1931
        %v1941 = vor.u32 %v1939, %v1940
        %v1942 = vshll.u32 2102212464, %v1930
        %v1943 = vshrl.u32 920167782, %v1931
        %v1944 = vor.u32 %v1942, %v1943
        %v1945 = vshll.u32 920167782, %v1930
        %v1946 = vshrl.u32 1326507024, %v1931
        %v1947 = vor.u32 %v1945, %v1946
        %vm1948 = vcmp.lt.s32.totalorder %v1929, 1
        %vm1949 = vcmp.lt.s32.totalorder %v1929, 2
        %vm1950 = vcmp.lt.s32.totalorder %v1929, 3
        %vm1951 = vcmp.lt.s32.totalorder %v1929, 4
        %v1952 = vsel %vm1948, %v1932, %v1935
        %v1953 = vsel %vm1951, %v1941, 2102212464
        %v1954 = vsel %vm1950, %v1938, %v1953
        %v1955 = vsel %vm1949, %v1952, %v1954
        %v1956 = vsel %vm1948, %v1935, %v1938
        %v1957 = vsel %vm1951, %v1944, 920167782
        %v1958 = vsel %vm1950, %v1941, %v1957
        %v1959 = vsel %vm1949, %v1956, %v1958
        %v1960 = vsel %vm1948, %v1938, %v1941
        %v1961 = vsel %vm1951, %v1947, 1326507024
        %v1962 = vsel %vm1950, %v1944, %v1961
        %v1963 = vsel %vm1949, %v1960, %v1962
        %v1964 = vshll.u32 %v1924, 8
        %v1965 = vmul.u32.u64.compose %v1964, %v1963
        %v1966 = vextract.low.u32 %v1965
        %v1967 = vextract.high.u32 %v1965
        %v1968 = vmul.u32.u64.compose %v1964, %v1959
        %v1969 = vextract.low.u32 %v1968
        %v1970 = vextract.high.u32 %v1968
        %v1971 = vmul.u32 %v1964, %v1955
        %v1972 = vadd.s32 %v1967, %v1969
        %vm1973 = vc.u32 %v1967, %v1969
        %v1974 = vadd.s32 %v1970, 1
        %v1975 = vsel %vm1973, %v1974, %v1970
        %v1976 = vadd.s32 %v1971, %v1975
        %v1977 = vadd.s32 %v1976, 536870912
        %v1978 = vshrl.u32 %v1977, 30
        %v1979 = vshll.u32 %v1978, 30
        %v1980 = vsub.s32 %v1976, %v1979
        %vm1981 = vcmp.lt.s32.totalorder %v1980, 0
        %v1982 = vsub.s32 0, %v1980
        %v1983 = vsel %vm1981, %v1982, %v1980
        %v1984 = vclz %v1983
        %v1985 = vsub.s32 %v1984, 2
        %vm1986 = vcmp.gt.s32.totalorder 0, %v1985
        %v1987 = vsel %vm1986, 0, %v1985
        %v1988 = vsub.s32 32, %v1987
        %v1989 = vshll.u32 %v1980, %v1987
        %v1990 = vshrl.u32 %v1972, %v1988
        %v1991 = vor.u32 %v1989, %v1990
        %v1992 = vsub.s32 4294967266, %v1987
        %v1993 = vadd.s32 %v1992, 127
        %v1994 = vshll.u32 %v1993, 23
        %v1995 = vor.u32 4788187, %v1994
        %v1996 = vand.u32 2147483647, %v1995
        %v1998 = vcvt.s32.f32 %v1991
        %v1999 = vmul.f32 %v1998, %v1996
        %v2000 = vxor.u32 %v1999, 2147483648
        %v2001 = vsel %vm1918, %v2000, %v1999
        %v2002 = vsub.s32 4, %v1978
        %v2003 = vsel %vm1918, %v2002, %v1978
        %v2004 = vsel %vm1917, %v1900, %v2001
        %v2005 = vsel %vm1917, 0, %v2003
        %v2006 = vcosq.f32.pop %v2004
        %v2007 = vsinq.f32.pop %v2004
        %vm2008 = vweird.f32 %v1900
        %v2009 = vadd.s32 %v2005, 3
        %v2010 = vand.u32 %v2009, 3
        %vm2011 = vcmp.lt.s32.totalorder %v2010, 2
        %vm2012 = vcmp.eq.s32.totalorder %v2010, 0
        %v2013 = vxor.u32 %v2007, 2147483648
        %v2014 = vsel %vm2012, %v2006, %v2013
        %vm2015 = vcmp.eq.s32.totalorder %v2010, 2
        %v2016 = vxor.u32 %v2006, 2147483648
        %v2017 = vsel %vm2015, %v2016, %v2007
        %v2018 = vsel %vm2011, %v2014, %v2017
        %v2019 = vsel %vm2008, nan, %v2018
        %v2020 = vand.u32 2147483647, %v1901
        %vm2021 = vcmp.le.f32.partialorder %v2020, 0.7853982
        %vm2022 = vcmp.lt.s32.totalorder %v1901, 0
        %v2023 = vand.u32 %v1901, 2139095040
        %v2024 = vshrl.u32 %v2023, 23
        %v2025 = vsub.s32 %v2024, 127
        %v2026 = vand.u32 2147483647, %v1901
        %v2027 = vand.u32 %v2026, 8388607
        %v2028 = vor.u32 %v2027, 8388608
        %v2029 = vsub.s32 0, %v2028
        %v2030 = vadd.s32 %v2025, 1
        %vm2031 = vcmp.gt.s32.totalorder %v2030, 0
        %v2032 = vsel %vm2031, %v2030, 0
        %v2033 = vshrl.u32 %v2032, 5
        %v2034 = vand.u32 %v2032, 31
        %v2035 = vsub.s32 32, %v2034
        %v2036 = vshrl.u32 683565275, %v2035
        %v2037 = vshll.u32 683565275, %v2034
        %v2038 = vshrl.u32 2475754826, %v2035
        %v2039 = vor.u32 %v2037, %v2038
        %v2040 = vshll.u32 2475754826, %v2034
        %v2041 = vshrl.u32 2131351028, %v2035
        %v2042 = vor.u32 %v2040, %v2041
        %v2043 = vshll.u32 2131351028, %v2034
        %v2044 = vshrl.u32 2102212464, %v2035
        %v2045 = vor.u32 %v2043, %v2044
        %v2046 = vshll.u32 2102212464, %v2034
        %v2047 = vshrl.u32 920167782, %v2035
        %v2048 = vor.u32 %v2046, %v2047
        %v2049 = vshll.u32 920167782, %v2034
        %v2050 = vshrl.u32 1326507024, %v2035
        %v2051 = vor.u32 %v2049, %v2050
        %vm2052 = vcmp.lt.s32.totalorder %v2033, 1
        %vm2053 = vcmp.lt.s32.totalorder %v2033, 2
        %vm2054 = vcmp.lt.s32.totalorder %v2033, 3
        %vm2055 = vcmp.lt.s32.totalorder %v2033, 4
        %v2056 = vsel %vm2052, %v2036, %v2039
        %v2057 = vsel %vm2055, %v2045, 2102212464
        %v2058 = vsel %vm2054, %v2042, %v2057
        %v2059 = vsel %vm2053, %v2056, %v2058
        %v2060 = vsel %vm2052, %v2039, %v2042
        %v2061 = vsel %vm2055, %v2048, 920167782
        %v2062 = vsel %vm2054, %v2045, %v2061
        %v2063 = vsel %vm2053, %v2060, %v2062
        %v2064 = vsel %vm2052, %v2042, %v2045
        %v2065 = vsel %vm2055, %v2051, 1326507024
        %v2066 = vsel %vm2054, %v2048, %v2065
        %v2067 = vsel %vm2053, %v2064, %v2066
        %v2068 = vshll.u32 %v2028, 8
        %v2069 = vmul.u32.u64.compose %v2068, %v2067
        %v2070 = vextract.low.u32 %v2069
        %v2071 = vextract.high.u32 %v2069
        %v2072 = vmul.u32.u64.compose %v2068, %v2063
        %v2073 = vextract.low.u32 %v2072
        %v2074 = vextract.high.u32 %v2072
        %v2075 = vmul.u32 %v2068, %v2059
        %v2076 = vadd.s32 %v2071, %v2073
        %vm2077 = vc.u32 %v2071, %v2073
        %v2078 = vadd.s32 %v2074, 1
        %v2079 = vsel %vm2077, %v2078, %v2074
        %v2080 = vadd.s32 %v2075, %v2079
        %v2081 = vadd.s32 %v2080, 536870912
        %v2082 = vshrl.u32 %v2081, 30
        %v2083 = vshll.u32 %v2082, 30
        %v2084 = vsub.s32 %v2080, %v2083
        %vm2085 = vcmp.lt.s32.totalorder %v2084, 0
        %v2086 = vsub.s32 0, %v2084
        %v2087 = vsel %vm2085, %v2086, %v2084
        %v2088 = vclz %v2087
        %v2089 = vsub.s32 %v2088, 2
        %vm2090 = vcmp.gt.s32.totalorder 0, %v2089
        %v2091 = vsel %vm2090, 0, %v2089
        %v2092 = vsub.s32 32, %v2091
        %v2093 = vshll.u32 %v2084, %v2091
        %v2094 = vshrl.u32 %v2076, %v2092
        %v2095 = vor.u32 %v2093, %v2094
        %v2096 = vsub.s32 4294967266, %v2091
        %v2097 = vadd.s32 %v2096, 127
        %v2098 = vshll.u32 %v2097, 23
        %v2099 = vor.u32 4788187, %v2098
        %v2100 = vand.u32 2147483647, %v2099
        %v2102 = vcvt.s32.f32 %v2095
        %v2103 = vmul.f32 %v2102, %v2100
        %v2104 = vxor.u32 %v2103, 2147483648
        %v2105 = vsel %vm2022, %v2104, %v2103
        %v2106 = vsub.s32 4, %v2082
        %v2107 = vsel %vm2022, %v2106, %v2082
        %v2108 = vsel %vm2021, %v1901, %v2105
        %v2109 = vsel %vm2021, 0, %v2107
        %v2110 = vcosq.f32.pop %v2108
        %v2111 = vsinq.f32.pop %v2108
        %vm2112 = vweird.f32 %v1901
        %v2113 = vadd.s32 %v2109, 3
        %v2114 = vand.u32 %v2113, 3
        %vm2115 = vcmp.lt.s32.totalorder %v2114, 2
        %vm2116 = vcmp.eq.s32.totalorder %v2114, 0
        %v2117 = vxor.u32 %v2111, 2147483648
        %v2118 = vsel %vm2116, %v2110, %v2117
        %vm2119 = vcmp.eq.s32.totalorder %v2114, 2
        %v2120 = vxor.u32 %v2110, 2147483648
        %v2121 = vsel %vm2119, %v2120, %v2111
        %v2122 = vsel %vm2115, %v2118, %v2121
        %v2123 = vsel %vm2112, nan, %v2122
        %v2124 = vand.u32 2147483647, %v1902
        %vm2125 = vcmp.le.f32.partialorder %v2124, 0.7853982
        %vm2126 = vcmp.lt.s32.totalorder %v1902, 0
        %v2127 = vand.u32 %v1902, 2139095040
        %v2128 = vshrl.u32 %v2127, 23
        %v2129 = vsub.s32 %v2128, 127
        %v2130 = vand.u32 2147483647, %v1902
        %v2131 = vand.u32 %v2130, 8388607
        %v2132 = vor.u32 %v2131, 8388608
        %v2133 = vsub.s32 0, %v2132
        %v2134 = vadd.s32 %v2129, 1
        %vm2135 = vcmp.gt.s32.totalorder %v2134, 0
        %v2136 = vsel %vm2135, %v2134, 0
        %v2137 = vshrl.u32 %v2136, 5
        %v2138 = vand.u32 %v2136, 31
        %v2139 = vsub.s32 32, %v2138
        %v2140 = vshrl.u32 683565275, %v2139
        %v2141 = vshll.u32 683565275, %v2138
        %v2142 = vshrl.u32 2475754826, %v2139
        %v2143 = vor.u32 %v2141, %v2142
        %v2144 = vshll.u32 2475754826, %v2138
        %v2145 = vshrl.u32 2131351028, %v2139
        %v2146 = vor.u32 %v2144, %v2145
        %v2147 = vshll.u32 2131351028, %v2138
        %v2148 = vshrl.u32 2102212464, %v2139
        %v2149 = vor.u32 %v2147, %v2148
        %v2150 = vshll.u32 2102212464, %v2138
        %v2151 = vshrl.u32 920167782, %v2139
        %v2152 = vor.u32 %v2150, %v2151
        %v2153 = vshll.u32 920167782, %v2138
        %v2154 = vshrl.u32 1326507024, %v2139
        %v2155 = vor.u32 %v2153, %v2154
        %vm2156 = vcmp.lt.s32.totalorder %v2137, 1
        %vm2157 = vcmp.lt.s32.totalorder %v2137, 2
        %vm2158 = vcmp.lt.s32.totalorder %v2137, 3
        %vm2159 = vcmp.lt.s32.totalorder %v2137, 4
        %v2160 = vsel %vm2156, %v2140, %v2143
        %v2161 = vsel %vm2159, %v2149, 2102212464
        %v2162 = vsel %vm2158, %v2146, %v2161
        %v2163 = vsel %vm2157, %v2160, %v2162
        %v2164 = vsel %vm2156, %v2143, %v2146
        %v2165 = vsel %vm2159, %v2152, 920167782
        %v2166 = vsel %vm2158, %v2149, %v2165
        %v2167 = vsel %vm2157, %v2164, %v2166
        %v2168 = vsel %vm2156, %v2146, %v2149
        %v2169 = vsel %vm2159, %v2155, 1326507024
        %v2170 = vsel %vm2158, %v2152, %v2169
        %v2171 = vsel %vm2157, %v2168, %v2170
        %v2172 = vshll.u32 %v2132, 8
        %v2173 = vmul.u32.u64.compose %v2172, %v2171
        %v2174 = vextract.low.u32 %v2173
        %v2175 = vextract.high.u32 %v2173
        %v2176 = vmul.u32.u64.compose %v2172, %v2167
        %v2177 = vextract.low.u32 %v2176
        %v2178 = vextract.high.u32 %v2176
        %v2179 = vmul.u32 %v2172, %v2163
        %v2180 = vadd.s32 %v2175, %v2177
        %vm2181 = vc.u32 %v2175, %v2177
        %v2182 = vadd.s32 %v2178, 1
        %v2183 = vsel %vm2181, %v2182, %v2178
        %v2184 = vadd.s32 %v2179, %v2183
        %v2185 = vadd.s32 %v2184, 536870912
        %v2186 = vshrl.u32 %v2185, 30
        %v2187 = vshll.u32 %v2186, 30
        %v2188 = vsub.s32 %v2184, %v2187
        %vm2189 = vcmp.lt.s32.totalorder %v2188, 0
        %v2190 = vsub.s32 0, %v2188
        %v2191 = vsel %vm2189, %v2190, %v2188
        %v2192 = vclz %v2191
        %v2193 = vsub.s32 %v2192, 2
        %vm2194 = vcmp.gt.s32.totalorder 0, %v2193
        %v2195 = vsel %vm2194, 0, %v2193
        %v2196 = vsub.s32 32, %v2195
        %v2197 = vshll.u32 %v2188, %v2195
        %v2198 = vshrl.u32 %v2180, %v2196
        %v2199 = vor.u32 %v2197, %v2198
        %v2200 = vsub.s32 4294967266, %v2195
        %v2201 = vadd.s32 %v2200, 127
        %v2202 = vshll.u32 %v2201, 23
        %v2203 = vor.u32 4788187, %v2202
        %v2204 = vand.u32 2147483647, %v2203
        %v2206 = vcvt.s32.f32 %v2199
        %v2207 = vmul.f32 %v2206, %v2204
        %v2208 = vxor.u32 %v2207, 2147483648
        %v2209 = vsel %vm2126, %v2208, %v2207
        %v2210 = vsub.s32 4, %v2186
        %v2211 = vsel %vm2126, %v2210, %v2186
        %v2212 = vsel %vm2125, %v1902, %v2209
        %v2213 = vsel %vm2125, 0, %v2211
        %v2214 = vcosq.f32.pop %v2212
        %v2215 = vsinq.f32.pop %v2212
        %vm2216 = vweird.f32 %v1902
        %v2217 = vadd.s32 %v2213, 3
        %v2218 = vand.u32 %v2217, 3
        %vm2219 = vcmp.lt.s32.totalorder %v2218, 2
        %vm2220 = vcmp.eq.s32.totalorder %v2218, 0
        %v2221 = vxor.u32 %v2215, 2147483648
        %v2222 = vsel %vm2220, %v2214, %v2221
        %vm2223 = vcmp.eq.s32.totalorder %v2218, 2
        %v2224 = vxor.u32 %v2214, 2147483648
        %v2225 = vsel %vm2223, %v2224, %v2215
        %v2226 = vsel %vm2219, %v2222, %v2225
        %v2227 = vsel %vm2216, nan, %v2226
        %v2228 = vand.u32 2147483647, %v1903
        %vm2229 = vcmp.le.f32.partialorder %v2228, 0.7853982
        %vm2230 = vcmp.lt.s32.totalorder %v1903, 0
        %v2231 = vand.u32 %v1903, 2139095040
        %v2232 = vshrl.u32 %v2231, 23
        %v2233 = vsub.s32 %v2232, 127
        %v2234 = vand.u32 2147483647, %v1903
        %v2235 = vand.u32 %v2234, 8388607
        %v2236 = vor.u32 %v2235, 8388608
        %v2237 = vsub.s32 0, %v2236
        %v2238 = vadd.s32 %v2233, 1
        %vm2239 = vcmp.gt.s32.totalorder %v2238, 0
        %v2240 = vsel %vm2239, %v2238, 0
        %v2241 = vshrl.u32 %v2240, 5
        %v2242 = vand.u32 %v2240, 31
        %v2243 = vsub.s32 32, %v2242
        %v2244 = vshrl.u32 683565275, %v2243
        %v2245 = vshll.u32 683565275, %v2242
        %v2246 = vshrl.u32 2475754826, %v2243
        %v2247 = vor.u32 %v2245, %v2246
        %v2248 = vshll.u32 2475754826, %v2242
        %v2249 = vshrl.u32 2131351028, %v2243
        %v2250 = vor.u32 %v2248, %v2249
        %v2251 = vshll.u32 2131351028, %v2242
        %v2252 = vshrl.u32 2102212464, %v2243
        %v2253 = vor.u32 %v2251, %v2252
        %v2254 = vshll.u32 2102212464, %v2242
        %v2255 = vshrl.u32 920167782, %v2243
        %v2256 = vor.u32 %v2254, %v2255
        %v2257 = vshll.u32 920167782, %v2242
        %v2258 = vshrl.u32 1326507024, %v2243
        %v2259 = vor.u32 %v2257, %v2258
        %vm2260 = vcmp.lt.s32.totalorder %v2241, 1
        %vm2261 = vcmp.lt.s32.totalorder %v2241, 2
        %vm2262 = vcmp.lt.s32.totalorder %v2241, 3
        %vm2263 = vcmp.lt.s32.totalorder %v2241, 4
        %v2264 = vsel %vm2260, %v2244, %v2247
        %v2265 = vsel %vm2263, %v2253, 2102212464
        %v2266 = vsel %vm2262, %v2250, %v2265
        %v2267 = vsel %vm2261, %v2264, %v2266
        %v2268 = vsel %vm2260, %v2247, %v2250
        %v2269 = vsel %vm2263, %v2256, 920167782
        %v2270 = vsel %vm2262, %v2253, %v2269
        %v2271 = vsel %vm2261, %v2268, %v2270
        %v2272 = vsel %vm2260, %v2250, %v2253
        %v2273 = vsel %vm2263, %v2259, 1326507024
        %v2274 = vsel %vm2262, %v2256, %v2273
        %v2275 = vsel %vm2261, %v2272, %v2274
        %v2276 = vshll.u32 %v2236, 8
        %v2277 = vmul.u32.u64.compose %v2276, %v2275
        %v2278 = vextract.low.u32 %v2277
        %v2279 = vextract.high.u32 %v2277
        %v2280 = vmul.u32.u64.compose %v2276, %v2271
        %v2281 = vextract.low.u32 %v2280
        %v2282 = vextract.high.u32 %v2280
        %v2283 = vmul.u32 %v2276, %v2267
        %v2284 = vadd.s32 %v2279, %v2281
        %vm2285 = vc.u32 %v2279, %v2281
        %v2286 = vadd.s32 %v2282, 1
        %v2287 = vsel %vm2285, %v2286, %v2282
        %v2288 = vadd.s32 %v2283, %v2287
        %v2289 = vadd.s32 %v2288, 536870912
        %v2290 = vshrl.u32 %v2289, 30
        %v2291 = vshll.u32 %v2290, 30
        %v2292 = vsub.s32 %v2288, %v2291
        %vm2293 = vcmp.lt.s32.totalorder %v2292, 0
        %v2294 = vsub.s32 0, %v2292
        %v2295 = vsel %vm2293, %v2294, %v2292
        %v2296 = vclz %v2295
        %v2297 = vsub.s32 %v2296, 2
        %vm2298 = vcmp.gt.s32.totalorder 0, %v2297
        %v2299 = vsel %vm2298, 0, %v2297
        %v2300 = vsub.s32 32, %v2299
        %v2301 = vshll.u32 %v2292, %v2299
        %v2302 = vshrl.u32 %v2284, %v2300
        %v2303 = vor.u32 %v2301, %v2302
        %v2304 = vsub.s32 4294967266, %v2299
        %v2305 = vadd.s32 %v2304, 127
        %v2306 = vshll.u32 %v2305, 23
        %v2307 = vor.u32 4788187, %v2306
        %v2308 = vand.u32 2147483647, %v2307
        %v2310 = vcvt.s32.f32 %v2303
        %v2311 = vmul.f32 %v2310, %v2308
        %v2312 = vxor.u32 %v2311, 2147483648
        %v2313 = vsel %vm2230, %v2312, %v2311
        %v2314 = vsub.s32 4, %v2290
        %v2315 = vsel %vm2230, %v2314, %v2290
        %v2316 = vsel %vm2229, %v1903, %v2313
        %v2317 = vsel %vm2229, 0, %v2315
        %v2318 = vcosq.f32.pop %v2316
        %v2319 = vsinq.f32.pop %v2316
        %vm2320 = vweird.f32 %v1903
        %v2321 = vadd.s32 %v2317, 3
        %v2322 = vand.u32 %v2321, 3
        %vm2323 = vcmp.lt.s32.totalorder %v2322, 2
        %vm2324 = vcmp.eq.s32.totalorder %v2322, 0
        %v2325 = vxor.u32 %v2319, 2147483648
        %v2326 = vsel %vm2324, %v2318, %v2325
        %vm2327 = vcmp.eq.s32.totalorder %v2322, 2
        %v2328 = vxor.u32 %v2318, 2147483648
        %v2329 = vsel %vm2327, %v2328, %v2319
        %v2330 = vsel %vm2323, %v2326, %v2329
        %v2331 = vsel %vm2320, nan, %v2330
        %v2332 = vand.u32 2147483647, %v1904
        %vm2333 = vcmp.le.f32.partialorder %v2332, 0.7853982
        %vm2334 = vcmp.lt.s32.totalorder %v1904, 0
        %v2335 = vand.u32 %v1904, 2139095040
        %v2336 = vshrl.u32 %v2335, 23
        %v2337 = vsub.s32 %v2336, 127
        %v2338 = vand.u32 2147483647, %v1904
        %v2339 = vand.u32 %v2338, 8388607
        %v2340 = vor.u32 %v2339, 8388608
        %v2341 = vsub.s32 0, %v2340
        %v2342 = vadd.s32 %v2337, 1
        %vm2343 = vcmp.gt.s32.totalorder %v2342, 0
        %v2344 = vsel %vm2343, %v2342, 0
        %v2345 = vshrl.u32 %v2344, 5
        %v2346 = vand.u32 %v2344, 31
        %v2347 = vsub.s32 32, %v2346
        %v2348 = vshrl.u32 683565275, %v2347
        %v2349 = vshll.u32 683565275, %v2346
        %v2350 = vshrl.u32 2475754826, %v2347
        %v2351 = vor.u32 %v2349, %v2350
        %v2352 = vshll.u32 2475754826, %v2346
        %v2353 = vshrl.u32 2131351028, %v2347
        %v2354 = vor.u32 %v2352, %v2353
        %v2355 = vshll.u32 2131351028, %v2346
        %v2356 = vshrl.u32 2102212464, %v2347
        %v2357 = vor.u32 %v2355, %v2356
        %v2358 = vshll.u32 2102212464, %v2346
        %v2359 = vshrl.u32 920167782, %v2347
        %v2360 = vor.u32 %v2358, %v2359
        %v2361 = vshll.u32 920167782, %v2346
        %v2362 = vshrl.u32 1326507024, %v2347
        %v2363 = vor.u32 %v2361, %v2362
        %vm2364 = vcmp.lt.s32.totalorder %v2345, 1
        %vm2365 = vcmp.lt.s32.totalorder %v2345, 2
        %vm2366 = vcmp.lt.s32.totalorder %v2345, 3
        %vm2367 = vcmp.lt.s32.totalorder %v2345, 4
        %v2368 = vsel %vm2364, %v2348, %v2351
        %v2369 = vsel %vm2367, %v2357, 2102212464
        %v2370 = vsel %vm2366, %v2354, %v2369
        %v2371 = vsel %vm2365, %v2368, %v2370
        %v2372 = vsel %vm2364, %v2351, %v2354
        %v2373 = vsel %vm2367, %v2360, 920167782
        %v2374 = vsel %vm2366, %v2357, %v2373
        %v2375 = vsel %vm2365, %v2372, %v2374
        %v2376 = vsel %vm2364, %v2354, %v2357
        %v2377 = vsel %vm2367, %v2363, 1326507024
        %v2378 = vsel %vm2366, %v2360, %v2377
        %v2379 = vsel %vm2365, %v2376, %v2378
        %v2380 = vshll.u32 %v2340, 8
        %v2381 = vmul.u32.u64.compose %v2380, %v2379
        %v2382 = vextract.low.u32 %v2381
        %v2383 = vextract.high.u32 %v2381
        %v2384 = vmul.u32.u64.compose %v2380, %v2375
        %v2385 = vextract.low.u32 %v2384
        %v2386 = vextract.high.u32 %v2384
        %v2387 = vmul.u32 %v2380, %v2371
        %v2388 = vadd.s32 %v2383, %v2385
        %vm2389 = vc.u32 %v2383, %v2385
        %v2390 = vadd.s32 %v2386, 1
        %v2391 = vsel %vm2389, %v2390, %v2386
        %v2392 = vadd.s32 %v2387, %v2391
        %v2393 = vadd.s32 %v2392, 536870912
        %v2394 = vshrl.u32 %v2393, 30
        %v2395 = vshll.u32 %v2394, 30
        %v2396 = vsub.s32 %v2392, %v2395
        %vm2397 = vcmp.lt.s32.totalorder %v2396, 0
        %v2398 = vsub.s32 0, %v2396
        %v2399 = vsel %vm2397, %v2398, %v2396
        %v2400 = vclz %v2399
        %v2401 = vsub.s32 %v2400, 2
        %vm2402 = vcmp.gt.s32.totalorder 0, %v2401
        %v2403 = vsel %vm2402, 0, %v2401
        %v2404 = vsub.s32 32, %v2403
        %v2405 = vshll.u32 %v2396, %v2403
        %v2406 = vshrl.u32 %v2388, %v2404
        %v2407 = vor.u32 %v2405, %v2406
        %v2408 = vsub.s32 4294967266, %v2403
        %v2409 = vadd.s32 %v2408, 127
        %v2410 = vshll.u32 %v2409, 23
        %v2411 = vor.u32 4788187, %v2410
        %v2412 = vand.u32 2147483647, %v2411
        %v2414 = vcvt.s32.f32 %v2407
        %v2415 = vmul.f32 %v2414, %v2412
        %v2416 = vxor.u32 %v2415, 2147483648
        %v2417 = vsel %vm2334, %v2416, %v2415
        %v2418 = vsub.s32 4, %v2394
        %v2419 = vsel %vm2334, %v2418, %v2394
        %v2420 = vsel %vm2333, %v1904, %v2417
        %v2421 = vsel %vm2333, 0, %v2419
        %v2422 = vcosq.f32.pop %v2420
        %v2423 = vsinq.f32.pop %v2420
        %vm2424 = vweird.f32 %v1904
        %v2425 = vadd.s32 %v2421, 3
        %v2426 = vand.u32 %v2425, 3
        %vm2427 = vcmp.lt.s32.totalorder %v2426, 2
        %vm2428 = vcmp.eq.s32.totalorder %v2426, 0
        %v2429 = vxor.u32 %v2423, 2147483648
        %v2430 = vsel %vm2428, %v2422, %v2429
        %vm2431 = vcmp.eq.s32.totalorder %v2426, 2
        %v2432 = vxor.u32 %v2422, 2147483648
        %v2433 = vsel %vm2431, %v2432, %v2423
        %v2434 = vsel %vm2427, %v2430, %v2433
        %v2435 = vsel %vm2424, nan, %v2434
        %v2436 = vand.u32 2147483647, %v1905
        %vm2437 = vcmp.le.f32.partialorder %v2436, 0.7853982
        %vm2438 = vcmp.lt.s32.totalorder %v1905, 0
        %v2439 = vand.u32 %v1905, 2139095040
        %v2440 = vshrl.u32 %v2439, 23
        %v2441 = vsub.s32 %v2440, 127
        %v2442 = vand.u32 2147483647, %v1905
        %v2443 = vand.u32 %v2442, 8388607
        %v2444 = vor.u32 %v2443, 8388608
        %v2445 = vsub.s32 0, %v2444
        %v2446 = vadd.s32 %v2441, 1
        %vm2447 = vcmp.gt.s32.totalorder %v2446, 0
        %v2448 = vsel %vm2447, %v2446, 0
        %v2449 = vshrl.u32 %v2448, 5
        %v2450 = vand.u32 %v2448, 31
        %v2451 = vsub.s32 32, %v2450
        %v2452 = vshrl.u32 683565275, %v2451
        %v2453 = vshll.u32 683565275, %v2450
        %v2454 = vshrl.u32 2475754826, %v2451
        %v2455 = vor.u32 %v2453, %v2454
        %v2456 = vshll.u32 2475754826, %v2450
        %v2457 = vshrl.u32 2131351028, %v2451
        %v2458 = vor.u32 %v2456, %v2457
        %v2459 = vshll.u32 2131351028, %v2450
        %v2460 = vshrl.u32 2102212464, %v2451
        %v2461 = vor.u32 %v2459, %v2460
        %v2462 = vshll.u32 2102212464, %v2450
        %v2463 = vshrl.u32 920167782, %v2451
        %v2464 = vor.u32 %v2462, %v2463
        %v2465 = vshll.u32 920167782, %v2450
        %v2466 = vshrl.u32 1326507024, %v2451
        %v2467 = vor.u32 %v2465, %v2466
        %vm2468 = vcmp.lt.s32.totalorder %v2449, 1
        %vm2469 = vcmp.lt.s32.totalorder %v2449, 2
        %vm2470 = vcmp.lt.s32.totalorder %v2449, 3
        %vm2471 = vcmp.lt.s32.totalorder %v2449, 4
        %v2472 = vsel %vm2468, %v2452, %v2455
        %v2473 = vsel %vm2471, %v2461, 2102212464
        %v2474 = vsel %vm2470, %v2458, %v2473
        %v2475 = vsel %vm2469, %v2472, %v2474
        %v2476 = vsel %vm2468, %v2455, %v2458
        %v2477 = vsel %vm2471, %v2464, 920167782
        %v2478 = vsel %vm2470, %v2461, %v2477
        %v2479 = vsel %vm2469, %v2476, %v2478
        %v2480 = vsel %vm2468, %v2458, %v2461
        %v2481 = vsel %vm2471, %v2467, 1326507024
        %v2482 = vsel %vm2470, %v2464, %v2481
        %v2483 = vsel %vm2469, %v2480, %v2482
        %v2484 = vshll.u32 %v2444, 8
        %v2485 = vmul.u32.u64.compose %v2484, %v2483
        %v2486 = vextract.low.u32 %v2485
        %v2487 = vextract.high.u32 %v2485
        %v2488 = vmul.u32.u64.compose %v2484, %v2479
        %v2489 = vextract.low.u32 %v2488
        %v2490 = vextract.high.u32 %v2488
        %v2491 = vmul.u32 %v2484, %v2475
        %v2492 = vadd.s32 %v2487, %v2489
        %vm2493 = vc.u32 %v2487, %v2489
        %v2494 = vadd.s32 %v2490, 1
        %v2495 = vsel %vm2493, %v2494, %v2490
        %v2496 = vadd.s32 %v2491, %v2495
        %v2497 = vadd.s32 %v2496, 536870912
        %v2498 = vshrl.u32 %v2497, 30
        %v2499 = vshll.u32 %v2498, 30
        %v2500 = vsub.s32 %v2496, %v2499
        %vm2501 = vcmp.lt.s32.totalorder %v2500, 0
        %v2502 = vsub.s32 0, %v2500
        %v2503 = vsel %vm2501, %v2502, %v2500
        %v2504 = vclz %v2503
        %v2505 = vsub.s32 %v2504, 2
        %vm2506 = vcmp.gt.s32.totalorder 0, %v2505
        %v2507 = vsel %vm2506, 0, %v2505
        %v2508 = vsub.s32 32, %v2507
        %v2509 = vshll.u32 %v2500, %v2507
        %v2510 = vshrl.u32 %v2492, %v2508
        %v2511 = vor.u32 %v2509, %v2510
        %v2512 = vsub.s32 4294967266, %v2507
        %v2513 = vadd.s32 %v2512, 127
        %v2514 = vshll.u32 %v2513, 23
        %v2515 = vor.u32 4788187, %v2514
        %v2516 = vand.u32 2147483647, %v2515
        %v2518 = vcvt.s32.f32 %v2511
        %v2519 = vmul.f32 %v2518, %v2516
        %v2520 = vxor.u32 %v2519, 2147483648
        %v2521 = vsel %vm2438, %v2520, %v2519
        %v2522 = vsub.s32 4, %v2498
        %v2523 = vsel %vm2438, %v2522, %v2498
        %v2524 = vsel %vm2437, %v1905, %v2521
        %v2525 = vsel %vm2437, 0, %v2523
        %v2526 = vcosq.f32.pop %v2524
        %v2527 = vsinq.f32.pop %v2524
        %vm2528 = vweird.f32 %v1905
        %v2529 = vadd.s32 %v2525, 3
        %v2530 = vand.u32 %v2529, 3
        %vm2531 = vcmp.lt.s32.totalorder %v2530, 2
        %vm2532 = vcmp.eq.s32.totalorder %v2530, 0
        %v2533 = vxor.u32 %v2527, 2147483648
        %v2534 = vsel %vm2532, %v2526, %v2533
        %vm2535 = vcmp.eq.s32.totalorder %v2530, 2
        %v2536 = vxor.u32 %v2526, 2147483648
        %v2537 = vsel %vm2535, %v2536, %v2527
        %v2538 = vsel %vm2531, %v2534, %v2537
        %v2539 = vsel %vm2528, nan, %v2538
        %v2540 = vand.u32 2147483647, %v1906
        %vm2541 = vcmp.le.f32.partialorder %v2540, 0.7853982
        %vm2542 = vcmp.lt.s32.totalorder %v1906, 0
        %v2543 = vand.u32 %v1906, 2139095040
        %v2544 = vshrl.u32 %v2543, 23
        %v2545 = vsub.s32 %v2544, 127
        %v2546 = vand.u32 2147483647, %v1906
        %v2547 = vand.u32 %v2546, 8388607
        %v2548 = vor.u32 %v2547, 8388608
        %v2549 = vsub.s32 0, %v2548
        %v2550 = vadd.s32 %v2545, 1
        %vm2551 = vcmp.gt.s32.totalorder %v2550, 0
        %v2552 = vsel %vm2551, %v2550, 0
        %v2553 = vshrl.u32 %v2552, 5
        %v2554 = vand.u32 %v2552, 31
        %v2555 = vsub.s32 32, %v2554
        %v2556 = vshrl.u32 683565275, %v2555
        %v2557 = vshll.u32 683565275, %v2554
        %v2558 = vshrl.u32 2475754826, %v2555
        %v2559 = vor.u32 %v2557, %v2558
        %v2560 = vshll.u32 2475754826, %v2554
        %v2561 = vshrl.u32 2131351028, %v2555
        %v2562 = vor.u32 %v2560, %v2561
        %v2563 = vshll.u32 2131351028, %v2554
        %v2564 = vshrl.u32 2102212464, %v2555
        %v2565 = vor.u32 %v2563, %v2564
        %v2566 = vshll.u32 2102212464, %v2554
        %v2567 = vshrl.u32 920167782, %v2555
        %v2568 = vor.u32 %v2566, %v2567
        %v2569 = vshll.u32 920167782, %v2554
        %v2570 = vshrl.u32 1326507024, %v2555
        %v2571 = vor.u32 %v2569, %v2570
        %vm2572 = vcmp.lt.s32.totalorder %v2553, 1
        %vm2573 = vcmp.lt.s32.totalorder %v2553, 2
        %vm2574 = vcmp.lt.s32.totalorder %v2553, 3
        %vm2575 = vcmp.lt.s32.totalorder %v2553, 4
        %v2576 = vsel %vm2572, %v2556, %v2559
        %v2577 = vsel %vm2575, %v2565, 2102212464
        %v2578 = vsel %vm2574, %v2562, %v2577
        %v2579 = vsel %vm2573, %v2576, %v2578
        %v2580 = vsel %vm2572, %v2559, %v2562
        %v2581 = vsel %vm2575, %v2568, 920167782
        %v2582 = vsel %vm2574, %v2565, %v2581
        %v2583 = vsel %vm2573, %v2580, %v2582
        %v2584 = vsel %vm2572, %v2562, %v2565
        %v2585 = vsel %vm2575, %v2571, 1326507024
        %v2586 = vsel %vm2574, %v2568, %v2585
        %v2587 = vsel %vm2573, %v2584, %v2586
        %v2588 = vshll.u32 %v2548, 8
        %v2589 = vmul.u32.u64.compose %v2588, %v2587
        %v2590 = vextract.low.u32 %v2589
        %v2591 = vextract.high.u32 %v2589
        %v2592 = vmul.u32.u64.compose %v2588, %v2583
        %v2593 = vextract.low.u32 %v2592
        %v2594 = vextract.high.u32 %v2592
        %v2595 = vmul.u32 %v2588, %v2579
        %v2596 = vadd.s32 %v2591, %v2593
        %vm2597 = vc.u32 %v2591, %v2593
        %v2598 = vadd.s32 %v2594, 1
        %v2599 = vsel %vm2597, %v2598, %v2594
        %v2600 = vadd.s32 %v2595, %v2599
        %v2601 = vadd.s32 %v2600, 536870912
        %v2602 = vshrl.u32 %v2601, 30
        %v2603 = vshll.u32 %v2602, 30
        %v2604 = vsub.s32 %v2600, %v2603
        %vm2605 = vcmp.lt.s32.totalorder %v2604, 0
        %v2606 = vsub.s32 0, %v2604
        %v2607 = vsel %vm2605, %v2606, %v2604
        %v2608 = vclz %v2607
        %v2609 = vsub.s32 %v2608, 2
        %vm2610 = vcmp.gt.s32.totalorder 0, %v2609
        %v2611 = vsel %vm2610, 0, %v2609
        %v2612 = vsub.s32 32, %v2611
        %v2613 = vshll.u32 %v2604, %v2611
        %v2614 = vshrl.u32 %v2596, %v2612
        %v2615 = vor.u32 %v2613, %v2614
        %v2616 = vsub.s32 4294967266, %v2611
        %v2617 = vadd.s32 %v2616, 127
        %v2618 = vshll.u32 %v2617, 23
        %v2619 = vor.u32 4788187, %v2618
        %v2620 = vand.u32 2147483647, %v2619
        %v2622 = vcvt.s32.f32 %v2615
        %v2623 = vmul.f32 %v2622, %v2620
        %v2624 = vxor.u32 %v2623, 2147483648
        %v2625 = vsel %vm2542, %v2624, %v2623
        %v2626 = vsub.s32 4, %v2602
        %v2627 = vsel %vm2542, %v2626, %v2602
        %v2628 = vsel %vm2541, %v1906, %v2625
        %v2629 = vsel %vm2541, 0, %v2627
        %v2630 = vcosq.f32.pop %v2628
        %v2631 = vsinq.f32.pop %v2628
        %vm2632 = vweird.f32 %v1906
        %v2633 = vadd.s32 %v2629, 3
        %v2634 = vand.u32 %v2633, 3
        %vm2635 = vcmp.lt.s32.totalorder %v2634, 2
        %vm2636 = vcmp.eq.s32.totalorder %v2634, 0
        %v2637 = vxor.u32 %v2631, 2147483648
        %v2638 = vsel %vm2636, %v2630, %v2637
        %vm2639 = vcmp.eq.s32.totalorder %v2634, 2
        %v2640 = vxor.u32 %v2630, 2147483648
        %v2641 = vsel %vm2639, %v2640, %v2631
        %v2642 = vsel %vm2635, %v2638, %v2641
        %v2643 = vsel %vm2632, nan, %v2642
        %v2644 = vand.u32 2147483647, %v1907
        %vm2645 = vcmp.le.f32.partialorder %v2644, 0.7853982
        %vm2646 = vcmp.lt.s32.totalorder %v1907, 0
        %v2647 = vand.u32 %v1907, 2139095040
        %v2648 = vshrl.u32 %v2647, 23
        %v2649 = vsub.s32 %v2648, 127
        %v2650 = vand.u32 2147483647, %v1907
        %v2651 = vand.u32 %v2650, 8388607
        %v2652 = vor.u32 %v2651, 8388608
        %v2653 = vsub.s32 0, %v2652
        %v2654 = vadd.s32 %v2649, 1
        %vm2655 = vcmp.gt.s32.totalorder %v2654, 0
        %v2656 = vsel %vm2655, %v2654, 0
        %v2657 = vshrl.u32 %v2656, 5
        %v2658 = vand.u32 %v2656, 31
        %v2659 = vsub.s32 32, %v2658
        %v2660 = vshrl.u32 683565275, %v2659
        %v2661 = vshll.u32 683565275, %v2658
        %v2662 = vshrl.u32 2475754826, %v2659
        %v2663 = vor.u32 %v2661, %v2662
        %v2664 = vshll.u32 2475754826, %v2658
        %v2665 = vshrl.u32 2131351028, %v2659
        %v2666 = vor.u32 %v2664, %v2665
        %v2667 = vshll.u32 2131351028, %v2658
        %v2668 = vshrl.u32 2102212464, %v2659
        %v2669 = vor.u32 %v2667, %v2668
        %v2670 = vshll.u32 2102212464, %v2658
        %v2671 = vshrl.u32 920167782, %v2659
        %v2672 = vor.u32 %v2670, %v2671
        %v2673 = vshll.u32 920167782, %v2658
        %v2674 = vshrl.u32 1326507024, %v2659
        %v2675 = vor.u32 %v2673, %v2674
        %vm2676 = vcmp.lt.s32.totalorder %v2657, 1
        %vm2677 = vcmp.lt.s32.totalorder %v2657, 2
        %vm2678 = vcmp.lt.s32.totalorder %v2657, 3
        %vm2679 = vcmp.lt.s32.totalorder %v2657, 4
        %v2680 = vsel %vm2676, %v2660, %v2663
        %v2681 = vsel %vm2679, %v2669, 2102212464
        %v2682 = vsel %vm2678, %v2666, %v2681
        %v2683 = vsel %vm2677, %v2680, %v2682
        %v2684 = vsel %vm2676, %v2663, %v2666
        %v2685 = vsel %vm2679, %v2672, 920167782
        %v2686 = vsel %vm2678, %v2669, %v2685
        %v2687 = vsel %vm2677, %v2684, %v2686
        %v2688 = vsel %vm2676, %v2666, %v2669
        %v2689 = vsel %vm2679, %v2675, 1326507024
        %v2690 = vsel %vm2678, %v2672, %v2689
        %v2691 = vsel %vm2677, %v2688, %v2690
        %v2692 = vshll.u32 %v2652, 8
        %v2693 = vmul.u32.u64.compose %v2692, %v2691
        %v2694 = vextract.low.u32 %v2693
        %v2695 = vextract.high.u32 %v2693
        %v2696 = vmul.u32.u64.compose %v2692, %v2687
        %v2697 = vextract.low.u32 %v2696
        %v2698 = vextract.high.u32 %v2696
        %v2699 = vmul.u32 %v2692, %v2683
        %v2700 = vadd.s32 %v2695, %v2697
        %vm2701 = vc.u32 %v2695, %v2697
        %v2702 = vadd.s32 %v2698, 1
        %v2703 = vsel %vm2701, %v2702, %v2698
        %v2704 = vadd.s32 %v2699, %v2703
        %v2705 = vadd.s32 %v2704, 536870912
        %v2706 = vshrl.u32 %v2705, 30
        %v2707 = vshll.u32 %v2706, 30
        %v2708 = vsub.s32 %v2704, %v2707
        %vm2709 = vcmp.lt.s32.totalorder %v2708, 0
        %v2710 = vsub.s32 0, %v2708
        %v2711 = vsel %vm2709, %v2710, %v2708
        %v2712 = vclz %v2711
        %v2713 = vsub.s32 %v2712, 2
        %vm2714 = vcmp.gt.s32.totalorder 0, %v2713
        %v2715 = vsel %vm2714, 0, %v2713
        %v2716 = vsub.s32 32, %v2715
        %v2717 = vshll.u32 %v2708, %v2715
        %v2718 = vshrl.u32 %v2700, %v2716
        %v2719 = vor.u32 %v2717, %v2718
        %v2720 = vsub.s32 4294967266, %v2715
        %v2721 = vadd.s32 %v2720, 127
        %v2722 = vshll.u32 %v2721, 23
        %v2723 = vor.u32 4788187, %v2722
        %v2724 = vand.u32 2147483647, %v2723
        %v2726 = vcvt.s32.f32 %v2719
        %v2727 = vmul.f32 %v2726, %v2724
        %v2728 = vxor.u32 %v2727, 2147483648
        %v2729 = vsel %vm2646, %v2728, %v2727
        %v2730 = vsub.s32 4, %v2706
        %v2731 = vsel %vm2646, %v2730, %v2706
        %v2732 = vsel %vm2645, %v1907, %v2729
        %v2733 = vsel %vm2645, 0, %v2731
        %v2734 = vcosq.f32.pop %v2732
        %v2735 = vsinq.f32.pop %v2732
        %vm2736 = vweird.f32 %v1907
        %v2737 = vadd.s32 %v2733, 3
        %v2738 = vand.u32 %v2737, 3
        %vm2739 = vcmp.lt.s32.totalorder %v2738, 2
        %vm2740 = vcmp.eq.s32.totalorder %v2738, 0
        %v2741 = vxor.u32 %v2735, 2147483648
        %v2742 = vsel %vm2740, %v2734, %v2741
        %vm2743 = vcmp.eq.s32.totalorder %v2738, 2
        %v2744 = vxor.u32 %v2734, 2147483648
        %v2745 = vsel %vm2743, %v2744, %v2735
        %v2746 = vsel %vm2739, %v2742, %v2745
        %v2747 = vsel %vm2736, nan, %v2746
        %v2748 = vand.u32 2147483647, %v1908
        %vm2749 = vcmp.le.f32.partialorder %v2748, 0.7853982
        %vm2750 = vcmp.lt.s32.totalorder %v1908, 0
        %v2751 = vand.u32 %v1908, 2139095040
        %v2752 = vshrl.u32 %v2751, 23
        %v2753 = vsub.s32 %v2752, 127
        %v2754 = vand.u32 2147483647, %v1908
        %v2755 = vand.u32 %v2754, 8388607
        %v2756 = vor.u32 %v2755, 8388608
        %v2757 = vsub.s32 0, %v2756
        %v2758 = vadd.s32 %v2753, 1
        %vm2759 = vcmp.gt.s32.totalorder %v2758, 0
        %v2760 = vsel %vm2759, %v2758, 0
        %v2761 = vshrl.u32 %v2760, 5
        %v2762 = vand.u32 %v2760, 31
        %v2763 = vsub.s32 32, %v2762
        %v2764 = vshrl.u32 683565275, %v2763
        %v2765 = vshll.u32 683565275, %v2762
        %v2766 = vshrl.u32 2475754826, %v2763
        %v2767 = vor.u32 %v2765, %v2766
        %v2768 = vshll.u32 2475754826, %v2762
        %v2769 = vshrl.u32 2131351028, %v2763
        %v2770 = vor.u32 %v2768, %v2769
        %v2771 = vshll.u32 2131351028, %v2762
        %v2772 = vshrl.u32 2102212464, %v2763
        %v2773 = vor.u32 %v2771, %v2772
        %v2774 = vshll.u32 2102212464, %v2762
        %v2775 = vshrl.u32 920167782, %v2763
        %v2776 = vor.u32 %v2774, %v2775
        %v2777 = vshll.u32 920167782, %v2762
        %v2778 = vshrl.u32 1326507024, %v2763
        %v2779 = vor.u32 %v2777, %v2778
        %vm2780 = vcmp.lt.s32.totalorder %v2761, 1
        %vm2781 = vcmp.lt.s32.totalorder %v2761, 2
        %vm2782 = vcmp.lt.s32.totalorder %v2761, 3
        %vm2783 = vcmp.lt.s32.totalorder %v2761, 4
        %v2784 = vsel %vm2780, %v2764, %v2767
        %v2785 = vsel %vm2783, %v2773, 2102212464
        %v2786 = vsel %vm2782, %v2770, %v2785
        %v2787 = vsel %vm2781, %v2784, %v2786
        %v2788 = vsel %vm2780, %v2767, %v2770
        %v2789 = vsel %vm2783, %v2776, 920167782
        %v2790 = vsel %vm2782, %v2773, %v2789
        %v2791 = vsel %vm2781, %v2788, %v2790
        %v2792 = vsel %vm2780, %v2770, %v2773
        %v2793 = vsel %vm2783, %v2779, 1326507024
        %v2794 = vsel %vm2782, %v2776, %v2793
        %v2795 = vsel %vm2781, %v2792, %v2794
        %v2796 = vshll.u32 %v2756, 8
        %v2797 = vmul.u32.u64.compose %v2796, %v2795
        %v2798 = vextract.low.u32 %v2797
        %v2799 = vextract.high.u32 %v2797
        %v2800 = vmul.u32.u64.compose %v2796, %v2791
        %v2801 = vextract.low.u32 %v2800
        %v2802 = vextract.high.u32 %v2800
        %v2803 = vmul.u32 %v2796, %v2787
        %v2804 = vadd.s32 %v2799, %v2801
        %vm2805 = vc.u32 %v2799, %v2801
        %v2806 = vadd.s32 %v2802, 1
        %v2807 = vsel %vm2805, %v2806, %v2802
        %v2808 = vadd.s32 %v2803, %v2807
        %v2809 = vadd.s32 %v2808, 536870912
        %v2810 = vshrl.u32 %v2809, 30
        %v2811 = vshll.u32 %v2810, 30
        %v2812 = vsub.s32 %v2808, %v2811
        %vm2813 = vcmp.lt.s32.totalorder %v2812, 0
        %v2814 = vsub.s32 0, %v2812
        %v2815 = vsel %vm2813, %v2814, %v2812
        %v2816 = vclz %v2815
        %v2817 = vsub.s32 %v2816, 2
        %vm2818 = vcmp.gt.s32.totalorder 0, %v2817
        %v2819 = vsel %vm2818, 0, %v2817
        %v2820 = vsub.s32 32, %v2819
        %v2821 = vshll.u32 %v2812, %v2819
        %v2822 = vshrl.u32 %v2804, %v2820
        %v2823 = vor.u32 %v2821, %v2822
        %v2824 = vsub.s32 4294967266, %v2819
        %v2825 = vadd.s32 %v2824, 127
        %v2826 = vshll.u32 %v2825, 23
        %v2827 = vor.u32 4788187, %v2826
        %v2828 = vand.u32 2147483647, %v2827
        %v2830 = vcvt.s32.f32 %v2823
        %v2831 = vmul.f32 %v2830, %v2828
        %v2832 = vxor.u32 %v2831, 2147483648
        %v2833 = vsel %vm2750, %v2832, %v2831
        %v2834 = vsub.s32 4, %v2810
        %v2835 = vsel %vm2750, %v2834, %v2810
        %v2836 = vsel %vm2749, %v1908, %v2833
        %v2837 = vsel %vm2749, 0, %v2835
        %v2838 = vcosq.f32.pop %v2836
        %v2839 = vsinq.f32.pop %v2836
        %vm2840 = vweird.f32 %v1908
        %v2841 = vadd.s32 %v2837, 3
        %v2842 = vand.u32 %v2841, 3
        %vm2843 = vcmp.lt.s32.totalorder %v2842, 2
        %vm2844 = vcmp.eq.s32.totalorder %v2842, 0
        %v2845 = vxor.u32 %v2839, 2147483648
        %v2846 = vsel %vm2844, %v2838, %v2845
        %vm2847 = vcmp.eq.s32.totalorder %v2842, 2
        %v2848 = vxor.u32 %v2838, 2147483648
        %v2849 = vsel %vm2847, %v2848, %v2839
        %v2850 = vsel %vm2843, %v2846, %v2849
        %v2851 = vsel %vm2840, nan, %v2850
        %v2852 = vand.u32 2147483647, %v1909
        %vm2853 = vcmp.le.f32.partialorder %v2852, 0.7853982
        %vm2854 = vcmp.lt.s32.totalorder %v1909, 0
        %v2855 = vand.u32 %v1909, 2139095040
        %v2856 = vshrl.u32 %v2855, 23
        %v2857 = vsub.s32 %v2856, 127
        %v2858 = vand.u32 2147483647, %v1909
        %v2859 = vand.u32 %v2858, 8388607
        %v2860 = vor.u32 %v2859, 8388608
        %v2861 = vsub.s32 0, %v2860
        %v2862 = vadd.s32 %v2857, 1
        %vm2863 = vcmp.gt.s32.totalorder %v2862, 0
        %v2864 = vsel %vm2863, %v2862, 0
        %v2865 = vshrl.u32 %v2864, 5
        %v2866 = vand.u32 %v2864, 31
        %v2867 = vsub.s32 32, %v2866
        %v2868 = vshrl.u32 683565275, %v2867
        %v2869 = vshll.u32 683565275, %v2866
        %v2870 = vshrl.u32 2475754826, %v2867
        %v2871 = vor.u32 %v2869, %v2870
        %v2872 = vshll.u32 2475754826, %v2866
        %v2873 = vshrl.u32 2131351028, %v2867
        %v2874 = vor.u32 %v2872, %v2873
        %v2875 = vshll.u32 2131351028, %v2866
        %v2876 = vshrl.u32 2102212464, %v2867
        %v2877 = vor.u32 %v2875, %v2876
        %v2878 = vshll.u32 2102212464, %v2866
        %v2879 = vshrl.u32 920167782, %v2867
        %v2880 = vor.u32 %v2878, %v2879
        %v2881 = vshll.u32 920167782, %v2866
        %v2882 = vshrl.u32 1326507024, %v2867
        %v2883 = vor.u32 %v2881, %v2882
        %vm2884 = vcmp.lt.s32.totalorder %v2865, 1
        %vm2885 = vcmp.lt.s32.totalorder %v2865, 2
        %vm2886 = vcmp.lt.s32.totalorder %v2865, 3
        %vm2887 = vcmp.lt.s32.totalorder %v2865, 4
        %v2888 = vsel %vm2884, %v2868, %v2871
        %v2889 = vsel %vm2887, %v2877, 2102212464
        %v2890 = vsel %vm2886, %v2874, %v2889
        %v2891 = vsel %vm2885, %v2888, %v2890
        %v2892 = vsel %vm2884, %v2871, %v2874
        %v2893 = vsel %vm2887, %v2880, 920167782
        %v2894 = vsel %vm2886, %v2877, %v2893
        %v2895 = vsel %vm2885, %v2892, %v2894
        %v2896 = vsel %vm2884, %v2874, %v2877
        %v2897 = vsel %vm2887, %v2883, 1326507024
        %v2898 = vsel %vm2886, %v2880, %v2897
        %v2899 = vsel %vm2885, %v2896, %v2898
        %v2900 = vshll.u32 %v2860, 8
        %v2901 = vmul.u32.u64.compose %v2900, %v2899
        %v2902 = vextract.low.u32 %v2901
        %v2903 = vextract.high.u32 %v2901
        %v2904 = vmul.u32.u64.compose %v2900, %v2895
        %v2905 = vextract.low.u32 %v2904
        %v2906 = vextract.high.u32 %v2904
        %v2907 = vmul.u32 %v2900, %v2891
        %v2908 = vadd.s32 %v2903, %v2905
        %vm2909 = vc.u32 %v2903, %v2905
        %v2910 = vadd.s32 %v2906, 1
        %v2911 = vsel %vm2909, %v2910, %v2906
        %v2912 = vadd.s32 %v2907, %v2911
        %v2913 = vadd.s32 %v2912, 536870912
        %v2914 = vshrl.u32 %v2913, 30
        %v2915 = vshll.u32 %v2914, 30
        %v2916 = vsub.s32 %v2912, %v2915
        %vm2917 = vcmp.lt.s32.totalorder %v2916, 0
        %v2918 = vsub.s32 0, %v2916
        %v2919 = vsel %vm2917, %v2918, %v2916
        %v2920 = vclz %v2919
        %v2921 = vsub.s32 %v2920, 2
        %vm2922 = vcmp.gt.s32.totalorder 0, %v2921
        %v2923 = vsel %vm2922, 0, %v2921
        %v2924 = vsub.s32 32, %v2923
        %v2925 = vshll.u32 %v2916, %v2923
        %v2926 = vshrl.u32 %v2908, %v2924
        %v2927 = vor.u32 %v2925, %v2926
        %v2928 = vsub.s32 4294967266, %v2923
        %v2929 = vadd.s32 %v2928, 127
        %v2930 = vshll.u32 %v2929, 23
        %v2931 = vor.u32 4788187, %v2930
        %v2932 = vand.u32 2147483647, %v2931
        %v2934 = vcvt.s32.f32 %v2927
        %v2935 = vmul.f32 %v2934, %v2932
        %v2936 = vxor.u32 %v2935, 2147483648
        %v2937 = vsel %vm2854, %v2936, %v2935
        %v2938 = vsub.s32 4, %v2914
        %v2939 = vsel %vm2854, %v2938, %v2914
        %v2940 = vsel %vm2853, %v1909, %v2937
        %v2941 = vsel %vm2853, 0, %v2939
        %v2942 = vcosq.f32.pop %v2940
        %v2943 = vsinq.f32.pop %v2940
        %vm2944 = vweird.f32 %v1909
        %v2945 = vadd.s32 %v2941, 3
        %v2946 = vand.u32 %v2945, 3
        %vm2947 = vcmp.lt.s32.totalorder %v2946, 2
        %vm2948 = vcmp.eq.s32.totalorder %v2946, 0
        %v2949 = vxor.u32 %v2943, 2147483648
        %v2950 = vsel %vm2948, %v2942, %v2949
        %vm2951 = vcmp.eq.s32.totalorder %v2946, 2
        %v2952 = vxor.u32 %v2942, 2147483648
        %v2953 = vsel %vm2951, %v2952, %v2943
        %v2954 = vsel %vm2947, %v2950, %v2953
        %v2955 = vsel %vm2944, nan, %v2954
        %v2956 = vand.u32 2147483647, %v1910
        %vm2957 = vcmp.le.f32.partialorder %v2956, 0.7853982
        %vm2958 = vcmp.lt.s32.totalorder %v1910, 0
        %v2959 = vand.u32 %v1910, 2139095040
        %v2960 = vshrl.u32 %v2959, 23
        %v2961 = vsub.s32 %v2960, 127
        %v2962 = vand.u32 2147483647, %v1910
        %v2963 = vand.u32 %v2962, 8388607
        %v2964 = vor.u32 %v2963, 8388608
        %v2965 = vsub.s32 0, %v2964
        %v2966 = vadd.s32 %v2961, 1
        %vm2967 = vcmp.gt.s32.totalorder %v2966, 0
        %v2968 = vsel %vm2967, %v2966, 0
        %v2969 = vshrl.u32 %v2968, 5
        %v2970 = vand.u32 %v2968, 31
        %v2971 = vsub.s32 32, %v2970
        %v2972 = vshrl.u32 683565275, %v2971
        %v2973 = vshll.u32 683565275, %v2970
        %v2974 = vshrl.u32 2475754826, %v2971
        %v2975 = vor.u32 %v2973, %v2974
        %v2976 = vshll.u32 2475754826, %v2970
        %v2977 = vshrl.u32 2131351028, %v2971
        %v2978 = vor.u32 %v2976, %v2977
        %v2979 = vshll.u32 2131351028, %v2970
        %v2980 = vshrl.u32 2102212464, %v2971
        %v2981 = vor.u32 %v2979, %v2980
        %v2982 = vshll.u32 2102212464, %v2970
        %v2983 = vshrl.u32 920167782, %v2971
        %v2984 = vor.u32 %v2982, %v2983
        %v2985 = vshll.u32 920167782, %v2970
        %v2986 = vshrl.u32 1326507024, %v2971
        %v2987 = vor.u32 %v2985, %v2986
        %vm2988 = vcmp.lt.s32.totalorder %v2969, 1
        %vm2989 = vcmp.lt.s32.totalorder %v2969, 2
        %vm2990 = vcmp.lt.s32.totalorder %v2969, 3
        %vm2991 = vcmp.lt.s32.totalorder %v2969, 4
        %v2992 = vsel %vm2988, %v2972, %v2975
        %v2993 = vsel %vm2991, %v2981, 2102212464
        %v2994 = vsel %vm2990, %v2978, %v2993
        %v2995 = vsel %vm2989, %v2992, %v2994
        %v2996 = vsel %vm2988, %v2975, %v2978
        %v2997 = vsel %vm2991, %v2984, 920167782
        %v2998 = vsel %vm2990, %v2981, %v2997
        %v2999 = vsel %vm2989, %v2996, %v2998
        %v3000 = vsel %vm2988, %v2978, %v2981
        %v3001 = vsel %vm2991, %v2987, 1326507024
        %v3002 = vsel %vm2990, %v2984, %v3001
        %v3003 = vsel %vm2989, %v3000, %v3002
        %v3004 = vshll.u32 %v2964, 8
        %v3005 = vmul.u32.u64.compose %v3004, %v3003
        %v3006 = vextract.low.u32 %v3005
        %v3007 = vextract.high.u32 %v3005
        %v3008 = vmul.u32.u64.compose %v3004, %v2999
        %v3009 = vextract.low.u32 %v3008
        %v3010 = vextract.high.u32 %v3008
        %v3011 = vmul.u32 %v3004, %v2995
        %v3012 = vadd.s32 %v3007, %v3009
        %vm3013 = vc.u32 %v3007, %v3009
        %v3014 = vadd.s32 %v3010, 1
        %v3015 = vsel %vm3013, %v3014, %v3010
        %v3016 = vadd.s32 %v3011, %v3015
        %v3017 = vadd.s32 %v3016, 536870912
        %v3018 = vshrl.u32 %v3017, 30
        %v3019 = vshll.u32 %v3018, 30
        %v3020 = vsub.s32 %v3016, %v3019
        %vm3021 = vcmp.lt.s32.totalorder %v3020, 0
        %v3022 = vsub.s32 0, %v3020
        %v3023 = vsel %vm3021, %v3022, %v3020
        %v3024 = vclz %v3023
        %v3025 = vsub.s32 %v3024, 2
        %vm3026 = vcmp.gt.s32.totalorder 0, %v3025
        %v3027 = vsel %vm3026, 0, %v3025
        %v3028 = vsub.s32 32, %v3027
        %v3029 = vshll.u32 %v3020, %v3027
        %v3030 = vshrl.u32 %v3012, %v3028
        %v3031 = vor.u32 %v3029, %v3030
        %v3032 = vsub.s32 4294967266, %v3027
        %v3033 = vadd.s32 %v3032, 127
        %v3034 = vshll.u32 %v3033, 23
        %v3035 = vor.u32 4788187, %v3034
        %v3036 = vand.u32 2147483647, %v3035
        %v3038 = vcvt.s32.f32 %v3031
        %v3039 = vmul.f32 %v3038, %v3036
        %v3040 = vxor.u32 %v3039, 2147483648
        %v3041 = vsel %vm2958, %v3040, %v3039
        %v3042 = vsub.s32 4, %v3018
        %v3043 = vsel %vm2958, %v3042, %v3018
        %v3044 = vsel %vm2957, %v1910, %v3041
        %v3045 = vsel %vm2957, 0, %v3043
        %v3046 = vcosq.f32.pop %v3044
        %v3047 = vsinq.f32.pop %v3044
        %vm3048 = vweird.f32 %v1910
        %v3049 = vadd.s32 %v3045, 3
        %v3050 = vand.u32 %v3049, 3
        %vm3051 = vcmp.lt.s32.totalorder %v3050, 2
        %vm3052 = vcmp.eq.s32.totalorder %v3050, 0
        %v3053 = vxor.u32 %v3047, 2147483648
        %v3054 = vsel %vm3052, %v3046, %v3053
        %vm3055 = vcmp.eq.s32.totalorder %v3050, 2
        %v3056 = vxor.u32 %v3046, 2147483648
        %v3057 = vsel %vm3055, %v3056, %v3047
        %v3058 = vsel %vm3051, %v3054, %v3057
        %v3059 = vsel %vm3048, nan, %v3058
        %v3060 = vand.u32 2147483647, %v1911
        %vm3061 = vcmp.le.f32.partialorder %v3060, 0.7853982
        %vm3062 = vcmp.lt.s32.totalorder %v1911, 0
        %v3063 = vand.u32 %v1911, 2139095040
        %v3064 = vshrl.u32 %v3063, 23
        %v3065 = vsub.s32 %v3064, 127
        %v3066 = vand.u32 2147483647, %v1911
        %v3067 = vand.u32 %v3066, 8388607
        %v3068 = vor.u32 %v3067, 8388608
        %v3069 = vsub.s32 0, %v3068
        %v3070 = vadd.s32 %v3065, 1
        %vm3071 = vcmp.gt.s32.totalorder %v3070, 0
        %v3072 = vsel %vm3071, %v3070, 0
        %v3073 = vshrl.u32 %v3072, 5
        %v3074 = vand.u32 %v3072, 31
        %v3075 = vsub.s32 32, %v3074
        %v3076 = vshrl.u32 683565275, %v3075
        %v3077 = vshll.u32 683565275, %v3074
        %v3078 = vshrl.u32 2475754826, %v3075
        %v3079 = vor.u32 %v3077, %v3078
        %v3080 = vshll.u32 2475754826, %v3074
        %v3081 = vshrl.u32 2131351028, %v3075
        %v3082 = vor.u32 %v3080, %v3081
        %v3083 = vshll.u32 2131351028, %v3074
        %v3084 = vshrl.u32 2102212464, %v3075
        %v3085 = vor.u32 %v3083, %v3084
        %v3086 = vshll.u32 2102212464, %v3074
        %v3087 = vshrl.u32 920167782, %v3075
        %v3088 = vor.u32 %v3086, %v3087
        %v3089 = vshll.u32 920167782, %v3074
        %v3090 = vshrl.u32 1326507024, %v3075
        %v3091 = vor.u32 %v3089, %v3090
        %vm3092 = vcmp.lt.s32.totalorder %v3073, 1
        %vm3093 = vcmp.lt.s32.totalorder %v3073, 2
        %vm3094 = vcmp.lt.s32.totalorder %v3073, 3
        %vm3095 = vcmp.lt.s32.totalorder %v3073, 4
        %v3096 = vsel %vm3092, %v3076, %v3079
        %v3097 = vsel %vm3095, %v3085, 2102212464
        %v3098 = vsel %vm3094, %v3082, %v3097
        %v3099 = vsel %vm3093, %v3096, %v3098
        %v3100 = vsel %vm3092, %v3079, %v3082
        %v3101 = vsel %vm3095, %v3088, 920167782
        %v3102 = vsel %vm3094, %v3085, %v3101
        %v3103 = vsel %vm3093, %v3100, %v3102
        %v3104 = vsel %vm3092, %v3082, %v3085
        %v3105 = vsel %vm3095, %v3091, 1326507024
        %v3106 = vsel %vm3094, %v3088, %v3105
        %v3107 = vsel %vm3093, %v3104, %v3106
        %v3108 = vshll.u32 %v3068, 8
        %v3109 = vmul.u32.u64.compose %v3108, %v3107
        %v3110 = vextract.low.u32 %v3109
        %v3111 = vextract.high.u32 %v3109
        %v3112 = vmul.u32.u64.compose %v3108, %v3103
        %v3113 = vextract.low.u32 %v3112
        %v3114 = vextract.high.u32 %v3112
        %v3115 = vmul.u32 %v3108, %v3099
        %v3116 = vadd.s32 %v3111, %v3113
        %vm3117 = vc.u32 %v3111, %v3113
        %v3118 = vadd.s32 %v3114, 1
        %v3119 = vsel %vm3117, %v3118, %v3114
        %v3120 = vadd.s32 %v3115, %v3119
        %v3121 = vadd.s32 %v3120, 536870912
        %v3122 = vshrl.u32 %v3121, 30
        %v3123 = vshll.u32 %v3122, 30
        %v3124 = vsub.s32 %v3120, %v3123
        %vm3125 = vcmp.lt.s32.totalorder %v3124, 0
        %v3126 = vsub.s32 0, %v3124
        %v3127 = vsel %vm3125, %v3126, %v3124
        %v3128 = vclz %v3127
        %v3129 = vsub.s32 %v3128, 2
        %vm3130 = vcmp.gt.s32.totalorder 0, %v3129
        %v3131 = vsel %vm3130, 0, %v3129
        %v3132 = vsub.s32 32, %v3131
        %v3133 = vshll.u32 %v3124, %v3131
        %v3134 = vshrl.u32 %v3116, %v3132
        %v3135 = vor.u32 %v3133, %v3134
        %v3136 = vsub.s32 4294967266, %v3131
        %v3137 = vadd.s32 %v3136, 127
        %v3138 = vshll.u32 %v3137, 23
        %v3139 = vor.u32 4788187, %v3138
        %v3140 = vand.u32 2147483647, %v3139
        %v3142 = vcvt.s32.f32 %v3135
        %v3143 = vmul.f32 %v3142, %v3140
        %v3144 = vxor.u32 %v3143, 2147483648
        %v3145 = vsel %vm3062, %v3144, %v3143
        %v3146 = vsub.s32 4, %v3122
        %v3147 = vsel %vm3062, %v3146, %v3122
        %v3148 = vsel %vm3061, %v1911, %v3145
        %v3149 = vsel %vm3061, 0, %v3147
        %v3150 = vcosq.f32.pop %v3148
        %v3151 = vsinq.f32.pop %v3148
        %vm3152 = vweird.f32 %v1911
        %v3153 = vadd.s32 %v3149, 3
        %v3154 = vand.u32 %v3153, 3
        %vm3155 = vcmp.lt.s32.totalorder %v3154, 2
        %vm3156 = vcmp.eq.s32.totalorder %v3154, 0
        %v3157 = vxor.u32 %v3151, 2147483648
        %v3158 = vsel %vm3156, %v3150, %v3157
        %vm3159 = vcmp.eq.s32.totalorder %v3154, 2
        %v3160 = vxor.u32 %v3150, 2147483648
        %v3161 = vsel %vm3159, %v3160, %v3151
        %v3162 = vsel %vm3155, %v3158, %v3161
        %v3163 = vsel %vm3152, nan, %v3162
        %v3164 = vand.u32 2147483647, %v1912
        %vm3165 = vcmp.le.f32.partialorder %v3164, 0.7853982
        %vm3166 = vcmp.lt.s32.totalorder %v1912, 0
        %v3167 = vand.u32 %v1912, 2139095040
        %v3168 = vshrl.u32 %v3167, 23
        %v3169 = vsub.s32 %v3168, 127
        %v3170 = vand.u32 2147483647, %v1912
        %v3171 = vand.u32 %v3170, 8388607
        %v3172 = vor.u32 %v3171, 8388608
        %v3173 = vsub.s32 0, %v3172
        %v3174 = vadd.s32 %v3169, 1
        %vm3175 = vcmp.gt.s32.totalorder %v3174, 0
        %v3176 = vsel %vm3175, %v3174, 0
        %v3177 = vshrl.u32 %v3176, 5
        %v3178 = vand.u32 %v3176, 31
        %v3179 = vsub.s32 32, %v3178
        %v3180 = vshrl.u32 683565275, %v3179
        %v3181 = vshll.u32 683565275, %v3178
        %v3182 = vshrl.u32 2475754826, %v3179
        %v3183 = vor.u32 %v3181, %v3182
        %v3184 = vshll.u32 2475754826, %v3178
        %v3185 = vshrl.u32 2131351028, %v3179
        %v3186 = vor.u32 %v3184, %v3185
        %v3187 = vshll.u32 2131351028, %v3178
        %v3188 = vshrl.u32 2102212464, %v3179
        %v3189 = vor.u32 %v3187, %v3188
        %v3190 = vshll.u32 2102212464, %v3178
        %v3191 = vshrl.u32 920167782, %v3179
        %v3192 = vor.u32 %v3190, %v3191
        %v3193 = vshll.u32 920167782, %v3178
        %v3194 = vshrl.u32 1326507024, %v3179
        %v3195 = vor.u32 %v3193, %v3194
        %vm3196 = vcmp.lt.s32.totalorder %v3177, 1
        %vm3197 = vcmp.lt.s32.totalorder %v3177, 2
        %vm3198 = vcmp.lt.s32.totalorder %v3177, 3
        %vm3199 = vcmp.lt.s32.totalorder %v3177, 4
        %v3200 = vsel %vm3196, %v3180, %v3183
        %v3201 = vsel %vm3199, %v3189, 2102212464
        %v3202 = vsel %vm3198, %v3186, %v3201
        %v3203 = vsel %vm3197, %v3200, %v3202
        %v3204 = vsel %vm3196, %v3183, %v3186
        %v3205 = vsel %vm3199, %v3192, 920167782
        %v3206 = vsel %vm3198, %v3189, %v3205
        %v3207 = vsel %vm3197, %v3204, %v3206
        %v3208 = vsel %vm3196, %v3186, %v3189
        %v3209 = vsel %vm3199, %v3195, 1326507024
        %v3210 = vsel %vm3198, %v3192, %v3209
        %v3211 = vsel %vm3197, %v3208, %v3210
        %v3212 = vshll.u32 %v3172, 8
        %v3213 = vmul.u32.u64.compose %v3212, %v3211
        %v3214 = vextract.low.u32 %v3213
        %v3215 = vextract.high.u32 %v3213
        %v3216 = vmul.u32.u64.compose %v3212, %v3207
        %v3217 = vextract.low.u32 %v3216
        %v3218 = vextract.high.u32 %v3216
        %v3219 = vmul.u32 %v3212, %v3203
        %v3220 = vadd.s32 %v3215, %v3217
        %vm3221 = vc.u32 %v3215, %v3217
        %v3222 = vadd.s32 %v3218, 1
        %v3223 = vsel %vm3221, %v3222, %v3218
        %v3224 = vadd.s32 %v3219, %v3223
        %v3225 = vadd.s32 %v3224, 536870912
        %v3226 = vshrl.u32 %v3225, 30
        %v3227 = vshll.u32 %v3226, 30
        %v3228 = vsub.s32 %v3224, %v3227
        %vm3229 = vcmp.lt.s32.totalorder %v3228, 0
        %v3230 = vsub.s32 0, %v3228
        %v3231 = vsel %vm3229, %v3230, %v3228
        %v3232 = vclz %v3231
        %v3233 = vsub.s32 %v3232, 2
        %vm3234 = vcmp.gt.s32.totalorder 0, %v3233
        %v3235 = vsel %vm3234, 0, %v3233
        %v3236 = vsub.s32 32, %v3235
        %v3237 = vshll.u32 %v3228, %v3235
        %v3238 = vshrl.u32 %v3220, %v3236
        %v3239 = vor.u32 %v3237, %v3238
        %v3240 = vsub.s32 4294967266, %v3235
        %v3241 = vadd.s32 %v3240, 127
        %v3242 = vshll.u32 %v3241, 23
        %v3243 = vor.u32 4788187, %v3242
        %v3244 = vand.u32 2147483647, %v3243
        %v3246 = vcvt.s32.f32 %v3239
        %v3247 = vmul.f32 %v3246, %v3244
        %v3248 = vxor.u32 %v3247, 2147483648
        %v3249 = vsel %vm3166, %v3248, %v3247
        %v3250 = vsub.s32 4, %v3226
        %v3251 = vsel %vm3166, %v3250, %v3226
        %v3252 = vsel %vm3165, %v1912, %v3249
        %v3253 = vsel %vm3165, 0, %v3251
        %v3254 = vcosq.f32.pop %v3252
        %v3255 = vsinq.f32.pop %v3252
        %vm3256 = vweird.f32 %v1912
        %v3257 = vadd.s32 %v3253, 3
        %v3258 = vand.u32 %v3257, 3
        %vm3259 = vcmp.lt.s32.totalorder %v3258, 2
        %vm3260 = vcmp.eq.s32.totalorder %v3258, 0
        %v3261 = vxor.u32 %v3255, 2147483648
        %v3262 = vsel %vm3260, %v3254, %v3261
        %vm3263 = vcmp.eq.s32.totalorder %v3258, 2
        %v3264 = vxor.u32 %v3254, 2147483648
        %v3265 = vsel %vm3263, %v3264, %v3255
        %v3266 = vsel %vm3259, %v3262, %v3265
        %v3267 = vsel %vm3256, nan, %v3266
        %v3268 = vand.u32 2147483647, %v1913
        %vm3269 = vcmp.le.f32.partialorder %v3268, 0.7853982
        %vm3270 = vcmp.lt.s32.totalorder %v1913, 0
        %v3271 = vand.u32 %v1913, 2139095040
        %v3272 = vshrl.u32 %v3271, 23
        %v3273 = vsub.s32 %v3272, 127
        %v3274 = vand.u32 2147483647, %v1913
        %v3275 = vand.u32 %v3274, 8388607
        %v3276 = vor.u32 %v3275, 8388608
        %v3277 = vsub.s32 0, %v3276
        %v3278 = vadd.s32 %v3273, 1
        %vm3279 = vcmp.gt.s32.totalorder %v3278, 0
        %v3280 = vsel %vm3279, %v3278, 0
        %v3281 = vshrl.u32 %v3280, 5
        %v3282 = vand.u32 %v3280, 31
        %v3283 = vsub.s32 32, %v3282
        %v3284 = vshrl.u32 683565275, %v3283
        %v3285 = vshll.u32 683565275, %v3282
        %v3286 = vshrl.u32 2475754826, %v3283
        %v3287 = vor.u32 %v3285, %v3286
        %v3288 = vshll.u32 2475754826, %v3282
        %v3289 = vshrl.u32 2131351028, %v3283
        %v3290 = vor.u32 %v3288, %v3289
        %v3291 = vshll.u32 2131351028, %v3282
        %v3292 = vshrl.u32 2102212464, %v3283
        %v3293 = vor.u32 %v3291, %v3292
        %v3294 = vshll.u32 2102212464, %v3282
        %v3295 = vshrl.u32 920167782, %v3283
        %v3296 = vor.u32 %v3294, %v3295
        %v3297 = vshll.u32 920167782, %v3282
        %v3298 = vshrl.u32 1326507024, %v3283
        %v3299 = vor.u32 %v3297, %v3298
        %vm3300 = vcmp.lt.s32.totalorder %v3281, 1
        %vm3301 = vcmp.lt.s32.totalorder %v3281, 2
        %vm3302 = vcmp.lt.s32.totalorder %v3281, 3
        %vm3303 = vcmp.lt.s32.totalorder %v3281, 4
        %v3304 = vsel %vm3300, %v3284, %v3287
        %v3305 = vsel %vm3303, %v3293, 2102212464
        %v3306 = vsel %vm3302, %v3290, %v3305
        %v3307 = vsel %vm3301, %v3304, %v3306
        %v3308 = vsel %vm3300, %v3287, %v3290
        %v3309 = vsel %vm3303, %v3296, 920167782
        %v3310 = vsel %vm3302, %v3293, %v3309
        %v3311 = vsel %vm3301, %v3308, %v3310
        %v3312 = vsel %vm3300, %v3290, %v3293
        %v3313 = vsel %vm3303, %v3299, 1326507024
        %v3314 = vsel %vm3302, %v3296, %v3313
        %v3315 = vsel %vm3301, %v3312, %v3314
        %v3316 = vshll.u32 %v3276, 8
        %v3317 = vmul.u32.u64.compose %v3316, %v3315
        %v3318 = vextract.low.u32 %v3317
        %v3319 = vextract.high.u32 %v3317
        %v3320 = vmul.u32.u64.compose %v3316, %v3311
        %v3321 = vextract.low.u32 %v3320
        %v3322 = vextract.high.u32 %v3320
        %v3323 = vmul.u32 %v3316, %v3307
        %v3324 = vadd.s32 %v3319, %v3321
        %vm3325 = vc.u32 %v3319, %v3321
        %v3326 = vadd.s32 %v3322, 1
        %v3327 = vsel %vm3325, %v3326, %v3322
        %v3328 = vadd.s32 %v3323, %v3327
        %v3329 = vadd.s32 %v3328, 536870912
        %v3330 = vshrl.u32 %v3329, 30
        %v3331 = vshll.u32 %v3330, 30
        %v3332 = vsub.s32 %v3328, %v3331
        %vm3333 = vcmp.lt.s32.totalorder %v3332, 0
        %v3334 = vsub.s32 0, %v3332
        %v3335 = vsel %vm3333, %v3334, %v3332
        %v3336 = vclz %v3335
        %v3337 = vsub.s32 %v3336, 2
        %vm3338 = vcmp.gt.s32.totalorder 0, %v3337
        %v3339 = vsel %vm3338, 0, %v3337
        %v3340 = vsub.s32 32, %v3339
        %v3341 = vshll.u32 %v3332, %v3339
        %v3342 = vshrl.u32 %v3324, %v3340
        %v3343 = vor.u32 %v3341, %v3342
        %v3344 = vsub.s32 4294967266, %v3339
        %v3345 = vadd.s32 %v3344, 127
        %v3346 = vshll.u32 %v3345, 23
        %v3347 = vor.u32 4788187, %v3346
        %v3348 = vand.u32 2147483647, %v3347
        %v3350 = vcvt.s32.f32 %v3343
        %v3351 = vmul.f32 %v3350, %v3348
        %v3352 = vxor.u32 %v3351, 2147483648
        %v3353 = vsel %vm3270, %v3352, %v3351
        %v3354 = vsub.s32 4, %v3330
        %v3355 = vsel %vm3270, %v3354, %v3330
        %v3356 = vsel %vm3269, %v1913, %v3353
        %v3357 = vsel %vm3269, 0, %v3355
        %v3358 = vcosq.f32.pop %v3356
        %v3359 = vsinq.f32.pop %v3356
        %vm3360 = vweird.f32 %v1913
        %v3361 = vadd.s32 %v3357, 3
        %v3362 = vand.u32 %v3361, 3
        %vm3363 = vcmp.lt.s32.totalorder %v3362, 2
        %vm3364 = vcmp.eq.s32.totalorder %v3362, 0
        %v3365 = vxor.u32 %v3359, 2147483648
        %v3366 = vsel %vm3364, %v3358, %v3365
        %vm3367 = vcmp.eq.s32.totalorder %v3362, 2
        %v3368 = vxor.u32 %v3358, 2147483648
        %v3369 = vsel %vm3367, %v3368, %v3359
        %v3370 = vsel %vm3363, %v3366, %v3369
        %v3371 = vsel %vm3360, nan, %v3370
        %v3372 = vand.u32 2147483647, %v1914
        %vm3373 = vcmp.le.f32.partialorder %v3372, 0.7853982
        %vm3374 = vcmp.lt.s32.totalorder %v1914, 0
        %v3375 = vand.u32 %v1914, 2139095040
        %v3376 = vshrl.u32 %v3375, 23
        %v3377 = vsub.s32 %v3376, 127
        %v3378 = vand.u32 2147483647, %v1914
        %v3379 = vand.u32 %v3378, 8388607
        %v3380 = vor.u32 %v3379, 8388608
        %v3381 = vsub.s32 0, %v3380
        %v3382 = vadd.s32 %v3377, 1
        %vm3383 = vcmp.gt.s32.totalorder %v3382, 0
        %v3384 = vsel %vm3383, %v3382, 0
        %v3385 = vshrl.u32 %v3384, 5
        %v3386 = vand.u32 %v3384, 31
        %v3387 = vsub.s32 32, %v3386
        %v3388 = vshrl.u32 683565275, %v3387
        %v3389 = vshll.u32 683565275, %v3386
        %v3390 = vshrl.u32 2475754826, %v3387
        %v3391 = vor.u32 %v3389, %v3390
        %v3392 = vshll.u32 2475754826, %v3386
        %v3393 = vshrl.u32 2131351028, %v3387
        %v3394 = vor.u32 %v3392, %v3393
        %v3395 = vshll.u32 2131351028, %v3386
        %v3396 = vshrl.u32 2102212464, %v3387
        %v3397 = vor.u32 %v3395, %v3396
        %v3398 = vshll.u32 2102212464, %v3386
        %v3399 = vshrl.u32 920167782, %v3387
        %v3400 = vor.u32 %v3398, %v3399
        %v3401 = vshll.u32 920167782, %v3386
        %v3402 = vshrl.u32 1326507024, %v3387
        %v3403 = vor.u32 %v3401, %v3402
        %vm3404 = vcmp.lt.s32.totalorder %v3385, 1
        %vm3405 = vcmp.lt.s32.totalorder %v3385, 2
        %vm3406 = vcmp.lt.s32.totalorder %v3385, 3
        %vm3407 = vcmp.lt.s32.totalorder %v3385, 4
        %v3408 = vsel %vm3404, %v3388, %v3391
        %v3409 = vsel %vm3407, %v3397, 2102212464
        %v3410 = vsel %vm3406, %v3394, %v3409
        %v3411 = vsel %vm3405, %v3408, %v3410
        %v3412 = vsel %vm3404, %v3391, %v3394
        %v3413 = vsel %vm3407, %v3400, 920167782
        %v3414 = vsel %vm3406, %v3397, %v3413
        %v3415 = vsel %vm3405, %v3412, %v3414
        %v3416 = vsel %vm3404, %v3394, %v3397
        %v3417 = vsel %vm3407, %v3403, 1326507024
        %v3418 = vsel %vm3406, %v3400, %v3417
        %v3419 = vsel %vm3405, %v3416, %v3418
        %v3420 = vshll.u32 %v3380, 8
        %v3421 = vmul.u32.u64.compose %v3420, %v3419
        %v3422 = vextract.low.u32 %v3421
        %v3423 = vextract.high.u32 %v3421
        %v3424 = vmul.u32.u64.compose %v3420, %v3415
        %v3425 = vextract.low.u32 %v3424
        %v3426 = vextract.high.u32 %v3424
        %v3427 = vmul.u32 %v3420, %v3411
        %v3428 = vadd.s32 %v3423, %v3425
        %vm3429 = vc.u32 %v3423, %v3425
        %v3430 = vadd.s32 %v3426, 1
        %v3431 = vsel %vm3429, %v3430, %v3426
        %v3432 = vadd.s32 %v3427, %v3431
        %v3433 = vadd.s32 %v3432, 536870912
        %v3434 = vshrl.u32 %v3433, 30
        %v3435 = vshll.u32 %v3434, 30
        %v3436 = vsub.s32 %v3432, %v3435
        %vm3437 = vcmp.lt.s32.totalorder %v3436, 0
        %v3438 = vsub.s32 0, %v3436
        %v3439 = vsel %vm3437, %v3438, %v3436
        %v3440 = vclz %v3439
        %v3441 = vsub.s32 %v3440, 2
        %vm3442 = vcmp.gt.s32.totalorder 0, %v3441
        %v3443 = vsel %vm3442, 0, %v3441
        %v3444 = vsub.s32 32, %v3443
        %v3445 = vshll.u32 %v3436, %v3443
        %v3446 = vshrl.u32 %v3428, %v3444
        %v3447 = vor.u32 %v3445, %v3446
        %v3448 = vsub.s32 4294967266, %v3443
        %v3449 = vadd.s32 %v3448, 127
        %v3450 = vshll.u32 %v3449, 23
        %v3451 = vor.u32 4788187, %v3450
        %v3452 = vand.u32 2147483647, %v3451
        %v3454 = vcvt.s32.f32 %v3447
        %v3455 = vmul.f32 %v3454, %v3452
        %v3456 = vxor.u32 %v3455, 2147483648
        %v3457 = vsel %vm3374, %v3456, %v3455
        %v3458 = vsub.s32 4, %v3434
        %v3459 = vsel %vm3374, %v3458, %v3434
        %v3460 = vsel %vm3373, %v1914, %v3457
        %v3461 = vsel %vm3373, 0, %v3459
        %v3462 = vcosq.f32.pop %v3460
        %v3463 = vsinq.f32.pop %v3460
        %vm3464 = vweird.f32 %v1914
        %v3465 = vadd.s32 %v3461, 3
        %v3466 = vand.u32 %v3465, 3
        %vm3467 = vcmp.lt.s32.totalorder %v3466, 2
        %vm3468 = vcmp.eq.s32.totalorder %v3466, 0
        %v3469 = vxor.u32 %v3463, 2147483648
        %v3470 = vsel %vm3468, %v3462, %v3469
        %vm3471 = vcmp.eq.s32.totalorder %v3466, 2
        %v3472 = vxor.u32 %v3462, 2147483648
        %v3473 = vsel %vm3471, %v3472, %v3463
        %v3474 = vsel %vm3467, %v3470, %v3473
        %v3475 = vsel %vm3464, nan, %v3474
        %v3476 = vand.u32 2147483647, %v1915
        %vm3477 = vcmp.le.f32.partialorder %v3476, 0.7853982
        %vm3478 = vcmp.lt.s32.totalorder %v1915, 0
        %v3479 = vand.u32 %v1915, 2139095040
        %v3480 = vshrl.u32 %v3479, 23
        %v3481 = vsub.s32 %v3480, 127
        %v3482 = vand.u32 2147483647, %v1915
        %v3483 = vand.u32 %v3482, 8388607
        %v3484 = vor.u32 %v3483, 8388608
        %v3485 = vsub.s32 0, %v3484
        %v3486 = vadd.s32 %v3481, 1
        %vm3487 = vcmp.gt.s32.totalorder %v3486, 0
        %v3488 = vsel %vm3487, %v3486, 0
        %v3489 = vshrl.u32 %v3488, 5
        %v3490 = vand.u32 %v3488, 31
        %v3491 = vsub.s32 32, %v3490
        %v3492 = vshrl.u32 683565275, %v3491
        %v3493 = vshll.u32 683565275, %v3490
        %v3494 = vshrl.u32 2475754826, %v3491
        %v3495 = vor.u32 %v3493, %v3494
        %v3496 = vshll.u32 2475754826, %v3490
        %v3497 = vshrl.u32 2131351028, %v3491
        %v3498 = vor.u32 %v3496, %v3497
        %v3499 = vshll.u32 2131351028, %v3490
        %v3500 = vshrl.u32 2102212464, %v3491
        %v3501 = vor.u32 %v3499, %v3500
        %v3502 = vshll.u32 2102212464, %v3490
        %v3503 = vshrl.u32 920167782, %v3491
        %v3504 = vor.u32 %v3502, %v3503
        %v3505 = vshll.u32 920167782, %v3490
        %v3506 = vshrl.u32 1326507024, %v3491
        %v3507 = vor.u32 %v3505, %v3506
        %vm3508 = vcmp.lt.s32.totalorder %v3489, 1
        %vm3509 = vcmp.lt.s32.totalorder %v3489, 2
        %vm3510 = vcmp.lt.s32.totalorder %v3489, 3
        %vm3511 = vcmp.lt.s32.totalorder %v3489, 4
        %v3512 = vsel %vm3508, %v3492, %v3495
        %v3513 = vsel %vm3511, %v3501, 2102212464
        %v3514 = vsel %vm3510, %v3498, %v3513
        %v3515 = vsel %vm3509, %v3512, %v3514
        %v3516 = vsel %vm3508, %v3495, %v3498
        %v3517 = vsel %vm3511, %v3504, 920167782
        %v3518 = vsel %vm3510, %v3501, %v3517
        %v3519 = vsel %vm3509, %v3516, %v3518
        %v3520 = vsel %vm3508, %v3498, %v3501
        %v3521 = vsel %vm3511, %v3507, 1326507024
        %v3522 = vsel %vm3510, %v3504, %v3521
        %v3523 = vsel %vm3509, %v3520, %v3522
        %v3524 = vshll.u32 %v3484, 8
        %v3525 = vmul.u32.u64.compose %v3524, %v3523
        %v3526 = vextract.low.u32 %v3525
        %v3527 = vextract.high.u32 %v3525
        %v3528 = vmul.u32.u64.compose %v3524, %v3519
        %v3529 = vextract.low.u32 %v3528
        %v3530 = vextract.high.u32 %v3528
        %v3531 = vmul.u32 %v3524, %v3515
        %v3532 = vadd.s32 %v3527, %v3529
        %vm3533 = vc.u32 %v3527, %v3529
        %v3534 = vadd.s32 %v3530, 1
        %v3535 = vsel %vm3533, %v3534, %v3530
        %v3536 = vadd.s32 %v3531, %v3535
        %v3537 = vadd.s32 %v3536, 536870912
        %v3538 = vshrl.u32 %v3537, 30
        %v3539 = vshll.u32 %v3538, 30
        %v3540 = vsub.s32 %v3536, %v3539
        %vm3541 = vcmp.lt.s32.totalorder %v3540, 0
        %v3542 = vsub.s32 0, %v3540
        %v3543 = vsel %vm3541, %v3542, %v3540
        %v3544 = vclz %v3543
        %v3545 = vsub.s32 %v3544, 2
        %vm3546 = vcmp.gt.s32.totalorder 0, %v3545
        %v3547 = vsel %vm3546, 0, %v3545
        %v3548 = vsub.s32 32, %v3547
        %v3549 = vshll.u32 %v3540, %v3547
        %v3550 = vshrl.u32 %v3532, %v3548
        %v3551 = vor.u32 %v3549, %v3550
        %v3552 = vsub.s32 4294967266, %v3547
        %v3553 = vadd.s32 %v3552, 127
        %v3554 = vshll.u32 %v3553, 23
        %v3555 = vor.u32 4788187, %v3554
        %v3556 = vand.u32 2147483647, %v3555
        %v3558 = vcvt.s32.f32 %v3551
        %v3559 = vmul.f32 %v3558, %v3556
        %v3560 = vxor.u32 %v3559, 2147483648
        %v3561 = vsel %vm3478, %v3560, %v3559
        %v3562 = vsub.s32 4, %v3538
        %v3563 = vsel %vm3478, %v3562, %v3538
        %v3564 = vsel %vm3477, %v1915, %v3561
        %v3565 = vsel %vm3477, 0, %v3563
        %v3566 = vcosq.f32.pop %v3564
        %v3567 = vsinq.f32.pop %v3564
        %vm3568 = vweird.f32 %v1915
        %v3569 = vadd.s32 %v3565, 3
        %v3570 = vand.u32 %v3569, 3
        %vm3571 = vcmp.lt.s32.totalorder %v3570, 2
        %vm3572 = vcmp.eq.s32.totalorder %v3570, 0
        %v3573 = vxor.u32 %v3567, 2147483648
        %v3574 = vsel %vm3572, %v3566, %v3573
        %vm3575 = vcmp.eq.s32.totalorder %v3570, 2
        %v3576 = vxor.u32 %v3566, 2147483648
        %v3577 = vsel %vm3575, %v3576, %v3567
        %v3578 = vsel %vm3571, %v3574, %v3577
        %v3579 = vsel %vm3568, nan, %v3578
        %v3580 = vmul.f32 %v1868, 30.0
        %v3581 = vmul.f32 %v1869, 30.0
        %v3582 = vmul.f32 %v1870, 30.0
        %v3583 = vmul.f32 %v1871, 30.0
        %v3584 = vmul.f32 %v1872, 30.0
        %v3585 = vmul.f32 %v1873, 30.0
        %v3586 = vmul.f32 %v1874, 30.0
        %v3587 = vmul.f32 %v1875, 30.0
        %v3588 = vmul.f32 %v1876, 30.0
        %v3589 = vmul.f32 %v1877, 30.0
        %v3590 = vmul.f32 %v1878, 30.0
        %v3591 = vmul.f32 %v1879, 30.0
        %v3592 = vmul.f32 %v1880, 30.0
        %v3593 = vmul.f32 %v1881, 30.0
        %v3594 = vmul.f32 %v1882, 30.0
        %v3595 = vmul.f32 %v1883, 30.0
        %v3596 = vadd.f32 %v3580, 0.1
        %v3597 = vadd.f32 %v3581, 0.1
        %v3598 = vadd.f32 %v3582, 0.1
        %v3599 = vadd.f32 %v3583, 0.1
        %v3600 = vadd.f32 %v3584, 0.1
        %v3601 = vadd.f32 %v3585, 0.1
        %v3602 = vadd.f32 %v3586, 0.1
        %v3603 = vadd.f32 %v3587, 0.1
        %v3604 = vadd.f32 %v3588, 0.1
        %v3605 = vadd.f32 %v3589, 0.1
        %v3606 = vadd.f32 %v3590, 0.1
        %v3607 = vadd.f32 %v3591, 0.1
        %v3608 = vadd.f32 %v3592, 0.1
        %v3609 = vadd.f32 %v3593, 0.1
        %v3610 = vadd.f32 %v3594, 0.1
        %v3611 = vadd.f32 %v3595, 0.1
        %v3612 = vmax.f32 %v1742, 0.0
        %v3613 = vmax.f32 %v1744, 0.0
        %v3614 = vmax.f32 %v1746, 0.0
        %v3615 = vmax.f32 %v1748, 0.0
        %v3616 = vmax.f32 %v1752, 0.0
        %v3617 = vmax.f32 %v1754, 0.0
        %v3618 = vmax.f32 %v1756, 0.0
        %v3619 = vmax.f32 %v1758, 0.0
        %v3620 = vmax.f32 %v1762, 0.0
        %v3621 = vmax.f32 %v1764, 0.0
        %v3622 = vmax.f32 %v1766, 0.0
        %v3623 = vmax.f32 %v1768, 0.0
        %v3624 = vmax.f32 %v1772, 0.0
        %v3625 = vmax.f32 %v1774, 0.0
        %v3626 = vmax.f32 %v1776, 0.0
        %v3627 = vmax.f32 %v1778, 0.0
        %v3628 = vmax.f32 %v1782, 0.0
        %v3629 = vmax.f32 %v1784, 0.0
        %v3630 = vmax.f32 %v1786, 0.0
        %v3631 = vmax.f32 %v1788, 0.0
        %v3632 = vmax.f32 %v1792, 0.0
        %v3633 = vmax.f32 %v1794, 0.0
        %v3634 = vmax.f32 %v1796, 0.0
        %v3635 = vmax.f32 %v1798, 0.0
        %v3636 = vmax.f32 %v1802, 0.0
        %v3637 = vmax.f32 %v1804, 0.0
        %v3638 = vmax.f32 %v1806, 0.0
        %v3639 = vmax.f32 %v1808, 0.0
        %v3640 = vmax.f32 %v1812, 0.0
        %v3641 = vmax.f32 %v1814, 0.0
        %v3642 = vmax.f32 %v1816, 0.0
        %v3643 = vmax.f32 %v1818, 0.0
        %v3644 = vld [vmem:[#allocation20] sm:$0xf]
        %v3645 = vld [vmem:[#allocation20 + $0x4] sm:$0xf]
        %v3646 = vld [vmem:[#allocation20 + $0x8] sm:$0xf]
        %v3647 = vld [vmem:[#allocation20 + $0xc] sm:$0xf]
        %v3648 = vld [vmem:[#allocation20 + $0x10] sm:$0xf]
        %v3649 = vld [vmem:[#allocation20 + $0x14] sm:$0xf]
        %v3650 = vld [vmem:[#allocation20 + $0x18] sm:$0xf]
        %v3651 = vld [vmem:[#allocation20 + $0x1c] sm:$0xf]
        %v3652 = vld [vmem:[#allocation20 + $0x20] sm:$0xf]
        %v3653 = vld [vmem:[#allocation20 + $0x24] sm:$0xf]
        %v3654 = vld [vmem:[#allocation20 + $0x28] sm:$0xf]
        %v3655 = vld [vmem:[#allocation20 + $0x2c] sm:$0xf]
        %v3656 = vld [vmem:[#allocation20 + $0x30] sm:$0xf]
        %v3657 = vld [vmem:[#allocation20 + $0x34] sm:$0xf]
        %v3658 = vld [vmem:[#allocation20 + $0x38] sm:$0xf]
        %v3659 = vld [vmem:[#allocation20 + $0x3c] sm:$0xf]
        %v3660 = vld [vmem:[#allocation22] sm:$0x1]
        %v3662 = vlaneseq
        %v3663 = vshrl.u32 %v3662, 7
        %v3664 = vsub.s32 0, %v3663
        %v3665 = vrot.slane %v3660, %v3664
        %v3683 = vunpack.c.l.b16 %v3644
        %v3684 = vunpack.c.l.b16 %v3645
        %v3685 = vunpack.c.l.b16 %v3646
        %v3686 = vunpack.c.l.b16 %v3647
        %v3687 = vunpack.c.l.b16 %v3648
        %v3688 = vunpack.c.l.b16 %v3649
        %v3689 = vunpack.c.l.b16 %v3650
        %v3690 = vunpack.c.l.b16 %v3651
        %v3691 = vunpack.c.l.b16 %v3652
        %v3692 = vunpack.c.l.b16 %v3653
        %v3693 = vunpack.c.l.b16 %v3654
        %v3694 = vunpack.c.l.b16 %v3655
        %v3695 = vunpack.c.l.b16 %v3656
        %v3696 = vunpack.c.l.b16 %v3657
        %v3697 = vunpack.c.l.b16 %v3658
        %v3698 = vunpack.c.l.b16 %v3659
        %v3699 = vpack.c.b16 %v3684, %v3683
        %v3700 = vpack.c.b16 %v3686, %v3685
        %v3701 = vpack.c.b16 %v3688, %v3687
        %v3702 = vpack.c.b16 %v3690, %v3689
        %v3703 = vpack.c.b16 %v3692, %v3691
        %v3704 = vpack.c.b16 %v3694, %v3693
        %v3705 = vpack.c.b16 %v3696, %v3695
        %v3706 = vpack.c.b16 %v3698, %v3697
        %3715 = vmatprep.subr.bf16.mxu0 0
        %3716 = vmatpush1.bf16.msra.mxu0 %v3699
        %3717 = vmatprep.subr.bf16.mxu0 0
        %3718 = vmatpush1.bf16.msra.mxu0 %v3700
        %3719 = vmatprep.subr.bf16.mxu0 0
        %3720 = vmatpush1.bf16.msra.mxu0 %v3701
        %3721 = vmatprep.subr.bf16.mxu0 0
        %3722 = vmatpush1.bf16.msra.mxu0 %v3702
        %3723 = vmatprep.subr.bf16.mxu0 0
        %3724 = vmatpush1.bf16.msra.mxu0 %v3703
        %3725 = vmatprep.subr.bf16.mxu0 0
        %3726 = vmatpush1.bf16.msra.mxu0 %v3704
        %3727 = vmatprep.subr.bf16.mxu0 0
        %3728 = vmatpush1.bf16.msra.mxu0 %v3705
        %3729 = vmatprep.subr.bf16.mxu0 0
        %3730 = vmatpush1.bf16.msra.mxu0 %v3706
        %3731 = vmatprep.subr.bf16.mxu0 0
        %3732 = vmatpush1.bf16.msra.mxu0 0
        %3733 = vmatprep.subr.bf16.mxu0 0
        %3734 = vmatpush1.bf16.msra.mxu0 0
        %3735 = vmatprep.subr.bf16.mxu0 0
        %3736 = vmatpush1.bf16.msra.mxu0 0
        %3737 = vmatprep.subr.bf16.mxu0 0
        %3738 = vmatpush1.bf16.msra.mxu0 0
        %3739 = vmatprep.subr.bf16.mxu0 0
        %3740 = vmatpush1.bf16.msra.mxu0 0
        %3741 = vmatprep.subr.bf16.mxu0 0
        %3742 = vmatpush1.bf16.msra.mxu0 0
        %3743 = vmatprep.subr.bf16.mxu0 0
        %3744 = vmatpush1.bf16.msra.mxu0 0
        %3745 = vmatprep.subr.bf16.mxu0 0
        %3746 = vmatpush1.bf16.msra.mxu0 0
        %3747 = vmatprep.mubr.bf16.mxu0 0
        %3748 = vmatmul.mubr.bf16.gmra.mrb[0].mxu0 %v1015
        %v3749 = vpop.f32.mrb[0].mxu0
        %v3750 = vadd.f32 %v3665, %v3749
        %v3751 = vpop.f32.mrb[0].mxu0
        %v3752 = vpop.f32.mrb[0].mxu0
        %v3753 = vadd.f32 %v3665, %v3752
        %v3754 = vpop.f32.mrb[0].mxu0
        %3755 = vmatprep.mubr.bf16.mxu0 0
        %3756 = vmatmul.mubr.bf16.gmra.mrb[0].mxu0 %v1016
        %v3757 = vpop.f32.mrb[0].mxu0
        %v3758 = vadd.f32 %v3665, %v3757
        %v3759 = vpop.f32.mrb[0].mxu0
        %v3760 = vpop.f32.mrb[0].mxu0
        %v3761 = vadd.f32 %v3665, %v3760
        %v3762 = vpop.f32.mrb[0].mxu0
        %3763 = vmatprep.mubr.bf16.mxu0 0
        %3764 = vmatmul.mubr.bf16.gmra.mrb[0].mxu0 %v1017
        %v3765 = vpop.f32.mrb[0].mxu0
        %v3766 = vadd.f32 %v3665, %v3765
        %v3767 = vpop.f32.mrb[0].mxu0
        %v3768 = vpop.f32.mrb[0].mxu0
        %v3769 = vadd.f32 %v3665, %v3768
        %v3770 = vpop.f32.mrb[0].mxu0
        %3771 = vmatprep.mubr.bf16.mxu0 0
        %3772 = vmatmul.mubr.bf16.gmra.mrb[0].mxu0 %v1018
        %v3773 = vpop.f32.mrb[0].mxu0
        %v3774 = vadd.f32 %v3665, %v3773
        %v3775 = vpop.f32.mrb[0].mxu0
        %v3776 = vpop.f32.mrb[0].mxu0
        %v3777 = vadd.f32 %v3665, %v3776
        %v3778 = vpop.f32.mrb[0].mxu0
        %3779 = vmatprep.mubr.bf16.mxu0 0
        %3780 = vmatmul.mubr.bf16.gmra.mrb[0].mxu0 %v1019
        %v3781 = vpop.f32.mrb[0].mxu0
        %v3782 = vadd.f32 %v3665, %v3781
        %v3783 = vpop.f32.mrb[0].mxu0
        %v3784 = vpop.f32.mrb[0].mxu0
        %v3785 = vadd.f32 %v3665, %v3784
        %v3786 = vpop.f32.mrb[0].mxu0
        %3787 = vmatprep.mubr.bf16.mxu0 0
        %3788 = vmatmul.mubr.bf16.gmra.mrb[0].mxu0 %v1020
        %v3789 = vpop.f32.mrb[0].mxu0
        %v3790 = vadd.f32 %v3665, %v3789
        %v3791 = vpop.f32.mrb[0].mxu0
        %v3792 = vpop.f32.mrb[0].mxu0
        %v3793 = vadd.f32 %v3665, %v3792
        %v3794 = vpop.f32.mrb[0].mxu0
        %3795 = vmatprep.mubr.bf16.mxu0 0
        %3796 = vmatmul.mubr.bf16.gmra.mrb[0].mxu0 %v1021
        %v3797 = vpop.f32.mrb[0].mxu0
        %v3798 = vadd.f32 %v3665, %v3797
        %v3799 = vpop.f32.mrb[0].mxu0
        %v3800 = vpop.f32.mrb[0].mxu0
        %v3801 = vadd.f32 %v3665, %v3800
        %v3802 = vpop.f32.mrb[0].mxu0
        %3803 = vmatprep.mubr.bf16.mxu0 0
        %3804 = vmatmul.mubr.bf16.gmra.mrb[0].mxu0 %v1022
        %v3805 = vpop.f32.mrb[0].mxu0
        %v3806 = vadd.f32 %v3665, %v3805
        %v3807 = vpop.f32.mrb[0].mxu0
        %v3808 = vpop.f32.mrb[0].mxu0
        %v3809 = vadd.f32 %v3665, %v3808
        %v3810 = vpop.f32.mrb[0].mxu0
        %3811 = vdwg.mxu0
        %vm3812 = vcmp.gt.f32.partialorder %v3750, 20.0
        %vm3813 = vcmp.gt.f32.partialorder %v3753, 20.0
        %vm3814 = vcmp.gt.f32.partialorder %v3758, 20.0
        %vm3815 = vcmp.gt.f32.partialorder %v3761, 20.0
        %vm3816 = vcmp.gt.f32.partialorder %v3766, 20.0
        %vm3817 = vcmp.gt.f32.partialorder %v3769, 20.0
        %vm3818 = vcmp.gt.f32.partialorder %v3774, 20.0
        %vm3819 = vcmp.gt.f32.partialorder %v3777, 20.0
        %vm3820 = vcmp.gt.f32.partialorder %v3782, 20.0
        %vm3821 = vcmp.gt.f32.partialorder %v3785, 20.0
        %vm3822 = vcmp.gt.f32.partialorder %v3790, 20.0
        %vm3823 = vcmp.gt.f32.partialorder %v3793, 20.0
        %vm3824 = vcmp.gt.f32.partialorder %v3798, 20.0
        %vm3825 = vcmp.gt.f32.partialorder %v3801, 20.0
        %vm3826 = vcmp.gt.f32.partialorder %v3806, 20.0
        %vm3827 = vcmp.gt.f32.partialorder %v3809, 20.0
        %v3828 = vmin.f32 %v3750, 20.0
        %v3829 = vmin.f32 %v3753, 20.0
        %v3830 = vmin.f32 %v3758, 20.0
        %v3831 = vmin.f32 %v3761, 20.0
        %v3832 = vmin.f32 %v3766, 20.0
        %v3833 = vmin.f32 %v3769, 20.0
        %v3834 = vmin.f32 %v3774, 20.0
        %v3835 = vmin.f32 %v3777, 20.0
        %v3836 = vmin.f32 %v3782, 20.0
        %v3837 = vmin.f32 %v3785, 20.0
        %v3838 = vmin.f32 %v3790, 20.0
        %v3839 = vmin.f32 %v3793, 20.0
        %v3840 = vmin.f32 %v3798, 20.0
        %v3841 = vmin.f32 %v3801, 20.0
        %v3842 = vmin.f32 %v3806, 20.0
        %v3843 = vmin.f32 %v3809, 20.0
        %v3844 = vmul.f32 %v3828, 1.442695
        %v3845 = vpow.pop %v3844
        %v3846 = vmul.f32 %v3829, 1.442695
        %v3847 = vpow.pop %v3846
        %v3848 = vmul.f32 %v3830, 1.442695
        %v3849 = vpow.pop %v3848
        %v3850 = vmul.f32 %v3831, 1.442695
        %v3851 = vpow.pop %v3850
        %v3852 = vmul.f32 %v3832, 1.442695
        %v3853 = vpow.pop %v3852
        %v3854 = vmul.f32 %v3833, 1.442695
        %v3855 = vpow.pop %v3854
        %v3856 = vmul.f32 %v3834, 1.442695
        %v3857 = vpow.pop %v3856
        %v3858 = vmul.f32 %v3835, 1.442695
        %v3859 = vpow.pop %v3858
        %v3860 = vmul.f32 %v3836, 1.442695
        %v3861 = vpow.pop %v3860
        %v3862 = vmul.f32 %v3837, 1.442695
        %v3863 = vpow.pop %v3862
        %v3864 = vmul.f32 %v3838, 1.442695
        %v3865 = vpow.pop %v3864
        %v3866 = vmul.f32 %v3839, 1.442695
        %v3867 = vpow.pop %v3866
        %v3868 = vmul.f32 %v3840, 1.442695
        %v3869 = vpow.pop %v3868
        %v3870 = vmul.f32 %v3841, 1.442695
        %v3871 = vpow.pop %v3870
        %v3872 = vmul.f32 %v3842, 1.442695
        %v3873 = vpow.pop %v3872
        %v3874 = vmul.f32 %v3843, 1.442695
        %v3875 = vpow.pop %v3874
        %v3876 = vadd.f32 %v3845, 1.0
        %v3877 = vlog2.pop %v3876
        %v3878 = vmul.f32 %v3877, 0.6931472
        %v3879 = vmul.f32 -0.5, %v3845
        %v3880 = vadd.f32 %v3879, 1.0
        %v3881 = vmul.f32 %v3880, %v3845
        %v3882 = vand.u32 2147483647, %v3845
        %vm3883 = vcmp.lt.f32.partialorder %v3882, 0.0004427343
        %v3884 = vsel %vm3883, %v3881, %v3878
        %v3885 = vadd.f32 %v3847, 1.0
        %v3886 = vlog2.pop %v3885
        %v3887 = vmul.f32 %v3886, 0.6931472
        %v3888 = vmul.f32 -0.5, %v3847
        %v3889 = vadd.f32 %v3888, 1.0
        %v3890 = vmul.f32 %v3889, %v3847
        %v3891 = vand.u32 2147483647, %v3847
        %vm3892 = vcmp.lt.f32.partialorder %v3891, 0.0004427343
        %v3893 = vsel %vm3892, %v3890, %v3887
        %v3894 = vadd.f32 %v3849, 1.0
        %v3895 = vlog2.pop %v3894
        %v3896 = vmul.f32 %v3895, 0.6931472
        %v3897 = vmul.f32 -0.5, %v3849
        %v3898 = vadd.f32 %v3897, 1.0
        %v3899 = vmul.f32 %v3898, %v3849
        %v3900 = vand.u32 2147483647, %v3849
        %vm3901 = vcmp.lt.f32.partialorder %v3900, 0.0004427343
        %v3902 = vsel %vm3901, %v3899, %v3896
        %v3903 = vadd.f32 %v3851, 1.0
        %v3904 = vlog2.pop %v3903
        %v3905 = vmul.f32 %v3904, 0.6931472
        %v3906 = vmul.f32 -0.5, %v3851
        %v3907 = vadd.f32 %v3906, 1.0
        %v3908 = vmul.f32 %v3907, %v3851
        %v3909 = vand.u32 2147483647, %v3851
        %vm3910 = vcmp.lt.f32.partialorder %v3909, 0.0004427343
        %v3911 = vsel %vm3910, %v3908, %v3905
        %v3912 = vadd.f32 %v3853, 1.0
        %v3913 = vlog2.pop %v3912
        %v3914 = vmul.f32 %v3913, 0.6931472
        %v3915 = vmul.f32 -0.5, %v3853
        %v3916 = vadd.f32 %v3915, 1.0
        %v3917 = vmul.f32 %v3916, %v3853
        %v3918 = vand.u32 2147483647, %v3853
        %vm3919 = vcmp.lt.f32.partialorder %v3918, 0.0004427343
        %v3920 = vsel %vm3919, %v3917, %v3914
        %v3921 = vadd.f32 %v3855, 1.0
        %v3922 = vlog2.pop %v3921
        %v3923 = vmul.f32 %v3922, 0.6931472
        %v3924 = vmul.f32 -0.5, %v3855
        %v3925 = vadd.f32 %v3924, 1.0
        %v3926 = vmul.f32 %v3925, %v3855
        %v3927 = vand.u32 2147483647, %v3855
        %vm3928 = vcmp.lt.f32.partialorder %v3927, 0.0004427343
        %v3929 = vsel %vm3928, %v3926, %v3923
        %v3930 = vadd.f32 %v3857, 1.0
        %v3931 = vlog2.pop %v3930
        %v3932 = vmul.f32 %v3931, 0.6931472
        %v3933 = vmul.f32 -0.5, %v3857
        %v3934 = vadd.f32 %v3933, 1.0
        %v3935 = vmul.f32 %v3934, %v3857
        %v3936 = vand.u32 2147483647, %v3857
        %vm3937 = vcmp.lt.f32.partialorder %v3936, 0.0004427343
        %v3938 = vsel %vm3937, %v3935, %v3932
        %v3939 = vadd.f32 %v3859, 1.0
        %v3940 = vlog2.pop %v3939
        %v3941 = vmul.f32 %v3940, 0.6931472
        %v3942 = vmul.f32 -0.5, %v3859
        %v3943 = vadd.f32 %v3942, 1.0
        %v3944 = vmul.f32 %v3943, %v3859
        %v3945 = vand.u32 2147483647, %v3859
        %vm3946 = vcmp.lt.f32.partialorder %v3945, 0.0004427343
        %v3947 = vsel %vm3946, %v3944, %v3941
        %v3948 = vadd.f32 %v3861, 1.0
        %v3949 = vlog2.pop %v3948
        %v3950 = vmul.f32 %v3949, 0.6931472
        %v3951 = vmul.f32 -0.5, %v3861
        %v3952 = vadd.f32 %v3951, 1.0
        %v3953 = vmul.f32 %v3952, %v3861
        %v3954 = vand.u32 2147483647, %v3861
        %vm3955 = vcmp.lt.f32.partialorder %v3954, 0.0004427343
        %v3956 = vsel %vm3955, %v3953, %v3950
        %v3957 = vadd.f32 %v3863, 1.0
        %v3958 = vlog2.pop %v3957
        %v3959 = vmul.f32 %v3958, 0.6931472
        %v3960 = vmul.f32 -0.5, %v3863
        %v3961 = vadd.f32 %v3960, 1.0
        %v3962 = vmul.f32 %v3961, %v3863
        %v3963 = vand.u32 2147483647, %v3863
        %vm3964 = vcmp.lt.f32.partialorder %v3963, 0.0004427343
        %v3965 = vsel %vm3964, %v3962, %v3959
        %v3966 = vadd.f32 %v3865, 1.0
        %v3967 = vlog2.pop %v3966
        %v3968 = vmul.f32 %v3967, 0.6931472
        %v3969 = vmul.f32 -0.5, %v3865
        %v3970 = vadd.f32 %v3969, 1.0
        %v3971 = vmul.f32 %v3970, %v3865
        %v3972 = vand.u32 2147483647, %v3865
        %vm3973 = vcmp.lt.f32.partialorder %v3972, 0.0004427343
        %v3974 = vsel %vm3973, %v3971, %v3968
        %v3975 = vadd.f32 %v3867, 1.0
        %v3976 = vlog2.pop %v3975
        %v3977 = vmul.f32 %v3976, 0.6931472
        %v3978 = vmul.f32 -0.5, %v3867
        %v3979 = vadd.f32 %v3978, 1.0
        %v3980 = vmul.f32 %v3979, %v3867
        %v3981 = vand.u32 2147483647, %v3867
        %vm3982 = vcmp.lt.f32.partialorder %v3981, 0.0004427343
        %v3983 = vsel %vm3982, %v3980, %v3977
        %v3984 = vadd.f32 %v3869, 1.0
        %v3985 = vlog2.pop %v3984
        %v3986 = vmul.f32 %v3985, 0.6931472
        %v3987 = vmul.f32 -0.5, %v3869
        %v3988 = vadd.f32 %v3987, 1.0
        %v3989 = vmul.f32 %v3988, %v3869
        %v3990 = vand.u32 2147483647, %v3869
        %vm3991 = vcmp.lt.f32.partialorder %v3990, 0.0004427343
        %v3992 = vsel %vm3991, %v3989, %v3986
        %v3993 = vadd.f32 %v3871, 1.0
        %v3994 = vlog2.pop %v3993
        %v3995 = vmul.f32 %v3994, 0.6931472
        %v3996 = vmul.f32 -0.5, %v3871
        %v3997 = vadd.f32 %v3996, 1.0
        %v3998 = vmul.f32 %v3997, %v3871
        %v3999 = vand.u32 2147483647, %v3871
        %vm4000 = vcmp.lt.f32.partialorder %v3999, 0.0004427343
        %v4001 = vsel %vm4000, %v3998, %v3995
        %v4002 = vadd.f32 %v3873, 1.0
        %v4003 = vlog2.pop %v4002
        %v4004 = vmul.f32 %v4003, 0.6931472
        %v4005 = vmul.f32 -0.5, %v3873
        %v4006 = vadd.f32 %v4005, 1.0
        %v4007 = vmul.f32 %v4006, %v3873
        %v4008 = vand.u32 2147483647, %v3873
        %vm4009 = vcmp.lt.f32.partialorder %v4008, 0.0004427343
        %v4010 = vsel %vm4009, %v4007, %v4004
        %v4011 = vadd.f32 %v3875, 1.0
        %v4012 = vlog2.pop %v4011
        %v4013 = vmul.f32 %v4012, 0.6931472
        %v4014 = vmul.f32 -0.5, %v3875
        %v4015 = vadd.f32 %v4014, 1.0
        %v4016 = vmul.f32 %v4015, %v3875
        %v4017 = vand.u32 2147483647, %v3875
        %vm4018 = vcmp.lt.f32.partialorder %v4017, 0.0004427343
        %v4019 = vsel %vm4018, %v4016, %v4013
        %v4020 = vsel %vm3812, %v3750, %v3884
        %v4021 = vsel %vm3813, %v3753, %v3893
        %v4022 = vsel %vm3814, %v3758, %v3902
        %v4023 = vsel %vm3815, %v3761, %v3911
        %v4024 = vsel %vm3816, %v3766, %v3920
        %v4025 = vsel %vm3817, %v3769, %v3929
        %v4026 = vsel %vm3818, %v3774, %v3938
        %v4027 = vsel %vm3819, %v3777, %v3947
        %v4028 = vsel %vm3820, %v3782, %v3956
        %v4029 = vsel %vm3821, %v3785, %v3965
        %v4030 = vsel %vm3822, %v3790, %v3974
        %v4031 = vsel %vm3823, %v3793, %v3983
        %v4032 = vsel %vm3824, %v3798, %v3992
        %v4033 = vsel %vm3825, %v3801, %v4001
        %v4034 = vsel %vm3826, %v3806, %v4010
        %v4035 = vsel %vm3827, %v3809, %v4019
        %v4036 = vpack.c.bf16 %v4021, %v4020
        %v4037 = vpack.c.bf16 %v4023, %v4022
        %v4038 = vpack.c.bf16 %v4025, %v4024
        %v4039 = vpack.c.bf16 %v4027, %v4026
        %v4040 = vpack.c.bf16 %v4029, %v4028
        %v4041 = vpack.c.bf16 %v4031, %v4030
        %v4042 = vpack.c.bf16 %v4033, %v4032
        %v4043 = vpack.c.bf16 %v4035, %v4034
        %v4044 = vld [vmem:[#allocation23] sm:$0xf]
        %v4045 = vld [vmem:[#allocation23 + $0x4] sm:$0xf]
        %v4046 = vld [vmem:[#allocation23 + $0x8] sm:$0xf]
        %v4047 = vld [vmem:[#allocation23 + $0xc] sm:$0xf]
        %v4048 = vld [vmem:[#allocation25] sm:$0x1]
        %v4050 = vlaneseq
        %v4051 = vshrl.u32 %v4050, 7
        %v4052 = vsub.s32 0, %v4051
        %v4053 = vrot.slane %v4048, %v4052
        %v4059 = vunpack.c.l.b16 %v4044
        %v4060 = vunpack.c.l.b16 %v4045
        %v4061 = vunpack.c.l.b16 %v4046
        %v4062 = vunpack.c.l.b16 %v4047
        %v4063 = vpack.c.b16 %v4060, %v4059
        %v4064 = vpack.c.b16 %v4062, %v4061
        %vm4067 = vcmask 261120
        %v4069 = vsel %vm4067, %v4036, 0
        %v4072 = vsel %vm4067, %v4037, 0
        %v4075 = vsel %vm4067, %v4038, 0
        %v4078 = vsel %vm4067, %v4039, 0
        %v4081 = vsel %vm4067, %v4040, 0
        %v4084 = vsel %vm4067, %v4041, 0
        %v4087 = vsel %vm4067, %v4042, 0
        %v4090 = vsel %vm4067, %v4043, 0
        %4092 = vmatprep.subr.bf16.mxu0 0
        %4093 = vmatpush1.bf16.msra.mxu0 %v4063
        %4094 = vmatprep.subr.bf16.mxu0 0
        %4095 = vmatpush1.bf16.msra.mxu0 %v4064
        %4096 = vmatprep.subr.bf16.mxu0 0
        %4097 = vmatpush1.bf16.msra.mxu0 0
        %4098 = vmatprep.subr.bf16.mxu0 0
        %4099 = vmatpush1.bf16.msra.mxu0 0
        %4100 = vmatprep.subr.bf16.mxu0 0
        %4101 = vmatpush1.bf16.msra.mxu0 0
        %4102 = vmatprep.subr.bf16.mxu0 0
        %4103 = vmatpush1.bf16.msra.mxu0 0
        %4104 = vmatprep.subr.bf16.mxu0 0
        %4105 = vmatpush1.bf16.msra.mxu0 0
        %4106 = vmatprep.subr.bf16.mxu0 0
        %4107 = vmatpush1.bf16.msra.mxu0 0
        %4108 = vmatprep.subr.bf16.mxu0 0
        %4109 = vmatpush1.bf16.msra.mxu0 0
        %4110 = vmatprep.subr.bf16.mxu0 0
        %4111 = vmatpush1.bf16.msra.mxu0 0
        %4112 = vmatprep.subr.bf16.mxu0 0
        %4113 = vmatpush1.bf16.msra.mxu0 0
        %4114 = vmatprep.subr.bf16.mxu0 0
        %4115 = vmatpush1.bf16.msra.mxu0 0
        %4116 = vmatprep.subr.bf16.mxu0 0
        %4117 = vmatpush1.bf16.msra.mxu0 0
        %4118 = vmatprep.subr.bf16.mxu0 0
        %4119 = vmatpush1.bf16.msra.mxu0 0
        %4120 = vmatprep.subr.bf16.mxu0 0
        %4121 = vmatpush1.bf16.msra.mxu0 0
        %4122 = vmatprep.subr.bf16.mxu0 0
        %4123 = vmatpush1.bf16.msra.mxu0 0
        %4124 = vmatprep.mubr.bf16.mxu0 0
        %4125 = vmatmul.mubr.bf16.gmra.mrb[0].mxu0 %v4069
        %v4126 = vpop.f32.mrb[0].mxu0
        %v4127 = vadd.f32 %v4053, %v4126
        %v4128 = vpop.f32.mrb[0].mxu0
        %v4129 = vpop.f32.mrb[0].mxu0
        %v4130 = vadd.f32 %v4053, %v4129
        %v4131 = vpop.f32.mrb[0].mxu0
        %4132 = vmatprep.mubr.bf16.mxu0 0
        %4133 = vmatmul.mubr.bf16.gmra.mrb[0].mxu0 %v4072
        %v4134 = vpop.f32.mrb[0].mxu0
        %v4135 = vadd.f32 %v4053, %v4134
        %v4136 = vpop.f32.mrb[0].mxu0
        %v4137 = vpop.f32.mrb[0].mxu0
        %v4138 = vadd.f32 %v4053, %v4137
        %v4139 = vpop.f32.mrb[0].mxu0
        %4140 = vmatprep.mubr.bf16.mxu0 0
        %4141 = vmatmul.mubr.bf16.gmra.mrb[0].mxu0 %v4075
        %v4142 = vpop.f32.mrb[0].mxu0
        %v4143 = vadd.f32 %v4053, %v4142
        %v4144 = vpop.f32.mrb[0].mxu0
        %v4145 = vpop.f32.mrb[0].mxu0
        %v4146 = vadd.f32 %v4053, %v4145
        %v4147 = vpop.f32.mrb[0].mxu0
        %4148 = vmatprep.mubr.bf16.mxu0 0
        %4149 = vmatmul.mubr.bf16.gmra.mrb[0].mxu0 %v4078
        %v4150 = vpop.f32.mrb[0].mxu0
        %v4151 = vadd.f32 %v4053, %v4150
        %v4152 = vpop.f32.mrb[0].mxu0
        %v4153 = vpop.f32.mrb[0].mxu0
        %v4154 = vadd.f32 %v4053, %v4153
        %v4155 = vpop.f32.mrb[0].mxu0
        %4156 = vmatprep.mubr.bf16.mxu0 0
        %4157 = vmatmul.mubr.bf16.gmra.mrb[0].mxu0 %v4081
        %v4158 = vpop.f32.mrb[0].mxu0
        %v4159 = vadd.f32 %v4053, %v4158
        %v4160 = vpop.f32.mrb[0].mxu0
        %v4161 = vpop.f32.mrb[0].mxu0
        %v4162 = vadd.f32 %v4053, %v4161
        %v4163 = vpop.f32.mrb[0].mxu0
        %4164 = vmatprep.mubr.bf16.mxu0 0
        %4165 = vmatmul.mubr.bf16.gmra.mrb[0].mxu0 %v4084
        %v4166 = vpop.f32.mrb[0].mxu0
        %v4167 = vadd.f32 %v4053, %v4166
        %v4168 = vpop.f32.mrb[0].mxu0
        %v4169 = vpop.f32.mrb[0].mxu0
        %v4170 = vadd.f32 %v4053, %v4169
        %v4171 = vpop.f32.mrb[0].mxu0
        %4172 = vmatprep.mubr.bf16.mxu0 0
        %4173 = vmatmul.mubr.bf16.gmra.mrb[0].mxu0 %v4087
        %v4174 = vpop.f32.mrb[0].mxu0
        %v4175 = vadd.f32 %v4053, %v4174
        %v4176 = vpop.f32.mrb[0].mxu0
        %v4177 = vpop.f32.mrb[0].mxu0
        %v4178 = vadd.f32 %v4053, %v4177
        %v4179 = vpop.f32.mrb[0].mxu0
        %4180 = vmatprep.mubr.bf16.mxu0 0
        %4181 = vmatmul.mubr.bf16.gmra.mrb[0].mxu0 %v4090
        %v4182 = vpop.f32.mrb[0].mxu0
        %v4183 = vadd.f32 %v4053, %v4182
        %v4184 = vpop.f32.mrb[0].mxu0
        %v4185 = vpop.f32.mrb[0].mxu0
        %v4186 = vadd.f32 %v4053, %v4185
        %v4187 = vpop.f32.mrb[0].mxu0
        %4188 = vdwg.mxu0
        %v4189 = vmax.f32 %v4127, 0.0
        %v4190 = vmax.f32 %v4130, 0.0
        %v4191 = vmax.f32 %v4135, 0.0
        %v4192 = vmax.f32 %v4138, 0.0
        %v4193 = vmax.f32 %v4143, 0.0
        %v4194 = vmax.f32 %v4146, 0.0
        %v4195 = vmax.f32 %v4151, 0.0
        %v4196 = vmax.f32 %v4154, 0.0
        %v4197 = vmax.f32 %v4159, 0.0
        %v4198 = vmax.f32 %v4162, 0.0
        %v4199 = vmax.f32 %v4167, 0.0
        %v4200 = vmax.f32 %v4170, 0.0
        %v4201 = vmax.f32 %v4175, 0.0
        %v4202 = vmax.f32 %v4178, 0.0
        %v4203 = vmax.f32 %v4183, 0.0
        %v4204 = vmax.f32 %v4186, 0.0
        %v4205 = vpack.c.bf16 %v4190, %v4189
        %v4206 = vpack.c.bf16 %v4192, %v4191
        %v4207 = vpack.c.bf16 %v4194, %v4193
        %v4208 = vpack.c.bf16 %v4196, %v4195
        %v4209 = vpack.c.bf16 %v4198, %v4197
        %v4210 = vpack.c.bf16 %v4200, %v4199
        %v4211 = vpack.c.bf16 %v4202, %v4201
        %v4212 = vpack.c.bf16 %v4204, %v4203
        %v4213 = vld [vmem:[#allocation26] sm:$0xf]
        %v4214 = vld [vmem:[#allocation26 + $0x4] sm:$0xf]
        %v4215 = vld [vmem:[#allocation26 + $0x8] sm:$0xf]
        %v4216 = vld [vmem:[#allocation26 + $0xc] sm:$0xf]
        %v4217 = vld [vmem:[#allocation26 + $0x10] sm:$0xf]
        %v4218 = vld [vmem:[#allocation26 + $0x14] sm:$0xf]
        %v4219 = vld [vmem:[#allocation26 + $0x18] sm:$0xf]
        %v4220 = vld [vmem:[#allocation26 + $0x1c] sm:$0xf]
        %v4221 = vld [vmem:[#allocation26 + $0x20] sm:$0xf]
        %v4222 = vld [vmem:[#allocation26 + $0x24] sm:$0xf]
        %v4223 = vld [vmem:[#allocation26 + $0x28] sm:$0xf]
        %v4224 = vld [vmem:[#allocation26 + $0x2c] sm:$0xf]
        %v4225 = vld [vmem:[#allocation26 + $0x30] sm:$0xf]
        %v4226 = vld [vmem:[#allocation26 + $0x34] sm:$0xf]
        %v4227 = vld [vmem:[#allocation26 + $0x38] sm:$0xf]
        %v4228 = vld [vmem:[#allocation26 + $0x3c] sm:$0xf]
        %v4229 = vld [vmem:[#allocation28] sm:$0x1]
        %v4231 = vlaneseq
        %v4232 = vshrl.u32 %v4231, 7
        %v4233 = vsub.s32 0, %v4232
        %v4234 = vrot.slane %v4229, %v4233
        %v4252 = vunpack.c.l.b16 %v4213
        %v4253 = vunpack.c.l.b16 %v4214
        %v4254 = vunpack.c.l.b16 %v4215
        %v4255 = vunpack.c.l.b16 %v4216
        %v4256 = vunpack.c.l.b16 %v4217
        %v4257 = vunpack.c.l.b16 %v4218
        %v4258 = vunpack.c.l.b16 %v4219
        %v4259 = vunpack.c.l.b16 %v4220
        %v4260 = vunpack.c.l.b16 %v4221
        %v4261 = vunpack.c.l.b16 %v4222
        %v4262 = vunpack.c.l.b16 %v4223
        %v4263 = vunpack.c.l.b16 %v4224
        %v4264 = vunpack.c.l.b16 %v4225
        %v4265 = vunpack.c.l.b16 %v4226
        %v4266 = vunpack.c.l.b16 %v4227
        %v4267 = vunpack.c.l.b16 %v4228
        %v4268 = vpack.c.b16 %v4253, %v4252
        %v4269 = vpack.c.b16 %v4255, %v4254
        %v4270 = vpack.c.b16 %v4257, %v4256
        %v4271 = vpack.c.b16 %v4259, %v4258
        %v4272 = vpack.c.b16 %v4261, %v4260
        %v4273 = vpack.c.b16 %v4263, %v4262
        %v4274 = vpack.c.b16 %v4265, %v4264
        %v4275 = vpack.c.b16 %v4267, %v4266
        %4284 = vmatprep.subr.bf16.mxu0 0
        %4285 = vmatpush1.bf16.msra.mxu0 %v4268
        %4286 = vmatprep.subr.bf16.mxu0 0
        %4287 = vmatpush1.bf16.msra.mxu0 %v4269
        %4288 = vmatprep.subr.bf16.mxu0 0
        %4289 = vmatpush1.bf16.msra.mxu0 %v4270
        %4290 = vmatprep.subr.bf16.mxu0 0
        %4291 = vmatpush1.bf16.msra.mxu0 %v4271
        %4292 = vmatprep.subr.bf16.mxu0 0
        %4293 = vmatpush1.bf16.msra.mxu0 %v4272
        %4294 = vmatprep.subr.bf16.mxu0 0
        %4295 = vmatpush1.bf16.msra.mxu0 %v4273
        %4296 = vmatprep.subr.bf16.mxu0 0
        %4297 = vmatpush1.bf16.msra.mxu0 %v4274
        %4298 = vmatprep.subr.bf16.mxu0 0
        %4299 = vmatpush1.bf16.msra.mxu0 %v4275
        %4300 = vmatprep.subr.bf16.mxu0 0
        %4301 = vmatpush1.bf16.msra.mxu0 0
        %4302 = vmatprep.subr.bf16.mxu0 0
        %4303 = vmatpush1.bf16.msra.mxu0 0
        %4304 = vmatprep.subr.bf16.mxu0 0
        %4305 = vmatpush1.bf16.msra.mxu0 0
        %4306 = vmatprep.subr.bf16.mxu0 0
        %4307 = vmatpush1.bf16.msra.mxu0 0
        %4308 = vmatprep.subr.bf16.mxu0 0
        %4309 = vmatpush1.bf16.msra.mxu0 0
        %4310 = vmatprep.subr.bf16.mxu0 0
        %4311 = vmatpush1.bf16.msra.mxu0 0
        %4312 = vmatprep.subr.bf16.mxu0 0
        %4313 = vmatpush1.bf16.msra.mxu0 0
        %4314 = vmatprep.subr.bf16.mxu0 0
        %4315 = vmatpush1.bf16.msra.mxu0 0
        %4316 = vmatprep.mubr.bf16.mxu0 0
        %4317 = vmatmul.mubr.bf16.gmra.mrb[0].mxu0 %v4205
        %v4318 = vpop.f32.mrb[0].mxu0
        %v4319 = vadd.f32 %v4234, %v4318
        %v4320 = vpop.f32.mrb[0].mxu0
        %v4321 = vpop.f32.mrb[0].mxu0
        %v4322 = vadd.f32 %v4234, %v4321
        %v4323 = vpop.f32.mrb[0].mxu0
        %4324 = vmatprep.mubr.bf16.mxu0 0
        %4325 = vmatmul.mubr.bf16.gmra.mrb[0].mxu0 %v4206
        %v4326 = vpop.f32.mrb[0].mxu0
        %v4327 = vadd.f32 %v4234, %v4326
        %v4328 = vpop.f32.mrb[0].mxu0
        %v4329 = vpop.f32.mrb[0].mxu0
        %v4330 = vadd.f32 %v4234, %v4329
        %v4331 = vpop.f32.mrb[0].mxu0
        %4332 = vmatprep.mubr.bf16.mxu0 0
        %4333 = vmatmul.mubr.bf16.gmra.mrb[0].mxu0 %v4207
        %v4334 = vpop.f32.mrb[0].mxu0
        %v4335 = vadd.f32 %v4234, %v4334
        %v4336 = vpop.f32.mrb[0].mxu0
        %v4337 = vpop.f32.mrb[0].mxu0
        %v4338 = vadd.f32 %v4234, %v4337
        %v4339 = vpop.f32.mrb[0].mxu0
        %4340 = vmatprep.mubr.bf16.mxu0 0
        %4341 = vmatmul.mubr.bf16.gmra.mrb[0].mxu0 %v4208
        %v4342 = vpop.f32.mrb[0].mxu0
        %v4343 = vadd.f32 %v4234, %v4342
        %v4344 = vpop.f32.mrb[0].mxu0
        %v4345 = vpop.f32.mrb[0].mxu0
        %v4346 = vadd.f32 %v4234, %v4345
        %v4347 = vpop.f32.mrb[0].mxu0
        %4348 = vmatprep.mubr.bf16.mxu0 0
        %4349 = vmatmul.mubr.bf16.gmra.mrb[0].mxu0 %v4209
        %v4350 = vpop.f32.mrb[0].mxu0
        %v4351 = vadd.f32 %v4234, %v4350
        %v4352 = vpop.f32.mrb[0].mxu0
        %v4353 = vpop.f32.mrb[0].mxu0
        %v4354 = vadd.f32 %v4234, %v4353
        %v4355 = vpop.f32.mrb[0].mxu0
        %4356 = vmatprep.mubr.bf16.mxu0 0
        %4357 = vmatmul.mubr.bf16.gmra.mrb[0].mxu0 %v4210
        %v4358 = vpop.f32.mrb[0].mxu0
        %v4359 = vadd.f32 %v4234, %v4358
        %v4360 = vpop.f32.mrb[0].mxu0
        %v4361 = vpop.f32.mrb[0].mxu0
        %v4362 = vadd.f32 %v4234, %v4361
        %v4363 = vpop.f32.mrb[0].mxu0
        %4364 = vmatprep.mubr.bf16.mxu0 0
        %4365 = vmatmul.mubr.bf16.gmra.mrb[0].mxu0 %v4211
        %v4366 = vpop.f32.mrb[0].mxu0
        %v4367 = vadd.f32 %v4234, %v4366
        %v4368 = vpop.f32.mrb[0].mxu0
        %v4369 = vpop.f32.mrb[0].mxu0
        %v4370 = vadd.f32 %v4234, %v4369
        %v4371 = vpop.f32.mrb[0].mxu0
        %4372 = vmatprep.mubr.bf16.mxu0 0
        %4373 = vmatmul.mubr.bf16.gmra.mrb[0].mxu0 %v4212
        %v4374 = vpop.f32.mrb[0].mxu0
        %v4375 = vadd.f32 %v4234, %v4374
        %v4376 = vpop.f32.mrb[0].mxu0
        %v4377 = vpop.f32.mrb[0].mxu0
        %v4378 = vadd.f32 %v4234, %v4377
        %v4379 = vpop.f32.mrb[0].mxu0
        %4380 = vdwg.mxu0
        %v4381 = vand.u32 2147483647, %v4319
        %v4382 = vand.u32 2147483647, %v4322
        %v4383 = vand.u32 2147483647, %v4327
        %v4384 = vand.u32 2147483647, %v4330
        %v4385 = vand.u32 2147483647, %v4335
        %v4386 = vand.u32 2147483647, %v4338
        %v4387 = vand.u32 2147483647, %v4343
        %v4388 = vand.u32 2147483647, %v4346
        %v4389 = vand.u32 2147483647, %v4351
        %v4390 = vand.u32 2147483647, %v4354
        %v4391 = vand.u32 2147483647, %v4359
        %v4392 = vand.u32 2147483647, %v4362
        %v4393 = vand.u32 2147483647, %v4367
        %v4394 = vand.u32 2147483647, %v4370
        %v4395 = vand.u32 2147483647, %v4375
        %v4396 = vand.u32 2147483647, %v4378
        %v4397 = vand.u32 2147483647, %v1884
        %vm4398 = vcmp.le.f32.partialorder %v4397, 0.7853982
        %vm4399 = vcmp.lt.s32.totalorder %v1884, 0
        %v4400 = vand.u32 %v1884, 2139095040
        %v4401 = vshrl.u32 %v4400, 23
        %v4402 = vsub.s32 %v4401, 127
        %v4403 = vand.u32 2147483647, %v1884
        %v4404 = vand.u32 %v4403, 8388607
        %v4405 = vor.u32 %v4404, 8388608
        %v4406 = vsub.s32 0, %v4405
        %v4407 = vadd.s32 %v4402, 1
        %vm4408 = vcmp.gt.s32.totalorder %v4407, 0
        %v4409 = vsel %vm4408, %v4407, 0
        %v4410 = vshrl.u32 %v4409, 5
        %v4411 = vand.u32 %v4409, 31
        %v4412 = vsub.s32 32, %v4411
        %v4413 = vshrl.u32 683565275, %v4412
        %v4414 = vshll.u32 683565275, %v4411
        %v4415 = vshrl.u32 2475754826, %v4412
        %v4416 = vor.u32 %v4414, %v4415
        %v4417 = vshll.u32 2475754826, %v4411
        %v4418 = vshrl.u32 2131351028, %v4412
        %v4419 = vor.u32 %v4417, %v4418
        %v4420 = vshll.u32 2131351028, %v4411
        %v4421 = vshrl.u32 2102212464, %v4412
        %v4422 = vor.u32 %v4420, %v4421
        %v4423 = vshll.u32 2102212464, %v4411
        %v4424 = vshrl.u32 920167782, %v4412
        %v4425 = vor.u32 %v4423, %v4424
        %v4426 = vshll.u32 920167782, %v4411
        %v4427 = vshrl.u32 1326507024, %v4412
        %v4428 = vor.u32 %v4426, %v4427
        %vm4429 = vcmp.lt.s32.totalorder %v4410, 1
        %vm4430 = vcmp.lt.s32.totalorder %v4410, 2
        %vm4431 = vcmp.lt.s32.totalorder %v4410, 3
        %vm4432 = vcmp.lt.s32.totalorder %v4410, 4
        %v4433 = vsel %vm4429, %v4413, %v4416
        %v4434 = vsel %vm4432, %v4422, 2102212464
        %v4435 = vsel %vm4431, %v4419, %v4434
        %v4436 = vsel %vm4430, %v4433, %v4435
        %v4437 = vsel %vm4429, %v4416, %v4419
        %v4438 = vsel %vm4432, %v4425, 920167782
        %v4439 = vsel %vm4431, %v4422, %v4438
        %v4440 = vsel %vm4430, %v4437, %v4439
        %v4441 = vsel %vm4429, %v4419, %v4422
        %v4442 = vsel %vm4432, %v4428, 1326507024
        %v4443 = vsel %vm4431, %v4425, %v4442
        %v4444 = vsel %vm4430, %v4441, %v4443
        %v4445 = vshll.u32 %v4405, 8
        %v4446 = vmul.u32.u64.compose %v4445, %v4444
        %v4447 = vextract.low.u32 %v4446
        %v4448 = vextract.high.u32 %v4446
        %v4449 = vmul.u32.u64.compose %v4445, %v4440
        %v4450 = vextract.low.u32 %v4449
        %v4451 = vextract.high.u32 %v4449
        %v4452 = vmul.u32 %v4445, %v4436
        %v4453 = vadd.s32 %v4448, %v4450
        %vm4454 = vc.u32 %v4448, %v4450
        %v4455 = vadd.s32 %v4451, 1
        %v4456 = vsel %vm4454, %v4455, %v4451
        %v4457 = vadd.s32 %v4452, %v4456
        %v4458 = vadd.s32 %v4457, 536870912
        %v4459 = vshrl.u32 %v4458, 30
        %v4460 = vshll.u32 %v4459, 30
        %v4461 = vsub.s32 %v4457, %v4460
        %vm4462 = vcmp.lt.s32.totalorder %v4461, 0
        %v4463 = vsub.s32 0, %v4461
        %v4464 = vsel %vm4462, %v4463, %v4461
        %v4465 = vclz %v4464
        %v4466 = vsub.s32 %v4465, 2
        %vm4467 = vcmp.gt.s32.totalorder 0, %v4466
        %v4468 = vsel %vm4467, 0, %v4466
        %v4469 = vsub.s32 32, %v4468
        %v4470 = vshll.u32 %v4461, %v4468
        %v4471 = vshrl.u32 %v4453, %v4469
        %v4472 = vor.u32 %v4470, %v4471
        %v4473 = vsub.s32 4294967266, %v4468
        %v4474 = vadd.s32 %v4473, 127
        %v4475 = vshll.u32 %v4474, 23
        %v4476 = vor.u32 4788187, %v4475
        %v4477 = vand.u32 2147483647, %v4476
        %v4479 = vcvt.s32.f32 %v4472
        %v4480 = vmul.f32 %v4479, %v4477
        %v4481 = vxor.u32 %v4480, 2147483648
        %v4482 = vsel %vm4399, %v4481, %v4480
        %v4483 = vsub.s32 4, %v4459
        %v4484 = vsel %vm4399, %v4483, %v4459
        %v4485 = vsel %vm4398, %v1884, %v4482
        %v4486 = vsel %vm4398, 0, %v4484
        %v4487 = vcosq.f32.pop %v4485
        %v4488 = vsinq.f32.pop %v4485
        %vm4489 = vweird.f32 %v1884
        %v4490 = vand.u32 %v4486, 3
        %vm4491 = vcmp.lt.s32.totalorder %v4490, 2
        %vm4492 = vcmp.eq.s32.totalorder %v4490, 0
        %v4493 = vxor.u32 %v4488, 2147483648
        %v4494 = vsel %vm4492, %v4487, %v4493
        %vm4495 = vcmp.eq.s32.totalorder %v4490, 2
        %v4496 = vxor.u32 %v4487, 2147483648
        %v4497 = vsel %vm4495, %v4496, %v4488
        %v4498 = vsel %vm4491, %v4494, %v4497
        %v4499 = vsel %vm4489, nan, %v4498
        %v4500 = vand.u32 2147483647, %v1885
        %vm4501 = vcmp.le.f32.partialorder %v4500, 0.7853982
        %vm4502 = vcmp.lt.s32.totalorder %v1885, 0
        %v4503 = vand.u32 %v1885, 2139095040
        %v4504 = vshrl.u32 %v4503, 23
        %v4505 = vsub.s32 %v4504, 127
        %v4506 = vand.u32 2147483647, %v1885
        %v4507 = vand.u32 %v4506, 8388607
        %v4508 = vor.u32 %v4507, 8388608
        %v4509 = vsub.s32 0, %v4508
        %v4510 = vadd.s32 %v4505, 1
        %vm4511 = vcmp.gt.s32.totalorder %v4510, 0
        %v4512 = vsel %vm4511, %v4510, 0
        %v4513 = vshrl.u32 %v4512, 5
        %v4514 = vand.u32 %v4512, 31
        %v4515 = vsub.s32 32, %v4514
        %v4516 = vshrl.u32 683565275, %v4515
        %v4517 = vshll.u32 683565275, %v4514
        %v4518 = vshrl.u32 2475754826, %v4515
        %v4519 = vor.u32 %v4517, %v4518
        %v4520 = vshll.u32 2475754826, %v4514
        %v4521 = vshrl.u32 2131351028, %v4515
        %v4522 = vor.u32 %v4520, %v4521
        %v4523 = vshll.u32 2131351028, %v4514
        %v4524 = vshrl.u32 2102212464, %v4515
        %v4525 = vor.u32 %v4523, %v4524
        %v4526 = vshll.u32 2102212464, %v4514
        %v4527 = vshrl.u32 920167782, %v4515
        %v4528 = vor.u32 %v4526, %v4527
        %v4529 = vshll.u32 920167782, %v4514
        %v4530 = vshrl.u32 1326507024, %v4515
        %v4531 = vor.u32 %v4529, %v4530
        %vm4532 = vcmp.lt.s32.totalorder %v4513, 1
        %vm4533 = vcmp.lt.s32.totalorder %v4513, 2
        %vm4534 = vcmp.lt.s32.totalorder %v4513, 3
        %vm4535 = vcmp.lt.s32.totalorder %v4513, 4
        %v4536 = vsel %vm4532, %v4516, %v4519
        %v4537 = vsel %vm4535, %v4525, 2102212464
        %v4538 = vsel %vm4534, %v4522, %v4537
        %v4539 = vsel %vm4533, %v4536, %v4538
        %v4540 = vsel %vm4532, %v4519, %v4522
        %v4541 = vsel %vm4535, %v4528, 920167782
        %v4542 = vsel %vm4534, %v4525, %v4541
        %v4543 = vsel %vm4533, %v4540, %v4542
        %v4544 = vsel %vm4532, %v4522, %v4525
        %v4545 = vsel %vm4535, %v4531, 1326507024
        %v4546 = vsel %vm4534, %v4528, %v4545
        %v4547 = vsel %vm4533, %v4544, %v4546
        %v4548 = vshll.u32 %v4508, 8
        %v4549 = vmul.u32.u64.compose %v4548, %v4547
        %v4550 = vextract.low.u32 %v4549
        %v4551 = vextract.high.u32 %v4549
        %v4552 = vmul.u32.u64.compose %v4548, %v4543
        %v4553 = vextract.low.u32 %v4552
        %v4554 = vextract.high.u32 %v4552
        %v4555 = vmul.u32 %v4548, %v4539
        %v4556 = vadd.s32 %v4551, %v4553
        %vm4557 = vc.u32 %v4551, %v4553
        %v4558 = vadd.s32 %v4554, 1
        %v4559 = vsel %vm4557, %v4558, %v4554
        %v4560 = vadd.s32 %v4555, %v4559
        %v4561 = vadd.s32 %v4560, 536870912
        %v4562 = vshrl.u32 %v4561, 30
        %v4563 = vshll.u32 %v4562, 30
        %v4564 = vsub.s32 %v4560, %v4563
        %vm4565 = vcmp.lt.s32.totalorder %v4564, 0
        %v4566 = vsub.s32 0, %v4564
        %v4567 = vsel %vm4565, %v4566, %v4564
        %v4568 = vclz %v4567
        %v4569 = vsub.s32 %v4568, 2
        %vm4570 = vcmp.gt.s32.totalorder 0, %v4569
        %v4571 = vsel %vm4570, 0, %v4569
        %v4572 = vsub.s32 32, %v4571
        %v4573 = vshll.u32 %v4564, %v4571
        %v4574 = vshrl.u32 %v4556, %v4572
        %v4575 = vor.u32 %v4573, %v4574
        %v4576 = vsub.s32 4294967266, %v4571
        %v4577 = vadd.s32 %v4576, 127
        %v4578 = vshll.u32 %v4577, 23
        %v4579 = vor.u32 4788187, %v4578
        %v4580 = vand.u32 2147483647, %v4579
        %v4582 = vcvt.s32.f32 %v4575
        %v4583 = vmul.f32 %v4582, %v4580
        %v4584 = vxor.u32 %v4583, 2147483648
        %v4585 = vsel %vm4502, %v4584, %v4583
        %v4586 = vsub.s32 4, %v4562
        %v4587 = vsel %vm4502, %v4586, %v4562
        %v4588 = vsel %vm4501, %v1885, %v4585
        %v4589 = vsel %vm4501, 0, %v4587
        %v4590 = vcosq.f32.pop %v4588
        %v4591 = vsinq.f32.pop %v4588
        %vm4592 = vweird.f32 %v1885
        %v4593 = vand.u32 %v4589, 3
        %vm4594 = vcmp.lt.s32.totalorder %v4593, 2
        %vm4595 = vcmp.eq.s32.totalorder %v4593, 0
        %v4596 = vxor.u32 %v4591, 2147483648
        %v4597 = vsel %vm4595, %v4590, %v4596
        %vm4598 = vcmp.eq.s32.totalorder %v4593, 2
        %v4599 = vxor.u32 %v4590, 2147483648
        %v4600 = vsel %vm4598, %v4599, %v4591
        %v4601 = vsel %vm4594, %v4597, %v4600
        %v4602 = vsel %vm4592, nan, %v4601
        %v4603 = vand.u32 2147483647, %v1886
        %vm4604 = vcmp.le.f32.partialorder %v4603, 0.7853982
        %vm4605 = vcmp.lt.s32.totalorder %v1886, 0
        %v4606 = vand.u32 %v1886, 2139095040
        %v4607 = vshrl.u32 %v4606, 23
        %v4608 = vsub.s32 %v4607, 127
        %v4609 = vand.u32 2147483647, %v1886
        %v4610 = vand.u32 %v4609, 8388607
        %v4611 = vor.u32 %v4610, 8388608
        %v4612 = vsub.s32 0, %v4611
        %v4613 = vadd.s32 %v4608, 1
        %vm4614 = vcmp.gt.s32.totalorder %v4613, 0
        %v4615 = vsel %vm4614, %v4613, 0
        %v4616 = vshrl.u32 %v4615, 5
        %v4617 = vand.u32 %v4615, 31
        %v4618 = vsub.s32 32, %v4617
        %v4619 = vshrl.u32 683565275, %v4618
        %v4620 = vshll.u32 683565275, %v4617
        %v4621 = vshrl.u32 2475754826, %v4618
        %v4622 = vor.u32 %v4620, %v4621
        %v4623 = vshll.u32 2475754826, %v4617
        %v4624 = vshrl.u32 2131351028, %v4618
        %v4625 = vor.u32 %v4623, %v4624
        %v4626 = vshll.u32 2131351028, %v4617
        %v4627 = vshrl.u32 2102212464, %v4618
        %v4628 = vor.u32 %v4626, %v4627
        %v4629 = vshll.u32 2102212464, %v4617
        %v4630 = vshrl.u32 920167782, %v4618
        %v4631 = vor.u32 %v4629, %v4630
        %v4632 = vshll.u32 920167782, %v4617
        %v4633 = vshrl.u32 1326507024, %v4618
        %v4634 = vor.u32 %v4632, %v4633
        %vm4635 = vcmp.lt.s32.totalorder %v4616, 1
        %vm4636 = vcmp.lt.s32.totalorder %v4616, 2
        %vm4637 = vcmp.lt.s32.totalorder %v4616, 3
        %vm4638 = vcmp.lt.s32.totalorder %v4616, 4
        %v4639 = vsel %vm4635, %v4619, %v4622
        %v4640 = vsel %vm4638, %v4628, 2102212464
        %v4641 = vsel %vm4637, %v4625, %v4640
        %v4642 = vsel %vm4636, %v4639, %v4641
        %v4643 = vsel %vm4635, %v4622, %v4625
        %v4644 = vsel %vm4638, %v4631, 920167782
        %v4645 = vsel %vm4637, %v4628, %v4644
        %v4646 = vsel %vm4636, %v4643, %v4645
        %v4647 = vsel %vm4635, %v4625, %v4628
        %v4648 = vsel %vm4638, %v4634, 1326507024
        %v4649 = vsel %vm4637, %v4631, %v4648
        %v4650 = vsel %vm4636, %v4647, %v4649
        %v4651 = vshll.u32 %v4611, 8
        %v4652 = vmul.u32.u64.compose %v4651, %v4650
        %v4653 = vextract.low.u32 %v4652
        %v4654 = vextract.high.u32 %v4652
        %v4655 = vmul.u32.u64.compose %v4651, %v4646
        %v4656 = vextract.low.u32 %v4655
        %v4657 = vextract.high.u32 %v4655
        %v4658 = vmul.u32 %v4651, %v4642
        %v4659 = vadd.s32 %v4654, %v4656
        %vm4660 = vc.u32 %v4654, %v4656
        %v4661 = vadd.s32 %v4657, 1
        %v4662 = vsel %vm4660, %v4661, %v4657
        %v4663 = vadd.s32 %v4658, %v4662
        %v4664 = vadd.s32 %v4663, 536870912
        %v4665 = vshrl.u32 %v4664, 30
        %v4666 = vshll.u32 %v4665, 30
        %v4667 = vsub.s32 %v4663, %v4666
        %vm4668 = vcmp.lt.s32.totalorder %v4667, 0
        %v4669 = vsub.s32 0, %v4667
        %v4670 = vsel %vm4668, %v4669, %v4667
        %v4671 = vclz %v4670
        %v4672 = vsub.s32 %v4671, 2
        %vm4673 = vcmp.gt.s32.totalorder 0, %v4672
        %v4674 = vsel %vm4673, 0, %v4672
        %v4675 = vsub.s32 32, %v4674
        %v4676 = vshll.u32 %v4667, %v4674
        %v4677 = vshrl.u32 %v4659, %v4675
        %v4678 = vor.u32 %v4676, %v4677
        %v4679 = vsub.s32 4294967266, %v4674
        %v4680 = vadd.s32 %v4679, 127
        %v4681 = vshll.u32 %v4680, 23
        %v4682 = vor.u32 4788187, %v4681
        %v4683 = vand.u32 2147483647, %v4682
        %v4685 = vcvt.s32.f32 %v4678
        %v4686 = vmul.f32 %v4685, %v4683
        %v4687 = vxor.u32 %v4686, 2147483648
        %v4688 = vsel %vm4605, %v4687, %v4686
        %v4689 = vsub.s32 4, %v4665
        %v4690 = vsel %vm4605, %v4689, %v4665
        %v4691 = vsel %vm4604, %v1886, %v4688
        %v4692 = vsel %vm4604, 0, %v4690
        %v4693 = vcosq.f32.pop %v4691
        %v4694 = vsinq.f32.pop %v4691
        %vm4695 = vweird.f32 %v1886
        %v4696 = vand.u32 %v4692, 3
        %vm4697 = vcmp.lt.s32.totalorder %v4696, 2
        %vm4698 = vcmp.eq.s32.totalorder %v4696, 0
        %v4699 = vxor.u32 %v4694, 2147483648
        %v4700 = vsel %vm4698, %v4693, %v4699
        %vm4701 = vcmp.eq.s32.totalorder %v4696, 2
        %v4702 = vxor.u32 %v4693, 2147483648
        %v4703 = vsel %vm4701, %v4702, %v4694
        %v4704 = vsel %vm4697, %v4700, %v4703
        %v4705 = vsel %vm4695, nan, %v4704
        %v4706 = vand.u32 2147483647, %v1887
        %vm4707 = vcmp.le.f32.partialorder %v4706, 0.7853982
        %vm4708 = vcmp.lt.s32.totalorder %v1887, 0
        %v4709 = vand.u32 %v1887, 2139095040
        %v4710 = vshrl.u32 %v4709, 23
        %v4711 = vsub.s32 %v4710, 127
        %v4712 = vand.u32 2147483647, %v1887
        %v4713 = vand.u32 %v4712, 8388607
        %v4714 = vor.u32 %v4713, 8388608
        %v4715 = vsub.s32 0, %v4714
        %v4716 = vadd.s32 %v4711, 1
        %vm4717 = vcmp.gt.s32.totalorder %v4716, 0
        %v4718 = vsel %vm4717, %v4716, 0
        %v4719 = vshrl.u32 %v4718, 5
        %v4720 = vand.u32 %v4718, 31
        %v4721 = vsub.s32 32, %v4720
        %v4722 = vshrl.u32 683565275, %v4721
        %v4723 = vshll.u32 683565275, %v4720
        %v4724 = vshrl.u32 2475754826, %v4721
        %v4725 = vor.u32 %v4723, %v4724
        %v4726 = vshll.u32 2475754826, %v4720
        %v4727 = vshrl.u32 2131351028, %v4721
        %v4728 = vor.u32 %v4726, %v4727
        %v4729 = vshll.u32 2131351028, %v4720
        %v4730 = vshrl.u32 2102212464, %v4721
        %v4731 = vor.u32 %v4729, %v4730
        %v4732 = vshll.u32 2102212464, %v4720
        %v4733 = vshrl.u32 920167782, %v4721
        %v4734 = vor.u32 %v4732, %v4733
        %v4735 = vshll.u32 920167782, %v4720
        %v4736 = vshrl.u32 1326507024, %v4721
        %v4737 = vor.u32 %v4735, %v4736
        %vm4738 = vcmp.lt.s32.totalorder %v4719, 1
        %vm4739 = vcmp.lt.s32.totalorder %v4719, 2
        %vm4740 = vcmp.lt.s32.totalorder %v4719, 3
        %vm4741 = vcmp.lt.s32.totalorder %v4719, 4
        %v4742 = vsel %vm4738, %v4722, %v4725
        %v4743 = vsel %vm4741, %v4731, 2102212464
        %v4744 = vsel %vm4740, %v4728, %v4743
        %v4745 = vsel %vm4739, %v4742, %v4744
        %v4746 = vsel %vm4738, %v4725, %v4728
        %v4747 = vsel %vm4741, %v4734, 920167782
        %v4748 = vsel %vm4740, %v4731, %v4747
        %v4749 = vsel %vm4739, %v4746, %v4748
        %v4750 = vsel %vm4738, %v4728, %v4731
        %v4751 = vsel %vm4741, %v4737, 1326507024
        %v4752 = vsel %vm4740, %v4734, %v4751
        %v4753 = vsel %vm4739, %v4750, %v4752
        %v4754 = vshll.u32 %v4714, 8
        %v4755 = vmul.u32.u64.compose %v4754, %v4753
        %v4756 = vextract.low.u32 %v4755
        %v4757 = vextract.high.u32 %v4755
        %v4758 = vmul.u32.u64.compose %v4754, %v4749
        %v4759 = vextract.low.u32 %v4758
        %v4760 = vextract.high.u32 %v4758
        %v4761 = vmul.u32 %v4754, %v4745
        %v4762 = vadd.s32 %v4757, %v4759
        %vm4763 = vc.u32 %v4757, %v4759
        %v4764 = vadd.s32 %v4760, 1
        %v4765 = vsel %vm4763, %v4764, %v4760
        %v4766 = vadd.s32 %v4761, %v4765
        %v4767 = vadd.s32 %v4766, 536870912
        %v4768 = vshrl.u32 %v4767, 30
        %v4769 = vshll.u32 %v4768, 30
        %v4770 = vsub.s32 %v4766, %v4769
        %vm4771 = vcmp.lt.s32.totalorder %v4770, 0
        %v4772 = vsub.s32 0, %v4770
        %v4773 = vsel %vm4771, %v4772, %v4770
        %v4774 = vclz %v4773
        %v4775 = vsub.s32 %v4774, 2
        %vm4776 = vcmp.gt.s32.totalorder 0, %v4775
        %v4777 = vsel %vm4776, 0, %v4775
        %v4778 = vsub.s32 32, %v4777
        %v4779 = vshll.u32 %v4770, %v4777
        %v4780 = vshrl.u32 %v4762, %v4778
        %v4781 = vor.u32 %v4779, %v4780
        %v4782 = vsub.s32 4294967266, %v4777
        %v4783 = vadd.s32 %v4782, 127
        %v4784 = vshll.u32 %v4783, 23
        %v4785 = vor.u32 4788187, %v4784
        %v4786 = vand.u32 2147483647, %v4785
        %v4788 = vcvt.s32.f32 %v4781
        %v4789 = vmul.f32 %v4788, %v4786
        %v4790 = vxor.u32 %v4789, 2147483648
        %v4791 = vsel %vm4708, %v4790, %v4789
        %v4792 = vsub.s32 4, %v4768
        %v4793 = vsel %vm4708, %v4792, %v4768
        %v4794 = vsel %vm4707, %v1887, %v4791
        %v4795 = vsel %vm4707, 0, %v4793
        %v4796 = vcosq.f32.pop %v4794
        %v4797 = vsinq.f32.pop %v4794
        %vm4798 = vweird.f32 %v1887
        %v4799 = vand.u32 %v4795, 3
        %vm4800 = vcmp.lt.s32.totalorder %v4799, 2
        %vm4801 = vcmp.eq.s32.totalorder %v4799, 0
        %v4802 = vxor.u32 %v4797, 2147483648
        %v4803 = vsel %vm4801, %v4796, %v4802
        %vm4804 = vcmp.eq.s32.totalorder %v4799, 2
        %v4805 = vxor.u32 %v4796, 2147483648
        %v4806 = vsel %vm4804, %v4805, %v4797
        %v4807 = vsel %vm4800, %v4803, %v4806
        %v4808 = vsel %vm4798, nan, %v4807
        %v4809 = vand.u32 2147483647, %v1888
        %vm4810 = vcmp.le.f32.partialorder %v4809, 0.7853982
        %vm4811 = vcmp.lt.s32.totalorder %v1888, 0
        %v4812 = vand.u32 %v1888, 2139095040
        %v4813 = vshrl.u32 %v4812, 23
        %v4814 = vsub.s32 %v4813, 127
        %v4815 = vand.u32 2147483647, %v1888
        %v4816 = vand.u32 %v4815, 8388607
        %v4817 = vor.u32 %v4816, 8388608
        %v4818 = vsub.s32 0, %v4817
        %v4819 = vadd.s32 %v4814, 1
        %vm4820 = vcmp.gt.s32.totalorder %v4819, 0
        %v4821 = vsel %vm4820, %v4819, 0
        %v4822 = vshrl.u32 %v4821, 5
        %v4823 = vand.u32 %v4821, 31
        %v4824 = vsub.s32 32, %v4823
        %v4825 = vshrl.u32 683565275, %v4824
        %v4826 = vshll.u32 683565275, %v4823
        %v4827 = vshrl.u32 2475754826, %v4824
        %v4828 = vor.u32 %v4826, %v4827
        %v4829 = vshll.u32 2475754826, %v4823
        %v4830 = vshrl.u32 2131351028, %v4824
        %v4831 = vor.u32 %v4829, %v4830
        %v4832 = vshll.u32 2131351028, %v4823
        %v4833 = vshrl.u32 2102212464, %v4824
        %v4834 = vor.u32 %v4832, %v4833
        %v4835 = vshll.u32 2102212464, %v4823
        %v4836 = vshrl.u32 920167782, %v4824
        %v4837 = vor.u32 %v4835, %v4836
        %v4838 = vshll.u32 920167782, %v4823
        %v4839 = vshrl.u32 1326507024, %v4824
        %v4840 = vor.u32 %v4838, %v4839
        %vm4841 = vcmp.lt.s32.totalorder %v4822, 1
        %vm4842 = vcmp.lt.s32.totalorder %v4822, 2
        %vm4843 = vcmp.lt.s32.totalorder %v4822, 3
        %vm4844 = vcmp.lt.s32.totalorder %v4822, 4
        %v4845 = vsel %vm4841, %v4825, %v4828
        %v4846 = vsel %vm4844, %v4834, 2102212464
        %v4847 = vsel %vm4843, %v4831, %v4846
        %v4848 = vsel %vm4842, %v4845, %v4847
        %v4849 = vsel %vm4841, %v4828, %v4831
        %v4850 = vsel %vm4844, %v4837, 920167782
        %v4851 = vsel %vm4843, %v4834, %v4850
        %v4852 = vsel %vm4842, %v4849, %v4851
        %v4853 = vsel %vm4841, %v4831, %v4834
        %v4854 = vsel %vm4844, %v4840, 1326507024
        %v4855 = vsel %vm4843, %v4837, %v4854
        %v4856 = vsel %vm4842, %v4853, %v4855
        %v4857 = vshll.u32 %v4817, 8
        %v4858 = vmul.u32.u64.compose %v4857, %v4856
        %v4859 = vextract.low.u32 %v4858
        %v4860 = vextract.high.u32 %v4858
        %v4861 = vmul.u32.u64.compose %v4857, %v4852
        %v4862 = vextract.low.u32 %v4861
        %v4863 = vextract.high.u32 %v4861
        %v4864 = vmul.u32 %v4857, %v4848
        %v4865 = vadd.s32 %v4860, %v4862
        %vm4866 = vc.u32 %v4860, %v4862
        %v4867 = vadd.s32 %v4863, 1
        %v4868 = vsel %vm4866, %v4867, %v4863
        %v4869 = vadd.s32 %v4864, %v4868
        %v4870 = vadd.s32 %v4869, 536870912
        %v4871 = vshrl.u32 %v4870, 30
        %v4872 = vshll.u32 %v4871, 30
        %v4873 = vsub.s32 %v4869, %v4872
        %vm4874 = vcmp.lt.s32.totalorder %v4873, 0
        %v4875 = vsub.s32 0, %v4873
        %v4876 = vsel %vm4874, %v4875, %v4873
        %v4877 = vclz %v4876
        %v4878 = vsub.s32 %v4877, 2
        %vm4879 = vcmp.gt.s32.totalorder 0, %v4878
        %v4880 = vsel %vm4879, 0, %v4878
        %v4881 = vsub.s32 32, %v4880
        %v4882 = vshll.u32 %v4873, %v4880
        %v4883 = vshrl.u32 %v4865, %v4881
        %v4884 = vor.u32 %v4882, %v4883
        %v4885 = vsub.s32 4294967266, %v4880
        %v4886 = vadd.s32 %v4885, 127
        %v4887 = vshll.u32 %v4886, 23
        %v4888 = vor.u32 4788187, %v4887
        %v4889 = vand.u32 2147483647, %v4888
        %v4891 = vcvt.s32.f32 %v4884
        %v4892 = vmul.f32 %v4891, %v4889
        %v4893 = vxor.u32 %v4892, 2147483648
        %v4894 = vsel %vm4811, %v4893, %v4892
        %v4895 = vsub.s32 4, %v4871
        %v4896 = vsel %vm4811, %v4895, %v4871
        %v4897 = vsel %vm4810, %v1888, %v4894
        %v4898 = vsel %vm4810, 0, %v4896
        %v4899 = vcosq.f32.pop %v4897
        %v4900 = vsinq.f32.pop %v4897
        %vm4901 = vweird.f32 %v1888
        %v4902 = vand.u32 %v4898, 3
        %vm4903 = vcmp.lt.s32.totalorder %v4902, 2
        %vm4904 = vcmp.eq.s32.totalorder %v4902, 0
        %v4905 = vxor.u32 %v4900, 2147483648
        %v4906 = vsel %vm4904, %v4899, %v4905
        %vm4907 = vcmp.eq.s32.totalorder %v4902, 2
        %v4908 = vxor.u32 %v4899, 2147483648
        %v4909 = vsel %vm4907, %v4908, %v4900
        %v4910 = vsel %vm4903, %v4906, %v4909
        %v4911 = vsel %vm4901, nan, %v4910
        %v4912 = vand.u32 2147483647, %v1889
        %vm4913 = vcmp.le.f32.partialorder %v4912, 0.7853982
        %vm4914 = vcmp.lt.s32.totalorder %v1889, 0
        %v4915 = vand.u32 %v1889, 2139095040
        %v4916 = vshrl.u32 %v4915, 23
        %v4917 = vsub.s32 %v4916, 127
        %v4918 = vand.u32 2147483647, %v1889
        %v4919 = vand.u32 %v4918, 8388607
        %v4920 = vor.u32 %v4919, 8388608
        %v4921 = vsub.s32 0, %v4920
        %v4922 = vadd.s32 %v4917, 1
        %vm4923 = vcmp.gt.s32.totalorder %v4922, 0
        %v4924 = vsel %vm4923, %v4922, 0
        %v4925 = vshrl.u32 %v4924, 5
        %v4926 = vand.u32 %v4924, 31
        %v4927 = vsub.s32 32, %v4926
        %v4928 = vshrl.u32 683565275, %v4927
        %v4929 = vshll.u32 683565275, %v4926
        %v4930 = vshrl.u32 2475754826, %v4927
        %v4931 = vor.u32 %v4929, %v4930
        %v4932 = vshll.u32 2475754826, %v4926
        %v4933 = vshrl.u32 2131351028, %v4927
        %v4934 = vor.u32 %v4932, %v4933
        %v4935 = vshll.u32 2131351028, %v4926
        %v4936 = vshrl.u32 2102212464, %v4927
        %v4937 = vor.u32 %v4935, %v4936
        %v4938 = vshll.u32 2102212464, %v4926
        %v4939 = vshrl.u32 920167782, %v4927
        %v4940 = vor.u32 %v4938, %v4939
        %v4941 = vshll.u32 920167782, %v4926
        %v4942 = vshrl.u32 1326507024, %v4927
        %v4943 = vor.u32 %v4941, %v4942
        %vm4944 = vcmp.lt.s32.totalorder %v4925, 1
        %vm4945 = vcmp.lt.s32.totalorder %v4925, 2
        %vm4946 = vcmp.lt.s32.totalorder %v4925, 3
        %vm4947 = vcmp.lt.s32.totalorder %v4925, 4
        %v4948 = vsel %vm4944, %v4928, %v4931
        %v4949 = vsel %vm4947, %v4937, 2102212464
        %v4950 = vsel %vm4946, %v4934, %v4949
        %v4951 = vsel %vm4945, %v4948, %v4950
        %v4952 = vsel %vm4944, %v4931, %v4934
        %v4953 = vsel %vm4947, %v4940, 920167782
        %v4954 = vsel %vm4946, %v4937, %v4953
        %v4955 = vsel %vm4945, %v4952, %v4954
        %v4956 = vsel %vm4944, %v4934, %v4937
        %v4957 = vsel %vm4947, %v4943, 1326507024
        %v4958 = vsel %vm4946, %v4940, %v4957
        %v4959 = vsel %vm4945, %v4956, %v4958
        %v4960 = vshll.u32 %v4920, 8
        %v4961 = vmul.u32.u64.compose %v4960, %v4959
        %v4962 = vextract.low.u32 %v4961
        %v4963 = vextract.high.u32 %v4961
        %v4964 = vmul.u32.u64.compose %v4960, %v4955
        %v4965 = vextract.low.u32 %v4964
        %v4966 = vextract.high.u32 %v4964
        %v4967 = vmul.u32 %v4960, %v4951
        %v4968 = vadd.s32 %v4963, %v4965
        %vm4969 = vc.u32 %v4963, %v4965
        %v4970 = vadd.s32 %v4966, 1
        %v4971 = vsel %vm4969, %v4970, %v4966
        %v4972 = vadd.s32 %v4967, %v4971
        %v4973 = vadd.s32 %v4972, 536870912
        %v4974 = vshrl.u32 %v4973, 30
        %v4975 = vshll.u32 %v4974, 30
        %v4976 = vsub.s32 %v4972, %v4975
        %vm4977 = vcmp.lt.s32.totalorder %v4976, 0
        %v4978 = vsub.s32 0, %v4976
        %v4979 = vsel %vm4977, %v4978, %v4976
        %v4980 = vclz %v4979
        %v4981 = vsub.s32 %v4980, 2
        %vm4982 = vcmp.gt.s32.totalorder 0, %v4981
        %v4983 = vsel %vm4982, 0, %v4981
        %v4984 = vsub.s32 32, %v4983
        %v4985 = vshll.u32 %v4976, %v4983
        %v4986 = vshrl.u32 %v4968, %v4984
        %v4987 = vor.u32 %v4985, %v4986
        %v4988 = vsub.s32 4294967266, %v4983
        %v4989 = vadd.s32 %v4988, 127
        %v4990 = vshll.u32 %v4989, 23
        %v4991 = vor.u32 4788187, %v4990
        %v4992 = vand.u32 2147483647, %v4991
        %v4994 = vcvt.s32.f32 %v4987
        %v4995 = vmul.f32 %v4994, %v4992
        %v4996 = vxor.u32 %v4995, 2147483648
        %v4997 = vsel %vm4914, %v4996, %v4995
        %v4998 = vsub.s32 4, %v4974
        %v4999 = vsel %vm4914, %v4998, %v4974
        %v5000 = vsel %vm4913, %v1889, %v4997
        %v5001 = vsel %vm4913, 0, %v4999
        %v5002 = vcosq.f32.pop %v5000
        %v5003 = vsinq.f32.pop %v5000
        %vm5004 = vweird.f32 %v1889
        %v5005 = vand.u32 %v5001, 3
        %vm5006 = vcmp.lt.s32.totalorder %v5005, 2
        %vm5007 = vcmp.eq.s32.totalorder %v5005, 0
        %v5008 = vxor.u32 %v5003, 2147483648
        %v5009 = vsel %vm5007, %v5002, %v5008
        %vm5010 = vcmp.eq.s32.totalorder %v5005, 2
        %v5011 = vxor.u32 %v5002, 2147483648
        %v5012 = vsel %vm5010, %v5011, %v5003
        %v5013 = vsel %vm5006, %v5009, %v5012
        %v5014 = vsel %vm5004, nan, %v5013
        %v5015 = vand.u32 2147483647, %v1890
        %vm5016 = vcmp.le.f32.partialorder %v5015, 0.7853982
        %vm5017 = vcmp.lt.s32.totalorder %v1890, 0
        %v5018 = vand.u32 %v1890, 2139095040
        %v5019 = vshrl.u32 %v5018, 23
        %v5020 = vsub.s32 %v5019, 127
        %v5021 = vand.u32 2147483647, %v1890
        %v5022 = vand.u32 %v5021, 8388607
        %v5023 = vor.u32 %v5022, 8388608
        %v5024 = vsub.s32 0, %v5023
        %v5025 = vadd.s32 %v5020, 1
        %vm5026 = vcmp.gt.s32.totalorder %v5025, 0
        %v5027 = vsel %vm5026, %v5025, 0
        %v5028 = vshrl.u32 %v5027, 5
        %v5029 = vand.u32 %v5027, 31
        %v5030 = vsub.s32 32, %v5029
        %v5031 = vshrl.u32 683565275, %v5030
        %v5032 = vshll.u32 683565275, %v5029
        %v5033 = vshrl.u32 2475754826, %v5030
        %v5034 = vor.u32 %v5032, %v5033
        %v5035 = vshll.u32 2475754826, %v5029
        %v5036 = vshrl.u32 2131351028, %v5030
        %v5037 = vor.u32 %v5035, %v5036
        %v5038 = vshll.u32 2131351028, %v5029
        %v5039 = vshrl.u32 2102212464, %v5030
        %v5040 = vor.u32 %v5038, %v5039
        %v5041 = vshll.u32 2102212464, %v5029
        %v5042 = vshrl.u32 920167782, %v5030
        %v5043 = vor.u32 %v5041, %v5042
        %v5044 = vshll.u32 920167782, %v5029
        %v5045 = vshrl.u32 1326507024, %v5030
        %v5046 = vor.u32 %v5044, %v5045
        %vm5047 = vcmp.lt.s32.totalorder %v5028, 1
        %vm5048 = vcmp.lt.s32.totalorder %v5028, 2
        %vm5049 = vcmp.lt.s32.totalorder %v5028, 3
        %vm5050 = vcmp.lt.s32.totalorder %v5028, 4
        %v5051 = vsel %vm5047, %v5031, %v5034
        %v5052 = vsel %vm5050, %v5040, 2102212464
        %v5053 = vsel %vm5049, %v5037, %v5052
        %v5054 = vsel %vm5048, %v5051, %v5053
        %v5055 = vsel %vm5047, %v5034, %v5037
        %v5056 = vsel %vm5050, %v5043, 920167782
        %v5057 = vsel %vm5049, %v5040, %v5056
        %v5058 = vsel %vm5048, %v5055, %v5057
        %v5059 = vsel %vm5047, %v5037, %v5040
        %v5060 = vsel %vm5050, %v5046, 1326507024
        %v5061 = vsel %vm5049, %v5043, %v5060
        %v5062 = vsel %vm5048, %v5059, %v5061
        %v5063 = vshll.u32 %v5023, 8
        %v5064 = vmul.u32.u64.compose %v5063, %v5062
        %v5065 = vextract.low.u32 %v5064
        %v5066 = vextract.high.u32 %v5064
        %v5067 = vmul.u32.u64.compose %v5063, %v5058
        %v5068 = vextract.low.u32 %v5067
        %v5069 = vextract.high.u32 %v5067
        %v5070 = vmul.u32 %v5063, %v5054
        %v5071 = vadd.s32 %v5066, %v5068
        %vm5072 = vc.u32 %v5066, %v5068
        %v5073 = vadd.s32 %v5069, 1
        %v5074 = vsel %vm5072, %v5073, %v5069
        %v5075 = vadd.s32 %v5070, %v5074
        %v5076 = vadd.s32 %v5075, 536870912
        %v5077 = vshrl.u32 %v5076, 30
        %v5078 = vshll.u32 %v5077, 30
        %v5079 = vsub.s32 %v5075, %v5078
        %vm5080 = vcmp.lt.s32.totalorder %v5079, 0
        %v5081 = vsub.s32 0, %v5079
        %v5082 = vsel %vm5080, %v5081, %v5079
        %v5083 = vclz %v5082
        %v5084 = vsub.s32 %v5083, 2
        %vm5085 = vcmp.gt.s32.totalorder 0, %v5084
        %v5086 = vsel %vm5085, 0, %v5084
        %v5087 = vsub.s32 32, %v5086
        %v5088 = vshll.u32 %v5079, %v5086
        %v5089 = vshrl.u32 %v5071, %v5087
        %v5090 = vor.u32 %v5088, %v5089
        %v5091 = vsub.s32 4294967266, %v5086
        %v5092 = vadd.s32 %v5091, 127
        %v5093 = vshll.u32 %v5092, 23
        %v5094 = vor.u32 4788187, %v5093
        %v5095 = vand.u32 2147483647, %v5094
        %v5097 = vcvt.s32.f32 %v5090
        %v5098 = vmul.f32 %v5097, %v5095
        %v5099 = vxor.u32 %v5098, 2147483648
        %v5100 = vsel %vm5017, %v5099, %v5098
        %v5101 = vsub.s32 4, %v5077
        %v5102 = vsel %vm5017, %v5101, %v5077
        %v5103 = vsel %vm5016, %v1890, %v5100
        %v5104 = vsel %vm5016, 0, %v5102
        %v5105 = vcosq.f32.pop %v5103
        %v5106 = vsinq.f32.pop %v5103
        %vm5107 = vweird.f32 %v1890
        %v5108 = vand.u32 %v5104, 3
        %vm5109 = vcmp.lt.s32.totalorder %v5108, 2
        %vm5110 = vcmp.eq.s32.totalorder %v5108, 0
        %v5111 = vxor.u32 %v5106, 2147483648
        %v5112 = vsel %vm5110, %v5105, %v5111
        %vm5113 = vcmp.eq.s32.totalorder %v5108, 2
        %v5114 = vxor.u32 %v5105, 2147483648
        %v5115 = vsel %vm5113, %v5114, %v5106
        %v5116 = vsel %vm5109, %v5112, %v5115
        %v5117 = vsel %vm5107, nan, %v5116
        %v5118 = vand.u32 2147483647, %v1891
        %vm5119 = vcmp.le.f32.partialorder %v5118, 0.7853982
        %vm5120 = vcmp.lt.s32.totalorder %v1891, 0
        %v5121 = vand.u32 %v1891, 2139095040
        %v5122 = vshrl.u32 %v5121, 23
        %v5123 = vsub.s32 %v5122, 127
        %v5124 = vand.u32 2147483647, %v1891
        %v5125 = vand.u32 %v5124, 8388607
        %v5126 = vor.u32 %v5125, 8388608
        %v5127 = vsub.s32 0, %v5126
        %v5128 = vadd.s32 %v5123, 1
        %vm5129 = vcmp.gt.s32.totalorder %v5128, 0
        %v5130 = vsel %vm5129, %v5128, 0
        %v5131 = vshrl.u32 %v5130, 5
        %v5132 = vand.u32 %v5130, 31
        %v5133 = vsub.s32 32, %v5132
        %v5134 = vshrl.u32 683565275, %v5133
        %v5135 = vshll.u32 683565275, %v5132
        %v5136 = vshrl.u32 2475754826, %v5133
        %v5137 = vor.u32 %v5135, %v5136
        %v5138 = vshll.u32 2475754826, %v5132
        %v5139 = vshrl.u32 2131351028, %v5133
        %v5140 = vor.u32 %v5138, %v5139
        %v5141 = vshll.u32 2131351028, %v5132
        %v5142 = vshrl.u32 2102212464, %v5133
        %v5143 = vor.u32 %v5141, %v5142
        %v5144 = vshll.u32 2102212464, %v5132
        %v5145 = vshrl.u32 920167782, %v5133
        %v5146 = vor.u32 %v5144, %v5145
        %v5147 = vshll.u32 920167782, %v5132
        %v5148 = vshrl.u32 1326507024, %v5133
        %v5149 = vor.u32 %v5147, %v5148
        %vm5150 = vcmp.lt.s32.totalorder %v5131, 1
        %vm5151 = vcmp.lt.s32.totalorder %v5131, 2
        %vm5152 = vcmp.lt.s32.totalorder %v5131, 3
        %vm5153 = vcmp.lt.s32.totalorder %v5131, 4
        %v5154 = vsel %vm5150, %v5134, %v5137
        %v5155 = vsel %vm5153, %v5143, 2102212464
        %v5156 = vsel %vm5152, %v5140, %v5155
        %v5157 = vsel %vm5151, %v5154, %v5156
        %v5158 = vsel %vm5150, %v5137, %v5140
        %v5159 = vsel %vm5153, %v5146, 920167782
        %v5160 = vsel %vm5152, %v5143, %v5159
        %v5161 = vsel %vm5151, %v5158, %v5160
        %v5162 = vsel %vm5150, %v5140, %v5143
        %v5163 = vsel %vm5153, %v5149, 1326507024
        %v5164 = vsel %vm5152, %v5146, %v5163
        %v5165 = vsel %vm5151, %v5162, %v5164
        %v5166 = vshll.u32 %v5126, 8
        %v5167 = vmul.u32.u64.compose %v5166, %v5165
        %v5168 = vextract.low.u32 %v5167
        %v5169 = vextract.high.u32 %v5167
        %v5170 = vmul.u32.u64.compose %v5166, %v5161
        %v5171 = vextract.low.u32 %v5170
        %v5172 = vextract.high.u32 %v5170
        %v5173 = vmul.u32 %v5166, %v5157
        %v5174 = vadd.s32 %v5169, %v5171
        %vm5175 = vc.u32 %v5169, %v5171
        %v5176 = vadd.s32 %v5172, 1
        %v5177 = vsel %vm5175, %v5176, %v5172
        %v5178 = vadd.s32 %v5173, %v5177
        %v5179 = vadd.s32 %v5178, 536870912
        %v5180 = vshrl.u32 %v5179, 30
        %v5181 = vshll.u32 %v5180, 30
        %v5182 = vsub.s32 %v5178, %v5181
        %vm5183 = vcmp.lt.s32.totalorder %v5182, 0
        %v5184 = vsub.s32 0, %v5182
        %v5185 = vsel %vm5183, %v5184, %v5182
        %v5186 = vclz %v5185
        %v5187 = vsub.s32 %v5186, 2
        %vm5188 = vcmp.gt.s32.totalorder 0, %v5187
        %v5189 = vsel %vm5188, 0, %v5187
        %v5190 = vsub.s32 32, %v5189
        %v5191 = vshll.u32 %v5182, %v5189
        %v5192 = vshrl.u32 %v5174, %v5190
        %v5193 = vor.u32 %v5191, %v5192
        %v5194 = vsub.s32 4294967266, %v5189
        %v5195 = vadd.s32 %v5194, 127
        %v5196 = vshll.u32 %v5195, 23
        %v5197 = vor.u32 4788187, %v5196
        %v5198 = vand.u32 2147483647, %v5197
        %v5200 = vcvt.s32.f32 %v5193
        %v5201 = vmul.f32 %v5200, %v5198
        %v5202 = vxor.u32 %v5201, 2147483648
        %v5203 = vsel %vm5120, %v5202, %v5201
        %v5204 = vsub.s32 4, %v5180
        %v5205 = vsel %vm5120, %v5204, %v5180
        %v5206 = vsel %vm5119, %v1891, %v5203
        %v5207 = vsel %vm5119, 0, %v5205
        %v5208 = vcosq.f32.pop %v5206
        %v5209 = vsinq.f32.pop %v5206
        %vm5210 = vweird.f32 %v1891
        %v5211 = vand.u32 %v5207, 3
        %vm5212 = vcmp.lt.s32.totalorder %v5211, 2
        %vm5213 = vcmp.eq.s32.totalorder %v5211, 0
        %v5214 = vxor.u32 %v5209, 2147483648
        %v5215 = vsel %vm5213, %v5208, %v5214
        %vm5216 = vcmp.eq.s32.totalorder %v5211, 2
        %v5217 = vxor.u32 %v5208, 2147483648
        %v5218 = vsel %vm5216, %v5217, %v5209
        %v5219 = vsel %vm5212, %v5215, %v5218
        %v5220 = vsel %vm5210, nan, %v5219
        %v5221 = vand.u32 2147483647, %v1892
        %vm5222 = vcmp.le.f32.partialorder %v5221, 0.7853982
        %vm5223 = vcmp.lt.s32.totalorder %v1892, 0
        %v5224 = vand.u32 %v1892, 2139095040
        %v5225 = vshrl.u32 %v5224, 23
        %v5226 = vsub.s32 %v5225, 127
        %v5227 = vand.u32 2147483647, %v1892
        %v5228 = vand.u32 %v5227, 8388607
        %v5229 = vor.u32 %v5228, 8388608
        %v5230 = vsub.s32 0, %v5229
        %v5231 = vadd.s32 %v5226, 1
        %vm5232 = vcmp.gt.s32.totalorder %v5231, 0
        %v5233 = vsel %vm5232, %v5231, 0
        %v5234 = vshrl.u32 %v5233, 5
        %v5235 = vand.u32 %v5233, 31
        %v5236 = vsub.s32 32, %v5235
        %v5237 = vshrl.u32 683565275, %v5236
        %v5238 = vshll.u32 683565275, %v5235
        %v5239 = vshrl.u32 2475754826, %v5236
        %v5240 = vor.u32 %v5238, %v5239
        %v5241 = vshll.u32 2475754826, %v5235
        %v5242 = vshrl.u32 2131351028, %v5236
        %v5243 = vor.u32 %v5241, %v5242
        %v5244 = vshll.u32 2131351028, %v5235
        %v5245 = vshrl.u32 2102212464, %v5236
        %v5246 = vor.u32 %v5244, %v5245
        %v5247 = vshll.u32 2102212464, %v5235
        %v5248 = vshrl.u32 920167782, %v5236
        %v5249 = vor.u32 %v5247, %v5248
        %v5250 = vshll.u32 920167782, %v5235
        %v5251 = vshrl.u32 1326507024, %v5236
        %v5252 = vor.u32 %v5250, %v5251
        %vm5253 = vcmp.lt.s32.totalorder %v5234, 1
        %vm5254 = vcmp.lt.s32.totalorder %v5234, 2
        %vm5255 = vcmp.lt.s32.totalorder %v5234, 3
        %vm5256 = vcmp.lt.s32.totalorder %v5234, 4
        %v5257 = vsel %vm5253, %v5237, %v5240
        %v5258 = vsel %vm5256, %v5246, 2102212464
        %v5259 = vsel %vm5255, %v5243, %v5258
        %v5260 = vsel %vm5254, %v5257, %v5259
        %v5261 = vsel %vm5253, %v5240, %v5243
        %v5262 = vsel %vm5256, %v5249, 920167782
        %v5263 = vsel %vm5255, %v5246, %v5262
        %v5264 = vsel %vm5254, %v5261, %v5263
        %v5265 = vsel %vm5253, %v5243, %v5246
        %v5266 = vsel %vm5256, %v5252, 1326507024
        %v5267 = vsel %vm5255, %v5249, %v5266
        %v5268 = vsel %vm5254, %v5265, %v5267
        %v5269 = vshll.u32 %v5229, 8
        %v5270 = vmul.u32.u64.compose %v5269, %v5268
        %v5271 = vextract.low.u32 %v5270
        %v5272 = vextract.high.u32 %v5270
        %v5273 = vmul.u32.u64.compose %v5269, %v5264
        %v5274 = vextract.low.u32 %v5273
        %v5275 = vextract.high.u32 %v5273
        %v5276 = vmul.u32 %v5269, %v5260
        %v5277 = vadd.s32 %v5272, %v5274
        %vm5278 = vc.u32 %v5272, %v5274
        %v5279 = vadd.s32 %v5275, 1
        %v5280 = vsel %vm5278, %v5279, %v5275
        %v5281 = vadd.s32 %v5276, %v5280
        %v5282 = vadd.s32 %v5281, 536870912
        %v5283 = vshrl.u32 %v5282, 30
        %v5284 = vshll.u32 %v5283, 30
        %v5285 = vsub.s32 %v5281, %v5284
        %vm5286 = vcmp.lt.s32.totalorder %v5285, 0
        %v5287 = vsub.s32 0, %v5285
        %v5288 = vsel %vm5286, %v5287, %v5285
        %v5289 = vclz %v5288
        %v5290 = vsub.s32 %v5289, 2
        %vm5291 = vcmp.gt.s32.totalorder 0, %v5290
        %v5292 = vsel %vm5291, 0, %v5290
        %v5293 = vsub.s32 32, %v5292
        %v5294 = vshll.u32 %v5285, %v5292
        %v5295 = vshrl.u32 %v5277, %v5293
        %v5296 = vor.u32 %v5294, %v5295
        %v5297 = vsub.s32 4294967266, %v5292
        %v5298 = vadd.s32 %v5297, 127
        %v5299 = vshll.u32 %v5298, 23
        %v5300 = vor.u32 4788187, %v5299
        %v5301 = vand.u32 2147483647, %v5300
        %v5303 = vcvt.s32.f32 %v5296
        %v5304 = vmul.f32 %v5303, %v5301
        %v5305 = vxor.u32 %v5304, 2147483648
        %v5306 = vsel %vm5223, %v5305, %v5304
        %v5307 = vsub.s32 4, %v5283
        %v5308 = vsel %vm5223, %v5307, %v5283
        %v5309 = vsel %vm5222, %v1892, %v5306
        %v5310 = vsel %vm5222, 0, %v5308
        %v5311 = vcosq.f32.pop %v5309
        %v5312 = vsinq.f32.pop %v5309
        %vm5313 = vweird.f32 %v1892
        %v5314 = vand.u32 %v5310, 3
        %vm5315 = vcmp.lt.s32.totalorder %v5314, 2
        %vm5316 = vcmp.eq.s32.totalorder %v5314, 0
        %v5317 = vxor.u32 %v5312, 2147483648
        %v5318 = vsel %vm5316, %v5311, %v5317
        %vm5319 = vcmp.eq.s32.totalorder %v5314, 2
        %v5320 = vxor.u32 %v5311, 2147483648
        %v5321 = vsel %vm5319, %v5320, %v5312
        %v5322 = vsel %vm5315, %v5318, %v5321
        %v5323 = vsel %vm5313, nan, %v5322
        %v5324 = vand.u32 2147483647, %v1893
        %vm5325 = vcmp.le.f32.partialorder %v5324, 0.7853982
        %vm5326 = vcmp.lt.s32.totalorder %v1893, 0
        %v5327 = vand.u32 %v1893, 2139095040
        %v5328 = vshrl.u32 %v5327, 23
        %v5329 = vsub.s32 %v5328, 127
        %v5330 = vand.u32 2147483647, %v1893
        %v5331 = vand.u32 %v5330, 8388607
        %v5332 = vor.u32 %v5331, 8388608
        %v5333 = vsub.s32 0, %v5332
        %v5334 = vadd.s32 %v5329, 1
        %vm5335 = vcmp.gt.s32.totalorder %v5334, 0
        %v5336 = vsel %vm5335, %v5334, 0
        %v5337 = vshrl.u32 %v5336, 5
        %v5338 = vand.u32 %v5336, 31
        %v5339 = vsub.s32 32, %v5338
        %v5340 = vshrl.u32 683565275, %v5339
        %v5341 = vshll.u32 683565275, %v5338
        %v5342 = vshrl.u32 2475754826, %v5339
        %v5343 = vor.u32 %v5341, %v5342
        %v5344 = vshll.u32 2475754826, %v5338
        %v5345 = vshrl.u32 2131351028, %v5339
        %v5346 = vor.u32 %v5344, %v5345
        %v5347 = vshll.u32 2131351028, %v5338
        %v5348 = vshrl.u32 2102212464, %v5339
        %v5349 = vor.u32 %v5347, %v5348
        %v5350 = vshll.u32 2102212464, %v5338
        %v5351 = vshrl.u32 920167782, %v5339
        %v5352 = vor.u32 %v5350, %v5351
        %v5353 = vshll.u32 920167782, %v5338
        %v5354 = vshrl.u32 1326507024, %v5339
        %v5355 = vor.u32 %v5353, %v5354
        %vm5356 = vcmp.lt.s32.totalorder %v5337, 1
        %vm5357 = vcmp.lt.s32.totalorder %v5337, 2
        %vm5358 = vcmp.lt.s32.totalorder %v5337, 3
        %vm5359 = vcmp.lt.s32.totalorder %v5337, 4
        %v5360 = vsel %vm5356, %v5340, %v5343
        %v5361 = vsel %vm5359, %v5349, 2102212464
        %v5362 = vsel %vm5358, %v5346, %v5361
        %v5363 = vsel %vm5357, %v5360, %v5362
        %v5364 = vsel %vm5356, %v5343, %v5346
        %v5365 = vsel %vm5359, %v5352, 920167782
        %v5366 = vsel %vm5358, %v5349, %v5365
        %v5367 = vsel %vm5357, %v5364, %v5366
        %v5368 = vsel %vm5356, %v5346, %v5349
        %v5369 = vsel %vm5359, %v5355, 1326507024
        %v5370 = vsel %vm5358, %v5352, %v5369
        %v5371 = vsel %vm5357, %v5368, %v5370
        %v5372 = vshll.u32 %v5332, 8
        %v5373 = vmul.u32.u64.compose %v5372, %v5371
        %v5374 = vextract.low.u32 %v5373
        %v5375 = vextract.high.u32 %v5373
        %v5376 = vmul.u32.u64.compose %v5372, %v5367
        %v5377 = vextract.low.u32 %v5376
        %v5378 = vextract.high.u32 %v5376
        %v5379 = vmul.u32 %v5372, %v5363
        %v5380 = vadd.s32 %v5375, %v5377
        %vm5381 = vc.u32 %v5375, %v5377
        %v5382 = vadd.s32 %v5378, 1
        %v5383 = vsel %vm5381, %v5382, %v5378
        %v5384 = vadd.s32 %v5379, %v5383
        %v5385 = vadd.s32 %v5384, 536870912
        %v5386 = vshrl.u32 %v5385, 30
        %v5387 = vshll.u32 %v5386, 30
        %v5388 = vsub.s32 %v5384, %v5387
        %vm5389 = vcmp.lt.s32.totalorder %v5388, 0
        %v5390 = vsub.s32 0, %v5388
        %v5391 = vsel %vm5389, %v5390, %v5388
        %v5392 = vclz %v5391
        %v5393 = vsub.s32 %v5392, 2
        %vm5394 = vcmp.gt.s32.totalorder 0, %v5393
        %v5395 = vsel %vm5394, 0, %v5393
        %v5396 = vsub.s32 32, %v5395
        %v5397 = vshll.u32 %v5388, %v5395
        %v5398 = vshrl.u32 %v5380, %v5396
        %v5399 = vor.u32 %v5397, %v5398
        %v5400 = vsub.s32 4294967266, %v5395
        %v5401 = vadd.s32 %v5400, 127
        %v5402 = vshll.u32 %v5401, 23
        %v5403 = vor.u32 4788187, %v5402
        %v5404 = vand.u32 2147483647, %v5403
        %v5406 = vcvt.s32.f32 %v5399
        %v5407 = vmul.f32 %v5406, %v5404
        %v5408 = vxor.u32 %v5407, 2147483648
        %v5409 = vsel %vm5326, %v5408, %v5407
        %v5410 = vsub.s32 4, %v5386
        %v5411 = vsel %vm5326, %v5410, %v5386
        %v5412 = vsel %vm5325, %v1893, %v5409
        %v5413 = vsel %vm5325, 0, %v5411
        %v5414 = vcosq.f32.pop %v5412
        %v5415 = vsinq.f32.pop %v5412
        %vm5416 = vweird.f32 %v1893
        %v5417 = vand.u32 %v5413, 3
        %vm5418 = vcmp.lt.s32.totalorder %v5417, 2
        %vm5419 = vcmp.eq.s32.totalorder %v5417, 0
        %v5420 = vxor.u32 %v5415, 2147483648
        %v5421 = vsel %vm5419, %v5414, %v5420
        %vm5422 = vcmp.eq.s32.totalorder %v5417, 2
        %v5423 = vxor.u32 %v5414, 2147483648
        %v5424 = vsel %vm5422, %v5423, %v5415
        %v5425 = vsel %vm5418, %v5421, %v5424
        %v5426 = vsel %vm5416, nan, %v5425
        %v5427 = vand.u32 2147483647, %v1894
        %vm5428 = vcmp.le.f32.partialorder %v5427, 0.7853982
        %vm5429 = vcmp.lt.s32.totalorder %v1894, 0
        %v5430 = vand.u32 %v1894, 2139095040
        %v5431 = vshrl.u32 %v5430, 23
        %v5432 = vsub.s32 %v5431, 127
        %v5433 = vand.u32 2147483647, %v1894
        %v5434 = vand.u32 %v5433, 8388607
        %v5435 = vor.u32 %v5434, 8388608
        %v5436 = vsub.s32 0, %v5435
        %v5437 = vadd.s32 %v5432, 1
        %vm5438 = vcmp.gt.s32.totalorder %v5437, 0
        %v5439 = vsel %vm5438, %v5437, 0
        %v5440 = vshrl.u32 %v5439, 5
        %v5441 = vand.u32 %v5439, 31
        %v5442 = vsub.s32 32, %v5441
        %v5443 = vshrl.u32 683565275, %v5442
        %v5444 = vshll.u32 683565275, %v5441
        %v5445 = vshrl.u32 2475754826, %v5442
        %v5446 = vor.u32 %v5444, %v5445
        %v5447 = vshll.u32 2475754826, %v5441
        %v5448 = vshrl.u32 2131351028, %v5442
        %v5449 = vor.u32 %v5447, %v5448
        %v5450 = vshll.u32 2131351028, %v5441
        %v5451 = vshrl.u32 2102212464, %v5442
        %v5452 = vor.u32 %v5450, %v5451
        %v5453 = vshll.u32 2102212464, %v5441
        %v5454 = vshrl.u32 920167782, %v5442
        %v5455 = vor.u32 %v5453, %v5454
        %v5456 = vshll.u32 920167782, %v5441
        %v5457 = vshrl.u32 1326507024, %v5442
        %v5458 = vor.u32 %v5456, %v5457
        %vm5459 = vcmp.lt.s32.totalorder %v5440, 1
        %vm5460 = vcmp.lt.s32.totalorder %v5440, 2
        %vm5461 = vcmp.lt.s32.totalorder %v5440, 3
        %vm5462 = vcmp.lt.s32.totalorder %v5440, 4
        %v5463 = vsel %vm5459, %v5443, %v5446
        %v5464 = vsel %vm5462, %v5452, 2102212464
        %v5465 = vsel %vm5461, %v5449, %v5464
        %v5466 = vsel %vm5460, %v5463, %v5465
        %v5467 = vsel %vm5459, %v5446, %v5449
        %v5468 = vsel %vm5462, %v5455, 920167782
        %v5469 = vsel %vm5461, %v5452, %v5468
        %v5470 = vsel %vm5460, %v5467, %v5469
        %v5471 = vsel %vm5459, %v5449, %v5452
        %v5472 = vsel %vm5462, %v5458, 1326507024
        %v5473 = vsel %vm5461, %v5455, %v5472
        %v5474 = vsel %vm5460, %v5471, %v5473
        %v5475 = vshll.u32 %v5435, 8
        %v5476 = vmul.u32.u64.compose %v5475, %v5474
        %v5477 = vextract.low.u32 %v5476
        %v5478 = vextract.high.u32 %v5476
        %v5479 = vmul.u32.u64.compose %v5475, %v5470
        %v5480 = vextract.low.u32 %v5479
        %v5481 = vextract.high.u32 %v5479
        %v5482 = vmul.u32 %v5475, %v5466
        %v5483 = vadd.s32 %v5478, %v5480
        %vm5484 = vc.u32 %v5478, %v5480
        %v5485 = vadd.s32 %v5481, 1
        %v5486 = vsel %vm5484, %v5485, %v5481
        %v5487 = vadd.s32 %v5482, %v5486
        %v5488 = vadd.s32 %v5487, 536870912
        %v5489 = vshrl.u32 %v5488, 30
        %v5490 = vshll.u32 %v5489, 30
        %v5491 = vsub.s32 %v5487, %v5490
        %vm5492 = vcmp.lt.s32.totalorder %v5491, 0
        %v5493 = vsub.s32 0, %v5491
        %v5494 = vsel %vm5492, %v5493, %v5491
        %v5495 = vclz %v5494
        %v5496 = vsub.s32 %v5495, 2
        %vm5497 = vcmp.gt.s32.totalorder 0, %v5496
        %v5498 = vsel %vm5497, 0, %v5496
        %v5499 = vsub.s32 32, %v5498
        %v5500 = vshll.u32 %v5491, %v5498
        %v5501 = vshrl.u32 %v5483, %v5499
        %v5502 = vor.u32 %v5500, %v5501
        %v5503 = vsub.s32 4294967266, %v5498
        %v5504 = vadd.s32 %v5503, 127
        %v5505 = vshll.u32 %v5504, 23
        %v5506 = vor.u32 4788187, %v5505
        %v5507 = vand.u32 2147483647, %v5506
        %v5509 = vcvt.s32.f32 %v5502
        %v5510 = vmul.f32 %v5509, %v5507
        %v5511 = vxor.u32 %v5510, 2147483648
        %v5512 = vsel %vm5429, %v5511, %v5510
        %v5513 = vsub.s32 4, %v5489
        %v5514 = vsel %vm5429, %v5513, %v5489
        %v5515 = vsel %vm5428, %v1894, %v5512
        %v5516 = vsel %vm5428, 0, %v5514
        %v5517 = vcosq.f32.pop %v5515
        %v5518 = vsinq.f32.pop %v5515
        %vm5519 = vweird.f32 %v1894
        %v5520 = vand.u32 %v5516, 3
        %vm5521 = vcmp.lt.s32.totalorder %v5520, 2
        %vm5522 = vcmp.eq.s32.totalorder %v5520, 0
        %v5523 = vxor.u32 %v5518, 2147483648
        %v5524 = vsel %vm5522, %v5517, %v5523
        %vm5525 = vcmp.eq.s32.totalorder %v5520, 2
        %v5526 = vxor.u32 %v5517, 2147483648
        %v5527 = vsel %vm5525, %v5526, %v5518
        %v5528 = vsel %vm5521, %v5524, %v5527
        %v5529 = vsel %vm5519, nan, %v5528
        %v5530 = vand.u32 2147483647, %v1895
        %vm5531 = vcmp.le.f32.partialorder %v5530, 0.7853982
        %vm5532 = vcmp.lt.s32.totalorder %v1895, 0
        %v5533 = vand.u32 %v1895, 2139095040
        %v5534 = vshrl.u32 %v5533, 23
        %v5535 = vsub.s32 %v5534, 127
        %v5536 = vand.u32 2147483647, %v1895
        %v5537 = vand.u32 %v5536, 8388607
        %v5538 = vor.u32 %v5537, 8388608
        %v5539 = vsub.s32 0, %v5538
        %v5540 = vadd.s32 %v5535, 1
        %vm5541 = vcmp.gt.s32.totalorder %v5540, 0
        %v5542 = vsel %vm5541, %v5540, 0
        %v5543 = vshrl.u32 %v5542, 5
        %v5544 = vand.u32 %v5542, 31
        %v5545 = vsub.s32 32, %v5544
        %v5546 = vshrl.u32 683565275, %v5545
        %v5547 = vshll.u32 683565275, %v5544
        %v5548 = vshrl.u32 2475754826, %v5545
        %v5549 = vor.u32 %v5547, %v5548
        %v5550 = vshll.u32 2475754826, %v5544
        %v5551 = vshrl.u32 2131351028, %v5545
        %v5552 = vor.u32 %v5550, %v5551
        %v5553 = vshll.u32 2131351028, %v5544
        %v5554 = vshrl.u32 2102212464, %v5545
        %v5555 = vor.u32 %v5553, %v5554
        %v5556 = vshll.u32 2102212464, %v5544
        %v5557 = vshrl.u32 920167782, %v5545
        %v5558 = vor.u32 %v5556, %v5557
        %v5559 = vshll.u32 920167782, %v5544
        %v5560 = vshrl.u32 1326507024, %v5545
        %v5561 = vor.u32 %v5559, %v5560
        %vm5562 = vcmp.lt.s32.totalorder %v5543, 1
        %vm5563 = vcmp.lt.s32.totalorder %v5543, 2
        %vm5564 = vcmp.lt.s32.totalorder %v5543, 3
        %vm5565 = vcmp.lt.s32.totalorder %v5543, 4
        %v5566 = vsel %vm5562, %v5546, %v5549
        %v5567 = vsel %vm5565, %v5555, 2102212464
        %v5568 = vsel %vm5564, %v5552, %v5567
        %v5569 = vsel %vm5563, %v5566, %v5568
        %v5570 = vsel %vm5562, %v5549, %v5552
        %v5571 = vsel %vm5565, %v5558, 920167782
        %v5572 = vsel %vm5564, %v5555, %v5571
        %v5573 = vsel %vm5563, %v5570, %v5572
        %v5574 = vsel %vm5562, %v5552, %v5555
        %v5575 = vsel %vm5565, %v5561, 1326507024
        %v5576 = vsel %vm5564, %v5558, %v5575
        %v5577 = vsel %vm5563, %v5574, %v5576
        %v5578 = vshll.u32 %v5538, 8
        %v5579 = vmul.u32.u64.compose %v5578, %v5577
        %v5580 = vextract.low.u32 %v5579
        %v5581 = vextract.high.u32 %v5579
        %v5582 = vmul.u32.u64.compose %v5578, %v5573
        %v5583 = vextract.low.u32 %v5582
        %v5584 = vextract.high.u32 %v5582
        %v5585 = vmul.u32 %v5578, %v5569
        %v5586 = vadd.s32 %v5581, %v5583
        %vm5587 = vc.u32 %v5581, %v5583
        %v5588 = vadd.s32 %v5584, 1
        %v5589 = vsel %vm5587, %v5588, %v5584
        %v5590 = vadd.s32 %v5585, %v5589
        %v5591 = vadd.s32 %v5590, 536870912
        %v5592 = vshrl.u32 %v5591, 30
        %v5593 = vshll.u32 %v5592, 30
        %v5594 = vsub.s32 %v5590, %v5593
        %vm5595 = vcmp.lt.s32.totalorder %v5594, 0
        %v5596 = vsub.s32 0, %v5594
        %v5597 = vsel %vm5595, %v5596, %v5594
        %v5598 = vclz %v5597
        %v5599 = vsub.s32 %v5598, 2
        %vm5600 = vcmp.gt.s32.totalorder 0, %v5599
        %v5601 = vsel %vm5600, 0, %v5599
        %v5602 = vsub.s32 32, %v5601
        %v5603 = vshll.u32 %v5594, %v5601
        %v5604 = vshrl.u32 %v5586, %v5602
        %v5605 = vor.u32 %v5603, %v5604
        %v5606 = vsub.s32 4294967266, %v5601
        %v5607 = vadd.s32 %v5606, 127
        %v5608 = vshll.u32 %v5607, 23
        %v5609 = vor.u32 4788187, %v5608
        %v5610 = vand.u32 2147483647, %v5609
        %v5612 = vcvt.s32.f32 %v5605
        %v5613 = vmul.f32 %v5612, %v5610
        %v5614 = vxor.u32 %v5613, 2147483648
        %v5615 = vsel %vm5532, %v5614, %v5613
        %v5616 = vsub.s32 4, %v5592
        %v5617 = vsel %vm5532, %v5616, %v5592
        %v5618 = vsel %vm5531, %v1895, %v5615
        %v5619 = vsel %vm5531, 0, %v5617
        %v5620 = vcosq.f32.pop %v5618
        %v5621 = vsinq.f32.pop %v5618
        %vm5622 = vweird.f32 %v1895
        %v5623 = vand.u32 %v5619, 3
        %vm5624 = vcmp.lt.s32.totalorder %v5623, 2
        %vm5625 = vcmp.eq.s32.totalorder %v5623, 0
        %v5626 = vxor.u32 %v5621, 2147483648
        %v5627 = vsel %vm5625, %v5620, %v5626
        %vm5628 = vcmp.eq.s32.totalorder %v5623, 2
        %v5629 = vxor.u32 %v5620, 2147483648
        %v5630 = vsel %vm5628, %v5629, %v5621
        %v5631 = vsel %vm5624, %v5627, %v5630
        %v5632 = vsel %vm5622, nan, %v5631
        %v5633 = vand.u32 2147483647, %v1896
        %vm5634 = vcmp.le.f32.partialorder %v5633, 0.7853982
        %vm5635 = vcmp.lt.s32.totalorder %v1896, 0
        %v5636 = vand.u32 %v1896, 2139095040
        %v5637 = vshrl.u32 %v5636, 23
        %v5638 = vsub.s32 %v5637, 127
        %v5639 = vand.u32 2147483647, %v1896
        %v5640 = vand.u32 %v5639, 8388607
        %v5641 = vor.u32 %v5640, 8388608
        %v5642 = vsub.s32 0, %v5641
        %v5643 = vadd.s32 %v5638, 1
        %vm5644 = vcmp.gt.s32.totalorder %v5643, 0
        %v5645 = vsel %vm5644, %v5643, 0
        %v5646 = vshrl.u32 %v5645, 5
        %v5647 = vand.u32 %v5645, 31
        %v5648 = vsub.s32 32, %v5647
        %v5649 = vshrl.u32 683565275, %v5648
        %v5650 = vshll.u32 683565275, %v5647
        %v5651 = vshrl.u32 2475754826, %v5648
        %v5652 = vor.u32 %v5650, %v5651
        %v5653 = vshll.u32 2475754826, %v5647
        %v5654 = vshrl.u32 2131351028, %v5648
        %v5655 = vor.u32 %v5653, %v5654
        %v5656 = vshll.u32 2131351028, %v5647
        %v5657 = vshrl.u32 2102212464, %v5648
        %v5658 = vor.u32 %v5656, %v5657
        %v5659 = vshll.u32 2102212464, %v5647
        %v5660 = vshrl.u32 920167782, %v5648
        %v5661 = vor.u32 %v5659, %v5660
        %v5662 = vshll.u32 920167782, %v5647
        %v5663 = vshrl.u32 1326507024, %v5648
        %v5664 = vor.u32 %v5662, %v5663
        %vm5665 = vcmp.lt.s32.totalorder %v5646, 1
        %vm5666 = vcmp.lt.s32.totalorder %v5646, 2
        %vm5667 = vcmp.lt.s32.totalorder %v5646, 3
        %vm5668 = vcmp.lt.s32.totalorder %v5646, 4
        %v5669 = vsel %vm5665, %v5649, %v5652
        %v5670 = vsel %vm5668, %v5658, 2102212464
        %v5671 = vsel %vm5667, %v5655, %v5670
        %v5672 = vsel %vm5666, %v5669, %v5671
        %v5673 = vsel %vm5665, %v5652, %v5655
        %v5674 = vsel %vm5668, %v5661, 920167782
        %v5675 = vsel %vm5667, %v5658, %v5674
        %v5676 = vsel %vm5666, %v5673, %v5675
        %v5677 = vsel %vm5665, %v5655, %v5658
        %v5678 = vsel %vm5668, %v5664, 1326507024
        %v5679 = vsel %vm5667, %v5661, %v5678
        %v5680 = vsel %vm5666, %v5677, %v5679
        %v5681 = vshll.u32 %v5641, 8
        %v5682 = vmul.u32.u64.compose %v5681, %v5680
        %v5683 = vextract.low.u32 %v5682
        %v5684 = vextract.high.u32 %v5682
        %v5685 = vmul.u32.u64.compose %v5681, %v5676
        %v5686 = vextract.low.u32 %v5685
        %v5687 = vextract.high.u32 %v5685
        %v5688 = vmul.u32 %v5681, %v5672
        %v5689 = vadd.s32 %v5684, %v5686
        %vm5690 = vc.u32 %v5684, %v5686
        %v5691 = vadd.s32 %v5687, 1
        %v5692 = vsel %vm5690, %v5691, %v5687
        %v5693 = vadd.s32 %v5688, %v5692
        %v5694 = vadd.s32 %v5693, 536870912
        %v5695 = vshrl.u32 %v5694, 30
        %v5696 = vshll.u32 %v5695, 30
        %v5697 = vsub.s32 %v5693, %v5696
        %vm5698 = vcmp.lt.s32.totalorder %v5697, 0
        %v5699 = vsub.s32 0, %v5697
        %v5700 = vsel %vm5698, %v5699, %v5697
        %v5701 = vclz %v5700
        %v5702 = vsub.s32 %v5701, 2
        %vm5703 = vcmp.gt.s32.totalorder 0, %v5702
        %v5704 = vsel %vm5703, 0, %v5702
        %v5705 = vsub.s32 32, %v5704
        %v5706 = vshll.u32 %v5697, %v5704
        %v5707 = vshrl.u32 %v5689, %v5705
        %v5708 = vor.u32 %v5706, %v5707
        %v5709 = vsub.s32 4294967266, %v5704
        %v5710 = vadd.s32 %v5709, 127
        %v5711 = vshll.u32 %v5710, 23
        %v5712 = vor.u32 4788187, %v5711
        %v5713 = vand.u32 2147483647, %v5712
        %v5715 = vcvt.s32.f32 %v5708
        %v5716 = vmul.f32 %v5715, %v5713
        %v5717 = vxor.u32 %v5716, 2147483648
        %v5718 = vsel %vm5635, %v5717, %v5716
        %v5719 = vsub.s32 4, %v5695
        %v5720 = vsel %vm5635, %v5719, %v5695
        %v5721 = vsel %vm5634, %v1896, %v5718
        %v5722 = vsel %vm5634, 0, %v5720
        %v5723 = vcosq.f32.pop %v5721
        %v5724 = vsinq.f32.pop %v5721
        %vm5725 = vweird.f32 %v1896
        %v5726 = vand.u32 %v5722, 3
        %vm5727 = vcmp.lt.s32.totalorder %v5726, 2
        %vm5728 = vcmp.eq.s32.totalorder %v5726, 0
        %v5729 = vxor.u32 %v5724, 2147483648
        %v5730 = vsel %vm5728, %v5723, %v5729
        %vm5731 = vcmp.eq.s32.totalorder %v5726, 2
        %v5732 = vxor.u32 %v5723, 2147483648
        %v5733 = vsel %vm5731, %v5732, %v5724
        %v5734 = vsel %vm5727, %v5730, %v5733
        %v5735 = vsel %vm5725, nan, %v5734
        %v5736 = vand.u32 2147483647, %v1897
        %vm5737 = vcmp.le.f32.partialorder %v5736, 0.7853982
        %vm5738 = vcmp.lt.s32.totalorder %v1897, 0
        %v5739 = vand.u32 %v1897, 2139095040
        %v5740 = vshrl.u32 %v5739, 23
        %v5741 = vsub.s32 %v5740, 127
        %v5742 = vand.u32 2147483647, %v1897
        %v5743 = vand.u32 %v5742, 8388607
        %v5744 = vor.u32 %v5743, 8388608
        %v5745 = vsub.s32 0, %v5744
        %v5746 = vadd.s32 %v5741, 1
        %vm5747 = vcmp.gt.s32.totalorder %v5746, 0
        %v5748 = vsel %vm5747, %v5746, 0
        %v5749 = vshrl.u32 %v5748, 5
        %v5750 = vand.u32 %v5748, 31
        %v5751 = vsub.s32 32, %v5750
        %v5752 = vshrl.u32 683565275, %v5751
        %v5753 = vshll.u32 683565275, %v5750
        %v5754 = vshrl.u32 2475754826, %v5751
        %v5755 = vor.u32 %v5753, %v5754
        %v5756 = vshll.u32 2475754826, %v5750
        %v5757 = vshrl.u32 2131351028, %v5751
        %v5758 = vor.u32 %v5756, %v5757
        %v5759 = vshll.u32 2131351028, %v5750
        %v5760 = vshrl.u32 2102212464, %v5751
        %v5761 = vor.u32 %v5759, %v5760
        %v5762 = vshll.u32 2102212464, %v5750
        %v5763 = vshrl.u32 920167782, %v5751
        %v5764 = vor.u32 %v5762, %v5763
        %v5765 = vshll.u32 920167782, %v5750
        %v5766 = vshrl.u32 1326507024, %v5751
        %v5767 = vor.u32 %v5765, %v5766
        %vm5768 = vcmp.lt.s32.totalorder %v5749, 1
        %vm5769 = vcmp.lt.s32.totalorder %v5749, 2
        %vm5770 = vcmp.lt.s32.totalorder %v5749, 3
        %vm5771 = vcmp.lt.s32.totalorder %v5749, 4
        %v5772 = vsel %vm5768, %v5752, %v5755
        %v5773 = vsel %vm5771, %v5761, 2102212464
        %v5774 = vsel %vm5770, %v5758, %v5773
        %v5775 = vsel %vm5769, %v5772, %v5774
        %v5776 = vsel %vm5768, %v5755, %v5758
        %v5777 = vsel %vm5771, %v5764, 920167782
        %v5778 = vsel %vm5770, %v5761, %v5777
        %v5779 = vsel %vm5769, %v5776, %v5778
        %v5780 = vsel %vm5768, %v5758, %v5761
        %v5781 = vsel %vm5771, %v5767, 1326507024
        %v5782 = vsel %vm5770, %v5764, %v5781
        %v5783 = vsel %vm5769, %v5780, %v5782
        %v5784 = vshll.u32 %v5744, 8
        %v5785 = vmul.u32.u64.compose %v5784, %v5783
        %v5786 = vextract.low.u32 %v5785
        %v5787 = vextract.high.u32 %v5785
        %v5788 = vmul.u32.u64.compose %v5784, %v5779
        %v5789 = vextract.low.u32 %v5788
        %v5790 = vextract.high.u32 %v5788
        %v5791 = vmul.u32 %v5784, %v5775
        %v5792 = vadd.s32 %v5787, %v5789
        %vm5793 = vc.u32 %v5787, %v5789
        %v5794 = vadd.s32 %v5790, 1
        %v5795 = vsel %vm5793, %v5794, %v5790
        %v5796 = vadd.s32 %v5791, %v5795
        %v5797 = vadd.s32 %v5796, 536870912
        %v5798 = vshrl.u32 %v5797, 30
        %v5799 = vshll.u32 %v5798, 30
        %v5800 = vsub.s32 %v5796, %v5799
        %vm5801 = vcmp.lt.s32.totalorder %v5800, 0
        %v5802 = vsub.s32 0, %v5800
        %v5803 = vsel %vm5801, %v5802, %v5800
        %v5804 = vclz %v5803
        %v5805 = vsub.s32 %v5804, 2
        %vm5806 = vcmp.gt.s32.totalorder 0, %v5805
        %v5807 = vsel %vm5806, 0, %v5805
        %v5808 = vsub.s32 32, %v5807
        %v5809 = vshll.u32 %v5800, %v5807
        %v5810 = vshrl.u32 %v5792, %v5808
        %v5811 = vor.u32 %v5809, %v5810
        %v5812 = vsub.s32 4294967266, %v5807
        %v5813 = vadd.s32 %v5812, 127
        %v5814 = vshll.u32 %v5813, 23
        %v5815 = vor.u32 4788187, %v5814
        %v5816 = vand.u32 2147483647, %v5815
        %v5818 = vcvt.s32.f32 %v5811
        %v5819 = vmul.f32 %v5818, %v5816
        %v5820 = vxor.u32 %v5819, 2147483648
        %v5821 = vsel %vm5738, %v5820, %v5819
        %v5822 = vsub.s32 4, %v5798
        %v5823 = vsel %vm5738, %v5822, %v5798
        %v5824 = vsel %vm5737, %v1897, %v5821
        %v5825 = vsel %vm5737, 0, %v5823
        %v5826 = vcosq.f32.pop %v5824
        %v5827 = vsinq.f32.pop %v5824
        %vm5828 = vweird.f32 %v1897
        %v5829 = vand.u32 %v5825, 3
        %vm5830 = vcmp.lt.s32.totalorder %v5829, 2
        %vm5831 = vcmp.eq.s32.totalorder %v5829, 0
        %v5832 = vxor.u32 %v5827, 2147483648
        %v5833 = vsel %vm5831, %v5826, %v5832
        %vm5834 = vcmp.eq.s32.totalorder %v5829, 2
        %v5835 = vxor.u32 %v5826, 2147483648
        %v5836 = vsel %vm5834, %v5835, %v5827
        %v5837 = vsel %vm5830, %v5833, %v5836
        %v5838 = vsel %vm5828, nan, %v5837
        %v5839 = vand.u32 2147483647, %v1898
        %vm5840 = vcmp.le.f32.partialorder %v5839, 0.7853982
        %vm5841 = vcmp.lt.s32.totalorder %v1898, 0
        %v5842 = vand.u32 %v1898, 2139095040
        %v5843 = vshrl.u32 %v5842, 23
        %v5844 = vsub.s32 %v5843, 127
        %v5845 = vand.u32 2147483647, %v1898
        %v5846 = vand.u32 %v5845, 8388607
        %v5847 = vor.u32 %v5846, 8388608
        %v5848 = vsub.s32 0, %v5847
        %v5849 = vadd.s32 %v5844, 1
        %vm5850 = vcmp.gt.s32.totalorder %v5849, 0
        %v5851 = vsel %vm5850, %v5849, 0
        %v5852 = vshrl.u32 %v5851, 5
        %v5853 = vand.u32 %v5851, 31
        %v5854 = vsub.s32 32, %v5853
        %v5855 = vshrl.u32 683565275, %v5854
        %v5856 = vshll.u32 683565275, %v5853
        %v5857 = vshrl.u32 2475754826, %v5854
        %v5858 = vor.u32 %v5856, %v5857
        %v5859 = vshll.u32 2475754826, %v5853
        %v5860 = vshrl.u32 2131351028, %v5854
        %v5861 = vor.u32 %v5859, %v5860
        %v5862 = vshll.u32 2131351028, %v5853
        %v5863 = vshrl.u32 2102212464, %v5854
        %v5864 = vor.u32 %v5862, %v5863
        %v5865 = vshll.u32 2102212464, %v5853
        %v5866 = vshrl.u32 920167782, %v5854
        %v5867 = vor.u32 %v5865, %v5866
        %v5868 = vshll.u32 920167782, %v5853
        %v5869 = vshrl.u32 1326507024, %v5854
        %v5870 = vor.u32 %v5868, %v5869
        %vm5871 = vcmp.lt.s32.totalorder %v5852, 1
        %vm5872 = vcmp.lt.s32.totalorder %v5852, 2
        %vm5873 = vcmp.lt.s32.totalorder %v5852, 3
        %vm5874 = vcmp.lt.s32.totalorder %v5852, 4
        %v5875 = vsel %vm5871, %v5855, %v5858
        %v5876 = vsel %vm5874, %v5864, 2102212464
        %v5877 = vsel %vm5873, %v5861, %v5876
        %v5878 = vsel %vm5872, %v5875, %v5877
        %v5879 = vsel %vm5871, %v5858, %v5861
        %v5880 = vsel %vm5874, %v5867, 920167782
        %v5881 = vsel %vm5873, %v5864, %v5880
        %v5882 = vsel %vm5872, %v5879, %v5881
        %v5883 = vsel %vm5871, %v5861, %v5864
        %v5884 = vsel %vm5874, %v5870, 1326507024
        %v5885 = vsel %vm5873, %v5867, %v5884
        %v5886 = vsel %vm5872, %v5883, %v5885
        %v5887 = vshll.u32 %v5847, 8
        %v5888 = vmul.u32.u64.compose %v5887, %v5886
        %v5889 = vextract.low.u32 %v5888
        %v5890 = vextract.high.u32 %v5888
        %v5891 = vmul.u32.u64.compose %v5887, %v5882
        %v5892 = vextract.low.u32 %v5891
        %v5893 = vextract.high.u32 %v5891
        %v5894 = vmul.u32 %v5887, %v5878
        %v5895 = vadd.s32 %v5890, %v5892
        %vm5896 = vc.u32 %v5890, %v5892
        %v5897 = vadd.s32 %v5893, 1
        %v5898 = vsel %vm5896, %v5897, %v5893
        %v5899 = vadd.s32 %v5894, %v5898
        %v5900 = vadd.s32 %v5899, 536870912
        %v5901 = vshrl.u32 %v5900, 30
        %v5902 = vshll.u32 %v5901, 30
        %v5903 = vsub.s32 %v5899, %v5902
        %vm5904 = vcmp.lt.s32.totalorder %v5903, 0
        %v5905 = vsub.s32 0, %v5903
        %v5906 = vsel %vm5904, %v5905, %v5903
        %v5907 = vclz %v5906
        %v5908 = vsub.s32 %v5907, 2
        %vm5909 = vcmp.gt.s32.totalorder 0, %v5908
        %v5910 = vsel %vm5909, 0, %v5908
        %v5911 = vsub.s32 32, %v5910
        %v5912 = vshll.u32 %v5903, %v5910
        %v5913 = vshrl.u32 %v5895, %v5911
        %v5914 = vor.u32 %v5912, %v5913
        %v5915 = vsub.s32 4294967266, %v5910
        %v5916 = vadd.s32 %v5915, 127
        %v5917 = vshll.u32 %v5916, 23
        %v5918 = vor.u32 4788187, %v5917
        %v5919 = vand.u32 2147483647, %v5918
        %v5921 = vcvt.s32.f32 %v5914
        %v5922 = vmul.f32 %v5921, %v5919
        %v5923 = vxor.u32 %v5922, 2147483648
        %v5924 = vsel %vm5841, %v5923, %v5922
        %v5925 = vsub.s32 4, %v5901
        %v5926 = vsel %vm5841, %v5925, %v5901
        %v5927 = vsel %vm5840, %v1898, %v5924
        %v5928 = vsel %vm5840, 0, %v5926
        %v5929 = vcosq.f32.pop %v5927
        %v5930 = vsinq.f32.pop %v5927
        %vm5931 = vweird.f32 %v1898
        %v5932 = vand.u32 %v5928, 3
        %vm5933 = vcmp.lt.s32.totalorder %v5932, 2
        %vm5934 = vcmp.eq.s32.totalorder %v5932, 0
        %v5935 = vxor.u32 %v5930, 2147483648
        %v5936 = vsel %vm5934, %v5929, %v5935
        %vm5937 = vcmp.eq.s32.totalorder %v5932, 2
        %v5938 = vxor.u32 %v5929, 2147483648
        %v5939 = vsel %vm5937, %v5938, %v5930
        %v5940 = vsel %vm5933, %v5936, %v5939
        %v5941 = vsel %vm5931, nan, %v5940
        %v5942 = vand.u32 2147483647, %v1899
        %vm5943 = vcmp.le.f32.partialorder %v5942, 0.7853982
        %vm5944 = vcmp.lt.s32.totalorder %v1899, 0
        %v5945 = vand.u32 %v1899, 2139095040
        %v5946 = vshrl.u32 %v5945, 23
        %v5947 = vsub.s32 %v5946, 127
        %v5948 = vand.u32 2147483647, %v1899
        %v5949 = vand.u32 %v5948, 8388607
        %v5950 = vor.u32 %v5949, 8388608
        %v5951 = vsub.s32 0, %v5950
        %v5952 = vadd.s32 %v5947, 1
        %vm5953 = vcmp.gt.s32.totalorder %v5952, 0
        %v5954 = vsel %vm5953, %v5952, 0
        %v5955 = vshrl.u32 %v5954, 5
        %v5956 = vand.u32 %v5954, 31
        %v5957 = vsub.s32 32, %v5956
        %v5958 = vshrl.u32 683565275, %v5957
        %v5959 = vshll.u32 683565275, %v5956
        %v5960 = vshrl.u32 2475754826, %v5957
        %v5961 = vor.u32 %v5959, %v5960
        %v5962 = vshll.u32 2475754826, %v5956
        %v5963 = vshrl.u32 2131351028, %v5957
        %v5964 = vor.u32 %v5962, %v5963
        %v5965 = vshll.u32 2131351028, %v5956
        %v5966 = vshrl.u32 2102212464, %v5957
        %v5967 = vor.u32 %v5965, %v5966
        %v5968 = vshll.u32 2102212464, %v5956
        %v5969 = vshrl.u32 920167782, %v5957
        %v5970 = vor.u32 %v5968, %v5969
        %v5971 = vshll.u32 920167782, %v5956
        %v5972 = vshrl.u32 1326507024, %v5957
        %v5973 = vor.u32 %v5971, %v5972
        %vm5974 = vcmp.lt.s32.totalorder %v5955, 1
        %vm5975 = vcmp.lt.s32.totalorder %v5955, 2
        %vm5976 = vcmp.lt.s32.totalorder %v5955, 3
        %vm5977 = vcmp.lt.s32.totalorder %v5955, 4
        %v5978 = vsel %vm5974, %v5958, %v5961
        %v5979 = vsel %vm5977, %v5967, 2102212464
        %v5980 = vsel %vm5976, %v5964, %v5979
        %v5981 = vsel %vm5975, %v5978, %v5980
        %v5982 = vsel %vm5974, %v5961, %v5964
        %v5983 = vsel %vm5977, %v5970, 920167782
        %v5984 = vsel %vm5976, %v5967, %v5983
        %v5985 = vsel %vm5975, %v5982, %v5984
        %v5986 = vsel %vm5974, %v5964, %v5967
        %v5987 = vsel %vm5977, %v5973, 1326507024
        %v5988 = vsel %vm5976, %v5970, %v5987
        %v5989 = vsel %vm5975, %v5986, %v5988
        %v5990 = vshll.u32 %v5950, 8
        %v5991 = vmul.u32.u64.compose %v5990, %v5989
        %v5992 = vextract.low.u32 %v5991
        %v5993 = vextract.high.u32 %v5991
        %v5994 = vmul.u32.u64.compose %v5990, %v5985
        %v5995 = vextract.low.u32 %v5994
        %v5996 = vextract.high.u32 %v5994
        %v5997 = vmul.u32 %v5990, %v5981
        %v5998 = vadd.s32 %v5993, %v5995
        %vm5999 = vc.u32 %v5993, %v5995
        %v6000 = vadd.s32 %v5996, 1
        %v6001 = vsel %vm5999, %v6000, %v5996
        %v6002 = vadd.s32 %v5997, %v6001
        %v6003 = vadd.s32 %v6002, 536870912
        %v6004 = vshrl.u32 %v6003, 30
        %v6005 = vshll.u32 %v6004, 30
        %v6006 = vsub.s32 %v6002, %v6005
        %vm6007 = vcmp.lt.s32.totalorder %v6006, 0
        %v6008 = vsub.s32 0, %v6006
        %v6009 = vsel %vm6007, %v6008, %v6006
        %v6010 = vclz %v6009
        %v6011 = vsub.s32 %v6010, 2
        %vm6012 = vcmp.gt.s32.totalorder 0, %v6011
        %v6013 = vsel %vm6012, 0, %v6011
        %v6014 = vsub.s32 32, %v6013
        %v6015 = vshll.u32 %v6006, %v6013
        %v6016 = vshrl.u32 %v5998, %v6014
        %v6017 = vor.u32 %v6015, %v6016
        %v6018 = vsub.s32 4294967266, %v6013
        %v6019 = vadd.s32 %v6018, 127
        %v6020 = vshll.u32 %v6019, 23
        %v6021 = vor.u32 4788187, %v6020
        %v6022 = vand.u32 2147483647, %v6021
        %v6024 = vcvt.s32.f32 %v6017
        %v6025 = vmul.f32 %v6024, %v6022
        %v6026 = vxor.u32 %v6025, 2147483648
        %v6027 = vsel %vm5944, %v6026, %v6025
        %v6028 = vsub.s32 4, %v6004
        %v6029 = vsel %vm5944, %v6028, %v6004
        %v6030 = vsel %vm5943, %v1899, %v6027
        %v6031 = vsel %vm5943, 0, %v6029
        %v6032 = vcosq.f32.pop %v6030
        %v6033 = vsinq.f32.pop %v6030
        %vm6034 = vweird.f32 %v1899
        %v6035 = vand.u32 %v6031, 3
        %vm6036 = vcmp.lt.s32.totalorder %v6035, 2
        %vm6037 = vcmp.eq.s32.totalorder %v6035, 0
        %v6038 = vxor.u32 %v6033, 2147483648
        %v6039 = vsel %vm6037, %v6032, %v6038
        %vm6040 = vcmp.eq.s32.totalorder %v6035, 2
        %v6041 = vxor.u32 %v6032, 2147483648
        %v6042 = vsel %vm6040, %v6041, %v6033
        %v6043 = vsel %vm6036, %v6039, %v6042
        %v6044 = vsel %vm6034, nan, %v6043
        %6061 = vrot.lane.b32.xlu0 %v2019, 104
        %v6062 = vpop.permute.xlu0 %6061
        %6063 = vrot.lane.b32.xlu0 %v2123, 104
        %v6064 = vpop.permute.xlu0 %6063
        %6065 = vrot.lane.b32.xlu0 %v2227, 104
        %v6066 = vpop.permute.xlu0 %6065
        %6067 = vrot.lane.b32.xlu0 %v2331, 104
        %v6068 = vpop.permute.xlu0 %6067
        %6069 = vrot.lane.b32.xlu0 %v2435, 104
        %v6070 = vpop.permute.xlu0 %6069
        %6071 = vrot.lane.b32.xlu0 %v2539, 104
        %v6072 = vpop.permute.xlu0 %6071
        %6073 = vrot.lane.b32.xlu0 %v2643, 104
        %v6074 = vpop.permute.xlu0 %6073
        %6075 = vrot.lane.b32.xlu0 %v2747, 104
        %v6076 = vpop.permute.xlu0 %6075
        %6077 = vrot.lane.b32.xlu0 %v2851, 104
        %v6078 = vpop.permute.xlu0 %6077
        %6079 = vrot.lane.b32.xlu0 %v2955, 104
        %v6080 = vpop.permute.xlu0 %6079
        %6081 = vrot.lane.b32.xlu0 %v3059, 104
        %v6082 = vpop.permute.xlu0 %6081
        %6083 = vrot.lane.b32.xlu0 %v3163, 104
        %v6084 = vpop.permute.xlu0 %6083
        %6085 = vrot.lane.b32.xlu0 %v3267, 104
        %v6086 = vpop.permute.xlu0 %6085
        %6087 = vrot.lane.b32.xlu0 %v3371, 104
        %v6088 = vpop.permute.xlu0 %6087
        %6089 = vrot.lane.b32.xlu0 %v3475, 104
        %v6090 = vpop.permute.xlu0 %6089
        %6091 = vrot.lane.b32.xlu0 %v3579, 104
        %v6092 = vpop.permute.xlu0 %6091
        %v6109 = vmul.f32 %v4499, %v6062
        %v6110 = vmul.f32 %v4602, %v6064
        %v6111 = vmul.f32 %v4705, %v6066
        %v6112 = vmul.f32 %v4808, %v6068
        %v6113 = vmul.f32 %v4911, %v6070
        %v6114 = vmul.f32 %v5014, %v6072
        %v6115 = vmul.f32 %v5117, %v6074
        %v6116 = vmul.f32 %v5220, %v6076
        %v6117 = vmul.f32 %v5323, %v6078
        %v6118 = vmul.f32 %v5426, %v6080
        %v6119 = vmul.f32 %v5529, %v6082
        %v6120 = vmul.f32 %v5632, %v6084
        %v6121 = vmul.f32 %v5735, %v6086
        %v6122 = vmul.f32 %v5838, %v6088
        %v6123 = vmul.f32 %v5941, %v6090
        %v6124 = vmul.f32 %v6044, %v6092
        %v6125 = vand.u32 2147483647, %v1884
        %vm6126 = vcmp.le.f32.partialorder %v6125, 0.7853982
        %vm6127 = vcmp.lt.s32.totalorder %v1884, 0
        %v6128 = vand.u32 %v1884, 2139095040
        %v6129 = vshrl.u32 %v6128, 23
        %v6130 = vsub.s32 %v6129, 127
        %v6131 = vand.u32 2147483647, %v1884
        %v6132 = vand.u32 %v6131, 8388607
        %v6133 = vor.u32 %v6132, 8388608
        %v6134 = vsub.s32 0, %v6133
        %v6135 = vadd.s32 %v6130, 1
        %vm6136 = vcmp.gt.s32.totalorder %v6135, 0
        %v6137 = vsel %vm6136, %v6135, 0
        %v6138 = vshrl.u32 %v6137, 5
        %v6139 = vand.u32 %v6137, 31
        %v6140 = vsub.s32 32, %v6139
        %v6141 = vshrl.u32 683565275, %v6140
        %v6142 = vshll.u32 683565275, %v6139
        %v6143 = vshrl.u32 2475754826, %v6140
        %v6144 = vor.u32 %v6142, %v6143
        %v6145 = vshll.u32 2475754826, %v6139
        %v6146 = vshrl.u32 2131351028, %v6140
        %v6147 = vor.u32 %v6145, %v6146
        %v6148 = vshll.u32 2131351028, %v6139
        %v6149 = vshrl.u32 2102212464, %v6140
        %v6150 = vor.u32 %v6148, %v6149
        %v6151 = vshll.u32 2102212464, %v6139
        %v6152 = vshrl.u32 920167782, %v6140
        %v6153 = vor.u32 %v6151, %v6152
        %v6154 = vshll.u32 920167782, %v6139
        %v6155 = vshrl.u32 1326507024, %v6140
        %v6156 = vor.u32 %v6154, %v6155
        %vm6157 = vcmp.lt.s32.totalorder %v6138, 1
        %vm6158 = vcmp.lt.s32.totalorder %v6138, 2
        %vm6159 = vcmp.lt.s32.totalorder %v6138, 3
        %vm6160 = vcmp.lt.s32.totalorder %v6138, 4
        %v6161 = vsel %vm6157, %v6141, %v6144
        %v6162 = vsel %vm6160, %v6150, 2102212464
        %v6163 = vsel %vm6159, %v6147, %v6162
        %v6164 = vsel %vm6158, %v6161, %v6163
        %v6165 = vsel %vm6157, %v6144, %v6147
        %v6166 = vsel %vm6160, %v6153, 920167782
        %v6167 = vsel %vm6159, %v6150, %v6166
        %v6168 = vsel %vm6158, %v6165, %v6167
        %v6169 = vsel %vm6157, %v6147, %v6150
        %v6170 = vsel %vm6160, %v6156, 1326507024
        %v6171 = vsel %vm6159, %v6153, %v6170
        %v6172 = vsel %vm6158, %v6169, %v6171
        %v6173 = vshll.u32 %v6133, 8
        %v6174 = vmul.u32.u64.compose %v6173, %v6172
        %v6175 = vextract.low.u32 %v6174
        %v6176 = vextract.high.u32 %v6174
        %v6177 = vmul.u32.u64.compose %v6173, %v6168
        %v6178 = vextract.low.u32 %v6177
        %v6179 = vextract.high.u32 %v6177
        %v6180 = vmul.u32 %v6173, %v6164
        %v6181 = vadd.s32 %v6176, %v6178
        %vm6182 = vc.u32 %v6176, %v6178
        %v6183 = vadd.s32 %v6179, 1
        %v6184 = vsel %vm6182, %v6183, %v6179
        %v6185 = vadd.s32 %v6180, %v6184
        %v6186 = vadd.s32 %v6185, 536870912
        %v6187 = vshrl.u32 %v6186, 30
        %v6188 = vshll.u32 %v6187, 30
        %v6189 = vsub.s32 %v6185, %v6188
        %vm6190 = vcmp.lt.s32.totalorder %v6189, 0
        %v6191 = vsub.s32 0, %v6189
        %v6192 = vsel %vm6190, %v6191, %v6189
        %v6193 = vclz %v6192
        %v6194 = vsub.s32 %v6193, 2
        %vm6195 = vcmp.gt.s32.totalorder 0, %v6194
        %v6196 = vsel %vm6195, 0, %v6194
        %v6197 = vsub.s32 32, %v6196
        %v6198 = vshll.u32 %v6189, %v6196
        %v6199 = vshrl.u32 %v6181, %v6197
        %v6200 = vor.u32 %v6198, %v6199
        %v6201 = vsub.s32 4294967266, %v6196
        %v6202 = vadd.s32 %v6201, 127
        %v6203 = vshll.u32 %v6202, 23
        %v6204 = vor.u32 4788187, %v6203
        %v6205 = vand.u32 2147483647, %v6204
        %v6207 = vcvt.s32.f32 %v6200
        %v6208 = vmul.f32 %v6207, %v6205
        %v6209 = vxor.u32 %v6208, 2147483648
        %v6210 = vsel %vm6127, %v6209, %v6208
        %v6211 = vsub.s32 4, %v6187
        %v6212 = vsel %vm6127, %v6211, %v6187
        %v6213 = vsel %vm6126, %v1884, %v6210
        %v6214 = vsel %vm6126, 0, %v6212
        %v6215 = vcosq.f32.pop %v6213
        %v6216 = vsinq.f32.pop %v6213
        %vm6217 = vweird.f32 %v1884
        %v6218 = vadd.s32 %v6214, 3
        %v6219 = vand.u32 %v6218, 3
        %vm6220 = vcmp.lt.s32.totalorder %v6219, 2
        %vm6221 = vcmp.eq.s32.totalorder %v6219, 0
        %v6222 = vxor.u32 %v6216, 2147483648
        %v6223 = vsel %vm6221, %v6215, %v6222
        %vm6224 = vcmp.eq.s32.totalorder %v6219, 2
        %v6225 = vxor.u32 %v6215, 2147483648
        %v6226 = vsel %vm6224, %v6225, %v6216
        %v6227 = vsel %vm6220, %v6223, %v6226
        %v6228 = vsel %vm6217, nan, %v6227
        %v6229 = vand.u32 2147483647, %v1885
        %vm6230 = vcmp.le.f32.partialorder %v6229, 0.7853982
        %vm6231 = vcmp.lt.s32.totalorder %v1885, 0
        %v6232 = vand.u32 %v1885, 2139095040
        %v6233 = vshrl.u32 %v6232, 23
        %v6234 = vsub.s32 %v6233, 127
        %v6235 = vand.u32 2147483647, %v1885
        %v6236 = vand.u32 %v6235, 8388607
        %v6237 = vor.u32 %v6236, 8388608
        %v6238 = vsub.s32 0, %v6237
        %v6239 = vadd.s32 %v6234, 1
        %vm6240 = vcmp.gt.s32.totalorder %v6239, 0
        %v6241 = vsel %vm6240, %v6239, 0
        %v6242 = vshrl.u32 %v6241, 5
        %v6243 = vand.u32 %v6241, 31
        %v6244 = vsub.s32 32, %v6243
        %v6245 = vshrl.u32 683565275, %v6244
        %v6246 = vshll.u32 683565275, %v6243
        %v6247 = vshrl.u32 2475754826, %v6244
        %v6248 = vor.u32 %v6246, %v6247
        %v6249 = vshll.u32 2475754826, %v6243
        %v6250 = vshrl.u32 2131351028, %v6244
        %v6251 = vor.u32 %v6249, %v6250
        %v6252 = vshll.u32 2131351028, %v6243
        %v6253 = vshrl.u32 2102212464, %v6244
        %v6254 = vor.u32 %v6252, %v6253
        %v6255 = vshll.u32 2102212464, %v6243
        %v6256 = vshrl.u32 920167782, %v6244
        %v6257 = vor.u32 %v6255, %v6256
        %v6258 = vshll.u32 920167782, %v6243
        %v6259 = vshrl.u32 1326507024, %v6244
        %v6260 = vor.u32 %v6258, %v6259
        %vm6261 = vcmp.lt.s32.totalorder %v6242, 1
        %vm6262 = vcmp.lt.s32.totalorder %v6242, 2
        %vm6263 = vcmp.lt.s32.totalorder %v6242, 3
        %vm6264 = vcmp.lt.s32.totalorder %v6242, 4
        %v6265 = vsel %vm6261, %v6245, %v6248
        %v6266 = vsel %vm6264, %v6254, 2102212464
        %v6267 = vsel %vm6263, %v6251, %v6266
        %v6268 = vsel %vm6262, %v6265, %v6267
        %v6269 = vsel %vm6261, %v6248, %v6251
        %v6270 = vsel %vm6264, %v6257, 920167782
        %v6271 = vsel %vm6263, %v6254, %v6270
        %v6272 = vsel %vm6262, %v6269, %v6271
        %v6273 = vsel %vm6261, %v6251, %v6254
        %v6274 = vsel %vm6264, %v6260, 1326507024
        %v6275 = vsel %vm6263, %v6257, %v6274
        %v6276 = vsel %vm6262, %v6273, %v6275
        %v6277 = vshll.u32 %v6237, 8
        %v6278 = vmul.u32.u64.compose %v6277, %v6276
        %v6279 = vextract.low.u32 %v6278
        %v6280 = vextract.high.u32 %v6278
        %v6281 = vmul.u32.u64.compose %v6277, %v6272
        %v6282 = vextract.low.u32 %v6281
        %v6283 = vextract.high.u32 %v6281
        %v6284 = vmul.u32 %v6277, %v6268
        %v6285 = vadd.s32 %v6280, %v6282
        %vm6286 = vc.u32 %v6280, %v6282
        %v6287 = vadd.s32 %v6283, 1
        %v6288 = vsel %vm6286, %v6287, %v6283
        %v6289 = vadd.s32 %v6284, %v6288
        %v6290 = vadd.s32 %v6289, 536870912
        %v6291 = vshrl.u32 %v6290, 30
        %v6292 = vshll.u32 %v6291, 30
        %v6293 = vsub.s32 %v6289, %v6292
        %vm6294 = vcmp.lt.s32.totalorder %v6293, 0
        %v6295 = vsub.s32 0, %v6293
        %v6296 = vsel %vm6294, %v6295, %v6293
        %v6297 = vclz %v6296
        %v6298 = vsub.s32 %v6297, 2
        %vm6299 = vcmp.gt.s32.totalorder 0, %v6298
        %v6300 = vsel %vm6299, 0, %v6298
        %v6301 = vsub.s32 32, %v6300
        %v6302 = vshll.u32 %v6293, %v6300
        %v6303 = vshrl.u32 %v6285, %v6301
        %v6304 = vor.u32 %v6302, %v6303
        %v6305 = vsub.s32 4294967266, %v6300
        %v6306 = vadd.s32 %v6305, 127
        %v6307 = vshll.u32 %v6306, 23
        %v6308 = vor.u32 4788187, %v6307
        %v6309 = vand.u32 2147483647, %v6308
        %v6311 = vcvt.s32.f32 %v6304
        %v6312 = vmul.f32 %v6311, %v6309
        %v6313 = vxor.u32 %v6312, 2147483648
        %v6314 = vsel %vm6231, %v6313, %v6312
        %v6315 = vsub.s32 4, %v6291
        %v6316 = vsel %vm6231, %v6315, %v6291
        %v6317 = vsel %vm6230, %v1885, %v6314
        %v6318 = vsel %vm6230, 0, %v6316
        %v6319 = vcosq.f32.pop %v6317
        %v6320 = vsinq.f32.pop %v6317
        %vm6321 = vweird.f32 %v1885
        %v6322 = vadd.s32 %v6318, 3
        %v6323 = vand.u32 %v6322, 3
        %vm6324 = vcmp.lt.s32.totalorder %v6323, 2
        %vm6325 = vcmp.eq.s32.totalorder %v6323, 0
        %v6326 = vxor.u32 %v6320, 2147483648
        %v6327 = vsel %vm6325, %v6319, %v6326
        %vm6328 = vcmp.eq.s32.totalorder %v6323, 2
        %v6329 = vxor.u32 %v6319, 2147483648
        %v6330 = vsel %vm6328, %v6329, %v6320
        %v6331 = vsel %vm6324, %v6327, %v6330
        %v6332 = vsel %vm6321, nan, %v6331
        %v6333 = vand.u32 2147483647, %v1886
        %vm6334 = vcmp.le.f32.partialorder %v6333, 0.7853982
        %vm6335 = vcmp.lt.s32.totalorder %v1886, 0
        %v6336 = vand.u32 %v1886, 2139095040
        %v6337 = vshrl.u32 %v6336, 23
        %v6338 = vsub.s32 %v6337, 127
        %v6339 = vand.u32 2147483647, %v1886
        %v6340 = vand.u32 %v6339, 8388607
        %v6341 = vor.u32 %v6340, 8388608
        %v6342 = vsub.s32 0, %v6341
        %v6343 = vadd.s32 %v6338, 1
        %vm6344 = vcmp.gt.s32.totalorder %v6343, 0
        %v6345 = vsel %vm6344, %v6343, 0
        %v6346 = vshrl.u32 %v6345, 5
        %v6347 = vand.u32 %v6345, 31
        %v6348 = vsub.s32 32, %v6347
        %v6349 = vshrl.u32 683565275, %v6348
        %v6350 = vshll.u32 683565275, %v6347
        %v6351 = vshrl.u32 2475754826, %v6348
        %v6352 = vor.u32 %v6350, %v6351
        %v6353 = vshll.u32 2475754826, %v6347
        %v6354 = vshrl.u32 2131351028, %v6348
        %v6355 = vor.u32 %v6353, %v6354
        %v6356 = vshll.u32 2131351028, %v6347
        %v6357 = vshrl.u32 2102212464, %v6348
        %v6358 = vor.u32 %v6356, %v6357
        %v6359 = vshll.u32 2102212464, %v6347
        %v6360 = vshrl.u32 920167782, %v6348
        %v6361 = vor.u32 %v6359, %v6360
        %v6362 = vshll.u32 920167782, %v6347
        %v6363 = vshrl.u32 1326507024, %v6348
        %v6364 = vor.u32 %v6362, %v6363
        %vm6365 = vcmp.lt.s32.totalorder %v6346, 1
        %vm6366 = vcmp.lt.s32.totalorder %v6346, 2
        %vm6367 = vcmp.lt.s32.totalorder %v6346, 3
        %vm6368 = vcmp.lt.s32.totalorder %v6346, 4
        %v6369 = vsel %vm6365, %v6349, %v6352
        %v6370 = vsel %vm6368, %v6358, 2102212464
        %v6371 = vsel %vm6367, %v6355, %v6370
        %v6372 = vsel %vm6366, %v6369, %v6371
        %v6373 = vsel %vm6365, %v6352, %v6355
        %v6374 = vsel %vm6368, %v6361, 920167782
        %v6375 = vsel %vm6367, %v6358, %v6374
        %v6376 = vsel %vm6366, %v6373, %v6375
        %v6377 = vsel %vm6365, %v6355, %v6358
        %v6378 = vsel %vm6368, %v6364, 1326507024
        %v6379 = vsel %vm6367, %v6361, %v6378
        %v6380 = vsel %vm6366, %v6377, %v6379
        %v6381 = vshll.u32 %v6341, 8
        %v6382 = vmul.u32.u64.compose %v6381, %v6380
        %v6383 = vextract.low.u32 %v6382
        %v6384 = vextract.high.u32 %v6382
        %v6385 = vmul.u32.u64.compose %v6381, %v6376
        %v6386 = vextract.low.u32 %v6385
        %v6387 = vextract.high.u32 %v6385
        %v6388 = vmul.u32 %v6381, %v6372
        %v6389 = vadd.s32 %v6384, %v6386
        %vm6390 = vc.u32 %v6384, %v6386
        %v6391 = vadd.s32 %v6387, 1
        %v6392 = vsel %vm6390, %v6391, %v6387
        %v6393 = vadd.s32 %v6388, %v6392
        %v6394 = vadd.s32 %v6393, 536870912
        %v6395 = vshrl.u32 %v6394, 30
        %v6396 = vshll.u32 %v6395, 30
        %v6397 = vsub.s32 %v6393, %v6396
        %vm6398 = vcmp.lt.s32.totalorder %v6397, 0
        %v6399 = vsub.s32 0, %v6397
        %v6400 = vsel %vm6398, %v6399, %v6397
        %v6401 = vclz %v6400
        %v6402 = vsub.s32 %v6401, 2
        %vm6403 = vcmp.gt.s32.totalorder 0, %v6402
        %v6404 = vsel %vm6403, 0, %v6402
        %v6405 = vsub.s32 32, %v6404
        %v6406 = vshll.u32 %v6397, %v6404
        %v6407 = vshrl.u32 %v6389, %v6405
        %v6408 = vor.u32 %v6406, %v6407
        %v6409 = vsub.s32 4294967266, %v6404
        %v6410 = vadd.s32 %v6409, 127
        %v6411 = vshll.u32 %v6410, 23
        %v6412 = vor.u32 4788187, %v6411
        %v6413 = vand.u32 2147483647, %v6412
        %v6415 = vcvt.s32.f32 %v6408
        %v6416 = vmul.f32 %v6415, %v6413
        %v6417 = vxor.u32 %v6416, 2147483648
        %v6418 = vsel %vm6335, %v6417, %v6416
        %v6419 = vsub.s32 4, %v6395
        %v6420 = vsel %vm6335, %v6419, %v6395
        %v6421 = vsel %vm6334, %v1886, %v6418
        %v6422 = vsel %vm6334, 0, %v6420
        %v6423 = vcosq.f32.pop %v6421
        %v6424 = vsinq.f32.pop %v6421
        %vm6425 = vweird.f32 %v1886
        %v6426 = vadd.s32 %v6422, 3
        %v6427 = vand.u32 %v6426, 3
        %vm6428 = vcmp.lt.s32.totalorder %v6427, 2
        %vm6429 = vcmp.eq.s32.totalorder %v6427, 0
        %v6430 = vxor.u32 %v6424, 2147483648
        %v6431 = vsel %vm6429, %v6423, %v6430
        %vm6432 = vcmp.eq.s32.totalorder %v6427, 2
        %v6433 = vxor.u32 %v6423, 2147483648
        %v6434 = vsel %vm6432, %v6433, %v6424
        %v6435 = vsel %vm6428, %v6431, %v6434
        %v6436 = vsel %vm6425, nan, %v6435
        %v6437 = vand.u32 2147483647, %v1887
        %vm6438 = vcmp.le.f32.partialorder %v6437, 0.7853982
        %vm6439 = vcmp.lt.s32.totalorder %v1887, 0
        %v6440 = vand.u32 %v1887, 2139095040
        %v6441 = vshrl.u32 %v6440, 23
        %v6442 = vsub.s32 %v6441, 127
        %v6443 = vand.u32 2147483647, %v1887
        %v6444 = vand.u32 %v6443, 8388607
        %v6445 = vor.u32 %v6444, 8388608
        %v6446 = vsub.s32 0, %v6445
        %v6447 = vadd.s32 %v6442, 1
        %vm6448 = vcmp.gt.s32.totalorder %v6447, 0
        %v6449 = vsel %vm6448, %v6447, 0
        %v6450 = vshrl.u32 %v6449, 5
        %v6451 = vand.u32 %v6449, 31
        %v6452 = vsub.s32 32, %v6451
        %v6453 = vshrl.u32 683565275, %v6452
        %v6454 = vshll.u32 683565275, %v6451
        %v6455 = vshrl.u32 2475754826, %v6452
        %v6456 = vor.u32 %v6454, %v6455
        %v6457 = vshll.u32 2475754826, %v6451
        %v6458 = vshrl.u32 2131351028, %v6452
        %v6459 = vor.u32 %v6457, %v6458
        %v6460 = vshll.u32 2131351028, %v6451
        %v6461 = vshrl.u32 2102212464, %v6452
        %v6462 = vor.u32 %v6460, %v6461
        %v6463 = vshll.u32 2102212464, %v6451
        %v6464 = vshrl.u32 920167782, %v6452
        %v6465 = vor.u32 %v6463, %v6464
        %v6466 = vshll.u32 920167782, %v6451
        %v6467 = vshrl.u32 1326507024, %v6452
        %v6468 = vor.u32 %v6466, %v6467
        %vm6469 = vcmp.lt.s32.totalorder %v6450, 1
        %vm6470 = vcmp.lt.s32.totalorder %v6450, 2
        %vm6471 = vcmp.lt.s32.totalorder %v6450, 3
        %vm6472 = vcmp.lt.s32.totalorder %v6450, 4
        %v6473 = vsel %vm6469, %v6453, %v6456
        %v6474 = vsel %vm6472, %v6462, 2102212464
        %v6475 = vsel %vm6471, %v6459, %v6474
        %v6476 = vsel %vm6470, %v6473, %v6475
        %v6477 = vsel %vm6469, %v6456, %v6459
        %v6478 = vsel %vm6472, %v6465, 920167782
        %v6479 = vsel %vm6471, %v6462, %v6478
        %v6480 = vsel %vm6470, %v6477, %v6479
        %v6481 = vsel %vm6469, %v6459, %v6462
        %v6482 = vsel %vm6472, %v6468, 1326507024
        %v6483 = vsel %vm6471, %v6465, %v6482
        %v6484 = vsel %vm6470, %v6481, %v6483
        %v6485 = vshll.u32 %v6445, 8
        %v6486 = vmul.u32.u64.compose %v6485, %v6484
        %v6487 = vextract.low.u32 %v6486
        %v6488 = vextract.high.u32 %v6486
        %v6489 = vmul.u32.u64.compose %v6485, %v6480
        %v6490 = vextract.low.u32 %v6489
        %v6491 = vextract.high.u32 %v6489
        %v6492 = vmul.u32 %v6485, %v6476
        %v6493 = vadd.s32 %v6488, %v6490
        %vm6494 = vc.u32 %v6488, %v6490
        %v6495 = vadd.s32 %v6491, 1
        %v6496 = vsel %vm6494, %v6495, %v6491
        %v6497 = vadd.s32 %v6492, %v6496
        %v6498 = vadd.s32 %v6497, 536870912
        %v6499 = vshrl.u32 %v6498, 30
        %v6500 = vshll.u32 %v6499, 30
        %v6501 = vsub.s32 %v6497, %v6500
        %vm6502 = vcmp.lt.s32.totalorder %v6501, 0
        %v6503 = vsub.s32 0, %v6501
        %v6504 = vsel %vm6502, %v6503, %v6501
        %v6505 = vclz %v6504
        %v6506 = vsub.s32 %v6505, 2
        %vm6507 = vcmp.gt.s32.totalorder 0, %v6506
        %v6508 = vsel %vm6507, 0, %v6506
        %v6509 = vsub.s32 32, %v6508
        %v6510 = vshll.u32 %v6501, %v6508
        %v6511 = vshrl.u32 %v6493, %v6509
        %v6512 = vor.u32 %v6510, %v6511
        %v6513 = vsub.s32 4294967266, %v6508
        %v6514 = vadd.s32 %v6513, 127
        %v6515 = vshll.u32 %v6514, 23
        %v6516 = vor.u32 4788187, %v6515
        %v6517 = vand.u32 2147483647, %v6516
        %v6519 = vcvt.s32.f32 %v6512
        %v6520 = vmul.f32 %v6519, %v6517
        %v6521 = vxor.u32 %v6520, 2147483648
        %v6522 = vsel %vm6439, %v6521, %v6520
        %v6523 = vsub.s32 4, %v6499
        %v6524 = vsel %vm6439, %v6523, %v6499
        %v6525 = vsel %vm6438, %v1887, %v6522
        %v6526 = vsel %vm6438, 0, %v6524
        %v6527 = vcosq.f32.pop %v6525
        %v6528 = vsinq.f32.pop %v6525
        %vm6529 = vweird.f32 %v1887
        %v6530 = vadd.s32 %v6526, 3
        %v6531 = vand.u32 %v6530, 3
        %vm6532 = vcmp.lt.s32.totalorder %v6531, 2
        %vm6533 = vcmp.eq.s32.totalorder %v6531, 0
        %v6534 = vxor.u32 %v6528, 2147483648
        %v6535 = vsel %vm6533, %v6527, %v6534
        %vm6536 = vcmp.eq.s32.totalorder %v6531, 2
        %v6537 = vxor.u32 %v6527, 2147483648
        %v6538 = vsel %vm6536, %v6537, %v6528
        %v6539 = vsel %vm6532, %v6535, %v6538
        %v6540 = vsel %vm6529, nan, %v6539
        %v6541 = vand.u32 2147483647, %v1888
        %vm6542 = vcmp.le.f32.partialorder %v6541, 0.7853982
        %vm6543 = vcmp.lt.s32.totalorder %v1888, 0
        %v6544 = vand.u32 %v1888, 2139095040
        %v6545 = vshrl.u32 %v6544, 23
        %v6546 = vsub.s32 %v6545, 127
        %v6547 = vand.u32 2147483647, %v1888
        %v6548 = vand.u32 %v6547, 8388607
        %v6549 = vor.u32 %v6548, 8388608
        %v6550 = vsub.s32 0, %v6549
        %v6551 = vadd.s32 %v6546, 1
        %vm6552 = vcmp.gt.s32.totalorder %v6551, 0
        %v6553 = vsel %vm6552, %v6551, 0
        %v6554 = vshrl.u32 %v6553, 5
        %v6555 = vand.u32 %v6553, 31
        %v6556 = vsub.s32 32, %v6555
        %v6557 = vshrl.u32 683565275, %v6556
        %v6558 = vshll.u32 683565275, %v6555
        %v6559 = vshrl.u32 2475754826, %v6556
        %v6560 = vor.u32 %v6558, %v6559
        %v6561 = vshll.u32 2475754826, %v6555
        %v6562 = vshrl.u32 2131351028, %v6556
        %v6563 = vor.u32 %v6561, %v6562
        %v6564 = vshll.u32 2131351028, %v6555
        %v6565 = vshrl.u32 2102212464, %v6556
        %v6566 = vor.u32 %v6564, %v6565
        %v6567 = vshll.u32 2102212464, %v6555
        %v6568 = vshrl.u32 920167782, %v6556
        %v6569 = vor.u32 %v6567, %v6568
        %v6570 = vshll.u32 920167782, %v6555
        %v6571 = vshrl.u32 1326507024, %v6556
        %v6572 = vor.u32 %v6570, %v6571
        %vm6573 = vcmp.lt.s32.totalorder %v6554, 1
        %vm6574 = vcmp.lt.s32.totalorder %v6554, 2
        %vm6575 = vcmp.lt.s32.totalorder %v6554, 3
        %vm6576 = vcmp.lt.s32.totalorder %v6554, 4
        %v6577 = vsel %vm6573, %v6557, %v6560
        %v6578 = vsel %vm6576, %v6566, 2102212464
        %v6579 = vsel %vm6575, %v6563, %v6578
        %v6580 = vsel %vm6574, %v6577, %v6579
        %v6581 = vsel %vm6573, %v6560, %v6563
        %v6582 = vsel %vm6576, %v6569, 920167782
        %v6583 = vsel %vm6575, %v6566, %v6582
        %v6584 = vsel %vm6574, %v6581, %v6583
        %v6585 = vsel %vm6573, %v6563, %v6566
        %v6586 = vsel %vm6576, %v6572, 1326507024
        %v6587 = vsel %vm6575, %v6569, %v6586
        %v6588 = vsel %vm6574, %v6585, %v6587
        %v6589 = vshll.u32 %v6549, 8
        %v6590 = vmul.u32.u64.compose %v6589, %v6588
        %v6591 = vextract.low.u32 %v6590
        %v6592 = vextract.high.u32 %v6590
        %v6593 = vmul.u32.u64.compose %v6589, %v6584
        %v6594 = vextract.low.u32 %v6593
        %v6595 = vextract.high.u32 %v6593
        %v6596 = vmul.u32 %v6589, %v6580
        %v6597 = vadd.s32 %v6592, %v6594
        %vm6598 = vc.u32 %v6592, %v6594
        %v6599 = vadd.s32 %v6595, 1
        %v6600 = vsel %vm6598, %v6599, %v6595
        %v6601 = vadd.s32 %v6596, %v6600
        %v6602 = vadd.s32 %v6601, 536870912
        %v6603 = vshrl.u32 %v6602, 30
        %v6604 = vshll.u32 %v6603, 30
        %v6605 = vsub.s32 %v6601, %v6604
        %vm6606 = vcmp.lt.s32.totalorder %v6605, 0
        %v6607 = vsub.s32 0, %v6605
        %v6608 = vsel %vm6606, %v6607, %v6605
        %v6609 = vclz %v6608
        %v6610 = vsub.s32 %v6609, 2
        %vm6611 = vcmp.gt.s32.totalorder 0, %v6610
        %v6612 = vsel %vm6611, 0, %v6610
        %v6613 = vsub.s32 32, %v6612
        %v6614 = vshll.u32 %v6605, %v6612
        %v6615 = vshrl.u32 %v6597, %v6613
        %v6616 = vor.u32 %v6614, %v6615
        %v6617 = vsub.s32 4294967266, %v6612
        %v6618 = vadd.s32 %v6617, 127
        %v6619 = vshll.u32 %v6618, 23
        %v6620 = vor.u32 4788187, %v6619
        %v6621 = vand.u32 2147483647, %v6620
        %v6623 = vcvt.s32.f32 %v6616
        %v6624 = vmul.f32 %v6623, %v6621
        %v6625 = vxor.u32 %v6624, 2147483648
        %v6626 = vsel %vm6543, %v6625, %v6624
        %v6627 = vsub.s32 4, %v6603
        %v6628 = vsel %vm6543, %v6627, %v6603
        %v6629 = vsel %vm6542, %v1888, %v6626
        %v6630 = vsel %vm6542, 0, %v6628
        %v6631 = vcosq.f32.pop %v6629
        %v6632 = vsinq.f32.pop %v6629
        %vm6633 = vweird.f32 %v1888
        %v6634 = vadd.s32 %v6630, 3
        %v6635 = vand.u32 %v6634, 3
        %vm6636 = vcmp.lt.s32.totalorder %v6635, 2
        %vm6637 = vcmp.eq.s32.totalorder %v6635, 0
        %v6638 = vxor.u32 %v6632, 2147483648
        %v6639 = vsel %vm6637, %v6631, %v6638
        %vm6640 = vcmp.eq.s32.totalorder %v6635, 2
        %v6641 = vxor.u32 %v6631, 2147483648
        %v6642 = vsel %vm6640, %v6641, %v6632
        %v6643 = vsel %vm6636, %v6639, %v6642
        %v6644 = vsel %vm6633, nan, %v6643
        %v6645 = vand.u32 2147483647, %v1889
        %vm6646 = vcmp.le.f32.partialorder %v6645, 0.7853982
        %vm6647 = vcmp.lt.s32.totalorder %v1889, 0
        %v6648 = vand.u32 %v1889, 2139095040
        %v6649 = vshrl.u32 %v6648, 23
        %v6650 = vsub.s32 %v6649, 127
        %v6651 = vand.u32 2147483647, %v1889
        %v6652 = vand.u32 %v6651, 8388607
        %v6653 = vor.u32 %v6652, 8388608
        %v6654 = vsub.s32 0, %v6653
        %v6655 = vadd.s32 %v6650, 1
        %vm6656 = vcmp.gt.s32.totalorder %v6655, 0
        %v6657 = vsel %vm6656, %v6655, 0
        %v6658 = vshrl.u32 %v6657, 5
        %v6659 = vand.u32 %v6657, 31
        %v6660 = vsub.s32 32, %v6659
        %v6661 = vshrl.u32 683565275, %v6660
        %v6662 = vshll.u32 683565275, %v6659
        %v6663 = vshrl.u32 2475754826, %v6660
        %v6664 = vor.u32 %v6662, %v6663
        %v6665 = vshll.u32 2475754826, %v6659
        %v6666 = vshrl.u32 2131351028, %v6660
        %v6667 = vor.u32 %v6665, %v6666
        %v6668 = vshll.u32 2131351028, %v6659
        %v6669 = vshrl.u32 2102212464, %v6660
        %v6670 = vor.u32 %v6668, %v6669
        %v6671 = vshll.u32 2102212464, %v6659
        %v6672 = vshrl.u32 920167782, %v6660
        %v6673 = vor.u32 %v6671, %v6672
        %v6674 = vshll.u32 920167782, %v6659
        %v6675 = vshrl.u32 1326507024, %v6660
        %v6676 = vor.u32 %v6674, %v6675
        %vm6677 = vcmp.lt.s32.totalorder %v6658, 1
        %vm6678 = vcmp.lt.s32.totalorder %v6658, 2
        %vm6679 = vcmp.lt.s32.totalorder %v6658, 3
        %vm6680 = vcmp.lt.s32.totalorder %v6658, 4
        %v6681 = vsel %vm6677, %v6661, %v6664
        %v6682 = vsel %vm6680, %v6670, 2102212464
        %v6683 = vsel %vm6679, %v6667, %v6682
        %v6684 = vsel %vm6678, %v6681, %v6683
        %v6685 = vsel %vm6677, %v6664, %v6667
        %v6686 = vsel %vm6680, %v6673, 920167782
        %v6687 = vsel %vm6679, %v6670, %v6686
        %v6688 = vsel %vm6678, %v6685, %v6687
        %v6689 = vsel %vm6677, %v6667, %v6670
        %v6690 = vsel %vm6680, %v6676, 1326507024
        %v6691 = vsel %vm6679, %v6673, %v6690
        %v6692 = vsel %vm6678, %v6689, %v6691
        %v6693 = vshll.u32 %v6653, 8
        %v6694 = vmul.u32.u64.compose %v6693, %v6692
        %v6695 = vextract.low.u32 %v6694
        %v6696 = vextract.high.u32 %v6694
        %v6697 = vmul.u32.u64.compose %v6693, %v6688
        %v6698 = vextract.low.u32 %v6697
        %v6699 = vextract.high.u32 %v6697
        %v6700 = vmul.u32 %v6693, %v6684
        %v6701 = vadd.s32 %v6696, %v6698
        %vm6702 = vc.u32 %v6696, %v6698
        %v6703 = vadd.s32 %v6699, 1
        %v6704 = vsel %vm6702, %v6703, %v6699
        %v6705 = vadd.s32 %v6700, %v6704
        %v6706 = vadd.s32 %v6705, 536870912
        %v6707 = vshrl.u32 %v6706, 30
        %v6708 = vshll.u32 %v6707, 30
        %v6709 = vsub.s32 %v6705, %v6708
        %vm6710 = vcmp.lt.s32.totalorder %v6709, 0
        %v6711 = vsub.s32 0, %v6709
        %v6712 = vsel %vm6710, %v6711, %v6709
        %v6713 = vclz %v6712
        %v6714 = vsub.s32 %v6713, 2
        %vm6715 = vcmp.gt.s32.totalorder 0, %v6714
        %v6716 = vsel %vm6715, 0, %v6714
        %v6717 = vsub.s32 32, %v6716
        %v6718 = vshll.u32 %v6709, %v6716
        %v6719 = vshrl.u32 %v6701, %v6717
        %v6720 = vor.u32 %v6718, %v6719
        %v6721 = vsub.s32 4294967266, %v6716
        %v6722 = vadd.s32 %v6721, 127
        %v6723 = vshll.u32 %v6722, 23
        %v6724 = vor.u32 4788187, %v6723
        %v6725 = vand.u32 2147483647, %v6724
        %v6727 = vcvt.s32.f32 %v6720
        %v6728 = vmul.f32 %v6727, %v6725
        %v6729 = vxor.u32 %v6728, 2147483648
        %v6730 = vsel %vm6647, %v6729, %v6728
        %v6731 = vsub.s32 4, %v6707
        %v6732 = vsel %vm6647, %v6731, %v6707
        %v6733 = vsel %vm6646, %v1889, %v6730
        %v6734 = vsel %vm6646, 0, %v6732
        %v6735 = vcosq.f32.pop %v6733
        %v6736 = vsinq.f32.pop %v6733
        %vm6737 = vweird.f32 %v1889
        %v6738 = vadd.s32 %v6734, 3
        %v6739 = vand.u32 %v6738, 3
        %vm6740 = vcmp.lt.s32.totalorder %v6739, 2
        %vm6741 = vcmp.eq.s32.totalorder %v6739, 0
        %v6742 = vxor.u32 %v6736, 2147483648
        %v6743 = vsel %vm6741, %v6735, %v6742
        %vm6744 = vcmp.eq.s32.totalorder %v6739, 2
        %v6745 = vxor.u32 %v6735, 2147483648
        %v6746 = vsel %vm6744, %v6745, %v6736
        %v6747 = vsel %vm6740, %v6743, %v6746
        %v6748 = vsel %vm6737, nan, %v6747
        %v6749 = vand.u32 2147483647, %v1890
        %vm6750 = vcmp.le.f32.partialorder %v6749, 0.7853982
        %vm6751 = vcmp.lt.s32.totalorder %v1890, 0
        %v6752 = vand.u32 %v1890, 2139095040
        %v6753 = vshrl.u32 %v6752, 23
        %v6754 = vsub.s32 %v6753, 127
        %v6755 = vand.u32 2147483647, %v1890
        %v6756 = vand.u32 %v6755, 8388607
        %v6757 = vor.u32 %v6756, 8388608
        %v6758 = vsub.s32 0, %v6757
        %v6759 = vadd.s32 %v6754, 1
        %vm6760 = vcmp.gt.s32.totalorder %v6759, 0
        %v6761 = vsel %vm6760, %v6759, 0
        %v6762 = vshrl.u32 %v6761, 5
        %v6763 = vand.u32 %v6761, 31
        %v6764 = vsub.s32 32, %v6763
        %v6765 = vshrl.u32 683565275, %v6764
        %v6766 = vshll.u32 683565275, %v6763
        %v6767 = vshrl.u32 2475754826, %v6764
        %v6768 = vor.u32 %v6766, %v6767
        %v6769 = vshll.u32 2475754826, %v6763
        %v6770 = vshrl.u32 2131351028, %v6764
        %v6771 = vor.u32 %v6769, %v6770
        %v6772 = vshll.u32 2131351028, %v6763
        %v6773 = vshrl.u32 2102212464, %v6764
        %v6774 = vor.u32 %v6772, %v6773
        %v6775 = vshll.u32 2102212464, %v6763
        %v6776 = vshrl.u32 920167782, %v6764
        %v6777 = vor.u32 %v6775, %v6776
        %v6778 = vshll.u32 920167782, %v6763
        %v6779 = vshrl.u32 1326507024, %v6764
        %v6780 = vor.u32 %v6778, %v6779
        %vm6781 = vcmp.lt.s32.totalorder %v6762, 1
        %vm6782 = vcmp.lt.s32.totalorder %v6762, 2
        %vm6783 = vcmp.lt.s32.totalorder %v6762, 3
        %vm6784 = vcmp.lt.s32.totalorder %v6762, 4
        %v6785 = vsel %vm6781, %v6765, %v6768
        %v6786 = vsel %vm6784, %v6774, 2102212464
        %v6787 = vsel %vm6783, %v6771, %v6786
        %v6788 = vsel %vm6782, %v6785, %v6787
        %v6789 = vsel %vm6781, %v6768, %v6771
        %v6790 = vsel %vm6784, %v6777, 920167782
        %v6791 = vsel %vm6783, %v6774, %v6790
        %v6792 = vsel %vm6782, %v6789, %v6791
        %v6793 = vsel %vm6781, %v6771, %v6774
        %v6794 = vsel %vm6784, %v6780, 1326507024
        %v6795 = vsel %vm6783, %v6777, %v6794
        %v6796 = vsel %vm6782, %v6793, %v6795
        %v6797 = vshll.u32 %v6757, 8
        %v6798 = vmul.u32.u64.compose %v6797, %v6796
        %v6799 = vextract.low.u32 %v6798
        %v6800 = vextract.high.u32 %v6798
        %v6801 = vmul.u32.u64.compose %v6797, %v6792
        %v6802 = vextract.low.u32 %v6801
        %v6803 = vextract.high.u32 %v6801
        %v6804 = vmul.u32 %v6797, %v6788
        %v6805 = vadd.s32 %v6800, %v6802
        %vm6806 = vc.u32 %v6800, %v6802
        %v6807 = vadd.s32 %v6803, 1
        %v6808 = vsel %vm6806, %v6807, %v6803
        %v6809 = vadd.s32 %v6804, %v6808
        %v6810 = vadd.s32 %v6809, 536870912
        %v6811 = vshrl.u32 %v6810, 30
        %v6812 = vshll.u32 %v6811, 30
        %v6813 = vsub.s32 %v6809, %v6812
        %vm6814 = vcmp.lt.s32.totalorder %v6813, 0
        %v6815 = vsub.s32 0, %v6813
        %v6816 = vsel %vm6814, %v6815, %v6813
        %v6817 = vclz %v6816
        %v6818 = vsub.s32 %v6817, 2
        %vm6819 = vcmp.gt.s32.totalorder 0, %v6818
        %v6820 = vsel %vm6819, 0, %v6818
        %v6821 = vsub.s32 32, %v6820
        %v6822 = vshll.u32 %v6813, %v6820
        %v6823 = vshrl.u32 %v6805, %v6821
        %v6824 = vor.u32 %v6822, %v6823
        %v6825 = vsub.s32 4294967266, %v6820
        %v6826 = vadd.s32 %v6825, 127
        %v6827 = vshll.u32 %v6826, 23
        %v6828 = vor.u32 4788187, %v6827
        %v6829 = vand.u32 2147483647, %v6828
        %v6831 = vcvt.s32.f32 %v6824
        %v6832 = vmul.f32 %v6831, %v6829
        %v6833 = vxor.u32 %v6832, 2147483648
        %v6834 = vsel %vm6751, %v6833, %v6832
        %v6835 = vsub.s32 4, %v6811
        %v6836 = vsel %vm6751, %v6835, %v6811
        %v6837 = vsel %vm6750, %v1890, %v6834
        %v6838 = vsel %vm6750, 0, %v6836
        %v6839 = vcosq.f32.pop %v6837
        %v6840 = vsinq.f32.pop %v6837
        %vm6841 = vweird.f32 %v1890
        %v6842 = vadd.s32 %v6838, 3
        %v6843 = vand.u32 %v6842, 3
        %vm6844 = vcmp.lt.s32.totalorder %v6843, 2
        %vm6845 = vcmp.eq.s32.totalorder %v6843, 0
        %v6846 = vxor.u32 %v6840, 2147483648
        %v6847 = vsel %vm6845, %v6839, %v6846
        %vm6848 = vcmp.eq.s32.totalorder %v6843, 2
        %v6849 = vxor.u32 %v6839, 2147483648
        %v6850 = vsel %vm6848, %v6849, %v6840
        %v6851 = vsel %vm6844, %v6847, %v6850
        %v6852 = vsel %vm6841, nan, %v6851
        %v6853 = vand.u32 2147483647, %v1891
        %vm6854 = vcmp.le.f32.partialorder %v6853, 0.7853982
        %vm6855 = vcmp.lt.s32.totalorder %v1891, 0
        %v6856 = vand.u32 %v1891, 2139095040
        %v6857 = vshrl.u32 %v6856, 23
        %v6858 = vsub.s32 %v6857, 127
        %v6859 = vand.u32 2147483647, %v1891
        %v6860 = vand.u32 %v6859, 8388607
        %v6861 = vor.u32 %v6860, 8388608
        %v6862 = vsub.s32 0, %v6861
        %v6863 = vadd.s32 %v6858, 1
        %vm6864 = vcmp.gt.s32.totalorder %v6863, 0
        %v6865 = vsel %vm6864, %v6863, 0
        %v6866 = vshrl.u32 %v6865, 5
        %v6867 = vand.u32 %v6865, 31
        %v6868 = vsub.s32 32, %v6867
        %v6869 = vshrl.u32 683565275, %v6868
        %v6870 = vshll.u32 683565275, %v6867
        %v6871 = vshrl.u32 2475754826, %v6868
        %v6872 = vor.u32 %v6870, %v6871
        %v6873 = vshll.u32 2475754826, %v6867
        %v6874 = vshrl.u32 2131351028, %v6868
        %v6875 = vor.u32 %v6873, %v6874
        %v6876 = vshll.u32 2131351028, %v6867
        %v6877 = vshrl.u32 2102212464, %v6868
        %v6878 = vor.u32 %v6876, %v6877
        %v6879 = vshll.u32 2102212464, %v6867
        %v6880 = vshrl.u32 920167782, %v6868
        %v6881 = vor.u32 %v6879, %v6880
        %v6882 = vshll.u32 920167782, %v6867
        %v6883 = vshrl.u32 1326507024, %v6868
        %v6884 = vor.u32 %v6882, %v6883
        %vm6885 = vcmp.lt.s32.totalorder %v6866, 1
        %vm6886 = vcmp.lt.s32.totalorder %v6866, 2
        %vm6887 = vcmp.lt.s32.totalorder %v6866, 3
        %vm6888 = vcmp.lt.s32.totalorder %v6866, 4
        %v6889 = vsel %vm6885, %v6869, %v6872
        %v6890 = vsel %vm6888, %v6878, 2102212464
        %v6891 = vsel %vm6887, %v6875, %v6890
        %v6892 = vsel %vm6886, %v6889, %v6891
        %v6893 = vsel %vm6885, %v6872, %v6875
        %v6894 = vsel %vm6888, %v6881, 920167782
        %v6895 = vsel %vm6887, %v6878, %v6894
        %v6896 = vsel %vm6886, %v6893, %v6895
        %v6897 = vsel %vm6885, %v6875, %v6878
        %v6898 = vsel %vm6888, %v6884, 1326507024
        %v6899 = vsel %vm6887, %v6881, %v6898
        %v6900 = vsel %vm6886, %v6897, %v6899
        %v6901 = vshll.u32 %v6861, 8
        %v6902 = vmul.u32.u64.compose %v6901, %v6900
        %v6903 = vextract.low.u32 %v6902
        %v6904 = vextract.high.u32 %v6902
        %v6905 = vmul.u32.u64.compose %v6901, %v6896
        %v6906 = vextract.low.u32 %v6905
        %v6907 = vextract.high.u32 %v6905
        %v6908 = vmul.u32 %v6901, %v6892
        %v6909 = vadd.s32 %v6904, %v6906
        %vm6910 = vc.u32 %v6904, %v6906
        %v6911 = vadd.s32 %v6907, 1
        %v6912 = vsel %vm6910, %v6911, %v6907
        %v6913 = vadd.s32 %v6908, %v6912
        %v6914 = vadd.s32 %v6913, 536870912
        %v6915 = vshrl.u32 %v6914, 30
        %v6916 = vshll.u32 %v6915, 30
        %v6917 = vsub.s32 %v6913, %v6916
        %vm6918 = vcmp.lt.s32.totalorder %v6917, 0
        %v6919 = vsub.s32 0, %v6917
        %v6920 = vsel %vm6918, %v6919, %v6917
        %v6921 = vclz %v6920
        %v6922 = vsub.s32 %v6921, 2
        %vm6923 = vcmp.gt.s32.totalorder 0, %v6922
        %v6924 = vsel %vm6923, 0, %v6922
        %v6925 = vsub.s32 32, %v6924
        %v6926 = vshll.u32 %v6917, %v6924
        %v6927 = vshrl.u32 %v6909, %v6925
        %v6928 = vor.u32 %v6926, %v6927
        %v6929 = vsub.s32 4294967266, %v6924
        %v6930 = vadd.s32 %v6929, 127
        %v6931 = vshll.u32 %v6930, 23
        %v6932 = vor.u32 4788187, %v6931
        %v6933 = vand.u32 2147483647, %v6932
        %v6935 = vcvt.s32.f32 %v6928
        %v6936 = vmul.f32 %v6935, %v6933
        %v6937 = vxor.u32 %v6936, 2147483648
        %v6938 = vsel %vm6855, %v6937, %v6936
        %v6939 = vsub.s32 4, %v6915
        %v6940 = vsel %vm6855, %v6939, %v6915
        %v6941 = vsel %vm6854, %v1891, %v6938
        %v6942 = vsel %vm6854, 0, %v6940
        %v6943 = vcosq.f32.pop %v6941
        %v6944 = vsinq.f32.pop %v6941
        %vm6945 = vweird.f32 %v1891
        %v6946 = vadd.s32 %v6942, 3
        %v6947 = vand.u32 %v6946, 3
        %vm6948 = vcmp.lt.s32.totalorder %v6947, 2
        %vm6949 = vcmp.eq.s32.totalorder %v6947, 0
        %v6950 = vxor.u32 %v6944, 2147483648
        %v6951 = vsel %vm6949, %v6943, %v6950
        %vm6952 = vcmp.eq.s32.totalorder %v6947, 2
        %v6953 = vxor.u32 %v6943, 2147483648
        %v6954 = vsel %vm6952, %v6953, %v6944
        %v6955 = vsel %vm6948, %v6951, %v6954
        %v6956 = vsel %vm6945, nan, %v6955
        %v6957 = vand.u32 2147483647, %v1892
        %vm6958 = vcmp.le.f32.partialorder %v6957, 0.7853982
        %vm6959 = vcmp.lt.s32.totalorder %v1892, 0
        %v6960 = vand.u32 %v1892, 2139095040
        %v6961 = vshrl.u32 %v6960, 23
        %v6962 = vsub.s32 %v6961, 127
        %v6963 = vand.u32 2147483647, %v1892
        %v6964 = vand.u32 %v6963, 8388607
        %v6965 = vor.u32 %v6964, 8388608
        %v6966 = vsub.s32 0, %v6965
        %v6967 = vadd.s32 %v6962, 1
        %vm6968 = vcmp.gt.s32.totalorder %v6967, 0
        %v6969 = vsel %vm6968, %v6967, 0
        %v6970 = vshrl.u32 %v6969, 5
        %v6971 = vand.u32 %v6969, 31
        %v6972 = vsub.s32 32, %v6971
        %v6973 = vshrl.u32 683565275, %v6972
        %v6974 = vshll.u32 683565275, %v6971
        %v6975 = vshrl.u32 2475754826, %v6972
        %v6976 = vor.u32 %v6974, %v6975
        %v6977 = vshll.u32 2475754826, %v6971
        %v6978 = vshrl.u32 2131351028, %v6972
        %v6979 = vor.u32 %v6977, %v6978
        %v6980 = vshll.u32 2131351028, %v6971
        %v6981 = vshrl.u32 2102212464, %v6972
        %v6982 = vor.u32 %v6980, %v6981
        %v6983 = vshll.u32 2102212464, %v6971
        %v6984 = vshrl.u32 920167782, %v6972
        %v6985 = vor.u32 %v6983, %v6984
        %v6986 = vshll.u32 920167782, %v6971
        %v6987 = vshrl.u32 1326507024, %v6972
        %v6988 = vor.u32 %v6986, %v6987
        %vm6989 = vcmp.lt.s32.totalorder %v6970, 1
        %vm6990 = vcmp.lt.s32.totalorder %v6970, 2
        %vm6991 = vcmp.lt.s32.totalorder %v6970, 3
        %vm6992 = vcmp.lt.s32.totalorder %v6970, 4
        %v6993 = vsel %vm6989, %v6973, %v6976
        %v6994 = vsel %vm6992, %v6982, 2102212464
        %v6995 = vsel %vm6991, %v6979, %v6994
        %v6996 = vsel %vm6990, %v6993, %v6995
        %v6997 = vsel %vm6989, %v6976, %v6979
        %v6998 = vsel %vm6992, %v6985, 920167782
        %v6999 = vsel %vm6991, %v6982, %v6998
        %v7000 = vsel %vm6990, %v6997, %v6999
        %v7001 = vsel %vm6989, %v6979, %v6982
        %v7002 = vsel %vm6992, %v6988, 1326507024
        %v7003 = vsel %vm6991, %v6985, %v7002
        %v7004 = vsel %vm6990, %v7001, %v7003
        %v7005 = vshll.u32 %v6965, 8
        %v7006 = vmul.u32.u64.compose %v7005, %v7004
        %v7007 = vextract.low.u32 %v7006
        %v7008 = vextract.high.u32 %v7006
        %v7009 = vmul.u32.u64.compose %v7005, %v7000
        %v7010 = vextract.low.u32 %v7009
        %v7011 = vextract.high.u32 %v7009
        %v7012 = vmul.u32 %v7005, %v6996
        %v7013 = vadd.s32 %v7008, %v7010
        %vm7014 = vc.u32 %v7008, %v7010
        %v7015 = vadd.s32 %v7011, 1
        %v7016 = vsel %vm7014, %v7015, %v7011
        %v7017 = vadd.s32 %v7012, %v7016
        %v7018 = vadd.s32 %v7017, 536870912
        %v7019 = vshrl.u32 %v7018, 30
        %v7020 = vshll.u32 %v7019, 30
        %v7021 = vsub.s32 %v7017, %v7020
        %vm7022 = vcmp.lt.s32.totalorder %v7021, 0
        %v7023 = vsub.s32 0, %v7021
        %v7024 = vsel %vm7022, %v7023, %v7021
        %v7025 = vclz %v7024
        %v7026 = vsub.s32 %v7025, 2
        %vm7027 = vcmp.gt.s32.totalorder 0, %v7026
        %v7028 = vsel %vm7027, 0, %v7026
        %v7029 = vsub.s32 32, %v7028
        %v7030 = vshll.u32 %v7021, %v7028
        %v7031 = vshrl.u32 %v7013, %v7029
        %v7032 = vor.u32 %v7030, %v7031
        %v7033 = vsub.s32 4294967266, %v7028
        %v7034 = vadd.s32 %v7033, 127
        %v7035 = vshll.u32 %v7034, 23
        %v7036 = vor.u32 4788187, %v7035
        %v7037 = vand.u32 2147483647, %v7036
        %v7039 = vcvt.s32.f32 %v7032
        %v7040 = vmul.f32 %v7039, %v7037
        %v7041 = vxor.u32 %v7040, 2147483648
        %v7042 = vsel %vm6959, %v7041, %v7040
        %v7043 = vsub.s32 4, %v7019
        %v7044 = vsel %vm6959, %v7043, %v7019
        %v7045 = vsel %vm6958, %v1892, %v7042
        %v7046 = vsel %vm6958, 0, %v7044
        %v7047 = vcosq.f32.pop %v7045
        %v7048 = vsinq.f32.pop %v7045
        %vm7049 = vweird.f32 %v1892
        %v7050 = vadd.s32 %v7046, 3
        %v7051 = vand.u32 %v7050, 3
        %vm7052 = vcmp.lt.s32.totalorder %v7051, 2
        %vm7053 = vcmp.eq.s32.totalorder %v7051, 0
        %v7054 = vxor.u32 %v7048, 2147483648
        %v7055 = vsel %vm7053, %v7047, %v7054
        %vm7056 = vcmp.eq.s32.totalorder %v7051, 2
        %v7057 = vxor.u32 %v7047, 2147483648
        %v7058 = vsel %vm7056, %v7057, %v7048
        %v7059 = vsel %vm7052, %v7055, %v7058
        %v7060 = vsel %vm7049, nan, %v7059
        %v7061 = vand.u32 2147483647, %v1893
        %vm7062 = vcmp.le.f32.partialorder %v7061, 0.7853982
        %vm7063 = vcmp.lt.s32.totalorder %v1893, 0
        %v7064 = vand.u32 %v1893, 2139095040
        %v7065 = vshrl.u32 %v7064, 23
        %v7066 = vsub.s32 %v7065, 127
        %v7067 = vand.u32 2147483647, %v1893
        %v7068 = vand.u32 %v7067, 8388607
        %v7069 = vor.u32 %v7068, 8388608
        %v7070 = vsub.s32 0, %v7069
        %v7071 = vadd.s32 %v7066, 1
        %vm7072 = vcmp.gt.s32.totalorder %v7071, 0
        %v7073 = vsel %vm7072, %v7071, 0
        %v7074 = vshrl.u32 %v7073, 5
        %v7075 = vand.u32 %v7073, 31
        %v7076 = vsub.s32 32, %v7075
        %v7077 = vshrl.u32 683565275, %v7076
        %v7078 = vshll.u32 683565275, %v7075
        %v7079 = vshrl.u32 2475754826, %v7076
        %v7080 = vor.u32 %v7078, %v7079
        %v7081 = vshll.u32 2475754826, %v7075
        %v7082 = vshrl.u32 2131351028, %v7076
        %v7083 = vor.u32 %v7081, %v7082
        %v7084 = vshll.u32 2131351028, %v7075
        %v7085 = vshrl.u32 2102212464, %v7076
        %v7086 = vor.u32 %v7084, %v7085
        %v7087 = vshll.u32 2102212464, %v7075
        %v7088 = vshrl.u32 920167782, %v7076
        %v7089 = vor.u32 %v7087, %v7088
        %v7090 = vshll.u32 920167782, %v7075
        %v7091 = vshrl.u32 1326507024, %v7076
        %v7092 = vor.u32 %v7090, %v7091
        %vm7093 = vcmp.lt.s32.totalorder %v7074, 1
        %vm7094 = vcmp.lt.s32.totalorder %v7074, 2
        %vm7095 = vcmp.lt.s32.totalorder %v7074, 3
        %vm7096 = vcmp.lt.s32.totalorder %v7074, 4
        %v7097 = vsel %vm7093, %v7077, %v7080
        %v7098 = vsel %vm7096, %v7086, 2102212464
        %v7099 = vsel %vm7095, %v7083, %v7098
        %v7100 = vsel %vm7094, %v7097, %v7099
        %v7101 = vsel %vm7093, %v7080, %v7083
        %v7102 = vsel %vm7096, %v7089, 920167782
        %v7103 = vsel %vm7095, %v7086, %v7102
        %v7104 = vsel %vm7094, %v7101, %v7103
        %v7105 = vsel %vm7093, %v7083, %v7086
        %v7106 = vsel %vm7096, %v7092, 1326507024
        %v7107 = vsel %vm7095, %v7089, %v7106
        %v7108 = vsel %vm7094, %v7105, %v7107
        %v7109 = vshll.u32 %v7069, 8
        %v7110 = vmul.u32.u64.compose %v7109, %v7108
        %v7111 = vextract.low.u32 %v7110
        %v7112 = vextract.high.u32 %v7110
        %v7113 = vmul.u32.u64.compose %v7109, %v7104
        %v7114 = vextract.low.u32 %v7113
        %v7115 = vextract.high.u32 %v7113
        %v7116 = vmul.u32 %v7109, %v7100
        %v7117 = vadd.s32 %v7112, %v7114
        %vm7118 = vc.u32 %v7112, %v7114
        %v7119 = vadd.s32 %v7115, 1
        %v7120 = vsel %vm7118, %v7119, %v7115
        %v7121 = vadd.s32 %v7116, %v7120
        %v7122 = vadd.s32 %v7121, 536870912
        %v7123 = vshrl.u32 %v7122, 30
        %v7124 = vshll.u32 %v7123, 30
        %v7125 = vsub.s32 %v7121, %v7124
        %vm7126 = vcmp.lt.s32.totalorder %v7125, 0
        %v7127 = vsub.s32 0, %v7125
        %v7128 = vsel %vm7126, %v7127, %v7125
        %v7129 = vclz %v7128
        %v7130 = vsub.s32 %v7129, 2
        %vm7131 = vcmp.gt.s32.totalorder 0, %v7130
        %v7132 = vsel %vm7131, 0, %v7130
        %v7133 = vsub.s32 32, %v7132
        %v7134 = vshll.u32 %v7125, %v7132
        %v7135 = vshrl.u32 %v7117, %v7133
        %v7136 = vor.u32 %v7134, %v7135
        %v7137 = vsub.s32 4294967266, %v7132
        %v7138 = vadd.s32 %v7137, 127
        %v7139 = vshll.u32 %v7138, 23
        %v7140 = vor.u32 4788187, %v7139
        %v7141 = vand.u32 2147483647, %v7140
        %v7143 = vcvt.s32.f32 %v7136
        %v7144 = vmul.f32 %v7143, %v7141
        %v7145 = vxor.u32 %v7144, 2147483648
        %v7146 = vsel %vm7063, %v7145, %v7144
        %v7147 = vsub.s32 4, %v7123
        %v7148 = vsel %vm7063, %v7147, %v7123
        %v7149 = vsel %vm7062, %v1893, %v7146
        %v7150 = vsel %vm7062, 0, %v7148
        %v7151 = vcosq.f32.pop %v7149
        %v7152 = vsinq.f32.pop %v7149
        %vm7153 = vweird.f32 %v1893
        %v7154 = vadd.s32 %v7150, 3
        %v7155 = vand.u32 %v7154, 3
        %vm7156 = vcmp.lt.s32.totalorder %v7155, 2
        %vm7157 = vcmp.eq.s32.totalorder %v7155, 0
        %v7158 = vxor.u32 %v7152, 2147483648
        %v7159 = vsel %vm7157, %v7151, %v7158
        %vm7160 = vcmp.eq.s32.totalorder %v7155, 2
        %v7161 = vxor.u32 %v7151, 2147483648
        %v7162 = vsel %vm7160, %v7161, %v7152
        %v7163 = vsel %vm7156, %v7159, %v7162
        %v7164 = vsel %vm7153, nan, %v7163
        %v7165 = vand.u32 2147483647, %v1894
        %vm7166 = vcmp.le.f32.partialorder %v7165, 0.7853982
        %vm7167 = vcmp.lt.s32.totalorder %v1894, 0
        %v7168 = vand.u32 %v1894, 2139095040
        %v7169 = vshrl.u32 %v7168, 23
        %v7170 = vsub.s32 %v7169, 127
        %v7171 = vand.u32 2147483647, %v1894
        %v7172 = vand.u32 %v7171, 8388607
        %v7173 = vor.u32 %v7172, 8388608
        %v7174 = vsub.s32 0, %v7173
        %v7175 = vadd.s32 %v7170, 1
        %vm7176 = vcmp.gt.s32.totalorder %v7175, 0
        %v7177 = vsel %vm7176, %v7175, 0
        %v7178 = vshrl.u32 %v7177, 5
        %v7179 = vand.u32 %v7177, 31
        %v7180 = vsub.s32 32, %v7179
        %v7181 = vshrl.u32 683565275, %v7180
        %v7182 = vshll.u32 683565275, %v7179
        %v7183 = vshrl.u32 2475754826, %v7180
        %v7184 = vor.u32 %v7182, %v7183
        %v7185 = vshll.u32 2475754826, %v7179
        %v7186 = vshrl.u32 2131351028, %v7180
        %v7187 = vor.u32 %v7185, %v7186
        %v7188 = vshll.u32 2131351028, %v7179
        %v7189 = vshrl.u32 2102212464, %v7180
        %v7190 = vor.u32 %v7188, %v7189
        %v7191 = vshll.u32 2102212464, %v7179
        %v7192 = vshrl.u32 920167782, %v7180
        %v7193 = vor.u32 %v7191, %v7192
        %v7194 = vshll.u32 920167782, %v7179
        %v7195 = vshrl.u32 1326507024, %v7180
        %v7196 = vor.u32 %v7194, %v7195
        %vm7197 = vcmp.lt.s32.totalorder %v7178, 1
        %vm7198 = vcmp.lt.s32.totalorder %v7178, 2
        %vm7199 = vcmp.lt.s32.totalorder %v7178, 3
        %vm7200 = vcmp.lt.s32.totalorder %v7178, 4
        %v7201 = vsel %vm7197, %v7181, %v7184
        %v7202 = vsel %vm7200, %v7190, 2102212464
        %v7203 = vsel %vm7199, %v7187, %v7202
        %v7204 = vsel %vm7198, %v7201, %v7203
        %v7205 = vsel %vm7197, %v7184, %v7187
        %v7206 = vsel %vm7200, %v7193, 920167782
        %v7207 = vsel %vm7199, %v7190, %v7206
        %v7208 = vsel %vm7198, %v7205, %v7207
        %v7209 = vsel %vm7197, %v7187, %v7190
        %v7210 = vsel %vm7200, %v7196, 1326507024
        %v7211 = vsel %vm7199, %v7193, %v7210
        %v7212 = vsel %vm7198, %v7209, %v7211
        %v7213 = vshll.u32 %v7173, 8
        %v7214 = vmul.u32.u64.compose %v7213, %v7212
        %v7215 = vextract.low.u32 %v7214
        %v7216 = vextract.high.u32 %v7214
        %v7217 = vmul.u32.u64.compose %v7213, %v7208
        %v7218 = vextract.low.u32 %v7217
        %v7219 = vextract.high.u32 %v7217
        %v7220 = vmul.u32 %v7213, %v7204
        %v7221 = vadd.s32 %v7216, %v7218
        %vm7222 = vc.u32 %v7216, %v7218
        %v7223 = vadd.s32 %v7219, 1
        %v7224 = vsel %vm7222, %v7223, %v7219
        %v7225 = vadd.s32 %v7220, %v7224
        %v7226 = vadd.s32 %v7225, 536870912
        %v7227 = vshrl.u32 %v7226, 30
        %v7228 = vshll.u32 %v7227, 30
        %v7229 = vsub.s32 %v7225, %v7228
        %vm7230 = vcmp.lt.s32.totalorder %v7229, 0
        %v7231 = vsub.s32 0, %v7229
        %v7232 = vsel %vm7230, %v7231, %v7229
        %v7233 = vclz %v7232
        %v7234 = vsub.s32 %v7233, 2
        %vm7235 = vcmp.gt.s32.totalorder 0, %v7234
        %v7236 = vsel %vm7235, 0, %v7234
        %v7237 = vsub.s32 32, %v7236
        %v7238 = vshll.u32 %v7229, %v7236
        %v7239 = vshrl.u32 %v7221, %v7237
        %v7240 = vor.u32 %v7238, %v7239
        %v7241 = vsub.s32 4294967266, %v7236
        %v7242 = vadd.s32 %v7241, 127
        %v7243 = vshll.u32 %v7242, 23
        %v7244 = vor.u32 4788187, %v7243
        %v7245 = vand.u32 2147483647, %v7244
        %v7247 = vcvt.s32.f32 %v7240
        %v7248 = vmul.f32 %v7247, %v7245
        %v7249 = vxor.u32 %v7248, 2147483648
        %v7250 = vsel %vm7167, %v7249, %v7248
        %v7251 = vsub.s32 4, %v7227
        %v7252 = vsel %vm7167, %v7251, %v7227
        %v7253 = vsel %vm7166, %v1894, %v7250
        %v7254 = vsel %vm7166, 0, %v7252
        %v7255 = vcosq.f32.pop %v7253
        %v7256 = vsinq.f32.pop %v7253
        %vm7257 = vweird.f32 %v1894
        %v7258 = vadd.s32 %v7254, 3
        %v7259 = vand.u32 %v7258, 3
        %vm7260 = vcmp.lt.s32.totalorder %v7259, 2
        %vm7261 = vcmp.eq.s32.totalorder %v7259, 0
        %v7262 = vxor.u32 %v7256, 2147483648
        %v7263 = vsel %vm7261, %v7255, %v7262
        %vm7264 = vcmp.eq.s32.totalorder %v7259, 2
        %v7265 = vxor.u32 %v7255, 2147483648
        %v7266 = vsel %vm7264, %v7265, %v7256
        %v7267 = vsel %vm7260, %v7263, %v7266
        %v7268 = vsel %vm7257, nan, %v7267
        %v7269 = vand.u32 2147483647, %v1895
        %vm7270 = vcmp.le.f32.partialorder %v7269, 0.7853982
        %vm7271 = vcmp.lt.s32.totalorder %v1895, 0
        %v7272 = vand.u32 %v1895, 2139095040
        %v7273 = vshrl.u32 %v7272, 23
        %v7274 = vsub.s32 %v7273, 127
        %v7275 = vand.u32 2147483647, %v1895
        %v7276 = vand.u32 %v7275, 8388607
        %v7277 = vor.u32 %v7276, 8388608
        %v7278 = vsub.s32 0, %v7277
        %v7279 = vadd.s32 %v7274, 1
        %vm7280 = vcmp.gt.s32.totalorder %v7279, 0
        %v7281 = vsel %vm7280, %v7279, 0
        %v7282 = vshrl.u32 %v7281, 5
        %v7283 = vand.u32 %v7281, 31
        %v7284 = vsub.s32 32, %v7283
        %v7285 = vshrl.u32 683565275, %v7284
        %v7286 = vshll.u32 683565275, %v7283
        %v7287 = vshrl.u32 2475754826, %v7284
        %v7288 = vor.u32 %v7286, %v7287
        %v7289 = vshll.u32 2475754826, %v7283
        %v7290 = vshrl.u32 2131351028, %v7284
        %v7291 = vor.u32 %v7289, %v7290
        %v7292 = vshll.u32 2131351028, %v7283
        %v7293 = vshrl.u32 2102212464, %v7284
        %v7294 = vor.u32 %v7292, %v7293
        %v7295 = vshll.u32 2102212464, %v7283
        %v7296 = vshrl.u32 920167782, %v7284
        %v7297 = vor.u32 %v7295, %v7296
        %v7298 = vshll.u32 920167782, %v7283
        %v7299 = vshrl.u32 1326507024, %v7284
        %v7300 = vor.u32 %v7298, %v7299
        %vm7301 = vcmp.lt.s32.totalorder %v7282, 1
        %vm7302 = vcmp.lt.s32.totalorder %v7282, 2
        %vm7303 = vcmp.lt.s32.totalorder %v7282, 3
        %vm7304 = vcmp.lt.s32.totalorder %v7282, 4
        %v7305 = vsel %vm7301, %v7285, %v7288
        %v7306 = vsel %vm7304, %v7294, 2102212464
        %v7307 = vsel %vm7303, %v7291, %v7306
        %v7308 = vsel %vm7302, %v7305, %v7307
        %v7309 = vsel %vm7301, %v7288, %v7291
        %v7310 = vsel %vm7304, %v7297, 920167782
        %v7311 = vsel %vm7303, %v7294, %v7310
        %v7312 = vsel %vm7302, %v7309, %v7311
        %v7313 = vsel %vm7301, %v7291, %v7294
        %v7314 = vsel %vm7304, %v7300, 1326507024
        %v7315 = vsel %vm7303, %v7297, %v7314
        %v7316 = vsel %vm7302, %v7313, %v7315
        %v7317 = vshll.u32 %v7277, 8
        %v7318 = vmul.u32.u64.compose %v7317, %v7316
        %v7319 = vextract.low.u32 %v7318
        %v7320 = vextract.high.u32 %v7318
        %v7321 = vmul.u32.u64.compose %v7317, %v7312
        %v7322 = vextract.low.u32 %v7321
        %v7323 = vextract.high.u32 %v7321
        %v7324 = vmul.u32 %v7317, %v7308
        %v7325 = vadd.s32 %v7320, %v7322
        %vm7326 = vc.u32 %v7320, %v7322
        %v7327 = vadd.s32 %v7323, 1
        %v7328 = vsel %vm7326, %v7327, %v7323
        %v7329 = vadd.s32 %v7324, %v7328
        %v7330 = vadd.s32 %v7329, 536870912
        %v7331 = vshrl.u32 %v7330, 30
        %v7332 = vshll.u32 %v7331, 30
        %v7333 = vsub.s32 %v7329, %v7332
        %vm7334 = vcmp.lt.s32.totalorder %v7333, 0
        %v7335 = vsub.s32 0, %v7333
        %v7336 = vsel %vm7334, %v7335, %v7333
        %v7337 = vclz %v7336
        %v7338 = vsub.s32 %v7337, 2
        %vm7339 = vcmp.gt.s32.totalorder 0, %v7338
        %v7340 = vsel %vm7339, 0, %v7338
        %v7341 = vsub.s32 32, %v7340
        %v7342 = vshll.u32 %v7333, %v7340
        %v7343 = vshrl.u32 %v7325, %v7341
        %v7344 = vor.u32 %v7342, %v7343
        %v7345 = vsub.s32 4294967266, %v7340
        %v7346 = vadd.s32 %v7345, 127
        %v7347 = vshll.u32 %v7346, 23
        %v7348 = vor.u32 4788187, %v7347
        %v7349 = vand.u32 2147483647, %v7348
        %v7351 = vcvt.s32.f32 %v7344
        %v7352 = vmul.f32 %v7351, %v7349
        %v7353 = vxor.u32 %v7352, 2147483648
        %v7354 = vsel %vm7271, %v7353, %v7352
        %v7355 = vsub.s32 4, %v7331
        %v7356 = vsel %vm7271, %v7355, %v7331
        %v7357 = vsel %vm7270, %v1895, %v7354
        %v7358 = vsel %vm7270, 0, %v7356
        %v7359 = vcosq.f32.pop %v7357
        %v7360 = vsinq.f32.pop %v7357
        %vm7361 = vweird.f32 %v1895
        %v7362 = vadd.s32 %v7358, 3
        %v7363 = vand.u32 %v7362, 3
        %vm7364 = vcmp.lt.s32.totalorder %v7363, 2
        %vm7365 = vcmp.eq.s32.totalorder %v7363, 0
        %v7366 = vxor.u32 %v7360, 2147483648
        %v7367 = vsel %vm7365, %v7359, %v7366
        %vm7368 = vcmp.eq.s32.totalorder %v7363, 2
        %v7369 = vxor.u32 %v7359, 2147483648
        %v7370 = vsel %vm7368, %v7369, %v7360
        %v7371 = vsel %vm7364, %v7367, %v7370
        %v7372 = vsel %vm7361, nan, %v7371
        %v7373 = vand.u32 2147483647, %v1896
        %vm7374 = vcmp.le.f32.partialorder %v7373, 0.7853982
        %vm7375 = vcmp.lt.s32.totalorder %v1896, 0
        %v7376 = vand.u32 %v1896, 2139095040
        %v7377 = vshrl.u32 %v7376, 23
        %v7378 = vsub.s32 %v7377, 127
        %v7379 = vand.u32 2147483647, %v1896
        %v7380 = vand.u32 %v7379, 8388607
        %v7381 = vor.u32 %v7380, 8388608
        %v7382 = vsub.s32 0, %v7381
        %v7383 = vadd.s32 %v7378, 1
        %vm7384 = vcmp.gt.s32.totalorder %v7383, 0
        %v7385 = vsel %vm7384, %v7383, 0
        %v7386 = vshrl.u32 %v7385, 5
        %v7387 = vand.u32 %v7385, 31
        %v7388 = vsub.s32 32, %v7387
        %v7389 = vshrl.u32 683565275, %v7388
        %v7390 = vshll.u32 683565275, %v7387
        %v7391 = vshrl.u32 2475754826, %v7388
        %v7392 = vor.u32 %v7390, %v7391
        %v7393 = vshll.u32 2475754826, %v7387
        %v7394 = vshrl.u32 2131351028, %v7388
        %v7395 = vor.u32 %v7393, %v7394
        %v7396 = vshll.u32 2131351028, %v7387
        %v7397 = vshrl.u32 2102212464, %v7388
        %v7398 = vor.u32 %v7396, %v7397
        %v7399 = vshll.u32 2102212464, %v7387
        %v7400 = vshrl.u32 920167782, %v7388
        %v7401 = vor.u32 %v7399, %v7400
        %v7402 = vshll.u32 920167782, %v7387
        %v7403 = vshrl.u32 1326507024, %v7388
        %v7404 = vor.u32 %v7402, %v7403
        %vm7405 = vcmp.lt.s32.totalorder %v7386, 1
        %vm7406 = vcmp.lt.s32.totalorder %v7386, 2
        %vm7407 = vcmp.lt.s32.totalorder %v7386, 3
        %vm7408 = vcmp.lt.s32.totalorder %v7386, 4
        %v7409 = vsel %vm7405, %v7389, %v7392
        %v7410 = vsel %vm7408, %v7398, 2102212464
        %v7411 = vsel %vm7407, %v7395, %v7410
        %v7412 = vsel %vm7406, %v7409, %v7411
        %v7413 = vsel %vm7405, %v7392, %v7395
        %v7414 = vsel %vm7408, %v7401, 920167782
        %v7415 = vsel %vm7407, %v7398, %v7414
        %v7416 = vsel %vm7406, %v7413, %v7415
        %v7417 = vsel %vm7405, %v7395, %v7398
        %v7418 = vsel %vm7408, %v7404, 1326507024
        %v7419 = vsel %vm7407, %v7401, %v7418
        %v7420 = vsel %vm7406, %v7417, %v7419
        %v7421 = vshll.u32 %v7381, 8
        %v7422 = vmul.u32.u64.compose %v7421, %v7420
        %v7423 = vextract.low.u32 %v7422
        %v7424 = vextract.high.u32 %v7422
        %v7425 = vmul.u32.u64.compose %v7421, %v7416
        %v7426 = vextract.low.u32 %v7425
        %v7427 = vextract.high.u32 %v7425
        %v7428 = vmul.u32 %v7421, %v7412
        %v7429 = vadd.s32 %v7424, %v7426
        %vm7430 = vc.u32 %v7424, %v7426
        %v7431 = vadd.s32 %v7427, 1
        %v7432 = vsel %vm7430, %v7431, %v7427
        %v7433 = vadd.s32 %v7428, %v7432
        %v7434 = vadd.s32 %v7433, 536870912
        %v7435 = vshrl.u32 %v7434, 30
        %v7436 = vshll.u32 %v7435, 30
        %v7437 = vsub.s32 %v7433, %v7436
        %vm7438 = vcmp.lt.s32.totalorder %v7437, 0
        %v7439 = vsub.s32 0, %v7437
        %v7440 = vsel %vm7438, %v7439, %v7437
        %v7441 = vclz %v7440
        %v7442 = vsub.s32 %v7441, 2
        %vm7443 = vcmp.gt.s32.totalorder 0, %v7442
        %v7444 = vsel %vm7443, 0, %v7442
        %v7445 = vsub.s32 32, %v7444
        %v7446 = vshll.u32 %v7437, %v7444
        %v7447 = vshrl.u32 %v7429, %v7445
        %v7448 = vor.u32 %v7446, %v7447
        %v7449 = vsub.s32 4294967266, %v7444
        %v7450 = vadd.s32 %v7449, 127
        %v7451 = vshll.u32 %v7450, 23
        %v7452 = vor.u32 4788187, %v7451
        %v7453 = vand.u32 2147483647, %v7452
        %v7455 = vcvt.s32.f32 %v7448
        %v7456 = vmul.f32 %v7455, %v7453
        %v7457 = vxor.u32 %v7456, 2147483648
        %v7458 = vsel %vm7375, %v7457, %v7456
        %v7459 = vsub.s32 4, %v7435
        %v7460 = vsel %vm7375, %v7459, %v7435
        %v7461 = vsel %vm7374, %v1896, %v7458
        %v7462 = vsel %vm7374, 0, %v7460
        %v7463 = vcosq.f32.pop %v7461
        %v7464 = vsinq.f32.pop %v7461
        %vm7465 = vweird.f32 %v1896
        %v7466 = vadd.s32 %v7462, 3
        %v7467 = vand.u32 %v7466, 3
        %vm7468 = vcmp.lt.s32.totalorder %v7467, 2
        %vm7469 = vcmp.eq.s32.totalorder %v7467, 0
        %v7470 = vxor.u32 %v7464, 2147483648
        %v7471 = vsel %vm7469, %v7463, %v7470
        %vm7472 = vcmp.eq.s32.totalorder %v7467, 2
        %v7473 = vxor.u32 %v7463, 2147483648
        %v7474 = vsel %vm7472, %v7473, %v7464
        %v7475 = vsel %vm7468, %v7471, %v7474
        %v7476 = vsel %vm7465, nan, %v7475
        %v7477 = vand.u32 2147483647, %v1897
        %vm7478 = vcmp.le.f32.partialorder %v7477, 0.7853982
        %vm7479 = vcmp.lt.s32.totalorder %v1897, 0
        %v7480 = vand.u32 %v1897, 2139095040
        %v7481 = vshrl.u32 %v7480, 23
        %v7482 = vsub.s32 %v7481, 127
        %v7483 = vand.u32 2147483647, %v1897
        %v7484 = vand.u32 %v7483, 8388607
        %v7485 = vor.u32 %v7484, 8388608
        %v7486 = vsub.s32 0, %v7485
        %v7487 = vadd.s32 %v7482, 1
        %vm7488 = vcmp.gt.s32.totalorder %v7487, 0
        %v7489 = vsel %vm7488, %v7487, 0
        %v7490 = vshrl.u32 %v7489, 5
        %v7491 = vand.u32 %v7489, 31
        %v7492 = vsub.s32 32, %v7491
        %v7493 = vshrl.u32 683565275, %v7492
        %v7494 = vshll.u32 683565275, %v7491
        %v7495 = vshrl.u32 2475754826, %v7492
        %v7496 = vor.u32 %v7494, %v7495
        %v7497 = vshll.u32 2475754826, %v7491
        %v7498 = vshrl.u32 2131351028, %v7492
        %v7499 = vor.u32 %v7497, %v7498
        %v7500 = vshll.u32 2131351028, %v7491
        %v7501 = vshrl.u32 2102212464, %v7492
        %v7502 = vor.u32 %v7500, %v7501
        %v7503 = vshll.u32 2102212464, %v7491
        %v7504 = vshrl.u32 920167782, %v7492
        %v7505 = vor.u32 %v7503, %v7504
        %v7506 = vshll.u32 920167782, %v7491
        %v7507 = vshrl.u32 1326507024, %v7492
        %v7508 = vor.u32 %v7506, %v7507
        %vm7509 = vcmp.lt.s32.totalorder %v7490, 1
        %vm7510 = vcmp.lt.s32.totalorder %v7490, 2
        %vm7511 = vcmp.lt.s32.totalorder %v7490, 3
        %vm7512 = vcmp.lt.s32.totalorder %v7490, 4
        %v7513 = vsel %vm7509, %v7493, %v7496
        %v7514 = vsel %vm7512, %v7502, 2102212464
        %v7515 = vsel %vm7511, %v7499, %v7514
        %v7516 = vsel %vm7510, %v7513, %v7515
        %v7517 = vsel %vm7509, %v7496, %v7499
        %v7518 = vsel %vm7512, %v7505, 920167782
        %v7519 = vsel %vm7511, %v7502, %v7518
        %v7520 = vsel %vm7510, %v7517, %v7519
        %v7521 = vsel %vm7509, %v7499, %v7502
        %v7522 = vsel %vm7512, %v7508, 1326507024
        %v7523 = vsel %vm7511, %v7505, %v7522
        %v7524 = vsel %vm7510, %v7521, %v7523
        %v7525 = vshll.u32 %v7485, 8
        %v7526 = vmul.u32.u64.compose %v7525, %v7524
        %v7527 = vextract.low.u32 %v7526
        %v7528 = vextract.high.u32 %v7526
        %v7529 = vmul.u32.u64.compose %v7525, %v7520
        %v7530 = vextract.low.u32 %v7529
        %v7531 = vextract.high.u32 %v7529
        %v7532 = vmul.u32 %v7525, %v7516
        %v7533 = vadd.s32 %v7528, %v7530
        %vm7534 = vc.u32 %v7528, %v7530
        %v7535 = vadd.s32 %v7531, 1
        %v7536 = vsel %vm7534, %v7535, %v7531
        %v7537 = vadd.s32 %v7532, %v7536
        %v7538 = vadd.s32 %v7537, 536870912
        %v7539 = vshrl.u32 %v7538, 30
        %v7540 = vshll.u32 %v7539, 30
        %v7541 = vsub.s32 %v7537, %v7540
        %vm7542 = vcmp.lt.s32.totalorder %v7541, 0
        %v7543 = vsub.s32 0, %v7541
        %v7544 = vsel %vm7542, %v7543, %v7541
        %v7545 = vclz %v7544
        %v7546 = vsub.s32 %v7545, 2
        %vm7547 = vcmp.gt.s32.totalorder 0, %v7546
        %v7548 = vsel %vm7547, 0, %v7546
        %v7549 = vsub.s32 32, %v7548
        %v7550 = vshll.u32 %v7541, %v7548
        %v7551 = vshrl.u32 %v7533, %v7549
        %v7552 = vor.u32 %v7550, %v7551
        %v7553 = vsub.s32 4294967266, %v7548
        %v7554 = vadd.s32 %v7553, 127
        %v7555 = vshll.u32 %v7554, 23
        %v7556 = vor.u32 4788187, %v7555
        %v7557 = vand.u32 2147483647, %v7556
        %v7559 = vcvt.s32.f32 %v7552
        %v7560 = vmul.f32 %v7559, %v7557
        %v7561 = vxor.u32 %v7560, 2147483648
        %v7562 = vsel %vm7479, %v7561, %v7560
        %v7563 = vsub.s32 4, %v7539
        %v7564 = vsel %vm7479, %v7563, %v7539
        %v7565 = vsel %vm7478, %v1897, %v7562
        %v7566 = vsel %vm7478, 0, %v7564
        %v7567 = vcosq.f32.pop %v7565
        %v7568 = vsinq.f32.pop %v7565
        %vm7569 = vweird.f32 %v1897
        %v7570 = vadd.s32 %v7566, 3
        %v7571 = vand.u32 %v7570, 3
        %vm7572 = vcmp.lt.s32.totalorder %v7571, 2
        %vm7573 = vcmp.eq.s32.totalorder %v7571, 0
        %v7574 = vxor.u32 %v7568, 2147483648
        %v7575 = vsel %vm7573, %v7567, %v7574
        %vm7576 = vcmp.eq.s32.totalorder %v7571, 2
        %v7577 = vxor.u32 %v7567, 2147483648
        %v7578 = vsel %vm7576, %v7577, %v7568
        %v7579 = vsel %vm7572, %v7575, %v7578
        %v7580 = vsel %vm7569, nan, %v7579
        %v7581 = vand.u32 2147483647, %v1898
        %vm7582 = vcmp.le.f32.partialorder %v7581, 0.7853982
        %vm7583 = vcmp.lt.s32.totalorder %v1898, 0
        %v7584 = vand.u32 %v1898, 2139095040
        %v7585 = vshrl.u32 %v7584, 23
        %v7586 = vsub.s32 %v7585, 127
        %v7587 = vand.u32 2147483647, %v1898
        %v7588 = vand.u32 %v7587, 8388607
        %v7589 = vor.u32 %v7588, 8388608
        %v7590 = vsub.s32 0, %v7589
        %v7591 = vadd.s32 %v7586, 1
        %vm7592 = vcmp.gt.s32.totalorder %v7591, 0
        %v7593 = vsel %vm7592, %v7591, 0
        %v7594 = vshrl.u32 %v7593, 5
        %v7595 = vand.u32 %v7593, 31
        %v7596 = vsub.s32 32, %v7595
        %v7597 = vshrl.u32 683565275, %v7596
        %v7598 = vshll.u32 683565275, %v7595
        %v7599 = vshrl.u32 2475754826, %v7596
        %v7600 = vor.u32 %v7598, %v7599
        %v7601 = vshll.u32 2475754826, %v7595
        %v7602 = vshrl.u32 2131351028, %v7596
        %v7603 = vor.u32 %v7601, %v7602
        %v7604 = vshll.u32 2131351028, %v7595
        %v7605 = vshrl.u32 2102212464, %v7596
        %v7606 = vor.u32 %v7604, %v7605
        %v7607 = vshll.u32 2102212464, %v7595
        %v7608 = vshrl.u32 920167782, %v7596
        %v7609 = vor.u32 %v7607, %v7608
        %v7610 = vshll.u32 920167782, %v7595
        %v7611 = vshrl.u32 1326507024, %v7596
        %v7612 = vor.u32 %v7610, %v7611
        %vm7613 = vcmp.lt.s32.totalorder %v7594, 1
        %vm7614 = vcmp.lt.s32.totalorder %v7594, 2
        %vm7615 = vcmp.lt.s32.totalorder %v7594, 3
        %vm7616 = vcmp.lt.s32.totalorder %v7594, 4
        %v7617 = vsel %vm7613, %v7597, %v7600
        %v7618 = vsel %vm7616, %v7606, 2102212464
        %v7619 = vsel %vm7615, %v7603, %v7618
        %v7620 = vsel %vm7614, %v7617, %v7619
        %v7621 = vsel %vm7613, %v7600, %v7603
        %v7622 = vsel %vm7616, %v7609, 920167782
        %v7623 = vsel %vm7615, %v7606, %v7622
        %v7624 = vsel %vm7614, %v7621, %v7623
        %v7625 = vsel %vm7613, %v7603, %v7606
        %v7626 = vsel %vm7616, %v7612, 1326507024
        %v7627 = vsel %vm7615, %v7609, %v7626
        %v7628 = vsel %vm7614, %v7625, %v7627
        %v7629 = vshll.u32 %v7589, 8
        %v7630 = vmul.u32.u64.compose %v7629, %v7628
        %v7631 = vextract.low.u32 %v7630
        %v7632 = vextract.high.u32 %v7630
        %v7633 = vmul.u32.u64.compose %v7629, %v7624
        %v7634 = vextract.low.u32 %v7633
        %v7635 = vextract.high.u32 %v7633
        %v7636 = vmul.u32 %v7629, %v7620
        %v7637 = vadd.s32 %v7632, %v7634
        %vm7638 = vc.u32 %v7632, %v7634
        %v7639 = vadd.s32 %v7635, 1
        %v7640 = vsel %vm7638, %v7639, %v7635
        %v7641 = vadd.s32 %v7636, %v7640
        %v7642 = vadd.s32 %v7641, 536870912
        %v7643 = vshrl.u32 %v7642, 30
        %v7644 = vshll.u32 %v7643, 30
        %v7645 = vsub.s32 %v7641, %v7644
        %vm7646 = vcmp.lt.s32.totalorder %v7645, 0
        %v7647 = vsub.s32 0, %v7645
        %v7648 = vsel %vm7646, %v7647, %v7645
        %v7649 = vclz %v7648
        %v7650 = vsub.s32 %v7649, 2
        %vm7651 = vcmp.gt.s32.totalorder 0, %v7650
        %v7652 = vsel %vm7651, 0, %v7650
        %v7653 = vsub.s32 32, %v7652
        %v7654 = vshll.u32 %v7645, %v7652
        %v7655 = vshrl.u32 %v7637, %v7653
        %v7656 = vor.u32 %v7654, %v7655
        %v7657 = vsub.s32 4294967266, %v7652
        %v7658 = vadd.s32 %v7657, 127
        %v7659 = vshll.u32 %v7658, 23
        %v7660 = vor.u32 4788187, %v7659
        %v7661 = vand.u32 2147483647, %v7660
        %v7663 = vcvt.s32.f32 %v7656
        %v7664 = vmul.f32 %v7663, %v7661
        %v7665 = vxor.u32 %v7664, 2147483648
        %v7666 = vsel %vm7583, %v7665, %v7664
        %v7667 = vsub.s32 4, %v7643
        %v7668 = vsel %vm7583, %v7667, %v7643
        %v7669 = vsel %vm7582, %v1898, %v7666
        %v7670 = vsel %vm7582, 0, %v7668
        %v7671 = vcosq.f32.pop %v7669
        %v7672 = vsinq.f32.pop %v7669
        %vm7673 = vweird.f32 %v1898
        %v7674 = vadd.s32 %v7670, 3
        %v7675 = vand.u32 %v7674, 3
        %vm7676 = vcmp.lt.s32.totalorder %v7675, 2
        %vm7677 = vcmp.eq.s32.totalorder %v7675, 0
        %v7678 = vxor.u32 %v7672, 2147483648
        %v7679 = vsel %vm7677, %v7671, %v7678
        %vm7680 = vcmp.eq.s32.totalorder %v7675, 2
        %v7681 = vxor.u32 %v7671, 2147483648
        %v7682 = vsel %vm7680, %v7681, %v7672
        %v7683 = vsel %vm7676, %v7679, %v7682
        %v7684 = vsel %vm7673, nan, %v7683
        %v7685 = vand.u32 2147483647, %v1899
        %vm7686 = vcmp.le.f32.partialorder %v7685, 0.7853982
        %vm7687 = vcmp.lt.s32.totalorder %v1899, 0
        %v7688 = vand.u32 %v1899, 2139095040
        %v7689 = vshrl.u32 %v7688, 23
        %v7690 = vsub.s32 %v7689, 127
        %v7691 = vand.u32 2147483647, %v1899
        %v7692 = vand.u32 %v7691, 8388607
        %v7693 = vor.u32 %v7692, 8388608
        %v7694 = vsub.s32 0, %v7693
        %v7695 = vadd.s32 %v7690, 1
        %vm7696 = vcmp.gt.s32.totalorder %v7695, 0
        %v7697 = vsel %vm7696, %v7695, 0
        %v7698 = vshrl.u32 %v7697, 5
        %v7699 = vand.u32 %v7697, 31
        %v7700 = vsub.s32 32, %v7699
        %v7701 = vshrl.u32 683565275, %v7700
        %v7702 = vshll.u32 683565275, %v7699
        %v7703 = vshrl.u32 2475754826, %v7700
        %v7704 = vor.u32 %v7702, %v7703
        %v7705 = vshll.u32 2475754826, %v7699
        %v7706 = vshrl.u32 2131351028, %v7700
        %v7707 = vor.u32 %v7705, %v7706
        %v7708 = vshll.u32 2131351028, %v7699
        %v7709 = vshrl.u32 2102212464, %v7700
        %v7710 = vor.u32 %v7708, %v7709
        %v7711 = vshll.u32 2102212464, %v7699
        %v7712 = vshrl.u32 920167782, %v7700
        %v7713 = vor.u32 %v7711, %v7712
        %v7714 = vshll.u32 920167782, %v7699
        %v7715 = vshrl.u32 1326507024, %v7700
        %v7716 = vor.u32 %v7714, %v7715
        %vm7717 = vcmp.lt.s32.totalorder %v7698, 1
        %vm7718 = vcmp.lt.s32.totalorder %v7698, 2
        %vm7719 = vcmp.lt.s32.totalorder %v7698, 3
        %vm7720 = vcmp.lt.s32.totalorder %v7698, 4
        %v7721 = vsel %vm7717, %v7701, %v7704
        %v7722 = vsel %vm7720, %v7710, 2102212464
        %v7723 = vsel %vm7719, %v7707, %v7722
        %v7724 = vsel %vm7718, %v7721, %v7723
        %v7725 = vsel %vm7717, %v7704, %v7707
        %v7726 = vsel %vm7720, %v7713, 920167782
        %v7727 = vsel %vm7719, %v7710, %v7726
        %v7728 = vsel %vm7718, %v7725, %v7727
        %v7729 = vsel %vm7717, %v7707, %v7710
        %v7730 = vsel %vm7720, %v7716, 1326507024
        %v7731 = vsel %vm7719, %v7713, %v7730
        %v7732 = vsel %vm7718, %v7729, %v7731
        %v7733 = vshll.u32 %v7693, 8
        %v7734 = vmul.u32.u64.compose %v7733, %v7732
        %v7735 = vextract.low.u32 %v7734
        %v7736 = vextract.high.u32 %v7734
        %v7737 = vmul.u32.u64.compose %v7733, %v7728
        %v7738 = vextract.low.u32 %v7737
        %v7739 = vextract.high.u32 %v7737
        %v7740 = vmul.u32 %v7733, %v7724
        %v7741 = vadd.s32 %v7736, %v7738
        %vm7742 = vc.u32 %v7736, %v7738
        %v7743 = vadd.s32 %v7739, 1
        %v7744 = vsel %vm7742, %v7743, %v7739
        %v7745 = vadd.s32 %v7740, %v7744
        %v7746 = vadd.s32 %v7745, 536870912
        %v7747 = vshrl.u32 %v7746, 30
        %v7748 = vshll.u32 %v7747, 30
        %v7749 = vsub.s32 %v7745, %v7748
        %vm7750 = vcmp.lt.s32.totalorder %v7749, 0
        %v7751 = vsub.s32 0, %v7749
        %v7752 = vsel %vm7750, %v7751, %v7749
        %v7753 = vclz %v7752
        %v7754 = vsub.s32 %v7753, 2
        %vm7755 = vcmp.gt.s32.totalorder 0, %v7754
        %v7756 = vsel %vm7755, 0, %v7754
        %v7757 = vsub.s32 32, %v7756
        %v7758 = vshll.u32 %v7749, %v7756
        %v7759 = vshrl.u32 %v7741, %v7757
        %v7760 = vor.u32 %v7758, %v7759
        %v7761 = vsub.s32 4294967266, %v7756
        %v7762 = vadd.s32 %v7761, 127
        %v7763 = vshll.u32 %v7762, 23
        %v7764 = vor.u32 4788187, %v7763
        %v7765 = vand.u32 2147483647, %v7764
        %v7767 = vcvt.s32.f32 %v7760
        %v7768 = vmul.f32 %v7767, %v7765
        %v7769 = vxor.u32 %v7768, 2147483648
        %v7770 = vsel %vm7687, %v7769, %v7768
        %v7771 = vsub.s32 4, %v7747
        %v7772 = vsel %vm7687, %v7771, %v7747
        %v7773 = vsel %vm7686, %v1899, %v7770
        %v7774 = vsel %vm7686, 0, %v7772
        %v7775 = vcosq.f32.pop %v7773
        %v7776 = vsinq.f32.pop %v7773
        %vm7777 = vweird.f32 %v1899
        %v7778 = vadd.s32 %v7774, 3
        %v7779 = vand.u32 %v7778, 3
        %vm7780 = vcmp.lt.s32.totalorder %v7779, 2
        %vm7781 = vcmp.eq.s32.totalorder %v7779, 0
        %v7782 = vxor.u32 %v7776, 2147483648
        %v7783 = vsel %vm7781, %v7775, %v7782
        %vm7784 = vcmp.eq.s32.totalorder %v7779, 2
        %v7785 = vxor.u32 %v7775, 2147483648
        %v7786 = vsel %vm7784, %v7785, %v7776
        %v7787 = vsel %vm7780, %v7783, %v7786
        %v7788 = vsel %vm7777, nan, %v7787
        %v7789 = vmul.f32 %v6228, %v6062
        %v7790 = vmul.f32 %v6332, %v6064
        %v7791 = vmul.f32 %v6436, %v6066
        %v7792 = vmul.f32 %v6540, %v6068
        %v7793 = vmul.f32 %v6644, %v6070
        %v7794 = vmul.f32 %v6748, %v6072
        %v7795 = vmul.f32 %v6852, %v6074
        %v7796 = vmul.f32 %v6956, %v6076
        %v7797 = vmul.f32 %v7060, %v6078
        %v7798 = vmul.f32 %v7164, %v6080
        %v7799 = vmul.f32 %v7268, %v6082
        %v7800 = vmul.f32 %v7372, %v6084
        %v7801 = vmul.f32 %v7476, %v6086
        %v7802 = vmul.f32 %v7580, %v6088
        %v7803 = vmul.f32 %v7684, %v6090
        %v7804 = vmul.f32 %v7788, %v6092
        %v7805 = vand.u32 2147483647, %v1900
        %vm7806 = vcmp.le.f32.partialorder %v7805, 0.7853982
        %vm7807 = vcmp.lt.s32.totalorder %v1900, 0
        %v7808 = vand.u32 %v1900, 2139095040
        %v7809 = vshrl.u32 %v7808, 23
        %v7810 = vsub.s32 %v7809, 127
        %v7811 = vand.u32 2147483647, %v1900
        %v7812 = vand.u32 %v7811, 8388607
        %v7813 = vor.u32 %v7812, 8388608
        %v7814 = vsub.s32 0, %v7813
        %v7815 = vadd.s32 %v7810, 1
        %vm7816 = vcmp.gt.s32.totalorder %v7815, 0
        %v7817 = vsel %vm7816, %v7815, 0
        %v7818 = vshrl.u32 %v7817, 5
        %v7819 = vand.u32 %v7817, 31
        %v7820 = vsub.s32 32, %v7819
        %v7821 = vshrl.u32 683565275, %v7820
        %v7822 = vshll.u32 683565275, %v7819
        %v7823 = vshrl.u32 2475754826, %v7820
        %v7824 = vor.u32 %v7822, %v7823
        %v7825 = vshll.u32 2475754826, %v7819
        %v7826 = vshrl.u32 2131351028, %v7820
        %v7827 = vor.u32 %v7825, %v7826
        %v7828 = vshll.u32 2131351028, %v7819
        %v7829 = vshrl.u32 2102212464, %v7820
        %v7830 = vor.u32 %v7828, %v7829
        %v7831 = vshll.u32 2102212464, %v7819
        %v7832 = vshrl.u32 920167782, %v7820
        %v7833 = vor.u32 %v7831, %v7832
        %v7834 = vshll.u32 920167782, %v7819
        %v7835 = vshrl.u32 1326507024, %v7820
        %v7836 = vor.u32 %v7834, %v7835
        %vm7837 = vcmp.lt.s32.totalorder %v7818, 1
        %vm7838 = vcmp.lt.s32.totalorder %v7818, 2
        %vm7839 = vcmp.lt.s32.totalorder %v7818, 3
        %vm7840 = vcmp.lt.s32.totalorder %v7818, 4
        %v7841 = vsel %vm7837, %v7821, %v7824
        %v7842 = vsel %vm7840, %v7830, 2102212464
        %v7843 = vsel %vm7839, %v7827, %v7842
        %v7844 = vsel %vm7838, %v7841, %v7843
        %v7845 = vsel %vm7837, %v7824, %v7827
        %v7846 = vsel %vm7840, %v7833, 920167782
        %v7847 = vsel %vm7839, %v7830, %v7846
        %v7848 = vsel %vm7838, %v7845, %v7847
        %v7849 = vsel %vm7837, %v7827, %v7830
        %v7850 = vsel %vm7840, %v7836, 1326507024
        %v7851 = vsel %vm7839, %v7833, %v7850
        %v7852 = vsel %vm7838, %v7849, %v7851
        %v7853 = vshll.u32 %v7813, 8
        %v7854 = vmul.u32.u64.compose %v7853, %v7852
        %v7855 = vextract.low.u32 %v7854
        %v7856 = vextract.high.u32 %v7854
        %v7857 = vmul.u32.u64.compose %v7853, %v7848
        %v7858 = vextract.low.u32 %v7857
        %v7859 = vextract.high.u32 %v7857
        %v7860 = vmul.u32 %v7853, %v7844
        %v7861 = vadd.s32 %v7856, %v7858
        %vm7862 = vc.u32 %v7856, %v7858
        %v7863 = vadd.s32 %v7859, 1
        %v7864 = vsel %vm7862, %v7863, %v7859
        %v7865 = vadd.s32 %v7860, %v7864
        %v7866 = vadd.s32 %v7865, 536870912
        %v7867 = vshrl.u32 %v7866, 30
        %v7868 = vshll.u32 %v7867, 30
        %v7869 = vsub.s32 %v7865, %v7868
        %vm7870 = vcmp.lt.s32.totalorder %v7869, 0
        %v7871 = vsub.s32 0, %v7869
        %v7872 = vsel %vm7870, %v7871, %v7869
        %v7873 = vclz %v7872
        %v7874 = vsub.s32 %v7873, 2
        %vm7875 = vcmp.gt.s32.totalorder 0, %v7874
        %v7876 = vsel %vm7875, 0, %v7874
        %v7877 = vsub.s32 32, %v7876
        %v7878 = vshll.u32 %v7869, %v7876
        %v7879 = vshrl.u32 %v7861, %v7877
        %v7880 = vor.u32 %v7878, %v7879
        %v7881 = vsub.s32 4294967266, %v7876
        %v7882 = vadd.s32 %v7881, 127
        %v7883 = vshll.u32 %v7882, 23
        %v7884 = vor.u32 4788187, %v7883
        %v7885 = vand.u32 2147483647, %v7884
        %v7887 = vcvt.s32.f32 %v7880
        %v7888 = vmul.f32 %v7887, %v7885
        %v7889 = vxor.u32 %v7888, 2147483648
        %v7890 = vsel %vm7807, %v7889, %v7888
        %v7891 = vsub.s32 4, %v7867
        %v7892 = vsel %vm7807, %v7891, %v7867
        %v7893 = vsel %vm7806, %v1900, %v7890
        %v7894 = vsel %vm7806, 0, %v7892
        %v7895 = vcosq.f32.pop %v7893
        %v7896 = vsinq.f32.pop %v7893
        %vm7897 = vweird.f32 %v1900
        %v7898 = vand.u32 %v7894, 3
        %vm7899 = vcmp.lt.s32.totalorder %v7898, 2
        %vm7900 = vcmp.eq.s32.totalorder %v7898, 0
        %v7901 = vxor.u32 %v7896, 2147483648
        %v7902 = vsel %vm7900, %v7895, %v7901
        %vm7903 = vcmp.eq.s32.totalorder %v7898, 2
        %v7904 = vxor.u32 %v7895, 2147483648
        %v7905 = vsel %vm7903, %v7904, %v7896
        %v7906 = vsel %vm7899, %v7902, %v7905
        %v7907 = vsel %vm7897, nan, %v7906
        %v7908 = vand.u32 2147483647, %v1901
        %vm7909 = vcmp.le.f32.partialorder %v7908, 0.7853982
        %vm7910 = vcmp.lt.s32.totalorder %v1901, 0
        %v7911 = vand.u32 %v1901, 2139095040
        %v7912 = vshrl.u32 %v7911, 23
        %v7913 = vsub.s32 %v7912, 127
        %v7914 = vand.u32 2147483647, %v1901
        %v7915 = vand.u32 %v7914, 8388607
        %v7916 = vor.u32 %v7915, 8388608
        %v7917 = vsub.s32 0, %v7916
        %v7918 = vadd.s32 %v7913, 1
        %vm7919 = vcmp.gt.s32.totalorder %v7918, 0
        %v7920 = vsel %vm7919, %v7918, 0
        %v7921 = vshrl.u32 %v7920, 5
        %v7922 = vand.u32 %v7920, 31
        %v7923 = vsub.s32 32, %v7922
        %v7924 = vshrl.u32 683565275, %v7923
        %v7925 = vshll.u32 683565275, %v7922
        %v7926 = vshrl.u32 2475754826, %v7923
        %v7927 = vor.u32 %v7925, %v7926
        %v7928 = vshll.u32 2475754826, %v7922
        %v7929 = vshrl.u32 2131351028, %v7923
        %v7930 = vor.u32 %v7928, %v7929
        %v7931 = vshll.u32 2131351028, %v7922
        %v7932 = vshrl.u32 2102212464, %v7923
        %v7933 = vor.u32 %v7931, %v7932
        %v7934 = vshll.u32 2102212464, %v7922
        %v7935 = vshrl.u32 920167782, %v7923
        %v7936 = vor.u32 %v7934, %v7935
        %v7937 = vshll.u32 920167782, %v7922
        %v7938 = vshrl.u32 1326507024, %v7923
        %v7939 = vor.u32 %v7937, %v7938
        %vm7940 = vcmp.lt.s32.totalorder %v7921, 1
        %vm7941 = vcmp.lt.s32.totalorder %v7921, 2
        %vm7942 = vcmp.lt.s32.totalorder %v7921, 3
        %vm7943 = vcmp.lt.s32.totalorder %v7921, 4
        %v7944 = vsel %vm7940, %v7924, %v7927
        %v7945 = vsel %vm7943, %v7933, 2102212464
        %v7946 = vsel %vm7942, %v7930, %v7945
        %v7947 = vsel %vm7941, %v7944, %v7946
        %v7948 = vsel %vm7940, %v7927, %v7930
        %v7949 = vsel %vm7943, %v7936, 920167782
        %v7950 = vsel %vm7942, %v7933, %v7949
        %v7951 = vsel %vm7941, %v7948, %v7950
        %v7952 = vsel %vm7940, %v7930, %v7933
        %v7953 = vsel %vm7943, %v7939, 1326507024
        %v7954 = vsel %vm7942, %v7936, %v7953
        %v7955 = vsel %vm7941, %v7952, %v7954
        %v7956 = vshll.u32 %v7916, 8
        %v7957 = vmul.u32.u64.compose %v7956, %v7955
        %v7958 = vextract.low.u32 %v7957
        %v7959 = vextract.high.u32 %v7957
        %v7960 = vmul.u32.u64.compose %v7956, %v7951
        %v7961 = vextract.low.u32 %v7960
        %v7962 = vextract.high.u32 %v7960
        %v7963 = vmul.u32 %v7956, %v7947
        %v7964 = vadd.s32 %v7959, %v7961
        %vm7965 = vc.u32 %v7959, %v7961
        %v7966 = vadd.s32 %v7962, 1
        %v7967 = vsel %vm7965, %v7966, %v7962
        %v7968 = vadd.s32 %v7963, %v7967
        %v7969 = vadd.s32 %v7968, 536870912
        %v7970 = vshrl.u32 %v7969, 30
        %v7971 = vshll.u32 %v7970, 30
        %v7972 = vsub.s32 %v7968, %v7971
        %vm7973 = vcmp.lt.s32.totalorder %v7972, 0
        %v7974 = vsub.s32 0, %v7972
        %v7975 = vsel %vm7973, %v7974, %v7972
        %v7976 = vclz %v7975
        %v7977 = vsub.s32 %v7976, 2
        %vm7978 = vcmp.gt.s32.totalorder 0, %v7977
        %v7979 = vsel %vm7978, 0, %v7977
        %v7980 = vsub.s32 32, %v7979
        %v7981 = vshll.u32 %v7972, %v7979
        %v7982 = vshrl.u32 %v7964, %v7980
        %v7983 = vor.u32 %v7981, %v7982
        %v7984 = vsub.s32 4294967266, %v7979
        %v7985 = vadd.s32 %v7984, 127
        %v7986 = vshll.u32 %v7985, 23
        %v7987 = vor.u32 4788187, %v7986
        %v7988 = vand.u32 2147483647, %v7987
        %v7990 = vcvt.s32.f32 %v7983
        %v7991 = vmul.f32 %v7990, %v7988
        %v7992 = vxor.u32 %v7991, 2147483648
        %v7993 = vsel %vm7910, %v7992, %v7991
        %v7994 = vsub.s32 4, %v7970
        %v7995 = vsel %vm7910, %v7994, %v7970
        %v7996 = vsel %vm7909, %v1901, %v7993
        %v7997 = vsel %vm7909, 0, %v7995
        %v7998 = vcosq.f32.pop %v7996
        %v7999 = vsinq.f32.pop %v7996
        %vm8000 = vweird.f32 %v1901
        %v8001 = vand.u32 %v7997, 3
        %vm8002 = vcmp.lt.s32.totalorder %v8001, 2
        %vm8003 = vcmp.eq.s32.totalorder %v8001, 0
        %v8004 = vxor.u32 %v7999, 2147483648
        %v8005 = vsel %vm8003, %v7998, %v8004
        %vm8006 = vcmp.eq.s32.totalorder %v8001, 2
        %v8007 = vxor.u32 %v7998, 2147483648
        %v8008 = vsel %vm8006, %v8007, %v7999
        %v8009 = vsel %vm8002, %v8005, %v8008
        %v8010 = vsel %vm8000, nan, %v8009
        %v8011 = vand.u32 2147483647, %v1902
        %vm8012 = vcmp.le.f32.partialorder %v8011, 0.7853982
        %vm8013 = vcmp.lt.s32.totalorder %v1902, 0
        %v8014 = vand.u32 %v1902, 2139095040
        %v8015 = vshrl.u32 %v8014, 23
        %v8016 = vsub.s32 %v8015, 127
        %v8017 = vand.u32 2147483647, %v1902
        %v8018 = vand.u32 %v8017, 8388607
        %v8019 = vor.u32 %v8018, 8388608
        %v8020 = vsub.s32 0, %v8019
        %v8021 = vadd.s32 %v8016, 1
        %vm8022 = vcmp.gt.s32.totalorder %v8021, 0
        %v8023 = vsel %vm8022, %v8021, 0
        %v8024 = vshrl.u32 %v8023, 5
        %v8025 = vand.u32 %v8023, 31
        %v8026 = vsub.s32 32, %v8025
        %v8027 = vshrl.u32 683565275, %v8026
        %v8028 = vshll.u32 683565275, %v8025
        %v8029 = vshrl.u32 2475754826, %v8026
        %v8030 = vor.u32 %v8028, %v8029
        %v8031 = vshll.u32 2475754826, %v8025
        %v8032 = vshrl.u32 2131351028, %v8026
        %v8033 = vor.u32 %v8031, %v8032
        %v8034 = vshll.u32 2131351028, %v8025
        %v8035 = vshrl.u32 2102212464, %v8026
        %v8036 = vor.u32 %v8034, %v8035
        %v8037 = vshll.u32 2102212464, %v8025
        %v8038 = vshrl.u32 920167782, %v8026
        %v8039 = vor.u32 %v8037, %v8038
        %v8040 = vshll.u32 920167782, %v8025
        %v8041 = vshrl.u32 1326507024, %v8026
        %v8042 = vor.u32 %v8040, %v8041
        %vm8043 = vcmp.lt.s32.totalorder %v8024, 1
        %vm8044 = vcmp.lt.s32.totalorder %v8024, 2
        %vm8045 = vcmp.lt.s32.totalorder %v8024, 3
        %vm8046 = vcmp.lt.s32.totalorder %v8024, 4
        %v8047 = vsel %vm8043, %v8027, %v8030
        %v8048 = vsel %vm8046, %v8036, 2102212464
        %v8049 = vsel %vm8045, %v8033, %v8048
        %v8050 = vsel %vm8044, %v8047, %v8049
        %v8051 = vsel %vm8043, %v8030, %v8033
        %v8052 = vsel %vm8046, %v8039, 920167782
        %v8053 = vsel %vm8045, %v8036, %v8052
        %v8054 = vsel %vm8044, %v8051, %v8053
        %v8055 = vsel %vm8043, %v8033, %v8036
        %v8056 = vsel %vm8046, %v8042, 1326507024
        %v8057 = vsel %vm8045, %v8039, %v8056
        %v8058 = vsel %vm8044, %v8055, %v8057
        %v8059 = vshll.u32 %v8019, 8
        %v8060 = vmul.u32.u64.compose %v8059, %v8058
        %v8061 = vextract.low.u32 %v8060
        %v8062 = vextract.high.u32 %v8060
        %v8063 = vmul.u32.u64.compose %v8059, %v8054
        %v8064 = vextract.low.u32 %v8063
        %v8065 = vextract.high.u32 %v8063
        %v8066 = vmul.u32 %v8059, %v8050
        %v8067 = vadd.s32 %v8062, %v8064
        %vm8068 = vc.u32 %v8062, %v8064
        %v8069 = vadd.s32 %v8065, 1
        %v8070 = vsel %vm8068, %v8069, %v8065
        %v8071 = vadd.s32 %v8066, %v8070
        %v8072 = vadd.s32 %v8071, 536870912
        %v8073 = vshrl.u32 %v8072, 30
        %v8074 = vshll.u32 %v8073, 30
        %v8075 = vsub.s32 %v8071, %v8074
        %vm8076 = vcmp.lt.s32.totalorder %v8075, 0
        %v8077 = vsub.s32 0, %v8075
        %v8078 = vsel %vm8076, %v8077, %v8075
        %v8079 = vclz %v8078
        %v8080 = vsub.s32 %v8079, 2
        %vm8081 = vcmp.gt.s32.totalorder 0, %v8080
        %v8082 = vsel %vm8081, 0, %v8080
        %v8083 = vsub.s32 32, %v8082
        %v8084 = vshll.u32 %v8075, %v8082
        %v8085 = vshrl.u32 %v8067, %v8083
        %v8086 = vor.u32 %v8084, %v8085
        %v8087 = vsub.s32 4294967266, %v8082
        %v8088 = vadd.s32 %v8087, 127
        %v8089 = vshll.u32 %v8088, 23
        %v8090 = vor.u32 4788187, %v8089
        %v8091 = vand.u32 2147483647, %v8090
        %v8093 = vcvt.s32.f32 %v8086
        %v8094 = vmul.f32 %v8093, %v8091
        %v8095 = vxor.u32 %v8094, 2147483648
        %v8096 = vsel %vm8013, %v8095, %v8094
        %v8097 = vsub.s32 4, %v8073
        %v8098 = vsel %vm8013, %v8097, %v8073
        %v8099 = vsel %vm8012, %v1902, %v8096
        %v8100 = vsel %vm8012, 0, %v8098
        %v8101 = vcosq.f32.pop %v8099
        %v8102 = vsinq.f32.pop %v8099
        %vm8103 = vweird.f32 %v1902
        %v8104 = vand.u32 %v8100, 3
        %vm8105 = vcmp.lt.s32.totalorder %v8104, 2
        %vm8106 = vcmp.eq.s32.totalorder %v8104, 0
        %v8107 = vxor.u32 %v8102, 2147483648
        %v8108 = vsel %vm8106, %v8101, %v8107
        %vm8109 = vcmp.eq.s32.totalorder %v8104, 2
        %v8110 = vxor.u32 %v8101, 2147483648
        %v8111 = vsel %vm8109, %v8110, %v8102
        %v8112 = vsel %vm8105, %v8108, %v8111
        %v8113 = vsel %vm8103, nan, %v8112
        %v8114 = vand.u32 2147483647, %v1903
        %vm8115 = vcmp.le.f32.partialorder %v8114, 0.7853982
        %vm8116 = vcmp.lt.s32.totalorder %v1903, 0
        %v8117 = vand.u32 %v1903, 2139095040
        %v8118 = vshrl.u32 %v8117, 23
        %v8119 = vsub.s32 %v8118, 127
        %v8120 = vand.u32 2147483647, %v1903
        %v8121 = vand.u32 %v8120, 8388607
        %v8122 = vor.u32 %v8121, 8388608
        %v8123 = vsub.s32 0, %v8122
        %v8124 = vadd.s32 %v8119, 1
        %vm8125 = vcmp.gt.s32.totalorder %v8124, 0
        %v8126 = vsel %vm8125, %v8124, 0
        %v8127 = vshrl.u32 %v8126, 5
        %v8128 = vand.u32 %v8126, 31
        %v8129 = vsub.s32 32, %v8128
        %v8130 = vshrl.u32 683565275, %v8129
        %v8131 = vshll.u32 683565275, %v8128
        %v8132 = vshrl.u32 2475754826, %v8129
        %v8133 = vor.u32 %v8131, %v8132
        %v8134 = vshll.u32 2475754826, %v8128
        %v8135 = vshrl.u32 2131351028, %v8129
        %v8136 = vor.u32 %v8134, %v8135
        %v8137 = vshll.u32 2131351028, %v8128
        %v8138 = vshrl.u32 2102212464, %v8129
        %v8139 = vor.u32 %v8137, %v8138
        %v8140 = vshll.u32 2102212464, %v8128
        %v8141 = vshrl.u32 920167782, %v8129
        %v8142 = vor.u32 %v8140, %v8141
        %v8143 = vshll.u32 920167782, %v8128
        %v8144 = vshrl.u32 1326507024, %v8129
        %v8145 = vor.u32 %v8143, %v8144
        %vm8146 = vcmp.lt.s32.totalorder %v8127, 1
        %vm8147 = vcmp.lt.s32.totalorder %v8127, 2
        %vm8148 = vcmp.lt.s32.totalorder %v8127, 3
        %vm8149 = vcmp.lt.s32.totalorder %v8127, 4
        %v8150 = vsel %vm8146, %v8130, %v8133
        %v8151 = vsel %vm8149, %v8139, 2102212464
        %v8152 = vsel %vm8148, %v8136, %v8151
        %v8153 = vsel %vm8147, %v8150, %v8152
        %v8154 = vsel %vm8146, %v8133, %v8136
        %v8155 = vsel %vm8149, %v8142, 920167782
        %v8156 = vsel %vm8148, %v8139, %v8155
        %v8157 = vsel %vm8147, %v8154, %v8156
        %v8158 = vsel %vm8146, %v8136, %v8139
        %v8159 = vsel %vm8149, %v8145, 1326507024
        %v8160 = vsel %vm8148, %v8142, %v8159
        %v8161 = vsel %vm8147, %v8158, %v8160
        %v8162 = vshll.u32 %v8122, 8
        %v8163 = vmul.u32.u64.compose %v8162, %v8161
        %v8164 = vextract.low.u32 %v8163
        %v8165 = vextract.high.u32 %v8163
        %v8166 = vmul.u32.u64.compose %v8162, %v8157
        %v8167 = vextract.low.u32 %v8166
        %v8168 = vextract.high.u32 %v8166
        %v8169 = vmul.u32 %v8162, %v8153
        %v8170 = vadd.s32 %v8165, %v8167
        %vm8171 = vc.u32 %v8165, %v8167
        %v8172 = vadd.s32 %v8168, 1
        %v8173 = vsel %vm8171, %v8172, %v8168
        %v8174 = vadd.s32 %v8169, %v8173
        %v8175 = vadd.s32 %v8174, 536870912
        %v8176 = vshrl.u32 %v8175, 30
        %v8177 = vshll.u32 %v8176, 30
        %v8178 = vsub.s32 %v8174, %v8177
        %vm8179 = vcmp.lt.s32.totalorder %v8178, 0
        %v8180 = vsub.s32 0, %v8178
        %v8181 = vsel %vm8179, %v8180, %v8178
        %v8182 = vclz %v8181
        %v8183 = vsub.s32 %v8182, 2
        %vm8184 = vcmp.gt.s32.totalorder 0, %v8183
        %v8185 = vsel %vm8184, 0, %v8183
        %v8186 = vsub.s32 32, %v8185
        %v8187 = vshll.u32 %v8178, %v8185
        %v8188 = vshrl.u32 %v8170, %v8186
        %v8189 = vor.u32 %v8187, %v8188
        %v8190 = vsub.s32 4294967266, %v8185
        %v8191 = vadd.s32 %v8190, 127
        %v8192 = vshll.u32 %v8191, 23
        %v8193 = vor.u32 4788187, %v8192
        %v8194 = vand.u32 2147483647, %v8193
        %v8196 = vcvt.s32.f32 %v8189
        %v8197 = vmul.f32 %v8196, %v8194
        %v8198 = vxor.u32 %v8197, 2147483648
        %v8199 = vsel %vm8116, %v8198, %v8197
        %v8200 = vsub.s32 4, %v8176
        %v8201 = vsel %vm8116, %v8200, %v8176
        %v8202 = vsel %vm8115, %v1903, %v8199
        %v8203 = vsel %vm8115, 0, %v8201
        %v8204 = vcosq.f32.pop %v8202
        %v8205 = vsinq.f32.pop %v8202
        %vm8206 = vweird.f32 %v1903
        %v8207 = vand.u32 %v8203, 3
        %vm8208 = vcmp.lt.s32.totalorder %v8207, 2
        %vm8209 = vcmp.eq.s32.totalorder %v8207, 0
        %v8210 = vxor.u32 %v8205, 2147483648
        %v8211 = vsel %vm8209, %v8204, %v8210
        %vm8212 = vcmp.eq.s32.totalorder %v8207, 2
        %v8213 = vxor.u32 %v8204, 2147483648
        %v8214 = vsel %vm8212, %v8213, %v8205
        %v8215 = vsel %vm8208, %v8211, %v8214
        %v8216 = vsel %vm8206, nan, %v8215
        %v8217 = vand.u32 2147483647, %v1904
        %vm8218 = vcmp.le.f32.partialorder %v8217, 0.7853982
        %vm8219 = vcmp.lt.s32.totalorder %v1904, 0
        %v8220 = vand.u32 %v1904, 2139095040
        %v8221 = vshrl.u32 %v8220, 23
        %v8222 = vsub.s32 %v8221, 127
        %v8223 = vand.u32 2147483647, %v1904
        %v8224 = vand.u32 %v8223, 8388607
        %v8225 = vor.u32 %v8224, 8388608
        %v8226 = vsub.s32 0, %v8225
        %v8227 = vadd.s32 %v8222, 1
        %vm8228 = vcmp.gt.s32.totalorder %v8227, 0
        %v8229 = vsel %vm8228, %v8227, 0
        %v8230 = vshrl.u32 %v8229, 5
        %v8231 = vand.u32 %v8229, 31
        %v8232 = vsub.s32 32, %v8231
        %v8233 = vshrl.u32 683565275, %v8232
        %v8234 = vshll.u32 683565275, %v8231
        %v8235 = vshrl.u32 2475754826, %v8232
        %v8236 = vor.u32 %v8234, %v8235
        %v8237 = vshll.u32 2475754826, %v8231
        %v8238 = vshrl.u32 2131351028, %v8232
        %v8239 = vor.u32 %v8237, %v8238
        %v8240 = vshll.u32 2131351028, %v8231
        %v8241 = vshrl.u32 2102212464, %v8232
        %v8242 = vor.u32 %v8240, %v8241
        %v8243 = vshll.u32 2102212464, %v8231
        %v8244 = vshrl.u32 920167782, %v8232
        %v8245 = vor.u32 %v8243, %v8244
        %v8246 = vshll.u32 920167782, %v8231
        %v8247 = vshrl.u32 1326507024, %v8232
        %v8248 = vor.u32 %v8246, %v8247
        %vm8249 = vcmp.lt.s32.totalorder %v8230, 1
        %vm8250 = vcmp.lt.s32.totalorder %v8230, 2
        %vm8251 = vcmp.lt.s32.totalorder %v8230, 3
        %vm8252 = vcmp.lt.s32.totalorder %v8230, 4
        %v8253 = vsel %vm8249, %v8233, %v8236
        %v8254 = vsel %vm8252, %v8242, 2102212464
        %v8255 = vsel %vm8251, %v8239, %v8254
        %v8256 = vsel %vm8250, %v8253, %v8255
        %v8257 = vsel %vm8249, %v8236, %v8239
        %v8258 = vsel %vm8252, %v8245, 920167782
        %v8259 = vsel %vm8251, %v8242, %v8258
        %v8260 = vsel %vm8250, %v8257, %v8259
        %v8261 = vsel %vm8249, %v8239, %v8242
        %v8262 = vsel %vm8252, %v8248, 1326507024
        %v8263 = vsel %vm8251, %v8245, %v8262
        %v8264 = vsel %vm8250, %v8261, %v8263
        %v8265 = vshll.u32 %v8225, 8
        %v8266 = vmul.u32.u64.compose %v8265, %v8264
        %v8267 = vextract.low.u32 %v8266
        %v8268 = vextract.high.u32 %v8266
        %v8269 = vmul.u32.u64.compose %v8265, %v8260
        %v8270 = vextract.low.u32 %v8269
        %v8271 = vextract.high.u32 %v8269
        %v8272 = vmul.u32 %v8265, %v8256
        %v8273 = vadd.s32 %v8268, %v8270
        %vm8274 = vc.u32 %v8268, %v8270
        %v8275 = vadd.s32 %v8271, 1
        %v8276 = vsel %vm8274, %v8275, %v8271
        %v8277 = vadd.s32 %v8272, %v8276
        %v8278 = vadd.s32 %v8277, 536870912
        %v8279 = vshrl.u32 %v8278, 30
        %v8280 = vshll.u32 %v8279, 30
        %v8281 = vsub.s32 %v8277, %v8280
        %vm8282 = vcmp.lt.s32.totalorder %v8281, 0
        %v8283 = vsub.s32 0, %v8281
        %v8284 = vsel %vm8282, %v8283, %v8281
        %v8285 = vclz %v8284
        %v8286 = vsub.s32 %v8285, 2
        %vm8287 = vcmp.gt.s32.totalorder 0, %v8286
        %v8288 = vsel %vm8287, 0, %v8286
        %v8289 = vsub.s32 32, %v8288
        %v8290 = vshll.u32 %v8281, %v8288
        %v8291 = vshrl.u32 %v8273, %v8289
        %v8292 = vor.u32 %v8290, %v8291
        %v8293 = vsub.s32 4294967266, %v8288
        %v8294 = vadd.s32 %v8293, 127
        %v8295 = vshll.u32 %v8294, 23
        %v8296 = vor.u32 4788187, %v8295
        %v8297 = vand.u32 2147483647, %v8296
        %v8299 = vcvt.s32.f32 %v8292
        %v8300 = vmul.f32 %v8299, %v8297
        %v8301 = vxor.u32 %v8300, 2147483648
        %v8302 = vsel %vm8219, %v8301, %v8300
        %v8303 = vsub.s32 4, %v8279
        %v8304 = vsel %vm8219, %v8303, %v8279
        %v8305 = vsel %vm8218, %v1904, %v8302
        %v8306 = vsel %vm8218, 0, %v8304
        %v8307 = vcosq.f32.pop %v8305
        %v8308 = vsinq.f32.pop %v8305
        %vm8309 = vweird.f32 %v1904
        %v8310 = vand.u32 %v8306, 3
        %vm8311 = vcmp.lt.s32.totalorder %v8310, 2
        %vm8312 = vcmp.eq.s32.totalorder %v8310, 0
        %v8313 = vxor.u32 %v8308, 2147483648
        %v8314 = vsel %vm8312, %v8307, %v8313
        %vm8315 = vcmp.eq.s32.totalorder %v8310, 2
        %v8316 = vxor.u32 %v8307, 2147483648
        %v8317 = vsel %vm8315, %v8316, %v8308
        %v8318 = vsel %vm8311, %v8314, %v8317
        %v8319 = vsel %vm8309, nan, %v8318
        %v8320 = vand.u32 2147483647, %v1905
        %vm8321 = vcmp.le.f32.partialorder %v8320, 0.7853982
        %vm8322 = vcmp.lt.s32.totalorder %v1905, 0
        %v8323 = vand.u32 %v1905, 2139095040
        %v8324 = vshrl.u32 %v8323, 23
        %v8325 = vsub.s32 %v8324, 127
        %v8326 = vand.u32 2147483647, %v1905
        %v8327 = vand.u32 %v8326, 8388607
        %v8328 = vor.u32 %v8327, 8388608
        %v8329 = vsub.s32 0, %v8328
        %v8330 = vadd.s32 %v8325, 1
        %vm8331 = vcmp.gt.s32.totalorder %v8330, 0
        %v8332 = vsel %vm8331, %v8330, 0
        %v8333 = vshrl.u32 %v8332, 5
        %v8334 = vand.u32 %v8332, 31
        %v8335 = vsub.s32 32, %v8334
        %v8336 = vshrl.u32 683565275, %v8335
        %v8337 = vshll.u32 683565275, %v8334
        %v8338 = vshrl.u32 2475754826, %v8335
        %v8339 = vor.u32 %v8337, %v8338
        %v8340 = vshll.u32 2475754826, %v8334
        %v8341 = vshrl.u32 2131351028, %v8335
        %v8342 = vor.u32 %v8340, %v8341
        %v8343 = vshll.u32 2131351028, %v8334
        %v8344 = vshrl.u32 2102212464, %v8335
        %v8345 = vor.u32 %v8343, %v8344
        %v8346 = vshll.u32 2102212464, %v8334
        %v8347 = vshrl.u32 920167782, %v8335
        %v8348 = vor.u32 %v8346, %v8347
        %v8349 = vshll.u32 920167782, %v8334
        %v8350 = vshrl.u32 1326507024, %v8335
        %v8351 = vor.u32 %v8349, %v8350
        %vm8352 = vcmp.lt.s32.totalorder %v8333, 1
        %vm8353 = vcmp.lt.s32.totalorder %v8333, 2
        %vm8354 = vcmp.lt.s32.totalorder %v8333, 3
        %vm8355 = vcmp.lt.s32.totalorder %v8333, 4
        %v8356 = vsel %vm8352, %v8336, %v8339
        %v8357 = vsel %vm8355, %v8345, 2102212464
        %v8358 = vsel %vm8354, %v8342, %v8357
        %v8359 = vsel %vm8353, %v8356, %v8358
        %v8360 = vsel %vm8352, %v8339, %v8342
        %v8361 = vsel %vm8355, %v8348, 920167782
        %v8362 = vsel %vm8354, %v8345, %v8361
        %v8363 = vsel %vm8353, %v8360, %v8362
        %v8364 = vsel %vm8352, %v8342, %v8345
        %v8365 = vsel %vm8355, %v8351, 1326507024
        %v8366 = vsel %vm8354, %v8348, %v8365
        %v8367 = vsel %vm8353, %v8364, %v8366
        %v8368 = vshll.u32 %v8328, 8
        %v8369 = vmul.u32.u64.compose %v8368, %v8367
        %v8370 = vextract.low.u32 %v8369
        %v8371 = vextract.high.u32 %v8369
        %v8372 = vmul.u32.u64.compose %v8368, %v8363
        %v8373 = vextract.low.u32 %v8372
        %v8374 = vextract.high.u32 %v8372
        %v8375 = vmul.u32 %v8368, %v8359
        %v8376 = vadd.s32 %v8371, %v8373
        %vm8377 = vc.u32 %v8371, %v8373
        %v8378 = vadd.s32 %v8374, 1
        %v8379 = vsel %vm8377, %v8378, %v8374
        %v8380 = vadd.s32 %v8375, %v8379
        %v8381 = vadd.s32 %v8380, 536870912
        %v8382 = vshrl.u32 %v8381, 30
        %v8383 = vshll.u32 %v8382, 30
        %v8384 = vsub.s32 %v8380, %v8383
        %vm8385 = vcmp.lt.s32.totalorder %v8384, 0
        %v8386 = vsub.s32 0, %v8384
        %v8387 = vsel %vm8385, %v8386, %v8384
        %v8388 = vclz %v8387
        %v8389 = vsub.s32 %v8388, 2
        %vm8390 = vcmp.gt.s32.totalorder 0, %v8389
        %v8391 = vsel %vm8390, 0, %v8389
        %v8392 = vsub.s32 32, %v8391
        %v8393 = vshll.u32 %v8384, %v8391
        %v8394 = vshrl.u32 %v8376, %v8392
        %v8395 = vor.u32 %v8393, %v8394
        %v8396 = vsub.s32 4294967266, %v8391
        %v8397 = vadd.s32 %v8396, 127
        %v8398 = vshll.u32 %v8397, 23
        %v8399 = vor.u32 4788187, %v8398
        %v8400 = vand.u32 2147483647, %v8399
        %v8402 = vcvt.s32.f32 %v8395
        %v8403 = vmul.f32 %v8402, %v8400
        %v8404 = vxor.u32 %v8403, 2147483648
        %v8405 = vsel %vm8322, %v8404, %v8403
        %v8406 = vsub.s32 4, %v8382
        %v8407 = vsel %vm8322, %v8406, %v8382
        %v8408 = vsel %vm8321, %v1905, %v8405
        %v8409 = vsel %vm8321, 0, %v8407
        %v8410 = vcosq.f32.pop %v8408
        %v8411 = vsinq.f32.pop %v8408
        %vm8412 = vweird.f32 %v1905
        %v8413 = vand.u32 %v8409, 3
        %vm8414 = vcmp.lt.s32.totalorder %v8413, 2
        %vm8415 = vcmp.eq.s32.totalorder %v8413, 0
        %v8416 = vxor.u32 %v8411, 2147483648
        %v8417 = vsel %vm8415, %v8410, %v8416
        %vm8418 = vcmp.eq.s32.totalorder %v8413, 2
        %v8419 = vxor.u32 %v8410, 2147483648
        %v8420 = vsel %vm8418, %v8419, %v8411
        %v8421 = vsel %vm8414, %v8417, %v8420
        %v8422 = vsel %vm8412, nan, %v8421
        %v8423 = vand.u32 2147483647, %v1906
        %vm8424 = vcmp.le.f32.partialorder %v8423, 0.7853982
        %vm8425 = vcmp.lt.s32.totalorder %v1906, 0
        %v8426 = vand.u32 %v1906, 2139095040
        %v8427 = vshrl.u32 %v8426, 23
        %v8428 = vsub.s32 %v8427, 127
        %v8429 = vand.u32 2147483647, %v1906
        %v8430 = vand.u32 %v8429, 8388607
        %v8431 = vor.u32 %v8430, 8388608
        %v8432 = vsub.s32 0, %v8431
        %v8433 = vadd.s32 %v8428, 1
        %vm8434 = vcmp.gt.s32.totalorder %v8433, 0
        %v8435 = vsel %vm8434, %v8433, 0
        %v8436 = vshrl.u32 %v8435, 5
        %v8437 = vand.u32 %v8435, 31
        %v8438 = vsub.s32 32, %v8437
        %v8439 = vshrl.u32 683565275, %v8438
        %v8440 = vshll.u32 683565275, %v8437
        %v8441 = vshrl.u32 2475754826, %v8438
        %v8442 = vor.u32 %v8440, %v8441
        %v8443 = vshll.u32 2475754826, %v8437
        %v8444 = vshrl.u32 2131351028, %v8438
        %v8445 = vor.u32 %v8443, %v8444
        %v8446 = vshll.u32 2131351028, %v8437
        %v8447 = vshrl.u32 2102212464, %v8438
        %v8448 = vor.u32 %v8446, %v8447
        %v8449 = vshll.u32 2102212464, %v8437
        %v8450 = vshrl.u32 920167782, %v8438
        %v8451 = vor.u32 %v8449, %v8450
        %v8452 = vshll.u32 920167782, %v8437
        %v8453 = vshrl.u32 1326507024, %v8438
        %v8454 = vor.u32 %v8452, %v8453
        %vm8455 = vcmp.lt.s32.totalorder %v8436, 1
        %vm8456 = vcmp.lt.s32.totalorder %v8436, 2
        %vm8457 = vcmp.lt.s32.totalorder %v8436, 3
        %vm8458 = vcmp.lt.s32.totalorder %v8436, 4
        %v8459 = vsel %vm8455, %v8439, %v8442
        %v8460 = vsel %vm8458, %v8448, 2102212464
        %v8461 = vsel %vm8457, %v8445, %v8460
        %v8462 = vsel %vm8456, %v8459, %v8461
        %v8463 = vsel %vm8455, %v8442, %v8445
        %v8464 = vsel %vm8458, %v8451, 920167782
        %v8465 = vsel %vm8457, %v8448, %v8464
        %v8466 = vsel %vm8456, %v8463, %v8465
        %v8467 = vsel %vm8455, %v8445, %v8448
        %v8468 = vsel %vm8458, %v8454, 1326507024
        %v8469 = vsel %vm8457, %v8451, %v8468
        %v8470 = vsel %vm8456, %v8467, %v8469
        %v8471 = vshll.u32 %v8431, 8
        %v8472 = vmul.u32.u64.compose %v8471, %v8470
        %v8473 = vextract.low.u32 %v8472
        %v8474 = vextract.high.u32 %v8472
        %v8475 = vmul.u32.u64.compose %v8471, %v8466
        %v8476 = vextract.low.u32 %v8475
        %v8477 = vextract.high.u32 %v8475
        %v8478 = vmul.u32 %v8471, %v8462
        %v8479 = vadd.s32 %v8474, %v8476
        %vm8480 = vc.u32 %v8474, %v8476
        %v8481 = vadd.s32 %v8477, 1
        %v8482 = vsel %vm8480, %v8481, %v8477
        %v8483 = vadd.s32 %v8478, %v8482
        %v8484 = vadd.s32 %v8483, 536870912
        %v8485 = vshrl.u32 %v8484, 30
        %v8486 = vshll.u32 %v8485, 30
        %v8487 = vsub.s32 %v8483, %v8486
        %vm8488 = vcmp.lt.s32.totalorder %v8487, 0
        %v8489 = vsub.s32 0, %v8487
        %v8490 = vsel %vm8488, %v8489, %v8487
        %v8491 = vclz %v8490
        %v8492 = vsub.s32 %v8491, 2
        %vm8493 = vcmp.gt.s32.totalorder 0, %v8492
        %v8494 = vsel %vm8493, 0, %v8492
        %v8495 = vsub.s32 32, %v8494
        %v8496 = vshll.u32 %v8487, %v8494
        %v8497 = vshrl.u32 %v8479, %v8495
        %v8498 = vor.u32 %v8496, %v8497
        %v8499 = vsub.s32 4294967266, %v8494
        %v8500 = vadd.s32 %v8499, 127
        %v8501 = vshll.u32 %v8500, 23
        %v8502 = vor.u32 4788187, %v8501
        %v8503 = vand.u32 2147483647, %v8502
        %v8505 = vcvt.s32.f32 %v8498
        %v8506 = vmul.f32 %v8505, %v8503
        %v8507 = vxor.u32 %v8506, 2147483648
        %v8508 = vsel %vm8425, %v8507, %v8506
        %v8509 = vsub.s32 4, %v8485
        %v8510 = vsel %vm8425, %v8509, %v8485
        %v8511 = vsel %vm8424, %v1906, %v8508
        %v8512 = vsel %vm8424, 0, %v8510
        %v8513 = vcosq.f32.pop %v8511
        %v8514 = vsinq.f32.pop %v8511
        %vm8515 = vweird.f32 %v1906
        %v8516 = vand.u32 %v8512, 3
        %vm8517 = vcmp.lt.s32.totalorder %v8516, 2
        %vm8518 = vcmp.eq.s32.totalorder %v8516, 0
        %v8519 = vxor.u32 %v8514, 2147483648
        %v8520 = vsel %vm8518, %v8513, %v8519
        %vm8521 = vcmp.eq.s32.totalorder %v8516, 2
        %v8522 = vxor.u32 %v8513, 2147483648
        %v8523 = vsel %vm8521, %v8522, %v8514
        %v8524 = vsel %vm8517, %v8520, %v8523
        %v8525 = vsel %vm8515, nan, %v8524
        %v8526 = vand.u32 2147483647, %v1907
        %vm8527 = vcmp.le.f32.partialorder %v8526, 0.7853982
        %vm8528 = vcmp.lt.s32.totalorder %v1907, 0
        %v8529 = vand.u32 %v1907, 2139095040
        %v8530 = vshrl.u32 %v8529, 23
        %v8531 = vsub.s32 %v8530, 127
        %v8532 = vand.u32 2147483647, %v1907
        %v8533 = vand.u32 %v8532, 8388607
        %v8534 = vor.u32 %v8533, 8388608
        %v8535 = vsub.s32 0, %v8534
        %v8536 = vadd.s32 %v8531, 1
        %vm8537 = vcmp.gt.s32.totalorder %v8536, 0
        %v8538 = vsel %vm8537, %v8536, 0
        %v8539 = vshrl.u32 %v8538, 5
        %v8540 = vand.u32 %v8538, 31
        %v8541 = vsub.s32 32, %v8540
        %v8542 = vshrl.u32 683565275, %v8541
        %v8543 = vshll.u32 683565275, %v8540
        %v8544 = vshrl.u32 2475754826, %v8541
        %v8545 = vor.u32 %v8543, %v8544
        %v8546 = vshll.u32 2475754826, %v8540
        %v8547 = vshrl.u32 2131351028, %v8541
        %v8548 = vor.u32 %v8546, %v8547
        %v8549 = vshll.u32 2131351028, %v8540
        %v8550 = vshrl.u32 2102212464, %v8541
        %v8551 = vor.u32 %v8549, %v8550
        %v8552 = vshll.u32 2102212464, %v8540
        %v8553 = vshrl.u32 920167782, %v8541
        %v8554 = vor.u32 %v8552, %v8553
        %v8555 = vshll.u32 920167782, %v8540
        %v8556 = vshrl.u32 1326507024, %v8541
        %v8557 = vor.u32 %v8555, %v8556
        %vm8558 = vcmp.lt.s32.totalorder %v8539, 1
        %vm8559 = vcmp.lt.s32.totalorder %v8539, 2
        %vm8560 = vcmp.lt.s32.totalorder %v8539, 3
        %vm8561 = vcmp.lt.s32.totalorder %v8539, 4
        %v8562 = vsel %vm8558, %v8542, %v8545
        %v8563 = vsel %vm8561, %v8551, 2102212464
        %v8564 = vsel %vm8560, %v8548, %v8563
        %v8565 = vsel %vm8559, %v8562, %v8564
        %v8566 = vsel %vm8558, %v8545, %v8548
        %v8567 = vsel %vm8561, %v8554, 920167782
        %v8568 = vsel %vm8560, %v8551, %v8567
        %v8569 = vsel %vm8559, %v8566, %v8568
        %v8570 = vsel %vm8558, %v8548, %v8551
        %v8571 = vsel %vm8561, %v8557, 1326507024
        %v8572 = vsel %vm8560, %v8554, %v8571
        %v8573 = vsel %vm8559, %v8570, %v8572
        %v8574 = vshll.u32 %v8534, 8
        %v8575 = vmul.u32.u64.compose %v8574, %v8573
        %v8576 = vextract.low.u32 %v8575
        %v8577 = vextract.high.u32 %v8575
        %v8578 = vmul.u32.u64.compose %v8574, %v8569
        %v8579 = vextract.low.u32 %v8578
        %v8580 = vextract.high.u32 %v8578
        %v8581 = vmul.u32 %v8574, %v8565
        %v8582 = vadd.s32 %v8577, %v8579
        %vm8583 = vc.u32 %v8577, %v8579
        %v8584 = vadd.s32 %v8580, 1
        %v8585 = vsel %vm8583, %v8584, %v8580
        %v8586 = vadd.s32 %v8581, %v8585
        %v8587 = vadd.s32 %v8586, 536870912
        %v8588 = vshrl.u32 %v8587, 30
        %v8589 = vshll.u32 %v8588, 30
        %v8590 = vsub.s32 %v8586, %v8589
        %vm8591 = vcmp.lt.s32.totalorder %v8590, 0
        %v8592 = vsub.s32 0, %v8590
        %v8593 = vsel %vm8591, %v8592, %v8590
        %v8594 = vclz %v8593
        %v8595 = vsub.s32 %v8594, 2
        %vm8596 = vcmp.gt.s32.totalorder 0, %v8595
        %v8597 = vsel %vm8596, 0, %v8595
        %v8598 = vsub.s32 32, %v8597
        %v8599 = vshll.u32 %v8590, %v8597
        %v8600 = vshrl.u32 %v8582, %v8598
        %v8601 = vor.u32 %v8599, %v8600
        %v8602 = vsub.s32 4294967266, %v8597
        %v8603 = vadd.s32 %v8602, 127
        %v8604 = vshll.u32 %v8603, 23
        %v8605 = vor.u32 4788187, %v8604
        %v8606 = vand.u32 2147483647, %v8605
        %v8608 = vcvt.s32.f32 %v8601
        %v8609 = vmul.f32 %v8608, %v8606
        %v8610 = vxor.u32 %v8609, 2147483648
        %v8611 = vsel %vm8528, %v8610, %v8609
        %v8612 = vsub.s32 4, %v8588
        %v8613 = vsel %vm8528, %v8612, %v8588
        %v8614 = vsel %vm8527, %v1907, %v8611
        %v8615 = vsel %vm8527, 0, %v8613
        %v8616 = vcosq.f32.pop %v8614
        %v8617 = vsinq.f32.pop %v8614
        %vm8618 = vweird.f32 %v1907
        %v8619 = vand.u32 %v8615, 3
        %vm8620 = vcmp.lt.s32.totalorder %v8619, 2
        %vm8621 = vcmp.eq.s32.totalorder %v8619, 0
        %v8622 = vxor.u32 %v8617, 2147483648
        %v8623 = vsel %vm8621, %v8616, %v8622
        %vm8624 = vcmp.eq.s32.totalorder %v8619, 2
        %v8625 = vxor.u32 %v8616, 2147483648
        %v8626 = vsel %vm8624, %v8625, %v8617
        %v8627 = vsel %vm8620, %v8623, %v8626
        %v8628 = vsel %vm8618, nan, %v8627
        %v8629 = vand.u32 2147483647, %v1908
        %vm8630 = vcmp.le.f32.partialorder %v8629, 0.7853982
        %vm8631 = vcmp.lt.s32.totalorder %v1908, 0
        %v8632 = vand.u32 %v1908, 2139095040
        %v8633 = vshrl.u32 %v8632, 23
        %v8634 = vsub.s32 %v8633, 127
        %v8635 = vand.u32 2147483647, %v1908
        %v8636 = vand.u32 %v8635, 8388607
        %v8637 = vor.u32 %v8636, 8388608
        %v8638 = vsub.s32 0, %v8637
        %v8639 = vadd.s32 %v8634, 1
        %vm8640 = vcmp.gt.s32.totalorder %v8639, 0
        %v8641 = vsel %vm8640, %v8639, 0
        %v8642 = vshrl.u32 %v8641, 5
        %v8643 = vand.u32 %v8641, 31
        %v8644 = vsub.s32 32, %v8643
        %v8645 = vshrl.u32 683565275, %v8644
        %v8646 = vshll.u32 683565275, %v8643
        %v8647 = vshrl.u32 2475754826, %v8644
        %v8648 = vor.u32 %v8646, %v8647
        %v8649 = vshll.u32 2475754826, %v8643
        %v8650 = vshrl.u32 2131351028, %v8644
        %v8651 = vor.u32 %v8649, %v8650
        %v8652 = vshll.u32 2131351028, %v8643
        %v8653 = vshrl.u32 2102212464, %v8644
        %v8654 = vor.u32 %v8652, %v8653
        %v8655 = vshll.u32 2102212464, %v8643
        %v8656 = vshrl.u32 920167782, %v8644
        %v8657 = vor.u32 %v8655, %v8656
        %v8658 = vshll.u32 920167782, %v8643
        %v8659 = vshrl.u32 1326507024, %v8644
        %v8660 = vor.u32 %v8658, %v8659
        %vm8661 = vcmp.lt.s32.totalorder %v8642, 1
        %vm8662 = vcmp.lt.s32.totalorder %v8642, 2
        %vm8663 = vcmp.lt.s32.totalorder %v8642, 3
        %vm8664 = vcmp.lt.s32.totalorder %v8642, 4
        %v8665 = vsel %vm8661, %v8645, %v8648
        %v8666 = vsel %vm8664, %v8654, 2102212464
        %v8667 = vsel %vm8663, %v8651, %v8666
        %v8668 = vsel %vm8662, %v8665, %v8667
        %v8669 = vsel %vm8661, %v8648, %v8651
        %v8670 = vsel %vm8664, %v8657, 920167782
        %v8671 = vsel %vm8663, %v8654, %v8670
        %v8672 = vsel %vm8662, %v8669, %v8671
        %v8673 = vsel %vm8661, %v8651, %v8654
        %v8674 = vsel %vm8664, %v8660, 1326507024
        %v8675 = vsel %vm8663, %v8657, %v8674
        %v8676 = vsel %vm8662, %v8673, %v8675
        %v8677 = vshll.u32 %v8637, 8
        %v8678 = vmul.u32.u64.compose %v8677, %v8676
        %v8679 = vextract.low.u32 %v8678
        %v8680 = vextract.high.u32 %v8678
        %v8681 = vmul.u32.u64.compose %v8677, %v8672
        %v8682 = vextract.low.u32 %v8681
        %v8683 = vextract.high.u32 %v8681
        %v8684 = vmul.u32 %v8677, %v8668
        %v8685 = vadd.s32 %v8680, %v8682
        %vm8686 = vc.u32 %v8680, %v8682
        %v8687 = vadd.s32 %v8683, 1
        %v8688 = vsel %vm8686, %v8687, %v8683
        %v8689 = vadd.s32 %v8684, %v8688
        %v8690 = vadd.s32 %v8689, 536870912
        %v8691 = vshrl.u32 %v8690, 30
        %v8692 = vshll.u32 %v8691, 30
        %v8693 = vsub.s32 %v8689, %v8692
        %vm8694 = vcmp.lt.s32.totalorder %v8693, 0
        %v8695 = vsub.s32 0, %v8693
        %v8696 = vsel %vm8694, %v8695, %v8693
        %v8697 = vclz %v8696
        %v8698 = vsub.s32 %v8697, 2
        %vm8699 = vcmp.gt.s32.totalorder 0, %v8698
        %v8700 = vsel %vm8699, 0, %v8698
        %v8701 = vsub.s32 32, %v8700
        %v8702 = vshll.u32 %v8693, %v8700
        %v8703 = vshrl.u32 %v8685, %v8701
        %v8704 = vor.u32 %v8702, %v8703
        %v8705 = vsub.s32 4294967266, %v8700
        %v8706 = vadd.s32 %v8705, 127
        %v8707 = vshll.u32 %v8706, 23
        %v8708 = vor.u32 4788187, %v8707
        %v8709 = vand.u32 2147483647, %v8708
        %v8711 = vcvt.s32.f32 %v8704
        %v8712 = vmul.f32 %v8711, %v8709
        %v8713 = vxor.u32 %v8712, 2147483648
        %v8714 = vsel %vm8631, %v8713, %v8712
        %v8715 = vsub.s32 4, %v8691
        %v8716 = vsel %vm8631, %v8715, %v8691
        %v8717 = vsel %vm8630, %v1908, %v8714
        %v8718 = vsel %vm8630, 0, %v8716
        %v8719 = vcosq.f32.pop %v8717
        %v8720 = vsinq.f32.pop %v8717
        %vm8721 = vweird.f32 %v1908
        %v8722 = vand.u32 %v8718, 3
        %vm8723 = vcmp.lt.s32.totalorder %v8722, 2
        %vm8724 = vcmp.eq.s32.totalorder %v8722, 0
        %v8725 = vxor.u32 %v8720, 2147483648
        %v8726 = vsel %vm8724, %v8719, %v8725
        %vm8727 = vcmp.eq.s32.totalorder %v8722, 2
        %v8728 = vxor.u32 %v8719, 2147483648
        %v8729 = vsel %vm8727, %v8728, %v8720
        %v8730 = vsel %vm8723, %v8726, %v8729
        %v8731 = vsel %vm8721, nan, %v8730
        %v8732 = vand.u32 2147483647, %v1909
        %vm8733 = vcmp.le.f32.partialorder %v8732, 0.7853982
        %vm8734 = vcmp.lt.s32.totalorder %v1909, 0
        %v8735 = vand.u32 %v1909, 2139095040
        %v8736 = vshrl.u32 %v8735, 23
        %v8737 = vsub.s32 %v8736, 127
        %v8738 = vand.u32 2147483647, %v1909
        %v8739 = vand.u32 %v8738, 8388607
        %v8740 = vor.u32 %v8739, 8388608
        %v8741 = vsub.s32 0, %v8740
        %v8742 = vadd.s32 %v8737, 1
        %vm8743 = vcmp.gt.s32.totalorder %v8742, 0
        %v8744 = vsel %vm8743, %v8742, 0
        %v8745 = vshrl.u32 %v8744, 5
        %v8746 = vand.u32 %v8744, 31
        %v8747 = vsub.s32 32, %v8746
        %v8748 = vshrl.u32 683565275, %v8747
        %v8749 = vshll.u32 683565275, %v8746
        %v8750 = vshrl.u32 2475754826, %v8747
        %v8751 = vor.u32 %v8749, %v8750
        %v8752 = vshll.u32 2475754826, %v8746
        %v8753 = vshrl.u32 2131351028, %v8747
        %v8754 = vor.u32 %v8752, %v8753
        %v8755 = vshll.u32 2131351028, %v8746
        %v8756 = vshrl.u32 2102212464, %v8747
        %v8757 = vor.u32 %v8755, %v8756
        %v8758 = vshll.u32 2102212464, %v8746
        %v8759 = vshrl.u32 920167782, %v8747
        %v8760 = vor.u32 %v8758, %v8759
        %v8761 = vshll.u32 920167782, %v8746
        %v8762 = vshrl.u32 1326507024, %v8747
        %v8763 = vor.u32 %v8761, %v8762
        %vm8764 = vcmp.lt.s32.totalorder %v8745, 1
        %vm8765 = vcmp.lt.s32.totalorder %v8745, 2
        %vm8766 = vcmp.lt.s32.totalorder %v8745, 3
        %vm8767 = vcmp.lt.s32.totalorder %v8745, 4
        %v8768 = vsel %vm8764, %v8748, %v8751
        %v8769 = vsel %vm8767, %v8757, 2102212464
        %v8770 = vsel %vm8766, %v8754, %v8769
        %v8771 = vsel %vm8765, %v8768, %v8770
        %v8772 = vsel %vm8764, %v8751, %v8754
        %v8773 = vsel %vm8767, %v8760, 920167782
        %v8774 = vsel %vm8766, %v8757, %v8773
        %v8775 = vsel %vm8765, %v8772, %v8774
        %v8776 = vsel %vm8764, %v8754, %v8757
        %v8777 = vsel %vm8767, %v8763, 1326507024
        %v8778 = vsel %vm8766, %v8760, %v8777
        %v8779 = vsel %vm8765, %v8776, %v8778
        %v8780 = vshll.u32 %v8740, 8
        %v8781 = vmul.u32.u64.compose %v8780, %v8779
        %v8782 = vextract.low.u32 %v8781
        %v8783 = vextract.high.u32 %v8781
        %v8784 = vmul.u32.u64.compose %v8780, %v8775
        %v8785 = vextract.low.u32 %v8784
        %v8786 = vextract.high.u32 %v8784
        %v8787 = vmul.u32 %v8780, %v8771
        %v8788 = vadd.s32 %v8783, %v8785
        %vm8789 = vc.u32 %v8783, %v8785
        %v8790 = vadd.s32 %v8786, 1
        %v8791 = vsel %vm8789, %v8790, %v8786
        %v8792 = vadd.s32 %v8787, %v8791
        %v8793 = vadd.s32 %v8792, 536870912
        %v8794 = vshrl.u32 %v8793, 30
        %v8795 = vshll.u32 %v8794, 30
        %v8796 = vsub.s32 %v8792, %v8795
        %vm8797 = vcmp.lt.s32.totalorder %v8796, 0
        %v8798 = vsub.s32 0, %v8796
        %v8799 = vsel %vm8797, %v8798, %v8796
        %v8800 = vclz %v8799
        %v8801 = vsub.s32 %v8800, 2
        %vm8802 = vcmp.gt.s32.totalorder 0, %v8801
        %v8803 = vsel %vm8802, 0, %v8801
        %v8804 = vsub.s32 32, %v8803
        %v8805 = vshll.u32 %v8796, %v8803
        %v8806 = vshrl.u32 %v8788, %v8804
        %v8807 = vor.u32 %v8805, %v8806
        %v8808 = vsub.s32 4294967266, %v8803
        %v8809 = vadd.s32 %v8808, 127
        %v8810 = vshll.u32 %v8809, 23
        %v8811 = vor.u32 4788187, %v8810
        %v8812 = vand.u32 2147483647, %v8811
        %v8814 = vcvt.s32.f32 %v8807
        %v8815 = vmul.f32 %v8814, %v8812
        %v8816 = vxor.u32 %v8815, 2147483648
        %v8817 = vsel %vm8734, %v8816, %v8815
        %v8818 = vsub.s32 4, %v8794
        %v8819 = vsel %vm8734, %v8818, %v8794
        %v8820 = vsel %vm8733, %v1909, %v8817
        %v8821 = vsel %vm8733, 0, %v8819
        %v8822 = vcosq.f32.pop %v8820
        %v8823 = vsinq.f32.pop %v8820
        %vm8824 = vweird.f32 %v1909
        %v8825 = vand.u32 %v8821, 3
        %vm8826 = vcmp.lt.s32.totalorder %v8825, 2
        %vm8827 = vcmp.eq.s32.totalorder %v8825, 0
        %v8828 = vxor.u32 %v8823, 2147483648
        %v8829 = vsel %vm8827, %v8822, %v8828
        %vm8830 = vcmp.eq.s32.totalorder %v8825, 2
        %v8831 = vxor.u32 %v8822, 2147483648
        %v8832 = vsel %vm8830, %v8831, %v8823
        %v8833 = vsel %vm8826, %v8829, %v8832
        %v8834 = vsel %vm8824, nan, %v8833
        %v8835 = vand.u32 2147483647, %v1910
        %vm8836 = vcmp.le.f32.partialorder %v8835, 0.7853982
        %vm8837 = vcmp.lt.s32.totalorder %v1910, 0
        %v8838 = vand.u32 %v1910, 2139095040
        %v8839 = vshrl.u32 %v8838, 23
        %v8840 = vsub.s32 %v8839, 127
        %v8841 = vand.u32 2147483647, %v1910
        %v8842 = vand.u32 %v8841, 8388607
        %v8843 = vor.u32 %v8842, 8388608
        %v8844 = vsub.s32 0, %v8843
        %v8845 = vadd.s32 %v8840, 1
        %vm8846 = vcmp.gt.s32.totalorder %v8845, 0
        %v8847 = vsel %vm8846, %v8845, 0
        %v8848 = vshrl.u32 %v8847, 5
        %v8849 = vand.u32 %v8847, 31
        %v8850 = vsub.s32 32, %v8849
        %v8851 = vshrl.u32 683565275, %v8850
        %v8852 = vshll.u32 683565275, %v8849
        %v8853 = vshrl.u32 2475754826, %v8850
        %v8854 = vor.u32 %v8852, %v8853
        %v8855 = vshll.u32 2475754826, %v8849
        %v8856 = vshrl.u32 2131351028, %v8850
        %v8857 = vor.u32 %v8855, %v8856
        %v8858 = vshll.u32 2131351028, %v8849
        %v8859 = vshrl.u32 2102212464, %v8850
        %v8860 = vor.u32 %v8858, %v8859
        %v8861 = vshll.u32 2102212464, %v8849
        %v8862 = vshrl.u32 920167782, %v8850
        %v8863 = vor.u32 %v8861, %v8862
        %v8864 = vshll.u32 920167782, %v8849
        %v8865 = vshrl.u32 1326507024, %v8850
        %v8866 = vor.u32 %v8864, %v8865
        %vm8867 = vcmp.lt.s32.totalorder %v8848, 1
        %vm8868 = vcmp.lt.s32.totalorder %v8848, 2
        %vm8869 = vcmp.lt.s32.totalorder %v8848, 3
        %vm8870 = vcmp.lt.s32.totalorder %v8848, 4
        %v8871 = vsel %vm8867, %v8851, %v8854
        %v8872 = vsel %vm8870, %v8860, 2102212464
        %v8873 = vsel %vm8869, %v8857, %v8872
        %v8874 = vsel %vm8868, %v8871, %v8873
        %v8875 = vsel %vm8867, %v8854, %v8857
        %v8876 = vsel %vm8870, %v8863, 920167782
        %v8877 = vsel %vm8869, %v8860, %v8876
        %v8878 = vsel %vm8868, %v8875, %v8877
        %v8879 = vsel %vm8867, %v8857, %v8860
        %v8880 = vsel %vm8870, %v8866, 1326507024
        %v8881 = vsel %vm8869, %v8863, %v8880
        %v8882 = vsel %vm8868, %v8879, %v8881
        %v8883 = vshll.u32 %v8843, 8
        %v8884 = vmul.u32.u64.compose %v8883, %v8882
        %v8885 = vextract.low.u32 %v8884
        %v8886 = vextract.high.u32 %v8884
        %v8887 = vmul.u32.u64.compose %v8883, %v8878
        %v8888 = vextract.low.u32 %v8887
        %v8889 = vextract.high.u32 %v8887
        %v8890 = vmul.u32 %v8883, %v8874
        %v8891 = vadd.s32 %v8886, %v8888
        %vm8892 = vc.u32 %v8886, %v8888
        %v8893 = vadd.s32 %v8889, 1
        %v8894 = vsel %vm8892, %v8893, %v8889
        %v8895 = vadd.s32 %v8890, %v8894
        %v8896 = vadd.s32 %v8895, 536870912
        %v8897 = vshrl.u32 %v8896, 30
        %v8898 = vshll.u32 %v8897, 30
        %v8899 = vsub.s32 %v8895, %v8898
        %vm8900 = vcmp.lt.s32.totalorder %v8899, 0
        %v8901 = vsub.s32 0, %v8899
        %v8902 = vsel %vm8900, %v8901, %v8899
        %v8903 = vclz %v8902
        %v8904 = vsub.s32 %v8903, 2
        %vm8905 = vcmp.gt.s32.totalorder 0, %v8904
        %v8906 = vsel %vm8905, 0, %v8904
        %v8907 = vsub.s32 32, %v8906
        %v8908 = vshll.u32 %v8899, %v8906
        %v8909 = vshrl.u32 %v8891, %v8907
        %v8910 = vor.u32 %v8908, %v8909
        %v8911 = vsub.s32 4294967266, %v8906
        %v8912 = vadd.s32 %v8911, 127
        %v8913 = vshll.u32 %v8912, 23
        %v8914 = vor.u32 4788187, %v8913
        %v8915 = vand.u32 2147483647, %v8914
        %v8917 = vcvt.s32.f32 %v8910
        %v8918 = vmul.f32 %v8917, %v8915
        %v8919 = vxor.u32 %v8918, 2147483648
        %v8920 = vsel %vm8837, %v8919, %v8918
        %v8921 = vsub.s32 4, %v8897
        %v8922 = vsel %vm8837, %v8921, %v8897
        %v8923 = vsel %vm8836, %v1910, %v8920
        %v8924 = vsel %vm8836, 0, %v8922
        %v8925 = vcosq.f32.pop %v8923
        %v8926 = vsinq.f32.pop %v8923
        %vm8927 = vweird.f32 %v1910
        %v8928 = vand.u32 %v8924, 3
        %vm8929 = vcmp.lt.s32.totalorder %v8928, 2
        %vm8930 = vcmp.eq.s32.totalorder %v8928, 0
        %v8931 = vxor.u32 %v8926, 2147483648
        %v8932 = vsel %vm8930, %v8925, %v8931
        %vm8933 = vcmp.eq.s32.totalorder %v8928, 2
        %v8934 = vxor.u32 %v8925, 2147483648
        %v8935 = vsel %vm8933, %v8934, %v8926
        %v8936 = vsel %vm8929, %v8932, %v8935
        %v8937 = vsel %vm8927, nan, %v8936
        %v8938 = vand.u32 2147483647, %v1911
        %vm8939 = vcmp.le.f32.partialorder %v8938, 0.7853982
        %vm8940 = vcmp.lt.s32.totalorder %v1911, 0
        %v8941 = vand.u32 %v1911, 2139095040
        %v8942 = vshrl.u32 %v8941, 23
        %v8943 = vsub.s32 %v8942, 127
        %v8944 = vand.u32 2147483647, %v1911
        %v8945 = vand.u32 %v8944, 8388607
        %v8946 = vor.u32 %v8945, 8388608
        %v8947 = vsub.s32 0, %v8946
        %v8948 = vadd.s32 %v8943, 1
        %vm8949 = vcmp.gt.s32.totalorder %v8948, 0
        %v8950 = vsel %vm8949, %v8948, 0
        %v8951 = vshrl.u32 %v8950, 5
        %v8952 = vand.u32 %v8950, 31
        %v8953 = vsub.s32 32, %v8952
        %v8954 = vshrl.u32 683565275, %v8953
        %v8955 = vshll.u32 683565275, %v8952
        %v8956 = vshrl.u32 2475754826, %v8953
        %v8957 = vor.u32 %v8955, %v8956
        %v8958 = vshll.u32 2475754826, %v8952
        %v8959 = vshrl.u32 2131351028, %v8953
        %v8960 = vor.u32 %v8958, %v8959
        %v8961 = vshll.u32 2131351028, %v8952
        %v8962 = vshrl.u32 2102212464, %v8953
        %v8963 = vor.u32 %v8961, %v8962
        %v8964 = vshll.u32 2102212464, %v8952
        %v8965 = vshrl.u32 920167782, %v8953
        %v8966 = vor.u32 %v8964, %v8965
        %v8967 = vshll.u32 920167782, %v8952
        %v8968 = vshrl.u32 1326507024, %v8953
        %v8969 = vor.u32 %v8967, %v8968
        %vm8970 = vcmp.lt.s32.totalorder %v8951, 1
        %vm8971 = vcmp.lt.s32.totalorder %v8951, 2
        %vm8972 = vcmp.lt.s32.totalorder %v8951, 3
        %vm8973 = vcmp.lt.s32.totalorder %v8951, 4
        %v8974 = vsel %vm8970, %v8954, %v8957
        %v8975 = vsel %vm8973, %v8963, 2102212464
        %v8976 = vsel %vm8972, %v8960, %v8975
        %v8977 = vsel %vm8971, %v8974, %v8976
        %v8978 = vsel %vm8970, %v8957, %v8960
        %v8979 = vsel %vm8973, %v8966, 920167782
        %v8980 = vsel %vm8972, %v8963, %v8979
        %v8981 = vsel %vm8971, %v8978, %v8980
        %v8982 = vsel %vm8970, %v8960, %v8963
        %v8983 = vsel %vm8973, %v8969, 1326507024
        %v8984 = vsel %vm8972, %v8966, %v8983
        %v8985 = vsel %vm8971, %v8982, %v8984
        %v8986 = vshll.u32 %v8946, 8
        %v8987 = vmul.u32.u64.compose %v8986, %v8985
        %v8988 = vextract.low.u32 %v8987
        %v8989 = vextract.high.u32 %v8987
        %v8990 = vmul.u32.u64.compose %v8986, %v8981
        %v8991 = vextract.low.u32 %v8990
        %v8992 = vextract.high.u32 %v8990
        %v8993 = vmul.u32 %v8986, %v8977
        %v8994 = vadd.s32 %v8989, %v8991
        %vm8995 = vc.u32 %v8989, %v8991
        %v8996 = vadd.s32 %v8992, 1
        %v8997 = vsel %vm8995, %v8996, %v8992
        %v8998 = vadd.s32 %v8993, %v8997
        %v8999 = vadd.s32 %v8998, 536870912
        %v9000 = vshrl.u32 %v8999, 30
        %v9001 = vshll.u32 %v9000, 30
        %v9002 = vsub.s32 %v8998, %v9001
        %vm9003 = vcmp.lt.s32.totalorder %v9002, 0
        %v9004 = vsub.s32 0, %v9002
        %v9005 = vsel %vm9003, %v9004, %v9002
        %v9006 = vclz %v9005
        %v9007 = vsub.s32 %v9006, 2
        %vm9008 = vcmp.gt.s32.totalorder 0, %v9007
        %v9009 = vsel %vm9008, 0, %v9007
        %v9010 = vsub.s32 32, %v9009
        %v9011 = vshll.u32 %v9002, %v9009
        %v9012 = vshrl.u32 %v8994, %v9010
        %v9013 = vor.u32 %v9011, %v9012
        %v9014 = vsub.s32 4294967266, %v9009
        %v9015 = vadd.s32 %v9014, 127
        %v9016 = vshll.u32 %v9015, 23
        %v9017 = vor.u32 4788187, %v9016
        %v9018 = vand.u32 2147483647, %v9017
        %v9020 = vcvt.s32.f32 %v9013
        %v9021 = vmul.f32 %v9020, %v9018
        %v9022 = vxor.u32 %v9021, 2147483648
        %v9023 = vsel %vm8940, %v9022, %v9021
        %v9024 = vsub.s32 4, %v9000
        %v9025 = vsel %vm8940, %v9024, %v9000
        %v9026 = vsel %vm8939, %v1911, %v9023
        %v9027 = vsel %vm8939, 0, %v9025
        %v9028 = vcosq.f32.pop %v9026
        %v9029 = vsinq.f32.pop %v9026
        %vm9030 = vweird.f32 %v1911
        %v9031 = vand.u32 %v9027, 3
        %vm9032 = vcmp.lt.s32.totalorder %v9031, 2
        %vm9033 = vcmp.eq.s32.totalorder %v9031, 0
        %v9034 = vxor.u32 %v9029, 2147483648
        %v9035 = vsel %vm9033, %v9028, %v9034
        %vm9036 = vcmp.eq.s32.totalorder %v9031, 2
        %v9037 = vxor.u32 %v9028, 2147483648
        %v9038 = vsel %vm9036, %v9037, %v9029
        %v9039 = vsel %vm9032, %v9035, %v9038
        %v9040 = vsel %vm9030, nan, %v9039
        %v9041 = vand.u32 2147483647, %v1912
        %vm9042 = vcmp.le.f32.partialorder %v9041, 0.7853982
        %vm9043 = vcmp.lt.s32.totalorder %v1912, 0
        %v9044 = vand.u32 %v1912, 2139095040
        %v9045 = vshrl.u32 %v9044, 23
        %v9046 = vsub.s32 %v9045, 127
        %v9047 = vand.u32 2147483647, %v1912
        %v9048 = vand.u32 %v9047, 8388607
        %v9049 = vor.u32 %v9048, 8388608
        %v9050 = vsub.s32 0, %v9049
        %v9051 = vadd.s32 %v9046, 1
        %vm9052 = vcmp.gt.s32.totalorder %v9051, 0
        %v9053 = vsel %vm9052, %v9051, 0
        %v9054 = vshrl.u32 %v9053, 5
        %v9055 = vand.u32 %v9053, 31
        %v9056 = vsub.s32 32, %v9055
        %v9057 = vshrl.u32 683565275, %v9056
        %v9058 = vshll.u32 683565275, %v9055
        %v9059 = vshrl.u32 2475754826, %v9056
        %v9060 = vor.u32 %v9058, %v9059
        %v9061 = vshll.u32 2475754826, %v9055
        %v9062 = vshrl.u32 2131351028, %v9056
        %v9063 = vor.u32 %v9061, %v9062
        %v9064 = vshll.u32 2131351028, %v9055
        %v9065 = vshrl.u32 2102212464, %v9056
        %v9066 = vor.u32 %v9064, %v9065
        %v9067 = vshll.u32 2102212464, %v9055
        %v9068 = vshrl.u32 920167782, %v9056
        %v9069 = vor.u32 %v9067, %v9068
        %v9070 = vshll.u32 920167782, %v9055
        %v9071 = vshrl.u32 1326507024, %v9056
        %v9072 = vor.u32 %v9070, %v9071
        %vm9073 = vcmp.lt.s32.totalorder %v9054, 1
        %vm9074 = vcmp.lt.s32.totalorder %v9054, 2
        %vm9075 = vcmp.lt.s32.totalorder %v9054, 3
        %vm9076 = vcmp.lt.s32.totalorder %v9054, 4
        %v9077 = vsel %vm9073, %v9057, %v9060
        %v9078 = vsel %vm9076, %v9066, 2102212464
        %v9079 = vsel %vm9075, %v9063, %v9078
        %v9080 = vsel %vm9074, %v9077, %v9079
        %v9081 = vsel %vm9073, %v9060, %v9063
        %v9082 = vsel %vm9076, %v9069, 920167782
        %v9083 = vsel %vm9075, %v9066, %v9082
        %v9084 = vsel %vm9074, %v9081, %v9083
        %v9085 = vsel %vm9073, %v9063, %v9066
        %v9086 = vsel %vm9076, %v9072, 1326507024
        %v9087 = vsel %vm9075, %v9069, %v9086
        %v9088 = vsel %vm9074, %v9085, %v9087
        %v9089 = vshll.u32 %v9049, 8
        %v9090 = vmul.u32.u64.compose %v9089, %v9088
        %v9091 = vextract.low.u32 %v9090
        %v9092 = vextract.high.u32 %v9090
        %v9093 = vmul.u32.u64.compose %v9089, %v9084
        %v9094 = vextract.low.u32 %v9093
        %v9095 = vextract.high.u32 %v9093
        %v9096 = vmul.u32 %v9089, %v9080
        %v9097 = vadd.s32 %v9092, %v9094
        %vm9098 = vc.u32 %v9092, %v9094
        %v9099 = vadd.s32 %v9095, 1
        %v9100 = vsel %vm9098, %v9099, %v9095
        %v9101 = vadd.s32 %v9096, %v9100
        %v9102 = vadd.s32 %v9101, 536870912
        %v9103 = vshrl.u32 %v9102, 30
        %v9104 = vshll.u32 %v9103, 30
        %v9105 = vsub.s32 %v9101, %v9104
        %vm9106 = vcmp.lt.s32.totalorder %v9105, 0
        %v9107 = vsub.s32 0, %v9105
        %v9108 = vsel %vm9106, %v9107, %v9105
        %v9109 = vclz %v9108
        %v9110 = vsub.s32 %v9109, 2
        %vm9111 = vcmp.gt.s32.totalorder 0, %v9110
        %v9112 = vsel %vm9111, 0, %v9110
        %v9113 = vsub.s32 32, %v9112
        %v9114 = vshll.u32 %v9105, %v9112
        %v9115 = vshrl.u32 %v9097, %v9113
        %v9116 = vor.u32 %v9114, %v9115
        %v9117 = vsub.s32 4294967266, %v9112
        %v9118 = vadd.s32 %v9117, 127
        %v9119 = vshll.u32 %v9118, 23
        %v9120 = vor.u32 4788187, %v9119
        %v9121 = vand.u32 2147483647, %v9120
        %v9123 = vcvt.s32.f32 %v9116
        %v9124 = vmul.f32 %v9123, %v9121
        %v9125 = vxor.u32 %v9124, 2147483648
        %v9126 = vsel %vm9043, %v9125, %v9124
        %v9127 = vsub.s32 4, %v9103
        %v9128 = vsel %vm9043, %v9127, %v9103
        %v9129 = vsel %vm9042, %v1912, %v9126
        %v9130 = vsel %vm9042, 0, %v9128
        %v9131 = vcosq.f32.pop %v9129
        %v9132 = vsinq.f32.pop %v9129
        %vm9133 = vweird.f32 %v1912
        %v9134 = vand.u32 %v9130, 3
        %vm9135 = vcmp.lt.s32.totalorder %v9134, 2
        %vm9136 = vcmp.eq.s32.totalorder %v9134, 0
        %v9137 = vxor.u32 %v9132, 2147483648
        %v9138 = vsel %vm9136, %v9131, %v9137
        %vm9139 = vcmp.eq.s32.totalorder %v9134, 2
        %v9140 = vxor.u32 %v9131, 2147483648
        %v9141 = vsel %vm9139, %v9140, %v9132
        %v9142 = vsel %vm9135, %v9138, %v9141
        %v9143 = vsel %vm9133, nan, %v9142
        %v9144 = vand.u32 2147483647, %v1913
        %vm9145 = vcmp.le.f32.partialorder %v9144, 0.7853982
        %vm9146 = vcmp.lt.s32.totalorder %v1913, 0
        %v9147 = vand.u32 %v1913, 2139095040
        %v9148 = vshrl.u32 %v9147, 23
        %v9149 = vsub.s32 %v9148, 127
        %v9150 = vand.u32 2147483647, %v1913
        %v9151 = vand.u32 %v9150, 8388607
        %v9152 = vor.u32 %v9151, 8388608
        %v9153 = vsub.s32 0, %v9152
        %v9154 = vadd.s32 %v9149, 1
        %vm9155 = vcmp.gt.s32.totalorder %v9154, 0
        %v9156 = vsel %vm9155, %v9154, 0
        %v9157 = vshrl.u32 %v9156, 5
        %v9158 = vand.u32 %v9156, 31
        %v9159 = vsub.s32 32, %v9158
        %v9160 = vshrl.u32 683565275, %v9159
        %v9161 = vshll.u32 683565275, %v9158
        %v9162 = vshrl.u32 2475754826, %v9159
        %v9163 = vor.u32 %v9161, %v9162
        %v9164 = vshll.u32 2475754826, %v9158
        %v9165 = vshrl.u32 2131351028, %v9159
        %v9166 = vor.u32 %v9164, %v9165
        %v9167 = vshll.u32 2131351028, %v9158
        %v9168 = vshrl.u32 2102212464, %v9159
        %v9169 = vor.u32 %v9167, %v9168
        %v9170 = vshll.u32 2102212464, %v9158
        %v9171 = vshrl.u32 920167782, %v9159
        %v9172 = vor.u32 %v9170, %v9171
        %v9173 = vshll.u32 920167782, %v9158
        %v9174 = vshrl.u32 1326507024, %v9159
        %v9175 = vor.u32 %v9173, %v9174
        %vm9176 = vcmp.lt.s32.totalorder %v9157, 1
        %vm9177 = vcmp.lt.s32.totalorder %v9157, 2
        %vm9178 = vcmp.lt.s32.totalorder %v9157, 3
        %vm9179 = vcmp.lt.s32.totalorder %v9157, 4
        %v9180 = vsel %vm9176, %v9160, %v9163
        %v9181 = vsel %vm9179, %v9169, 2102212464
        %v9182 = vsel %vm9178, %v9166, %v9181
        %v9183 = vsel %vm9177, %v9180, %v9182
        %v9184 = vsel %vm9176, %v9163, %v9166
        %v9185 = vsel %vm9179, %v9172, 920167782
        %v9186 = vsel %vm9178, %v9169, %v9185
        %v9187 = vsel %vm9177, %v9184, %v9186
        %v9188 = vsel %vm9176, %v9166, %v9169
        %v9189 = vsel %vm9179, %v9175, 1326507024
        %v9190 = vsel %vm9178, %v9172, %v9189
        %v9191 = vsel %vm9177, %v9188, %v9190
        %v9192 = vshll.u32 %v9152, 8
        %v9193 = vmul.u32.u64.compose %v9192, %v9191
        %v9194 = vextract.low.u32 %v9193
        %v9195 = vextract.high.u32 %v9193
        %v9196 = vmul.u32.u64.compose %v9192, %v9187
        %v9197 = vextract.low.u32 %v9196
        %v9198 = vextract.high.u32 %v9196
        %v9199 = vmul.u32 %v9192, %v9183
        %v9200 = vadd.s32 %v9195, %v9197
        %vm9201 = vc.u32 %v9195, %v9197
        %v9202 = vadd.s32 %v9198, 1
        %v9203 = vsel %vm9201, %v9202, %v9198
        %v9204 = vadd.s32 %v9199, %v9203
        %v9205 = vadd.s32 %v9204, 536870912
        %v9206 = vshrl.u32 %v9205, 30
        %v9207 = vshll.u32 %v9206, 30
        %v9208 = vsub.s32 %v9204, %v9207
        %vm9209 = vcmp.lt.s32.totalorder %v9208, 0
        %v9210 = vsub.s32 0, %v9208
        %v9211 = vsel %vm9209, %v9210, %v9208
        %v9212 = vclz %v9211
        %v9213 = vsub.s32 %v9212, 2
        %vm9214 = vcmp.gt.s32.totalorder 0, %v9213
        %v9215 = vsel %vm9214, 0, %v9213
        %v9216 = vsub.s32 32, %v9215
        %v9217 = vshll.u32 %v9208, %v9215
        %v9218 = vshrl.u32 %v9200, %v9216
        %v9219 = vor.u32 %v9217, %v9218
        %v9220 = vsub.s32 4294967266, %v9215
        %v9221 = vadd.s32 %v9220, 127
        %v9222 = vshll.u32 %v9221, 23
        %v9223 = vor.u32 4788187, %v9222
        %v9224 = vand.u32 2147483647, %v9223
        %v9226 = vcvt.s32.f32 %v9219
        %v9227 = vmul.f32 %v9226, %v9224
        %v9228 = vxor.u32 %v9227, 2147483648
        %v9229 = vsel %vm9146, %v9228, %v9227
        %v9230 = vsub.s32 4, %v9206
        %v9231 = vsel %vm9146, %v9230, %v9206
        %v9232 = vsel %vm9145, %v1913, %v9229
        %v9233 = vsel %vm9145, 0, %v9231
        %v9234 = vcosq.f32.pop %v9232
        %v9235 = vsinq.f32.pop %v9232
        %vm9236 = vweird.f32 %v1913
        %v9237 = vand.u32 %v9233, 3
        %vm9238 = vcmp.lt.s32.totalorder %v9237, 2
        %vm9239 = vcmp.eq.s32.totalorder %v9237, 0
        %v9240 = vxor.u32 %v9235, 2147483648
        %v9241 = vsel %vm9239, %v9234, %v9240
        %vm9242 = vcmp.eq.s32.totalorder %v9237, 2
        %v9243 = vxor.u32 %v9234, 2147483648
        %v9244 = vsel %vm9242, %v9243, %v9235
        %v9245 = vsel %vm9238, %v9241, %v9244
        %v9246 = vsel %vm9236, nan, %v9245
        %v9247 = vand.u32 2147483647, %v1914
        %vm9248 = vcmp.le.f32.partialorder %v9247, 0.7853982
        %vm9249 = vcmp.lt.s32.totalorder %v1914, 0
        %v9250 = vand.u32 %v1914, 2139095040
        %v9251 = vshrl.u32 %v9250, 23
        %v9252 = vsub.s32 %v9251, 127
        %v9253 = vand.u32 2147483647, %v1914
        %v9254 = vand.u32 %v9253, 8388607
        %v9255 = vor.u32 %v9254, 8388608
        %v9256 = vsub.s32 0, %v9255
        %v9257 = vadd.s32 %v9252, 1
        %vm9258 = vcmp.gt.s32.totalorder %v9257, 0
        %v9259 = vsel %vm9258, %v9257, 0
        %v9260 = vshrl.u32 %v9259, 5
        %v9261 = vand.u32 %v9259, 31
        %v9262 = vsub.s32 32, %v9261
        %v9263 = vshrl.u32 683565275, %v9262
        %v9264 = vshll.u32 683565275, %v9261
        %v9265 = vshrl.u32 2475754826, %v9262
        %v9266 = vor.u32 %v9264, %v9265
        %v9267 = vshll.u32 2475754826, %v9261
        %v9268 = vshrl.u32 2131351028, %v9262
        %v9269 = vor.u32 %v9267, %v9268
        %v9270 = vshll.u32 2131351028, %v9261
        %v9271 = vshrl.u32 2102212464, %v9262
        %v9272 = vor.u32 %v9270, %v9271
        %v9273 = vshll.u32 2102212464, %v9261
        %v9274 = vshrl.u32 920167782, %v9262
        %v9275 = vor.u32 %v9273, %v9274
        %v9276 = vshll.u32 920167782, %v9261
        %v9277 = vshrl.u32 1326507024, %v9262
        %v9278 = vor.u32 %v9276, %v9277
        %vm9279 = vcmp.lt.s32.totalorder %v9260, 1
        %vm9280 = vcmp.lt.s32.totalorder %v9260, 2
        %vm9281 = vcmp.lt.s32.totalorder %v9260, 3
        %vm9282 = vcmp.lt.s32.totalorder %v9260, 4
        %v9283 = vsel %vm9279, %v9263, %v9266
        %v9284 = vsel %vm9282, %v9272, 2102212464
        %v9285 = vsel %vm9281, %v9269, %v9284
        %v9286 = vsel %vm9280, %v9283, %v9285
        %v9287 = vsel %vm9279, %v9266, %v9269
        %v9288 = vsel %vm9282, %v9275, 920167782
        %v9289 = vsel %vm9281, %v9272, %v9288
        %v9290 = vsel %vm9280, %v9287, %v9289
        %v9291 = vsel %vm9279, %v9269, %v9272
        %v9292 = vsel %vm9282, %v9278, 1326507024
        %v9293 = vsel %vm9281, %v9275, %v9292
        %v9294 = vsel %vm9280, %v9291, %v9293
        %v9295 = vshll.u32 %v9255, 8
        %v9296 = vmul.u32.u64.compose %v9295, %v9294
        %v9297 = vextract.low.u32 %v9296
        %v9298 = vextract.high.u32 %v9296
        %v9299 = vmul.u32.u64.compose %v9295, %v9290
        %v9300 = vextract.low.u32 %v9299
        %v9301 = vextract.high.u32 %v9299
        %v9302 = vmul.u32 %v9295, %v9286
        %v9303 = vadd.s32 %v9298, %v9300
        %vm9304 = vc.u32 %v9298, %v9300
        %v9305 = vadd.s32 %v9301, 1
        %v9306 = vsel %vm9304, %v9305, %v9301
        %v9307 = vadd.s32 %v9302, %v9306
        %v9308 = vadd.s32 %v9307, 536870912
        %v9309 = vshrl.u32 %v9308, 30
        %v9310 = vshll.u32 %v9309, 30
        %v9311 = vsub.s32 %v9307, %v9310
        %vm9312 = vcmp.lt.s32.totalorder %v9311, 0
        %v9313 = vsub.s32 0, %v9311
        %v9314 = vsel %vm9312, %v9313, %v9311
        %v9315 = vclz %v9314
        %v9316 = vsub.s32 %v9315, 2
        %vm9317 = vcmp.gt.s32.totalorder 0, %v9316
        %v9318 = vsel %vm9317, 0, %v9316
        %v9319 = vsub.s32 32, %v9318
        %v9320 = vshll.u32 %v9311, %v9318
        %v9321 = vshrl.u32 %v9303, %v9319
        %v9322 = vor.u32 %v9320, %v9321
        %v9323 = vsub.s32 4294967266, %v9318
        %v9324 = vadd.s32 %v9323, 127
        %v9325 = vshll.u32 %v9324, 23
        %v9326 = vor.u32 4788187, %v9325
        %v9327 = vand.u32 2147483647, %v9326
        %v9329 = vcvt.s32.f32 %v9322
        %v9330 = vmul.f32 %v9329, %v9327
        %v9331 = vxor.u32 %v9330, 2147483648
        %v9332 = vsel %vm9249, %v9331, %v9330
        %v9333 = vsub.s32 4, %v9309
        %v9334 = vsel %vm9249, %v9333, %v9309
        %v9335 = vsel %vm9248, %v1914, %v9332
        %v9336 = vsel %vm9248, 0, %v9334
        %v9337 = vcosq.f32.pop %v9335
        %v9338 = vsinq.f32.pop %v9335
        %vm9339 = vweird.f32 %v1914
        %v9340 = vand.u32 %v9336, 3
        %vm9341 = vcmp.lt.s32.totalorder %v9340, 2
        %vm9342 = vcmp.eq.s32.totalorder %v9340, 0
        %v9343 = vxor.u32 %v9338, 2147483648
        %v9344 = vsel %vm9342, %v9337, %v9343
        %vm9345 = vcmp.eq.s32.totalorder %v9340, 2
        %v9346 = vxor.u32 %v9337, 2147483648
        %v9347 = vsel %vm9345, %v9346, %v9338
        %v9348 = vsel %vm9341, %v9344, %v9347
        %v9349 = vsel %vm9339, nan, %v9348
        %v9350 = vand.u32 2147483647, %v1915
        %vm9351 = vcmp.le.f32.partialorder %v9350, 0.7853982
        %vm9352 = vcmp.lt.s32.totalorder %v1915, 0
        %v9353 = vand.u32 %v1915, 2139095040
        %v9354 = vshrl.u32 %v9353, 23
        %v9355 = vsub.s32 %v9354, 127
        %v9356 = vand.u32 2147483647, %v1915
        %v9357 = vand.u32 %v9356, 8388607
        %v9358 = vor.u32 %v9357, 8388608
        %v9359 = vsub.s32 0, %v9358
        %v9360 = vadd.s32 %v9355, 1
        %vm9361 = vcmp.gt.s32.totalorder %v9360, 0
        %v9362 = vsel %vm9361, %v9360, 0
        %v9363 = vshrl.u32 %v9362, 5
        %v9364 = vand.u32 %v9362, 31
        %v9365 = vsub.s32 32, %v9364
        %v9366 = vshrl.u32 683565275, %v9365
        %v9367 = vshll.u32 683565275, %v9364
        %v9368 = vshrl.u32 2475754826, %v9365
        %v9369 = vor.u32 %v9367, %v9368
        %v9370 = vshll.u32 2475754826, %v9364
        %v9371 = vshrl.u32 2131351028, %v9365
        %v9372 = vor.u32 %v9370, %v9371
        %v9373 = vshll.u32 2131351028, %v9364
        %v9374 = vshrl.u32 2102212464, %v9365
        %v9375 = vor.u32 %v9373, %v9374
        %v9376 = vshll.u32 2102212464, %v9364
        %v9377 = vshrl.u32 920167782, %v9365
        %v9378 = vor.u32 %v9376, %v9377
        %v9379 = vshll.u32 920167782, %v9364
        %v9380 = vshrl.u32 1326507024, %v9365
        %v9381 = vor.u32 %v9379, %v9380
        %vm9382 = vcmp.lt.s32.totalorder %v9363, 1
        %vm9383 = vcmp.lt.s32.totalorder %v9363, 2
        %vm9384 = vcmp.lt.s32.totalorder %v9363, 3
        %vm9385 = vcmp.lt.s32.totalorder %v9363, 4
        %v9386 = vsel %vm9382, %v9366, %v9369
        %v9387 = vsel %vm9385, %v9375, 2102212464
        %v9388 = vsel %vm9384, %v9372, %v9387
        %v9389 = vsel %vm9383, %v9386, %v9388
        %v9390 = vsel %vm9382, %v9369, %v9372
        %v9391 = vsel %vm9385, %v9378, 920167782
        %v9392 = vsel %vm9384, %v9375, %v9391
        %v9393 = vsel %vm9383, %v9390, %v9392
        %v9394 = vsel %vm9382, %v9372, %v9375
        %v9395 = vsel %vm9385, %v9381, 1326507024
        %v9396 = vsel %vm9384, %v9378, %v9395
        %v9397 = vsel %vm9383, %v9394, %v9396
        %v9398 = vshll.u32 %v9358, 8
        %v9399 = vmul.u32.u64.compose %v9398, %v9397
        %v9400 = vextract.low.u32 %v9399
        %v9401 = vextract.high.u32 %v9399
        %v9402 = vmul.u32.u64.compose %v9398, %v9393
        %v9403 = vextract.low.u32 %v9402
        %v9404 = vextract.high.u32 %v9402
        %v9405 = vmul.u32 %v9398, %v9389
        %v9406 = vadd.s32 %v9401, %v9403
        %vm9407 = vc.u32 %v9401, %v9403
        %v9408 = vadd.s32 %v9404, 1
        %v9409 = vsel %vm9407, %v9408, %v9404
        %v9410 = vadd.s32 %v9405, %v9409
        %v9411 = vadd.s32 %v9410, 536870912
        %v9412 = vshrl.u32 %v9411, 30
        %v9413 = vshll.u32 %v9412, 30
        %v9414 = vsub.s32 %v9410, %v9413
        %vm9415 = vcmp.lt.s32.totalorder %v9414, 0
        %v9416 = vsub.s32 0, %v9414
        %v9417 = vsel %vm9415, %v9416, %v9414
        %v9418 = vclz %v9417
        %v9419 = vsub.s32 %v9418, 2
        %vm9420 = vcmp.gt.s32.totalorder 0, %v9419
        %v9421 = vsel %vm9420, 0, %v9419
        %v9422 = vsub.s32 32, %v9421
        %v9423 = vshll.u32 %v9414, %v9421
        %v9424 = vshrl.u32 %v9406, %v9422
        %v9425 = vor.u32 %v9423, %v9424
        %v9426 = vsub.s32 4294967266, %v9421
        %v9427 = vadd.s32 %v9426, 127
        %v9428 = vshll.u32 %v9427, 23
        %v9429 = vor.u32 4788187, %v9428
        %v9430 = vand.u32 2147483647, %v9429
        %v9432 = vcvt.s32.f32 %v9425
        %v9433 = vmul.f32 %v9432, %v9430
        %v9434 = vxor.u32 %v9433, 2147483648
        %v9435 = vsel %vm9352, %v9434, %v9433
        %v9436 = vsub.s32 4, %v9412
        %v9437 = vsel %vm9352, %v9436, %v9412
        %v9438 = vsel %vm9351, %v1915, %v9435
        %v9439 = vsel %vm9351, 0, %v9437
        %v9440 = vcosq.f32.pop %v9438
        %v9441 = vsinq.f32.pop %v9438
        %vm9442 = vweird.f32 %v1915
        %v9443 = vand.u32 %v9439, 3
        %vm9444 = vcmp.lt.s32.totalorder %v9443, 2
        %vm9445 = vcmp.eq.s32.totalorder %v9443, 0
        %v9446 = vxor.u32 %v9441, 2147483648
        %v9447 = vsel %vm9445, %v9440, %v9446
        %vm9448 = vcmp.eq.s32.totalorder %v9443, 2
        %v9449 = vxor.u32 %v9440, 2147483648
        %v9450 = vsel %vm9448, %v9449, %v9441
        %v9451 = vsel %vm9444, %v9447, %v9450
        %v9452 = vsel %vm9442, nan, %v9451
        %9469 = vrot.lane.b32.xlu0 %v7789, 24
        %v9470 = vpop.permute.xlu0 %9469
        %9471 = vrot.lane.b32.xlu0 %v7790, 24
        %v9472 = vpop.permute.xlu0 %9471
        %9473 = vrot.lane.b32.xlu0 %v7791, 24
        %v9474 = vpop.permute.xlu0 %9473
        %9475 = vrot.lane.b32.xlu0 %v7792, 24
        %v9476 = vpop.permute.xlu0 %9475
        %9477 = vrot.lane.b32.xlu0 %v7793, 24
        %v9478 = vpop.permute.xlu0 %9477
        %9479 = vrot.lane.b32.xlu0 %v7794, 24
        %v9480 = vpop.permute.xlu0 %9479
        %9481 = vrot.lane.b32.xlu0 %v7795, 24
        %v9482 = vpop.permute.xlu0 %9481
        %9483 = vrot.lane.b32.xlu0 %v7796, 24
        %v9484 = vpop.permute.xlu0 %9483
        %9485 = vrot.lane.b32.xlu0 %v7797, 24
        %v9486 = vpop.permute.xlu0 %9485
        %9487 = vrot.lane.b32.xlu0 %v7798, 24
        %v9488 = vpop.permute.xlu0 %9487
        %9489 = vrot.lane.b32.xlu0 %v7799, 24
        %v9490 = vpop.permute.xlu0 %9489
        %9491 = vrot.lane.b32.xlu0 %v7800, 24
        %v9492 = vpop.permute.xlu0 %9491
        %9493 = vrot.lane.b32.xlu0 %v7801, 24
        %v9494 = vpop.permute.xlu0 %9493
        %9495 = vrot.lane.b32.xlu0 %v7802, 24
        %v9496 = vpop.permute.xlu0 %9495
        %9497 = vrot.lane.b32.xlu0 %v7803, 24
        %v9498 = vpop.permute.xlu0 %9497
        %9499 = vrot.lane.b32.xlu0 %v7804, 24
        %v9500 = vpop.permute.xlu0 %9499
        %9533 = vrot.lane.b32.xlu0 %v7907, 24
        %v9534 = vpop.permute.xlu0 %9533
        %9535 = vrot.lane.b32.xlu0 %v8010, 24
        %v9536 = vpop.permute.xlu0 %9535
        %9537 = vrot.lane.b32.xlu0 %v8113, 24
        %v9538 = vpop.permute.xlu0 %9537
        %9539 = vrot.lane.b32.xlu0 %v8216, 24
        %v9540 = vpop.permute.xlu0 %9539
        %9541 = vrot.lane.b32.xlu0 %v8319, 24
        %v9542 = vpop.permute.xlu0 %9541
        %9543 = vrot.lane.b32.xlu0 %v8422, 24
        %v9544 = vpop.permute.xlu0 %9543
        %9545 = vrot.lane.b32.xlu0 %v8525, 24
        %v9546 = vpop.permute.xlu0 %9545
        %9547 = vrot.lane.b32.xlu0 %v8628, 24
        %v9548 = vpop.permute.xlu0 %9547
        %9549 = vrot.lane.b32.xlu0 %v8731, 24
        %v9550 = vpop.permute.xlu0 %9549
        %9551 = vrot.lane.b32.xlu0 %v8834, 24
        %v9552 = vpop.permute.xlu0 %9551
        %9553 = vrot.lane.b32.xlu0 %v8937, 24
        %v9554 = vpop.permute.xlu0 %9553
        %9555 = vrot.lane.b32.xlu0 %v9040, 24
        %v9556 = vpop.permute.xlu0 %9555
        %9557 = vrot.lane.b32.xlu0 %v9143, 24
        %v9558 = vpop.permute.xlu0 %9557
        %9559 = vrot.lane.b32.xlu0 %v9246, 24
        %v9560 = vpop.permute.xlu0 %9559
        %9561 = vrot.lane.b32.xlu0 %v9349, 24
        %v9562 = vpop.permute.xlu0 %9561
        %9563 = vrot.lane.b32.xlu0 %v9452, 24
        %v9564 = vpop.permute.xlu0 %9563
        %9597 = vrot.lane.b32.xlu0 %v3596, 24
        %v9598 = vpop.permute.xlu0 %9597
        %9599 = vrot.lane.b32.xlu0 %v3597, 24
        %v9600 = vpop.permute.xlu0 %9599
        %9601 = vrot.lane.b32.xlu0 %v3598, 24
        %v9602 = vpop.permute.xlu0 %9601
        %9603 = vrot.lane.b32.xlu0 %v3599, 24
        %v9604 = vpop.permute.xlu0 %9603
        %9605 = vrot.lane.b32.xlu0 %v3600, 24
        %v9606 = vpop.permute.xlu0 %9605
        %9607 = vrot.lane.b32.xlu0 %v3601, 24
        %v9608 = vpop.permute.xlu0 %9607
        %9609 = vrot.lane.b32.xlu0 %v3602, 24
        %v9610 = vpop.permute.xlu0 %9609
        %9611 = vrot.lane.b32.xlu0 %v3603, 24
        %v9612 = vpop.permute.xlu0 %9611
        %9613 = vrot.lane.b32.xlu0 %v3604, 24
        %v9614 = vpop.permute.xlu0 %9613
        %9615 = vrot.lane.b32.xlu0 %v3605, 24
        %v9616 = vpop.permute.xlu0 %9615
        %9617 = vrot.lane.b32.xlu0 %v3606, 24
        %v9618 = vpop.permute.xlu0 %9617
        %9619 = vrot.lane.b32.xlu0 %v3607, 24
        %v9620 = vpop.permute.xlu0 %9619
        %9621 = vrot.lane.b32.xlu0 %v3608, 24
        %v9622 = vpop.permute.xlu0 %9621
        %9623 = vrot.lane.b32.xlu0 %v3609, 24
        %v9624 = vpop.permute.xlu0 %9623
        %9625 = vrot.lane.b32.xlu0 %v3610, 24
        %v9626 = vpop.permute.xlu0 %9625
        %9627 = vrot.lane.b32.xlu0 %v3611, 24
        %v9628 = vpop.permute.xlu0 %9627
        %9677 = vrot.lane.b32.xlu0 %v3612, 24
        %v9678 = vpop.permute.xlu0 %9677
        %9679 = vrot.lane.b32.xlu0 %v3613, 24
        %v9680 = vpop.permute.xlu0 %9679
        %9681 = vrot.lane.b32.xlu0 %v3614, 24
        %v9682 = vpop.permute.xlu0 %9681
        %9683 = vrot.lane.b32.xlu0 %v3615, 24
        %v9684 = vpop.permute.xlu0 %9683
        %9685 = vrot.lane.b32.xlu0 %v3616, 24
        %v9686 = vpop.permute.xlu0 %9685
        %9687 = vrot.lane.b32.xlu0 %v3617, 24
        %v9688 = vpop.permute.xlu0 %9687
        %9689 = vrot.lane.b32.xlu0 %v3618, 24
        %v9690 = vpop.permute.xlu0 %9689
        %9691 = vrot.lane.b32.xlu0 %v3619, 24
        %v9692 = vpop.permute.xlu0 %9691
        %9693 = vrot.lane.b32.xlu0 %v3620, 24
        %v9694 = vpop.permute.xlu0 %9693
        %9695 = vrot.lane.b32.xlu0 %v3621, 24
        %v9696 = vpop.permute.xlu0 %9695
        %9697 = vrot.lane.b32.xlu0 %v3622, 24
        %v9698 = vpop.permute.xlu0 %9697
        %9699 = vrot.lane.b32.xlu0 %v3623, 24
        %v9700 = vpop.permute.xlu0 %9699
        %9701 = vrot.lane.b32.xlu0 %v3624, 24
        %v9702 = vpop.permute.xlu0 %9701
        %9703 = vrot.lane.b32.xlu0 %v3625, 24
        %v9704 = vpop.permute.xlu0 %9703
        %9705 = vrot.lane.b32.xlu0 %v3626, 24
        %v9706 = vpop.permute.xlu0 %9705
        %9707 = vrot.lane.b32.xlu0 %v3627, 24
        %v9708 = vpop.permute.xlu0 %9707
        %9709 = vrot.lane.b32.xlu0 %v3628, 24
        %v9710 = vpop.permute.xlu0 %9709
        %9711 = vrot.lane.b32.xlu0 %v3629, 24
        %v9712 = vpop.permute.xlu0 %9711
        %9713 = vrot.lane.b32.xlu0 %v3630, 24
        %v9714 = vpop.permute.xlu0 %9713
        %9715 = vrot.lane.b32.xlu0 %v3631, 24
        %v9716 = vpop.permute.xlu0 %9715
        %9717 = vrot.lane.b32.xlu0 %v3632, 24
        %v9718 = vpop.permute.xlu0 %9717
        %9719 = vrot.lane.b32.xlu0 %v3633, 24
        %v9720 = vpop.permute.xlu0 %9719
        %9721 = vrot.lane.b32.xlu0 %v3634, 24
        %v9722 = vpop.permute.xlu0 %9721
        %9723 = vrot.lane.b32.xlu0 %v3635, 24
        %v9724 = vpop.permute.xlu0 %9723
        %9725 = vrot.lane.b32.xlu0 %v3636, 24
        %v9726 = vpop.permute.xlu0 %9725
        %9727 = vrot.lane.b32.xlu0 %v3637, 24
        %v9728 = vpop.permute.xlu0 %9727
        %9729 = vrot.lane.b32.xlu0 %v3638, 24
        %v9730 = vpop.permute.xlu0 %9729
        %9731 = vrot.lane.b32.xlu0 %v3639, 24
        %v9732 = vpop.permute.xlu0 %9731
        %9733 = vrot.lane.b32.xlu0 %v3640, 24
        %v9734 = vpop.permute.xlu0 %9733
        %9735 = vrot.lane.b32.xlu0 %v3641, 24
        %v9736 = vpop.permute.xlu0 %9735
        %9737 = vrot.lane.b32.xlu0 %v3642, 24
        %v9738 = vpop.permute.xlu0 %9737
        %9739 = vrot.lane.b32.xlu0 %v3643, 24
        %v9740 = vpop.permute.xlu0 %9739
        %vm9741 = vcmask 195584
        %v9742 = vsel %vm9741, %v9678, %v9680
        %v9743 = vsel %vm9741, %v9682, %v9684
        %v9744 = vsel %vm9741, %v9686, %v9688
        %v9745 = vsel %vm9741, %v9690, %v9692
        %v9746 = vsel %vm9741, %v9694, %v9696
        %v9747 = vsel %vm9741, %v9698, %v9700
        %v9748 = vsel %vm9741, %v9702, %v9704
        %v9749 = vsel %vm9741, %v9706, %v9708
        %v9750 = vsel %vm9741, %v9710, %v9712
        %v9751 = vsel %vm9741, %v9714, %v9716
        %v9752 = vsel %vm9741, %v9718, %v9720
        %v9753 = vsel %vm9741, %v9722, %v9724
        %v9754 = vsel %vm9741, %v9726, %v9728
        %v9755 = vsel %vm9741, %v9730, %v9732
        %v9756 = vsel %vm9741, %v9734, %v9736
        %v9757 = vsel %vm9741, %v9738, %v9740
        %9806 = vrot.lane.b32.xlu0 %v4381, 40
        %v9807 = vpop.permute.xlu0 %9806
        %9808 = vrot.lane.b32.xlu0 %v4382, 40
        %v9809 = vpop.permute.xlu0 %9808
        %9810 = vrot.lane.b32.xlu0 %v4383, 40
        %v9811 = vpop.permute.xlu0 %9810
        %9812 = vrot.lane.b32.xlu0 %v4384, 40
        %v9813 = vpop.permute.xlu0 %9812
        %9814 = vrot.lane.b32.xlu0 %v4385, 40
        %v9815 = vpop.permute.xlu0 %9814
        %9816 = vrot.lane.b32.xlu0 %v4386, 40
        %v9817 = vpop.permute.xlu0 %9816
        %9818 = vrot.lane.b32.xlu0 %v4387, 40
        %v9819 = vpop.permute.xlu0 %9818
        %9820 = vrot.lane.b32.xlu0 %v4388, 40
        %v9821 = vpop.permute.xlu0 %9820
        %9822 = vrot.lane.b32.xlu0 %v4389, 40
        %v9823 = vpop.permute.xlu0 %9822
        %9824 = vrot.lane.b32.xlu0 %v4390, 40
        %v9825 = vpop.permute.xlu0 %9824
        %9826 = vrot.lane.b32.xlu0 %v4391, 40
        %v9827 = vpop.permute.xlu0 %9826
        %9828 = vrot.lane.b32.xlu0 %v4392, 40
        %v9829 = vpop.permute.xlu0 %9828
        %9830 = vrot.lane.b32.xlu0 %v4393, 40
        %v9831 = vpop.permute.xlu0 %9830
        %9832 = vrot.lane.b32.xlu0 %v4394, 40
        %v9833 = vpop.permute.xlu0 %9832
        %9834 = vrot.lane.b32.xlu0 %v4395, 40
        %v9835 = vpop.permute.xlu0 %9834
        %9836 = vrot.lane.b32.xlu0 %v4396, 40
        %v9837 = vpop.permute.xlu0 %9836
        %v9854 = vsel %vm9741, %v6109, %v9470
        %v9855 = vsel %vm9741, %v6110, %v9472
        %v9856 = vsel %vm9741, %v6111, %v9474
        %v9857 = vsel %vm9741, %v6112, %v9476
        %v9858 = vsel %vm9741, %v6113, %v9478
        %v9859 = vsel %vm9741, %v6114, %v9480
        %v9860 = vsel %vm9741, %v6115, %v9482
        %v9861 = vsel %vm9741, %v6116, %v9484
        %v9862 = vsel %vm9741, %v6117, %v9486
        %v9863 = vsel %vm9741, %v6118, %v9488
        %v9864 = vsel %vm9741, %v6119, %v9490
        %v9865 = vsel %vm9741, %v6120, %v9492
        %v9866 = vsel %vm9741, %v6121, %v9494
        %v9867 = vsel %vm9741, %v6122, %v9496
        %v9868 = vsel %vm9741, %v6123, %v9498
        %v9869 = vsel %vm9741, %v6124, %v9500
        %vm9870 = vcmask 392192
        %v9871 = vsel %vm9870, %v9854, %v9534
        %v9872 = vsel %vm9870, %v9855, %v9536
        %v9873 = vsel %vm9870, %v9856, %v9538
        %v9874 = vsel %vm9870, %v9857, %v9540
        %v9875 = vsel %vm9870, %v9858, %v9542
        %v9876 = vsel %vm9870, %v9859, %v9544
        %v9877 = vsel %vm9870, %v9860, %v9546
        %v9878 = vsel %vm9870, %v9861, %v9548
        %v9879 = vsel %vm9870, %v9862, %v9550
        %v9880 = vsel %vm9870, %v9863, %v9552
        %v9881 = vsel %vm9870, %v9864, %v9554
        %v9882 = vsel %vm9870, %v9865, %v9556
        %v9883 = vsel %vm9870, %v9866, %v9558
        %v9884 = vsel %vm9870, %v9867, %v9560
        %v9885 = vsel %vm9870, %v9868, %v9562
        %v9886 = vsel %vm9870, %v9869, %v9564
        %vm9887 = vcmask 588800
        %v9888 = vsel %vm9887, %v9871, %v9598
        %v9889 = vsel %vm9887, %v9872, %v9600
        %v9890 = vsel %vm9887, %v9873, %v9602
        %v9891 = vsel %vm9887, %v9874, %v9604
        %v9892 = vsel %vm9887, %v9875, %v9606
        %v9893 = vsel %vm9887, %v9876, %v9608
        %v9894 = vsel %vm9887, %v9877, %v9610
        %v9895 = vsel %vm9887, %v9878, %v9612
        %v9896 = vsel %vm9887, %v9879, %v9614
        %v9897 = vsel %vm9887, %v9880, %v9616
        %v9898 = vsel %vm9887, %v9881, %v9618
        %v9899 = vsel %vm9887, %v9882, %v9620
        %v9900 = vsel %vm9887, %v9883, %v9622
        %v9901 = vsel %vm9887, %v9884, %v9624
        %v9902 = vsel %vm9887, %v9885, %v9626
        %v9903 = vsel %vm9887, %v9886, %v9628
        %vm9904 = vcmask 785408
        %v9905 = vsel %vm9904, %v9888, %v9678
        %v9906 = vsel %vm9904, %v9889, %v9682
        %v9907 = vsel %vm9904, %v9890, %v9686
        %v9908 = vsel %vm9904, %v9891, %v9690
        %v9909 = vsel %vm9904, %v9892, %v9694
        %v9910 = vsel %vm9904, %v9893, %v9698
        %v9911 = vsel %vm9904, %v9894, %v9702
        %v9912 = vsel %vm9904, %v9895, %v9706
        %v9913 = vsel %vm9904, %v9896, %v9710
        %v9914 = vsel %vm9904, %v9897, %v9714
        %v9915 = vsel %vm9904, %v9898, %v9718
        %v9916 = vsel %vm9904, %v9899, %v9722
        %v9917 = vsel %vm9904, %v9900, %v9726
        %v9918 = vsel %vm9904, %v9901, %v9730
        %v9919 = vsel %vm9904, %v9902, %v9734
        %v9920 = vsel %vm9904, %v9903, %v9738
        %vm9921 = vcmask 326656
        %v9922 = vsel %vm9921, %v9742, %v9807
        %v9923 = vsel %vm9921, %v9743, %v9809
        %v9924 = vsel %vm9921, %v9744, %v9811
        %v9925 = vsel %vm9921, %v9745, %v9813
        %v9926 = vsel %vm9921, %v9746, %v9815
        %v9927 = vsel %vm9921, %v9747, %v9817
        %v9928 = vsel %vm9921, %v9748, %v9819
        %v9929 = vsel %vm9921, %v9749, %v9821
        %v9930 = vsel %vm9921, %v9750, %v9823
        %v9931 = vsel %vm9921, %v9751, %v9825
        %v9932 = vsel %vm9921, %v9752, %v9827
        %v9933 = vsel %vm9921, %v9753, %v9829
        %v9934 = vsel %vm9921, %v9754, %v9831
        %v9935 = vsel %vm9921, %v9755, %v9833
        %v9936 = vsel %vm9921, %v9756, %v9835
        %v9937 = vsel %vm9921, %v9757, %v9837
        %vm9938 = vcmask 351232
        %v9939 = vsel %vm9938, %v9922, 0.0
        %v9940 = vsel %vm9938, %v9923, 0.0
        %v9941 = vsel %vm9938, %v9924, 0.0
        %v9942 = vsel %vm9938, %v9925, 0.0
        %v9943 = vsel %vm9938, %v9926, 0.0
        %v9944 = vsel %vm9938, %v9927, 0.0
        %v9945 = vsel %vm9938, %v9928, 0.0
        %v9946 = vsel %vm9938, %v9929, 0.0
        %v9947 = vsel %vm9938, %v9930, 0.0
        %v9948 = vsel %vm9938, %v9931, 0.0
        %v9949 = vsel %vm9938, %v9932, 0.0
        %v9950 = vsel %vm9938, %v9933, 0.0
        %v9951 = vsel %vm9938, %v9934, 0.0
        %v9952 = vsel %vm9938, %v9935, 0.0
        %v9953 = vsel %vm9938, %v9936, 0.0
        %v9954 = vsel %vm9938, %v9937, 0.0
        %9955 = vst [vmem:[%s780] sm:$0xff] %v9905
        %9956 = vst [vmem:[%s780 + $0x8] sm:$0xff] %v9939
        %9957 = vst [vmem:[%s780 + $0x10] sm:$0xff] %v9906
        %9958 = vst [vmem:[%s780 + $0x18] sm:$0xff] %v9940
        %9959 = vst [vmem:[%s780 + $0x20] sm:$0xff] %v9907
        %9960 = vst [vmem:[%s780 + $0x28] sm:$0xff] %v9941
        %9961 = vst [vmem:[%s780 + $0x30] sm:$0xff] %v9908
        %9962 = vst [vmem:[%s780 + $0x38] sm:$0xff] %v9942
        %9963 = vst [vmem:[%s780 + $0x40] sm:$0xff] %v9909
        %9964 = vst [vmem:[%s780 + $0x48] sm:$0xff] %v9943
        %9965 = vst [vmem:[%s780 + $0x50] sm:$0xff] %v9910
        %9966 = vst [vmem:[%s780 + $0x58] sm:$0xff] %v9944
        %9967 = vst [vmem:[%s780 + $0x60] sm:$0xff] %v9911
        %9968 = vst [vmem:[%s780 + $0x68] sm:$0xff] %v9945
        %9969 = vst [vmem:[%s780 + $0x70] sm:$0xff] %v9912
        %9970 = vst [vmem:[%s780 + $0x78] sm:$0xff] %v9946
        %9971 = vst [vmem:[%s780 + $0x80] sm:$0xff] %v9913
        %9972 = vst [vmem:[%s780 + $0x88] sm:$0xff] %v9947
        %9973 = vst [vmem:[%s780 + $0x90] sm:$0xff] %v9914
        %9974 = vst [vmem:[%s780 + $0x98] sm:$0xff] %v9948
        %9975 = vst [vmem:[%s780 + $0xa0] sm:$0xff] %v9915
        %9976 = vst [vmem:[%s780 + $0xa8] sm:$0xff] %v9949
        %9977 = vst [vmem:[%s780 + $0xb0] sm:$0xff] %v9916
        %9978 = vst [vmem:[%s780 + $0xb8] sm:$0xff] %v9950
        %9979 = vst [vmem:[%s780 + $0xc0] sm:$0xff] %v9917
        %9980 = vst [vmem:[%s780 + $0xc8] sm:$0xff] %v9951
        %9981 = vst [vmem:[%s780 + $0xd0] sm:$0xff] %v9918
        %9982 = vst [vmem:[%s780 + $0xd8] sm:$0xff] %v9952
        %9983 = vst [vmem:[%s780 + $0xe0] sm:$0xff] %v9919
        %9984 = vst [vmem:[%s780 + $0xe8] sm:$0xff] %v9953
        %9985 = vst [vmem:[%s780 + $0xf0] sm:$0xff] %v9920
        %9986 = vst [vmem:[%s780 + $0xf8] sm:$0xff] %v9954
        %s9987 = sand.u32 %s412, 1
        %s9988 = scalar_lea.sflag [#allocation4], %s9987
        %s9989 = sand.u32 %s412, 1
        %s9990 = smul.addr %s9989, 256
        %s9991 = scalar_lea.vmem [#allocation29], %s9990
        // Predicated region
        $region157: #{indirect_illum_forward.1} parent=87 // pred_check
          %p9992 = pneg %p422
        $region158: #{indirect_illum_forward.1} parent=87 // pred_check_branch
          %9994 = sbr.rel (%p9992) target = $region160
        $region159: #{indirect_illum_forward.1} parent=87 // pred_region
          %s9995 = smul.u32 16, %s42
          %s9997 = ssub.s32 4096, 4096
          %9998 = vsyncadd %s9988, %s9997
          %s9999 = smul.addr %s9995, 2
          %s10000 = smul.addr %s9999, 128
          %s10001 = scalar_lea.hbm %s17, %s10000
          %s10002 = sshll.u32 %s9991, 4
          %s10003 = int_to_ptr.vmem [resolvable:$true] %s10002
          %10008 = dma.vmem_to_hbm [thread:$0]  %s10003, 4096, %s10001, %s9988, 256, 256, 16
        $region160: #{indirect_illum_forward.1} parent=87 // pred_fallthru
          _
      $region88: #{indirect_illum_forward.1} parent=5 // pred_fallthru
        _
      %p10009 = scmp.le.s32.totalorder 2, %s37
      // Predicated region
      $region161: #{indirect_illum_forward.1} parent=5 // pred_check
        %p10010 = pneg %p10009
      $region162: #{indirect_illum_forward.1} parent=5 // pred_check_branch
        %10012 = sbr.rel (%p10010) target = $region164
      $region163: #{indirect_illum_forward.1} parent=5 // pred_region
        %s10013 = ssub.s32 %s37, 2
        // Predicated region
        $region165: #{indirect_illum_forward.1} parent=163 // pred_check
          %p10014 = pneg %p428
        $region166: #{indirect_illum_forward.1} parent=163 // pred_check_branch
          %10016 = sbr.rel (%p10014) target = $region168
        $region167: #{indirect_illum_forward.1} parent=163 // pred_region
          %s10017 = sand.u32 %s413, 1
          %s10018 = scalar_lea.sflag [#allocation4], %s10017
          %s10019 = sand.u32 %s413, 1
          %s10020 = smul.addr %s10019, 256
          %s10021 = scalar_lea.vmem [#allocation29], %s10020
          %10022 = dma.done %s10018, 4096
        $region168: #{indirect_illum_forward.1} parent=163 // pred_fallthru
          _
      $region164: #{indirect_illum_forward.1} parent=5 // pred_fallthru
        _
    $region6: #{indirect_illum_forward.1} parent=1 // loop_footer
      %s41 = sadd.s32 1, %s37
    $region7: #{indirect_illum_forward.1} parent=1 // loop_footer_branch
      %36 = sbr.rel target = $region3
    $region8: #{indirect_illum_forward.1} parent=1 // loop_exit
      _
    %10023 = vsyncpa [#allocation3], 1
    %s10024 = scalar_lea.sflag [#allocation3], 1
    %10025 = vsyncpa %s10024, 1
    %10026 = vsyncpa [#allocation6], 1
    %10027 = vsyncpa [#allocation9], 1
    %10028 = vsyncpa [#allocation12], 1
    %10029 = vsyncpa [#allocation15], 1
    %10030 = vsyncpa [#allocation18], 1
    %10031 = vsyncpa [#allocation21], 1
    %10032 = vsyncpa [#allocation24], 1
    %10033 = vsyncpa [#allocation27], 1
    %10034 = vsyncpa [#allocation4], 1
    %s10035 = scalar_lea.sflag [#allocation4], 1
    %10036 = vsyncpa %s10035, 1

</llo_original>
